<compile_context>
chip_gen: v7x
topology: tpu7x:2x2x1
jax: 0.10.0
libtpu: 0.0.40
codegen_flags: <defaults>
</compile_context>

<pallas_src>
import functools

import jax
import jax.numpy as jnp
from jax import lax
from jax.experimental import pallas as pl
from jax.experimental.pallas import tpu as pltpu


def _erf_poly(z):
    # Abramowitz & Stegun 7.1.26 rational approximation, |error| < 1.5e-7.
    # Used for exact (erf) GELU inside the kernel without relying on a
    # hardware erf lowering.  TODO(synk): switch to lax.erf if/when desired.
    a1, a2, a3, a4, a5 = (0.254829592, -0.284496736, 1.421413741,
                          -1.453152027, 1.061405429)
    p = 0.3275911
    za = jnp.abs(z)
    t = 1.0 / (1.0 + p * za)
    poly = ((((a5 * t + a4) * t + a3) * t + a2) * t + a1) * t
    y = 1.0 - poly * jnp.exp(-(za * za))
    return jnp.where(z < 0.0, -y, y)


def _block_kernel(x_ref, xh_ref,
                  n1g_ref, n1b_ref,
                  wqkv_ref,
                  wproj_ref, bproj_ref,
                  n2g_ref, n2b_ref,
                  wfc1_ref, bfc1_ref,
                  wfc2_ref, bfc2_ref,
                  y_ref, yh_ref,
                  *, num_heads, L_mt, scale, eps):
    C = wqkv_ref.shape[0]
    H = num_heads
    D = C // H

    x = x_ref[0].astype(jnp.float32)      # (N, C)
    xh = xh_ref[0].astype(jnp.float32)    # (N, C)

    g1 = n1g_ref[...].astype(jnp.float32)     # (1, C)
    b1 = n1b_ref[...].astype(jnp.float32)
    g2 = n2g_ref[...].astype(jnp.float32)
    b2 = n2b_ref[...].astype(jnp.float32)

    def layernorm(z, g, b):
        mean = jnp.mean(z, axis=-1, keepdims=True)
        zc = z - mean
        var = jnp.mean(zc * zc, axis=-1, keepdims=True)
        return zc * lax.rsqrt(var + eps) * g + b

    # ---- norm1 + qkv (no bias: qkv_bias=False in the module) ----
    wqkv = wqkv_ref[...].astype(jnp.float32)                         # (C, 3C)
    xn = layernorm(x, g1, b1)
    xhn = layernorm(xh, g1, b1)
    qkv = jnp.dot(xn, wqkv, preferred_element_type=jnp.float32)      # (N, 3C)
    qkvh = jnp.dot(xhn, wqkv, preferred_element_type=jnp.float32)    # (N, 3C)

    q, k, v = qkv[:, 0:C], qkv[:, C:2 * C], qkv[:, 2 * C:3 * C]
    qh, kh, vh = qkvh[:, 0:C], qkvh[:, C:2 * C], qkvh[:, 2 * C:3 * C]

    def attn(q_, k_, v_):
        # Per-head softmax attention; head outputs packed back densely into
        # the channel/lane dim (equivalent to transpose(1,2).reshape(.., C)).
        outs = []
        for h in range(H):
            lo = h * D
            qh_ = q_[:, lo:lo + D]                                   # (Lq, D)
            kh_ = k_[:, lo:lo + D]                                   # (Lk, D)
            vh_ = v_[:, lo:lo + D]                                   # (Lk, D)
            s = lax.dot_general(qh_, kh_, (((1,), (1,)), ((), ())),
                                preferred_element_type=jnp.float32) * scale
            s = s - jnp.max(s, axis=-1, keepdims=True)
            p = jnp.exp(s)
            p = p / jnp.sum(p, axis=-1, keepdims=True)
            outs.append(jnp.dot(p, vh_, preferred_element_type=jnp.float32))
        return jnp.concatenate(outs, axis=-1)                        # (Lq, C)

    # Three attention patterns of the module (template part is shared).
    x_mt = attn(q[:L_mt], k[:L_mt], v[:L_mt])        # template <-> template
    x_s = attn(q[L_mt:], k, v)                       # search  -> all   (RGB)
    x_s_hsi = attn(qh[L_mt:], kh, vh)                # search  -> all   (HSI)

    # ---- proj + residual ----
    wproj = wproj_ref[...].astype(jnp.float32)
    bproj = bproj_ref[...].astype(jnp.float32)
    a_x = jnp.concatenate([x_mt, x_s], axis=0)       # (N, C)
    a_h = jnp.concatenate([x_mt, x_s_hsi], axis=0)   # (N, C)
    x1 = x + jnp.dot(a_x, wproj, preferred_element_type=jnp.float32) + bproj
    xh1 = xh + jnp.dot(a_h, wproj, preferred_element_type=jnp.float32) + bproj

    # ---- norm2 + MLP (exact erf-GELU) + residual ----
    wfc1 = wfc1_ref[...].astype(jnp.float32)
    bfc1 = bfc1_ref[...].astype(jnp.float32)
    wfc2 = wfc2_ref[...].astype(jnp.float32)
    bfc2 = bfc2_ref[...].astype(jnp.float32)
    inv_sqrt2 = 0.7071067811865476

    def mlp(z):
        zn = layernorm(z, g2, b2)
        hid = jnp.dot(zn, wfc1, preferred_element_type=jnp.float32) + bfc1
        hid = 0.5 * hid * (1.0 + _erf_poly(hid * inv_sqrt2))
        return jnp.dot(hid, wfc2, preferred_element_type=jnp.float32) + bfc2

    y = x1 + mlp(x1)
    yh = xh1 + mlp(xh1)

    y_ref[0] = y.astype(y_ref.dtype)
    yh_ref[0] = yh.astype(yh_ref.dtype)


def block_forward(x, x_hsi, params, *, t_h, t_w, s_h, s_w, num_heads, eps=1e-5):
    B, N, C = x.shape
    H = num_heads
    D = C // H
    L_mt = t_h * t_w * 2
    L_s = s_h * s_w
    assert N == L_mt + L_s
    assert C % H == 0
    scale = D ** (-0.5)
    hidden = params["w_fc1"].shape[1]

    def row(p):
        return p.reshape(1, -1)

    def full_spec(shape):
        return pl.BlockSpec(shape, lambda b: (0,) * len(shape))

    x_spec = pl.BlockSpec((1, N, C), lambda b: (b, 0, 0))

    kernel = functools.partial(_block_kernel, num_heads=H, L_mt=L_mt,
                               scale=scale, eps=eps)

    y, y_hsi = pl.pallas_call(
        kernel,
        out_shape=(jax.ShapeDtypeStruct((B, N, C), x.dtype),
                   jax.ShapeDtypeStruct((B, N, C), x_hsi.dtype)),
        grid_spec=pltpu.PrefetchScalarGridSpec(
            num_scalar_prefetch=0,
            grid=(B,),
            in_specs=[
                x_spec, x_spec,                       # x, x_hsi
                full_spec((1, C)), full_spec((1, C)),  # norm1 gamma/beta
                full_spec((C, 3 * C)),                 # w_qkv (no bias)
                full_spec((C, C)), full_spec((1, C)),  # w_proj, b_proj
                full_spec((1, C)), full_spec((1, C)),  # norm2 gamma/beta
                full_spec((C, hidden)), full_spec((1, hidden)),  # fc1
                full_spec((hidden, C)), full_spec((1, C)),       # fc2
            ],
            out_specs=(x_spec, x_spec),
        ),
        compiler_params=pltpu.CompilerParams(
            dimension_semantics=("parallel",)),
    )(x, x_hsi,
      row(params["norm1_g"]), row(params["norm1_b"]),
      params["w_qkv"],
      params["w_proj"], row(params["b_proj"]),
      row(params["norm2_g"]), row(params["norm2_b"]),
      params["w_fc1"], row(params["b_fc1"]),
      params["w_fc2"], row(params["b_fc2"]))
    return y, y_hsi


# ----------------------------- Pure-JAX reference ----------------------------
def block_forward_ref(x, x_hsi, params, *, t_h, t_w, s_h, s_w, num_heads):
    B, N, C = x.shape
    H = num_heads
    D = C // H
    L_mt = t_h * t_w * 2
    scale = D ** (-0.5)
    eps = 1e-5

    def ln(z, g, b):
        mean = jnp.mean(z, axis=-1, keepdims=True)
        var = jnp.mean((z - mean) ** 2, axis=-1, keepdims=True)
        return (z - mean) / jnp.sqrt(var + eps) * g + b

    def qkv_fn(zn):
        qkv = (zn @ params["w_qkv"]).reshape(B, N, 3, H, D)
        qkv = jnp.transpose(qkv, (2, 0, 3, 1, 4))
        return qkv[0], qkv[1], qkv[2]   # (B, H, L, D)

    def softmax_attn(q, k, v):
        s = jnp.einsum("bhqd,bhkd->bhqk", q, k) * scale
        p = jax.nn.softmax(s, axis=-1)
        o = jnp.einsum("bhqk,bhkd->bhqd", p, v)
        return jnp.transpose(o, (0, 2, 1, 3)).reshape(B, -1, C)

    xn = ln(x, params["norm1_g"], params["norm1_b"])
    xhn = ln(x_hsi, params["norm1_g"], params["norm1_b"])
    q, k, v = qkv_fn(xn)
    qh, kh, vh = qkv_fn(xhn)

    x_mt = softmax_attn(q[:, :, :L_mt], k[:, :, :L_mt], v[:, :, :L_mt])
    x_s = softmax_attn(q[:, :, L_mt:], k, v)
    x_s_hsi = softmax_attn(qh[:, :, L_mt:], kh, vh)

    def proj(z):
        return z @ params["w_proj"] + params["b_proj"]

    x = x + proj(jnp.concatenate([x_mt, x_s], axis=1))
    x_hsi = x_hsi + proj(jnp.concatenate([x_mt, x_s_hsi], axis=1))

    def mlp(z):
        zn = ln(z, params["norm2_g"], params["norm2_b"])
        h = jax.nn.gelu(zn @ params["w_fc1"] + params["b_fc1"], approximate=False)
        return h @ params["w_fc2"] + params["b_fc2"]

    x = x + mlp(x)
    x_hsi = x_hsi + mlp(x_hsi)
    return x, x_hsi


if __name__ == "__main__":
    key = jax.random.PRNGKey(0)

    # Shapes implied by the module: dim=64, heads=8 (head_dim=8),
    # template 2x2 (x2 memories) + search 4x4  ->  N = 8 + 16 = 24 tokens.
    B, C, NH = 2, 64, 8
    t_h = t_w = 2
    s_h = s_w = 4
    L_mt = t_h * t_w * 2
    L_s = s_h * s_w
    N = L_mt + L_s

    ks = jax.random.split(key, 13)
    params = {
        "norm1_g": 1.0 + 0.1 * jax.random.normal(ks[0], (C,), jnp.float32),
        "norm1_b": 0.1 * jax.random.normal(ks[1], (C,), jnp.float32),
        "w_qkv": 0.1 * jax.random.normal(ks[2], (C, 3 * C), jnp.float32),
        "w_proj": 0.1 * jax.random.normal(ks[3], (C, C), jnp.float32),
        "b_proj": 0.1 * jax.random.normal(ks[4], (C,), jnp.float32),
        "norm2_g": 1.0 + 0.1 * jax.random.normal(ks[5], (C,), jnp.float32),
        "norm2_b": 0.1 * jax.random.normal(ks[6], (C,), jnp.float32),
        "w_fc1": 0.1 * jax.random.normal(ks[7], (C, 4 * C), jnp.float32),
        "b_fc1": 0.1 * jax.random.normal(ks[8], (4 * C,), jnp.float32),
        "w_fc2": 0.1 * jax.random.normal(ks[9], (4 * C, C), jnp.float32),
        "b_fc2": 0.1 * jax.random.normal(ks[10], (C,), jnp.float32),
    }
    x = jax.random.normal(ks[11], (B, N, C), jnp.float32)
    x_hsi = jax.random.normal(ks[12], (B, N, C), jnp.float32)

    fwd = jax.jit(functools.partial(block_forward, t_h=t_h, t_w=t_w,
                                    s_h=s_h, s_w=s_w, num_heads=NH))
    y, y_hsi = fwd(x, x_hsi, params)
    jax.block_until_ready((y, y_hsi))

    yr, yr_hsi = block_forward_ref(x, x_hsi, params, t_h=t_h, t_w=t_w,
                                   s_h=s_h, s_w=s_w, num_heads=NH)
    assert y.shape == (B, N, C) and y_hsi.shape == (B, N, C)
    assert jnp.allclose(y, yr, atol=1e-3, rtol=1e-3), float(jnp.max(jnp.abs(y - yr)))
    assert jnp.allclose(y_hsi, yr_hsi, atol=1e-3, rtol=1e-3), float(jnp.max(jnp.abs(y_hsi - yr_hsi)))

    print("KERNEL_OK")
</pallas_src>

<mosaic_0001>
module attributes {stable_mosaic.version = 11 : i64} {
  func.func @_block_kernel(%arg0: i32, %arg1: memref<1x24x64xf32, #tpu.memory_space<vmem>>, %arg2: memref<1x24x64xf32, #tpu.memory_space<vmem>>, %arg3: memref<1x64xf32, #tpu.memory_space<vmem>>, %arg4: memref<1x64xf32, #tpu.memory_space<vmem>>, %arg5: memref<64x192xf32, #tpu.memory_space<vmem>>, %arg6: memref<64x64xf32, #tpu.memory_space<vmem>>, %arg7: memref<1x64xf32, #tpu.memory_space<vmem>>, %arg8: memref<1x64xf32, #tpu.memory_space<vmem>>, %arg9: memref<1x64xf32, #tpu.memory_space<vmem>>, %arg10: memref<64x256xf32, #tpu.memory_space<vmem>>, %arg11: memref<1x256xf32, #tpu.memory_space<vmem>>, %arg12: memref<256x64xf32, #tpu.memory_space<vmem>>, %arg13: memref<1x64xf32, #tpu.memory_space<vmem>>, %arg14: memref<1x24x64xf32, #tpu.memory_space<vmem>>, %arg15: memref<1x24x64xf32, #tpu.memory_space<vmem>>) attributes {dimension_semantics = [#tpu.dimension_semantics<parallel>], iteration_bounds = array<i64: 2>, scalar_prefetch = 0 : i64, scratch_operands = 0 : i64, tpu.core_type = #tpu.core_type<tc>, window_params = [{transform_indices = @transform_0, window_bounds = array<i64: 1, 24, 64>}, {transform_indices = @transform_1, window_bounds = array<i64: 1, 24, 64>}, {pipeline_mode = #tpu.pipeline_mode<synchronous>, transform_indices = @transform_2, window_bounds = array<i64: 1, 64>}, {pipeline_mode = #tpu.pipeline_mode<synchronous>, transform_indices = @transform_3, window_bounds = array<i64: 1, 64>}, {pipeline_mode = #tpu.pipeline_mode<synchronous>, transform_indices = @transform_4, window_bounds = array<i64: 64, 192>}, {pipeline_mode = #tpu.pipeline_mode<synchronous>, transform_indices = @transform_5, window_bounds = array<i64: 64, 64>}, {pipeline_mode = #tpu.pipeline_mode<synchronous>, transform_indices = @transform_6, window_bounds = array<i64: 1, 64>}, {pipeline_mode = #tpu.pipeline_mode<synchronous>, transform_indices = @transform_7, window_bounds = array<i64: 1, 64>}, {pipeline_mode = #tpu.pipeline_mode<synchronous>, transform_indices = @transform_8, window_bounds = array<i64: 1, 64>}, {pipeline_mode = #tpu.pipeline_mode<synchronous>, transform_indices = @transform_9, window_bounds = array<i64: 64, 256>}, {pipeline_mode = #tpu.pipeline_mode<synchronous>, transform_indices = @transform_10, window_bounds = array<i64: 1, 256>}, {pipeline_mode = #tpu.pipeline_mode<synchronous>, transform_indices = @transform_11, window_bounds = array<i64: 256, 64>}, {pipeline_mode = #tpu.pipeline_mode<synchronous>, transform_indices = @transform_12, window_bounds = array<i64: 1, 64>}, {transform_indices = @transform_13, window_bounds = array<i64: 1, 24, 64>}, {transform_indices = @transform_14, window_bounds = array<i64: 1, 24, 64>}]} {
    %c0 = arith.constant 0 : index
    %c0_0 = arith.constant 0 : index
    %c0_1 = arith.constant 0 : index
    %0 = vector.load %arg1[%c0, %c0_0, %c0_1] : memref<1x24x64xf32, #tpu.memory_space<vmem>>, vector<1x24x64xf32>
    %1 = vector.shape_cast %0 : vector<1x24x64xf32> to vector<24x64xf32>
    %c0_2 = arith.constant 0 : index
    %c0_3 = arith.constant 0 : index
    %c0_4 = arith.constant 0 : index
    %2 = vector.load %arg2[%c0_2, %c0_3, %c0_4] : memref<1x24x64xf32, #tpu.memory_space<vmem>>, vector<1x24x64xf32>
    %3 = vector.shape_cast %2 : vector<1x24x64xf32> to vector<24x64xf32>
    %c0_5 = arith.constant 0 : index
    %c0_6 = arith.constant 0 : index
    %4 = vector.load %arg3[%c0_5, %c0_6] : memref<1x64xf32, #tpu.memory_space<vmem>>, vector<1x64xf32>
    %c0_7 = arith.constant 0 : index
    %c0_8 = arith.constant 0 : index
    %5 = vector.load %arg4[%c0_7, %c0_8] : memref<1x64xf32, #tpu.memory_space<vmem>>, vector<1x64xf32>
    %c0_9 = arith.constant 0 : index
    %c0_10 = arith.constant 0 : index
    %6 = vector.load %arg8[%c0_9, %c0_10] : memref<1x64xf32, #tpu.memory_space<vmem>>, vector<1x64xf32>
    %c0_11 = arith.constant 0 : index
    %c0_12 = arith.constant 0 : index
    %7 = vector.load %arg9[%c0_11, %c0_12] : memref<1x64xf32, #tpu.memory_space<vmem>>, vector<1x64xf32>
    %c0_13 = arith.constant 0 : index
    %c0_14 = arith.constant 0 : index
    %8 = vector.load %arg5[%c0_13, %c0_14] : memref<64x192xf32, #tpu.memory_space<vmem>>, vector<64x192xf32>
    %cst = arith.constant dense<0.000000e+00> : vector<24xf32>
    %9 = vector.multi_reduction <add>, %1, %cst [1] : vector<24x64xf32> to vector<24xf32>
    %10 = vector.shape_cast %9 : vector<24xf32> to vector<24x1xf32>
    %cst_15 = arith.constant 6.400000e+01 : f32
    %11 = vector.broadcast %cst_15 : f32 to vector<24x1xf32>
    %12 = arith.divf %10, %11 : vector<24x1xf32>
    %13 = vector.broadcast %12 : vector<24x1xf32> to vector<24x64xf32>
    %14 = arith.subf %1, %13 : vector<24x64xf32>
    %15 = arith.mulf %14, %14 : vector<24x64xf32>
    %cst_16 = arith.constant dense<0.000000e+00> : vector<24xf32>
    %16 = vector.multi_reduction <add>, %15, %cst_16 [1] : vector<24x64xf32> to vector<24xf32>
    %17 = vector.shape_cast %16 : vector<24xf32> to vector<24x1xf32>
    %cst_17 = arith.constant 6.400000e+01 : f32
    %18 = vector.broadcast %cst_17 : f32 to vector<24x1xf32>
    %19 = arith.divf %17, %18 : vector<24x1xf32>
    %cst_18 = arith.constant 9.99999974E-6 : f32
    %20 = vector.broadcast %cst_18 : f32 to vector<24x1xf32>
    %21 = arith.addf %19, %20 : vector<24x1xf32>
    %22 = math.rsqrt %21 : vector<24x1xf32>
    %23 = vector.broadcast %22 : vector<24x1xf32> to vector<24x64xf32>
    %24 = arith.mulf %14, %23 : vector<24x64xf32>
    %25 = vector.broadcast %4 : vector<1x64xf32> to vector<24x64xf32>
    %26 = arith.mulf %24, %25 : vector<24x64xf32>
    %27 = vector.broadcast %5 : vector<1x64xf32> to vector<24x64xf32>
    %28 = arith.addf %26, %27 : vector<24x64xf32>
    %cst_19 = arith.constant dense<0.000000e+00> : vector<24xf32>
    %29 = vector.multi_reduction <add>, %3, %cst_19 [1] : vector<24x64xf32> to vector<24xf32>
    %30 = vector.shape_cast %29 : vector<24xf32> to vector<24x1xf32>
    %cst_20 = arith.constant 6.400000e+01 : f32
    %31 = vector.broadcast %cst_20 : f32 to vector<24x1xf32>
    %32 = arith.divf %30, %31 : vector<24x1xf32>
    %33 = vector.broadcast %32 : vector<24x1xf32> to vector<24x64xf32>
    %34 = arith.subf %3, %33 : vector<24x64xf32>
    %35 = arith.mulf %34, %34 : vector<24x64xf32>
    %cst_21 = arith.constant dense<0.000000e+00> : vector<24xf32>
    %36 = vector.multi_reduction <add>, %35, %cst_21 [1] : vector<24x64xf32> to vector<24xf32>
    %37 = vector.shape_cast %36 : vector<24xf32> to vector<24x1xf32>
    %cst_22 = arith.constant 6.400000e+01 : f32
    %38 = vector.broadcast %cst_22 : f32 to vector<24x1xf32>
    %39 = arith.divf %37, %38 : vector<24x1xf32>
    %cst_23 = arith.constant 9.99999974E-6 : f32
    %40 = vector.broadcast %cst_23 : f32 to vector<24x1xf32>
    %41 = arith.addf %39, %40 : vector<24x1xf32>
    %42 = math.rsqrt %41 : vector<24x1xf32>
    %43 = vector.broadcast %42 : vector<24x1xf32> to vector<24x64xf32>
    %44 = arith.mulf %34, %43 : vector<24x64xf32>
    %45 = vector.broadcast %4 : vector<1x64xf32> to vector<24x64xf32>
    %46 = arith.mulf %44, %45 : vector<24x64xf32>
    %47 = vector.broadcast %5 : vector<1x64xf32> to vector<24x64xf32>
    %48 = arith.addf %46, %47 : vector<24x64xf32>
    %cst_24 = arith.constant dense<0.000000e+00> : vector<24x192xf32>
    %49 = tpu.matmul %28, %8, %cst_24 {dimension_numbers = #tpu.dot_dimension_numbers<[1], [0], [0], [1], [0, 0, 1, 1], [], []>} : vector<24x64xf32>, vector<64x192xf32>, vector<24x192xf32> -> vector<24x192xf32>
    %cst_25 = arith.constant dense<0.000000e+00> : vector<24x192xf32>
    %50 = tpu.matmul %48, %8, %cst_25 {dimension_numbers = #tpu.dot_dimension_numbers<[1], [0], [0], [1], [0, 0, 1, 1], [], []>} : vector<24x64xf32>, vector<64x192xf32>, vector<24x192xf32> -> vector<24x192xf32>
    %51 = vector.extract_strided_slice %49 {offsets = [0, 0], sizes = [24, 64], strides = [1, 1]} : vector<24x192xf32> to vector<24x64xf32>
    %52 = vector.extract_strided_slice %49 {offsets = [0, 64], sizes = [24, 64], strides = [1, 1]} : vector<24x192xf32> to vector<24x64xf32>
    %53 = vector.extract_strided_slice %49 {offsets = [0, 128], sizes = [24, 64], strides = [1, 1]} : vector<24x192xf32> to vector<24x64xf32>
    %54 = vector.extract_strided_slice %50 {offsets = [0, 0], sizes = [24, 64], strides = [1, 1]} : vector<24x192xf32> to vector<24x64xf32>
    %55 = vector.extract_strided_slice %50 {offsets = [0, 64], sizes = [24, 64], strides = [1, 1]} : vector<24x192xf32> to vector<24x64xf32>
    %56 = vector.extract_strided_slice %50 {offsets = [0, 128], sizes = [24, 64], strides = [1, 1]} : vector<24x192xf32> to vector<24x64xf32>
    %57 = vector.extract_strided_slice %51 {offsets = [0, 0], sizes = [8, 64], strides = [1, 1]} : vector<24x64xf32> to vector<8x64xf32>
    %58 = vector.extract_strided_slice %52 {offsets = [0, 0], sizes = [8, 64], strides = [1, 1]} : vector<24x64xf32> to vector<8x64xf32>
    %59 = vector.extract_strided_slice %53 {offsets = [0, 0], sizes = [8, 64], strides = [1, 1]} : vector<24x64xf32> to vector<8x64xf32>
    %60 = vector.extract_strided_slice %57 {offsets = [0, 0], sizes = [8, 8], strides = [1, 1]} : vector<8x64xf32> to vector<8x8xf32>
    %61 = vector.extract_strided_slice %58 {offsets = [0, 0], sizes = [8, 8], strides = [1, 1]} : vector<8x64xf32> to vector<8x8xf32>
    %62 = vector.extract_strided_slice %59 {offsets = [0, 0], sizes = [8, 8], strides = [1, 1]} : vector<8x64xf32> to vector<8x8xf32>
    %cst_26 = arith.constant dense<0.000000e+00> : vector<8x8xf32>
    %63 = tpu.matmul %60, %61, %cst_26 {dimension_numbers = #tpu.dot_dimension_numbers<[1], [1], [0], [0], [0, 0, 1, 0], [], []>} : vector<8x8xf32>, vector<8x8xf32>, vector<8x8xf32> -> vector<8x8xf32>
    %cst_27 = arith.constant 0.353553385 : f32
    %64 = vector.broadcast %cst_27 : f32 to vector<8x8xf32>
    %65 = arith.mulf %63, %64 : vector<8x8xf32>
    %cst_28 = arith.constant dense<0xFF800000> : vector<8xf32>
    %66 = vector.multi_reduction <maximumf>, %65, %cst_28 [1] : vector<8x8xf32> to vector<8xf32>
    %67 = vector.shape_cast %66 : vector<8xf32> to vector<8x1xf32>
    %68 = vector.broadcast %67 : vector<8x1xf32> to vector<8x8xf32>
    %69 = arith.subf %65, %68 : vector<8x8xf32>
    %70 = math.exp %69 : vector<8x8xf32>
    %cst_29 = arith.constant dense<0.000000e+00> : vector<8xf32>
    %71 = vector.multi_reduction <add>, %70, %cst_29 [1] : vector<8x8xf32> to vector<8xf32>
    %72 = vector.shape_cast %71 : vector<8xf32> to vector<8x1xf32>
    %73 = vector.broadcast %72 : vector<8x1xf32> to vector<8x8xf32>
    %74 = arith.divf %70, %73 : vector<8x8xf32>
    %cst_30 = arith.constant dense<0.000000e+00> : vector<8x8xf32>
    %75 = tpu.matmul %74, %62, %cst_30 {dimension_numbers = #tpu.dot_dimension_numbers<[1], [0], [0], [1], [0, 0, 1, 1], [], []>} : vector<8x8xf32>, vector<8x8xf32>, vector<8x8xf32> -> vector<8x8xf32>
    %76 = vector.extract_strided_slice %57 {offsets = [0, 8], sizes = [8, 8], strides = [1, 1]} : vector<8x64xf32> to vector<8x8xf32>
    %77 = vector.extract_strided_slice %58 {offsets = [0, 8], sizes = [8, 8], strides = [1, 1]} : vector<8x64xf32> to vector<8x8xf32>
    %78 = vector.extract_strided_slice %59 {offsets = [0, 8], sizes = [8, 8], strides = [1, 1]} : vector<8x64xf32> to vector<8x8xf32>
    %cst_31 = arith.constant dense<0.000000e+00> : vector<8x8xf32>
    %79 = tpu.matmul %76, %77, %cst_31 {dimension_numbers = #tpu.dot_dimension_numbers<[1], [1], [0], [0], [0, 0, 1, 0], [], []>} : vector<8x8xf32>, vector<8x8xf32>, vector<8x8xf32> -> vector<8x8xf32>
    %cst_32 = arith.constant 0.353553385 : f32
    %80 = vector.broadcast %cst_32 : f32 to vector<8x8xf32>
    %81 = arith.mulf %79, %80 : vector<8x8xf32>
    %cst_33 = arith.constant dense<0xFF800000> : vector<8xf32>
    %82 = vector.multi_reduction <maximumf>, %81, %cst_33 [1] : vector<8x8xf32> to vector<8xf32>
    %83 = vector.shape_cast %82 : vector<8xf32> to vector<8x1xf32>
    %84 = vector.broadcast %83 : vector<8x1xf32> to vector<8x8xf32>
    %85 = arith.subf %81, %84 : vector<8x8xf32>
    %86 = math.exp %85 : vector<8x8xf32>
    %cst_34 = arith.constant dense<0.000000e+00> : vector<8xf32>
    %87 = vector.multi_reduction <add>, %86, %cst_34 [1] : vector<8x8xf32> to vector<8xf32>
    %88 = vector.shape_cast %87 : vector<8xf32> to vector<8x1xf32>
    %89 = vector.broadcast %88 : vector<8x1xf32> to vector<8x8xf32>
    %90 = arith.divf %86, %89 : vector<8x8xf32>
    %cst_35 = arith.constant dense<0.000000e+00> : vector<8x8xf32>
    %91 = tpu.matmul %90, %78, %cst_35 {dimension_numbers = #tpu.dot_dimension_numbers<[1], [0], [0], [1], [0, 0, 1, 1], [], []>} : vector<8x8xf32>, vector<8x8xf32>, vector<8x8xf32> -> vector<8x8xf32>
    %92 = vector.extract_strided_slice %57 {offsets = [0, 16], sizes = [8, 8], strides = [1, 1]} : vector<8x64xf32> to vector<8x8xf32>
    %93 = vector.extract_strided_slice %58 {offsets = [0, 16], sizes = [8, 8], strides = [1, 1]} : vector<8x64xf32> to vector<8x8xf32>
    %94 = vector.extract_strided_slice %59 {offsets = [0, 16], sizes = [8, 8], strides = [1, 1]} : vector<8x64xf32> to vector<8x8xf32>
    %cst_36 = arith.constant dense<0.000000e+00> : vector<8x8xf32>
    %95 = tpu.matmul %92, %93, %cst_36 {dimension_numbers = #tpu.dot_dimension_numbers<[1], [1], [0], [0], [0, 0, 1, 0], [], []>} : vector<8x8xf32>, vector<8x8xf32>, vector<8x8xf32> -> vector<8x8xf32>
    %cst_37 = arith.constant 0.353553385 : f32
    %96 = vector.broadcast %cst_37 : f32 to vector<8x8xf32>
    %97 = arith.mulf %95, %96 : vector<8x8xf32>
    %cst_38 = arith.constant dense<0xFF800000> : vector<8xf32>
    %98 = vector.multi_reduction <maximumf>, %97, %cst_38 [1] : vector<8x8xf32> to vector<8xf32>
    %99 = vector.shape_cast %98 : vector<8xf32> to vector<8x1xf32>
    %100 = vector.broadcast %99 : vector<8x1xf32> to vector<8x8xf32>
    %101 = arith.subf %97, %100 : vector<8x8xf32>
    %102 = math.exp %101 : vector<8x8xf32>
    %cst_39 = arith.constant dense<0.000000e+00> : vector<8xf32>
    %103 = vector.multi_reduction <add>, %102, %cst_39 [1] : vector<8x8xf32> to vector<8xf32>
    %104 = vector.shape_cast %103 : vector<8xf32> to vector<8x1xf32>
    %105 = vector.broadcast %104 : vector<8x1xf32> to vector<8x8xf32>
    %106 = arith.divf %102, %105 : vector<8x8xf32>
    %cst_40 = arith.constant dense<0.000000e+00> : vector<8x8xf32>
    %107 = tpu.matmul %106, %94, %cst_40 {dimension_numbers = #tpu.dot_dimension_numbers<[1], [0], [0], [1], [0, 0, 1, 1], [], []>} : vector<8x8xf32>, vector<8x8xf32>, vector<8x8xf32> -> vector<8x8xf32>
    %108 = vector.extract_strided_slice %57 {offsets = [0, 24], sizes = [8, 8], strides = [1, 1]} : vector<8x64xf32> to vector<8x8xf32>
    %109 = vector.extract_strided_slice %58 {offsets = [0, 24], sizes = [8, 8], strides = [1, 1]} : vector<8x64xf32> to vector<8x8xf32>
    %110 = vector.extract_strided_slice %59 {offsets = [0, 24], sizes = [8, 8], strides = [1, 1]} : vector<8x64xf32> to vector<8x8xf32>
    %cst_41 = arith.constant dense<0.000000e+00> : vector<8x8xf32>
    %111 = tpu.matmul %108, %109, %cst_41 {dimension_numbers = #tpu.dot_dimension_numbers<[1], [1], [0], [0], [0, 0, 1, 0], [], []>} : vector<8x8xf32>, vector<8x8xf32>, vector<8x8xf32> -> vector<8x8xf32>
    %cst_42 = arith.constant 0.353553385 : f32
    %112 = vector.broadcast %cst_42 : f32 to vector<8x8xf32>
    %113 = arith.mulf %111, %112 : vector<8x8xf32>
    %cst_43 = arith.constant dense<0xFF800000> : vector<8xf32>
    %114 = vector.multi_reduction <maximumf>, %113, %cst_43 [1] : vector<8x8xf32> to vector<8xf32>
    %115 = vector.shape_cast %114 : vector<8xf32> to vector<8x1xf32>
    %116 = vector.broadcast %115 : vector<8x1xf32> to vector<8x8xf32>
    %117 = arith.subf %113, %116 : vector<8x8xf32>
    %118 = math.exp %117 : vector<8x8xf32>
    %cst_44 = arith.constant dense<0.000000e+00> : vector<8xf32>
    %119 = vector.multi_reduction <add>, %118, %cst_44 [1] : vector<8x8xf32> to vector<8xf32>
    %120 = vector.shape_cast %119 : vector<8xf32> to vector<8x1xf32>
    %121 = vector.broadcast %120 : vector<8x1xf32> to vector<8x8xf32>
    %122 = arith.divf %118, %121 : vector<8x8xf32>
    %cst_45 = arith.constant dense<0.000000e+00> : vector<8x8xf32>
    %123 = tpu.matmul %122, %110, %cst_45 {dimension_numbers = #tpu.dot_dimension_numbers<[1], [0], [0], [1], [0, 0, 1, 1], [], []>} : vector<8x8xf32>, vector<8x8xf32>, vector<8x8xf32> -> vector<8x8xf32>
    %124 = vector.extract_strided_slice %57 {offsets = [0, 32], sizes = [8, 8], strides = [1, 1]} : vector<8x64xf32> to vector<8x8xf32>
    %125 = vector.extract_strided_slice %58 {offsets = [0, 32], sizes = [8, 8], strides = [1, 1]} : vector<8x64xf32> to vector<8x8xf32>
    %126 = vector.extract_strided_slice %59 {offsets = [0, 32], sizes = [8, 8], strides = [1, 1]} : vector<8x64xf32> to vector<8x8xf32>
    %cst_46 = arith.constant dense<0.000000e+00> : vector<8x8xf32>
    %127 = tpu.matmul %124, %125, %cst_46 {dimension_numbers = #tpu.dot_dimension_numbers<[1], [1], [0], [0], [0, 0, 1, 0], [], []>} : vector<8x8xf32>, vector<8x8xf32>, vector<8x8xf32> -> vector<8x8xf32>
    %cst_47 = arith.constant 0.353553385 : f32
    %128 = vector.broadcast %cst_47 : f32 to vector<8x8xf32>
    %129 = arith.mulf %127, %128 : vector<8x8xf32>
    %cst_48 = arith.constant dense<0xFF800000> : vector<8xf32>
    %130 = vector.multi_reduction <maximumf>, %129, %cst_48 [1] : vector<8x8xf32> to vector<8xf32>
    %131 = vector.shape_cast %130 : vector<8xf32> to vector<8x1xf32>
    %132 = vector.broadcast %131 : vector<8x1xf32> to vector<8x8xf32>
    %133 = arith.subf %129, %132 : vector<8x8xf32>
    %134 = math.exp %133 : vector<8x8xf32>
    %cst_49 = arith.constant dense<0.000000e+00> : vector<8xf32>
    %135 = vector.multi_reduction <add>, %134, %cst_49 [1] : vector<8x8xf32> to vector<8xf32>
    %136 = vector.shape_cast %135 : vector<8xf32> to vector<8x1xf32>
    %137 = vector.broadcast %136 : vector<8x1xf32> to vector<8x8xf32>
    %138 = arith.divf %134, %137 : vector<8x8xf32>
    %cst_50 = arith.constant dense<0.000000e+00> : vector<8x8xf32>
    %139 = tpu.matmul %138, %126, %cst_50 {dimension_numbers = #tpu.dot_dimension_numbers<[1], [0], [0], [1], [0, 0, 1, 1], [], []>} : vector<8x8xf32>, vector<8x8xf32>, vector<8x8xf32> -> vector<8x8xf32>
    %140 = vector.extract_strided_slice %57 {offsets = [0, 40], sizes = [8, 8], strides = [1, 1]} : vector<8x64xf32> to vector<8x8xf32>
    %141 = vector.extract_strided_slice %58 {offsets = [0, 40], sizes = [8, 8], strides = [1, 1]} : vector<8x64xf32> to vector<8x8xf32>
    %142 = vector.extract_strided_slice %59 {offsets = [0, 40], sizes = [8, 8], strides = [1, 1]} : vector<8x64xf32> to vector<8x8xf32>
    %cst_51 = arith.constant dense<0.000000e+00> : vector<8x8xf32>
    %143 = tpu.matmul %140, %141, %cst_51 {dimension_numbers = #tpu.dot_dimension_numbers<[1], [1], [0], [0], [0, 0, 1, 0], [], []>} : vector<8x8xf32>, vector<8x8xf32>, vector<8x8xf32> -> vector<8x8xf32>
    %cst_52 = arith.constant 0.353553385 : f32
    %144 = vector.broadcast %cst_52 : f32 to vector<8x8xf32>
    %145 = arith.mulf %143, %144 : vector<8x8xf32>
    %cst_53 = arith.constant dense<0xFF800000> : vector<8xf32>
    %146 = vector.multi_reduction <maximumf>, %145, %cst_53 [1] : vector<8x8xf32> to vector<8xf32>
    %147 = vector.shape_cast %146 : vector<8xf32> to vector<8x1xf32>
    %148 = vector.broadcast %147 : vector<8x1xf32> to vector<8x8xf32>
    %149 = arith.subf %145, %148 : vector<8x8xf32>
    %150 = math.exp %149 : vector<8x8xf32>
    %cst_54 = arith.constant dense<0.000000e+00> : vector<8xf32>
    %151 = vector.multi_reduction <add>, %150, %cst_54 [1] : vector<8x8xf32> to vector<8xf32>
    %152 = vector.shape_cast %151 : vector<8xf32> to vector<8x1xf32>
    %153 = vector.broadcast %152 : vector<8x1xf32> to vector<8x8xf32>
    %154 = arith.divf %150, %153 : vector<8x8xf32>
    %cst_55 = arith.constant dense<0.000000e+00> : vector<8x8xf32>
    %155 = tpu.matmul %154, %142, %cst_55 {dimension_numbers = #tpu.dot_dimension_numbers<[1], [0], [0], [1], [0, 0, 1, 1], [], []>} : vector<8x8xf32>, vector<8x8xf32>, vector<8x8xf32> -> vector<8x8xf32>
    %156 = vector.extract_strided_slice %57 {offsets = [0, 48], sizes = [8, 8], strides = [1, 1]} : vector<8x64xf32> to vector<8x8xf32>
    %157 = vector.extract_strided_slice %58 {offsets = [0, 48], sizes = [8, 8], strides = [1, 1]} : vector<8x64xf32> to vector<8x8xf32>
    %158 = vector.extract_strided_slice %59 {offsets = [0, 48], sizes = [8, 8], strides = [1, 1]} : vector<8x64xf32> to vector<8x8xf32>
    %cst_56 = arith.constant dense<0.000000e+00> : vector<8x8xf32>
    %159 = tpu.matmul %156, %157, %cst_56 {dimension_numbers = #tpu.dot_dimension_numbers<[1], [1], [0], [0], [0, 0, 1, 0], [], []>} : vector<8x8xf32>, vector<8x8xf32>, vector<8x8xf32> -> vector<8x8xf32>
    %cst_57 = arith.constant 0.353553385 : f32
    %160 = vector.broadcast %cst_57 : f32 to vector<8x8xf32>
    %161 = arith.mulf %159, %160 : vector<8x8xf32>
    %cst_58 = arith.constant dense<0xFF800000> : vector<8xf32>
    %162 = vector.multi_reduction <maximumf>, %161, %cst_58 [1] : vector<8x8xf32> to vector<8xf32>
    %163 = vector.shape_cast %162 : vector<8xf32> to vector<8x1xf32>
    %164 = vector.broadcast %163 : vector<8x1xf32> to vector<8x8xf32>
    %165 = arith.subf %161, %164 : vector<8x8xf32>
    %166 = math.exp %165 : vector<8x8xf32>
    %cst_59 = arith.constant dense<0.000000e+00> : vector<8xf32>
    %167 = vector.multi_reduction <add>, %166, %cst_59 [1] : vector<8x8xf32> to vector<8xf32>
    %168 = vector.shape_cast %167 : vector<8xf32> to vector<8x1xf32>
    %169 = vector.broadcast %168 : vector<8x1xf32> to vector<8x8xf32>
    %170 = arith.divf %166, %169 : vector<8x8xf32>
    %cst_60 = arith.constant dense<0.000000e+00> : vector<8x8xf32>
    %171 = tpu.matmul %170, %158, %cst_60 {dimension_numbers = #tpu.dot_dimension_numbers<[1], [0], [0], [1], [0, 0, 1, 1], [], []>} : vector<8x8xf32>, vector<8x8xf32>, vector<8x8xf32> -> vector<8x8xf32>
    %172 = vector.extract_strided_slice %57 {offsets = [0, 56], sizes = [8, 8], strides = [1, 1]} : vector<8x64xf32> to vector<8x8xf32>
    %173 = vector.extract_strided_slice %58 {offsets = [0, 56], sizes = [8, 8], strides = [1, 1]} : vector<8x64xf32> to vector<8x8xf32>
    %174 = vector.extract_strided_slice %59 {offsets = [0, 56], sizes = [8, 8], strides = [1, 1]} : vector<8x64xf32> to vector<8x8xf32>
    %cst_61 = arith.constant dense<0.000000e+00> : vector<8x8xf32>
    %175 = tpu.matmul %172, %173, %cst_61 {dimension_numbers = #tpu.dot_dimension_numbers<[1], [1], [0], [0], [0, 0, 1, 0], [], []>} : vector<8x8xf32>, vector<8x8xf32>, vector<8x8xf32> -> vector<8x8xf32>
    %cst_62 = arith.constant 0.353553385 : f32
    %176 = vector.broadcast %cst_62 : f32 to vector<8x8xf32>
    %177 = arith.mulf %175, %176 : vector<8x8xf32>
    %cst_63 = arith.constant dense<0xFF800000> : vector<8xf32>
    %178 = vector.multi_reduction <maximumf>, %177, %cst_63 [1] : vector<8x8xf32> to vector<8xf32>
    %179 = vector.shape_cast %178 : vector<8xf32> to vector<8x1xf32>
    %180 = vector.broadcast %179 : vector<8x1xf32> to vector<8x8xf32>
    %181 = arith.subf %177, %180 : vector<8x8xf32>
    %182 = math.exp %181 : vector<8x8xf32>
    %cst_64 = arith.constant dense<0.000000e+00> : vector<8xf32>
    %183 = vector.multi_reduction <add>, %182, %cst_64 [1] : vector<8x8xf32> to vector<8xf32>
    %184 = vector.shape_cast %183 : vector<8xf32> to vector<8x1xf32>
    %185 = vector.broadcast %184 : vector<8x1xf32> to vector<8x8xf32>
    %186 = arith.divf %182, %185 : vector<8x8xf32>
    %cst_65 = arith.constant dense<0.000000e+00> : vector<8x8xf32>
    %187 = tpu.matmul %186, %174, %cst_65 {dimension_numbers = #tpu.dot_dimension_numbers<[1], [0], [0], [1], [0, 0, 1, 1], [], []>} : vector<8x8xf32>, vector<8x8xf32>, vector<8x8xf32> -> vector<8x8xf32>
    %188 = tpu.concatenate %75, %91, %107, %123, %139, %155, %171, %187 in 1 : vector<8x8xf32>, vector<8x8xf32>, vector<8x8xf32>, vector<8x8xf32>, vector<8x8xf32>, vector<8x8xf32>, vector<8x8xf32>, vector<8x8xf32> -> vector<8x64xf32>
    %189 = vector.extract_strided_slice %51 {offsets = [8, 0], sizes = [16, 64], strides = [1, 1]} : vector<24x64xf32> to vector<16x64xf32>
    %190 = vector.extract_strided_slice %189 {offsets = [0, 0], sizes = [16, 8], strides = [1, 1]} : vector<16x64xf32> to vector<16x8xf32>
    %191 = vector.extract_strided_slice %52 {offsets = [0, 0], sizes = [24, 8], strides = [1, 1]} : vector<24x64xf32> to vector<24x8xf32>
    %192 = vector.extract_strided_slice %53 {offsets = [0, 0], sizes = [24, 8], strides = [1, 1]} : vector<24x64xf32> to vector<24x8xf32>
    %cst_66 = arith.constant dense<0.000000e+00> : vector<16x24xf32>
    %193 = tpu.matmul %190, %191, %cst_66 {dimension_numbers = #tpu.dot_dimension_numbers<[1], [1], [0], [0], [0, 0, 1, 0], [], []>} : vector<16x8xf32>, vector<24x8xf32>, vector<16x24xf32> -> vector<16x24xf32>
    %cst_67 = arith.constant 0.353553385 : f32
    %194 = vector.broadcast %cst_67 : f32 to vector<16x24xf32>
    %195 = arith.mulf %193, %194 : vector<16x24xf32>
    %cst_68 = arith.constant dense<0xFF800000> : vector<16xf32>
    %196 = vector.multi_reduction <maximumf>, %195, %cst_68 [1] : vector<16x24xf32> to vector<16xf32>
    %197 = vector.shape_cast %196 : vector<16xf32> to vector<16x1xf32>
    %198 = vector.broadcast %197 : vector<16x1xf32> to vector<16x24xf32>
    %199 = arith.subf %195, %198 : vector<16x24xf32>
    %200 = math.exp %199 : vector<16x24xf32>
    %cst_69 = arith.constant dense<0.000000e+00> : vector<16xf32>
    %201 = vector.multi_reduction <add>, %200, %cst_69 [1] : vector<16x24xf32> to vector<16xf32>
    %202 = vector.shape_cast %201 : vector<16xf32> to vector<16x1xf32>
    %203 = vector.broadcast %202 : vector<16x1xf32> to vector<16x24xf32>
    %204 = arith.divf %200, %203 : vector<16x24xf32>
    %cst_70 = arith.constant dense<0.000000e+00> : vector<16x8xf32>
    %205 = tpu.matmul %204, %192, %cst_70 {dimension_numbers = #tpu.dot_dimension_numbers<[1], [0], [0], [1], [0, 0, 1, 1], [], []>} : vector<16x24xf32>, vector<24x8xf32>, vector<16x8xf32> -> vector<16x8xf32>
    %206 = vector.extract_strided_slice %189 {offsets = [0, 8], sizes = [16, 8], strides = [1, 1]} : vector<16x64xf32> to vector<16x8xf32>
    %207 = vector.extract_strided_slice %52 {offsets = [0, 8], sizes = [24, 8], strides = [1, 1]} : vector<24x64xf32> to vector<24x8xf32>
    %208 = vector.extract_strided_slice %53 {offsets = [0, 8], sizes = [24, 8], strides = [1, 1]} : vector<24x64xf32> to vector<24x8xf32>
    %cst_71 = arith.constant dense<0.000000e+00> : vector<16x24xf32>
    %209 = tpu.matmul %206, %207, %cst_71 {dimension_numbers = #tpu.dot_dimension_numbers<[1], [1], [0], [0], [0, 0, 1, 0], [], []>} : vector<16x8xf32>, vector<24x8xf32>, vector<16x24xf32> -> vector<16x24xf32>
    %cst_72 = arith.constant 0.353553385 : f32
    %210 = vector.broadcast %cst_72 : f32 to vector<16x24xf32>
    %211 = arith.mulf %209, %210 : vector<16x24xf32>
    %cst_73 = arith.constant dense<0xFF800000> : vector<16xf32>
    %212 = vector.multi_reduction <maximumf>, %211, %cst_73 [1] : vector<16x24xf32> to vector<16xf32>
    %213 = vector.shape_cast %212 : vector<16xf32> to vector<16x1xf32>
    %214 = vector.broadcast %213 : vector<16x1xf32> to vector<16x24xf32>
    %215 = arith.subf %211, %214 : vector<16x24xf32>
    %216 = math.exp %215 : vector<16x24xf32>
    %cst_74 = arith.constant dense<0.000000e+00> : vector<16xf32>
    %217 = vector.multi_reduction <add>, %216, %cst_74 [1] : vector<16x24xf32> to vector<16xf32>
    %218 = vector.shape_cast %217 : vector<16xf32> to vector<16x1xf32>
    %219 = vector.broadcast %218 : vector<16x1xf32> to vector<16x24xf32>
    %220 = arith.divf %216, %219 : vector<16x24xf32>
    %cst_75 = arith.constant dense<0.000000e+00> : vector<16x8xf32>
    %221 = tpu.matmul %220, %208, %cst_75 {dimension_numbers = #tpu.dot_dimension_numbers<[1], [0], [0], [1], [0, 0, 1, 1], [], []>} : vector<16x24xf32>, vector<24x8xf32>, vector<16x8xf32> -> vector<16x8xf32>
    %222 = vector.extract_strided_slice %189 {offsets = [0, 16], sizes = [16, 8], strides = [1, 1]} : vector<16x64xf32> to vector<16x8xf32>
    %223 = vector.extract_strided_slice %52 {offsets = [0, 16], sizes = [24, 8], strides = [1, 1]} : vector<24x64xf32> to vector<24x8xf32>
    %224 = vector.extract_strided_slice %53 {offsets = [0, 16], sizes = [24, 8], strides = [1, 1]} : vector<24x64xf32> to vector<24x8xf32>
    %cst_76 = arith.constant dense<0.000000e+00> : vector<16x24xf32>
    %225 = tpu.matmul %222, %223, %cst_76 {dimension_numbers = #tpu.dot_dimension_numbers<[1], [1], [0], [0], [0, 0, 1, 0], [], []>} : vector<16x8xf32>, vector<24x8xf32>, vector<16x24xf32> -> vector<16x24xf32>
    %cst_77 = arith.constant 0.353553385 : f32
    %226 = vector.broadcast %cst_77 : f32 to vector<16x24xf32>
    %227 = arith.mulf %225, %226 : vector<16x24xf32>
    %cst_78 = arith.constant dense<0xFF800000> : vector<16xf32>
    %228 = vector.multi_reduction <maximumf>, %227, %cst_78 [1] : vector<16x24xf32> to vector<16xf32>
    %229 = vector.shape_cast %228 : vector<16xf32> to vector<16x1xf32>
    %230 = vector.broadcast %229 : vector<16x1xf32> to vector<16x24xf32>
    %231 = arith.subf %227, %230 : vector<16x24xf32>
    %232 = math.exp %231 : vector<16x24xf32>
    %cst_79 = arith.constant dense<0.000000e+00> : vector<16xf32>
    %233 = vector.multi_reduction <add>, %232, %cst_79 [1] : vector<16x24xf32> to vector<16xf32>
    %234 = vector.shape_cast %233 : vector<16xf32> to vector<16x1xf32>
    %235 = vector.broadcast %234 : vector<16x1xf32> to vector<16x24xf32>
    %236 = arith.divf %232, %235 : vector<16x24xf32>
    %cst_80 = arith.constant dense<0.000000e+00> : vector<16x8xf32>
    %237 = tpu.matmul %236, %224, %cst_80 {dimension_numbers = #tpu.dot_dimension_numbers<[1], [0], [0], [1], [0, 0, 1, 1], [], []>} : vector<16x24xf32>, vector<24x8xf32>, vector<16x8xf32> -> vector<16x8xf32>
    %238 = vector.extract_strided_slice %189 {offsets = [0, 24], sizes = [16, 8], strides = [1, 1]} : vector<16x64xf32> to vector<16x8xf32>
    %239 = vector.extract_strided_slice %52 {offsets = [0, 24], sizes = [24, 8], strides = [1, 1]} : vector<24x64xf32> to vector<24x8xf32>
    %240 = vector.extract_strided_slice %53 {offsets = [0, 24], sizes = [24, 8], strides = [1, 1]} : vector<24x64xf32> to vector<24x8xf32>
    %cst_81 = arith.constant dense<0.000000e+00> : vector<16x24xf32>
    %241 = tpu.matmul %238, %239, %cst_81 {dimension_numbers = #tpu.dot_dimension_numbers<[1], [1], [0], [0], [0, 0, 1, 0], [], []>} : vector<16x8xf32>, vector<24x8xf32>, vector<16x24xf32> -> vector<16x24xf32>
    %cst_82 = arith.constant 0.353553385 : f32
    %242 = vector.broadcast %cst_82 : f32 to vector<16x24xf32>
    %243 = arith.mulf %241, %242 : vector<16x24xf32>
    %cst_83 = arith.constant dense<0xFF800000> : vector<16xf32>
    %244 = vector.multi_reduction <maximumf>, %243, %cst_83 [1] : vector<16x24xf32> to vector<16xf32>
    %245 = vector.shape_cast %244 : vector<16xf32> to vector<16x1xf32>
    %246 = vector.broadcast %245 : vector<16x1xf32> to vector<16x24xf32>
    %247 = arith.subf %243, %246 : vector<16x24xf32>
    %248 = math.exp %247 : vector<16x24xf32>
    %cst_84 = arith.constant dense<0.000000e+00> : vector<16xf32>
    %249 = vector.multi_reduction <add>, %248, %cst_84 [1] : vector<16x24xf32> to vector<16xf32>
    %250 = vector.shape_cast %249 : vector<16xf32> to vector<16x1xf32>
    %251 = vector.broadcast %250 : vector<16x1xf32> to vector<16x24xf32>
    %252 = arith.divf %248, %251 : vector<16x24xf32>
    %cst_85 = arith.constant dense<0.000000e+00> : vector<16x8xf32>
    %253 = tpu.matmul %252, %240, %cst_85 {dimension_numbers = #tpu.dot_dimension_numbers<[1], [0], [0], [1], [0, 0, 1, 1], [], []>} : vector<16x24xf32>, vector<24x8xf32>, vector<16x8xf32> -> vector<16x8xf32>
    %254 = vector.extract_strided_slice %189 {offsets = [0, 32], sizes = [16, 8], strides = [1, 1]} : vector<16x64xf32> to vector<16x8xf32>
    %255 = vector.extract_strided_slice %52 {offsets = [0, 32], sizes = [24, 8], strides = [1, 1]} : vector<24x64xf32> to vector<24x8xf32>
    %256 = vector.extract_strided_slice %53 {offsets = [0, 32], sizes = [24, 8], strides = [1, 1]} : vector<24x64xf32> to vector<24x8xf32>
    %cst_86 = arith.constant dense<0.000000e+00> : vector<16x24xf32>
    %257 = tpu.matmul %254, %255, %cst_86 {dimension_numbers = #tpu.dot_dimension_numbers<[1], [1], [0], [0], [0, 0, 1, 0], [], []>} : vector<16x8xf32>, vector<24x8xf32>, vector<16x24xf32> -> vector<16x24xf32>
    %cst_87 = arith.constant 0.353553385 : f32
    %258 = vector.broadcast %cst_87 : f32 to vector<16x24xf32>
    %259 = arith.mulf %257, %258 : vector<16x24xf32>
    %cst_88 = arith.constant dense<0xFF800000> : vector<16xf32>
    %260 = vector.multi_reduction <maximumf>, %259, %cst_88 [1] : vector<16x24xf32> to vector<16xf32>
    %261 = vector.shape_cast %260 : vector<16xf32> to vector<16x1xf32>
    %262 = vector.broadcast %261 : vector<16x1xf32> to vector<16x24xf32>
    %263 = arith.subf %259, %262 : vector<16x24xf32>
    %264 = math.exp %263 : vector<16x24xf32>
    %cst_89 = arith.constant dense<0.000000e+00> : vector<16xf32>
    %265 = vector.multi_reduction <add>, %264, %cst_89 [1] : vector<16x24xf32> to vector<16xf32>
    %266 = vector.shape_cast %265 : vector<16xf32> to vector<16x1xf32>
    %267 = vector.broadcast %266 : vector<16x1xf32> to vector<16x24xf32>
    %268 = arith.divf %264, %267 : vector<16x24xf32>
    %cst_90 = arith.constant dense<0.000000e+00> : vector<16x8xf32>
    %269 = tpu.matmul %268, %256, %cst_90 {dimension_numbers = #tpu.dot_dimension_numbers<[1], [0], [0], [1], [0, 0, 1, 1], [], []>} : vector<16x24xf32>, vector<24x8xf32>, vector<16x8xf32> -> vector<16x8xf32>
    %270 = vector.extract_strided_slice %189 {offsets = [0, 40], sizes = [16, 8], strides = [1, 1]} : vector<16x64xf32> to vector<16x8xf32>
    %271 = vector.extract_strided_slice %52 {offsets = [0, 40], sizes = [24, 8], strides = [1, 1]} : vector<24x64xf32> to vector<24x8xf32>
    %272 = vector.extract_strided_slice %53 {offsets = [0, 40], sizes = [24, 8], strides = [1, 1]} : vector<24x64xf32> to vector<24x8xf32>
    %cst_91 = arith.constant dense<0.000000e+00> : vector<16x24xf32>
    %273 = tpu.matmul %270, %271, %cst_91 {dimension_numbers = #tpu.dot_dimension_numbers<[1], [1], [0], [0], [0, 0, 1, 0], [], []>} : vector<16x8xf32>, vector<24x8xf32>, vector<16x24xf32> -> vector<16x24xf32>
    %cst_92 = arith.constant 0.353553385 : f32
    %274 = vector.broadcast %cst_92 : f32 to vector<16x24xf32>
    %275 = arith.mulf %273, %274 : vector<16x24xf32>
    %cst_93 = arith.constant dense<0xFF800000> : vector<16xf32>
    %276 = vector.multi_reduction <maximumf>, %275, %cst_93 [1] : vector<16x24xf32> to vector<16xf32>
    %277 = vector.shape_cast %276 : vector<16xf32> to vector<16x1xf32>
    %278 = vector.broadcast %277 : vector<16x1xf32> to vector<16x24xf32>
    %279 = arith.subf %275, %278 : vector<16x24xf32>
    %280 = math.exp %279 : vector<16x24xf32>
    %cst_94 = arith.constant dense<0.000000e+00> : vector<16xf32>
    %281 = vector.multi_reduction <add>, %280, %cst_94 [1] : vector<16x24xf32> to vector<16xf32>
    %282 = vector.shape_cast %281 : vector<16xf32> to vector<16x1xf32>
    %283 = vector.broadcast %282 : vector<16x1xf32> to vector<16x24xf32>
    %284 = arith.divf %280, %283 : vector<16x24xf32>
    %cst_95 = arith.constant dense<0.000000e+00> : vector<16x8xf32>
    %285 = tpu.matmul %284, %272, %cst_95 {dimension_numbers = #tpu.dot_dimension_numbers<[1], [0], [0], [1], [0, 0, 1, 1], [], []>} : vector<16x24xf32>, vector<24x8xf32>, vector<16x8xf32> -> vector<16x8xf32>
    %286 = vector.extract_strided_slice %189 {offsets = [0, 48], sizes = [16, 8], strides = [1, 1]} : vector<16x64xf32> to vector<16x8xf32>
    %287 = vector.extract_strided_slice %52 {offsets = [0, 48], sizes = [24, 8], strides = [1, 1]} : vector<24x64xf32> to vector<24x8xf32>
    %288 = vector.extract_strided_slice %53 {offsets = [0, 48], sizes = [24, 8], strides = [1, 1]} : vector<24x64xf32> to vector<24x8xf32>
    %cst_96 = arith.constant dense<0.000000e+00> : vector<16x24xf32>
    %289 = tpu.matmul %286, %287, %cst_96 {dimension_numbers = #tpu.dot_dimension_numbers<[1], [1], [0], [0], [0, 0, 1, 0], [], []>} : vector<16x8xf32>, vector<24x8xf32>, vector<16x24xf32> -> vector<16x24xf32>
    %cst_97 = arith.constant 0.353553385 : f32
    %290 = vector.broadcast %cst_97 : f32 to vector<16x24xf32>
    %291 = arith.mulf %289, %290 : vector<16x24xf32>
    %cst_98 = arith.constant dense<0xFF800000> : vector<16xf32>
    %292 = vector.multi_reduction <maximumf>, %291, %cst_98 [1] : vector<16x24xf32> to vector<16xf32>
    %293 = vector.shape_cast %292 : vector<16xf32> to vector<16x1xf32>
    %294 = vector.broadcast %293 : vector<16x1xf32> to vector<16x24xf32>
    %295 = arith.subf %291, %294 : vector<16x24xf32>
    %296 = math.exp %295 : vector<16x24xf32>
    %cst_99 = arith.constant dense<0.000000e+00> : vector<16xf32>
    %297 = vector.multi_reduction <add>, %296, %cst_99 [1] : vector<16x24xf32> to vector<16xf32>
    %298 = vector.shape_cast %297 : vector<16xf32> to vector<16x1xf32>
    %299 = vector.broadcast %298 : vector<16x1xf32> to vector<16x24xf32>
    %300 = arith.divf %296, %299 : vector<16x24xf32>
    %cst_100 = arith.constant dense<0.000000e+00> : vector<16x8xf32>
    %301 = tpu.matmul %300, %288, %cst_100 {dimension_numbers = #tpu.dot_dimension_numbers<[1], [0], [0], [1], [0, 0, 1, 1], [], []>} : vector<16x24xf32>, vector<24x8xf32>, vector<16x8xf32> -> vector<16x8xf32>
    %302 = vector.extract_strided_slice %189 {offsets = [0, 56], sizes = [16, 8], strides = [1, 1]} : vector<16x64xf32> to vector<16x8xf32>
    %303 = vector.extract_strided_slice %52 {offsets = [0, 56], sizes = [24, 8], strides = [1, 1]} : vector<24x64xf32> to vector<24x8xf32>
    %304 = vector.extract_strided_slice %53 {offsets = [0, 56], sizes = [24, 8], strides = [1, 1]} : vector<24x64xf32> to vector<24x8xf32>
    %cst_101 = arith.constant dense<0.000000e+00> : vector<16x24xf32>
    %305 = tpu.matmul %302, %303, %cst_101 {dimension_numbers = #tpu.dot_dimension_numbers<[1], [1], [0], [0], [0, 0, 1, 0], [], []>} : vector<16x8xf32>, vector<24x8xf32>, vector<16x24xf32> -> vector<16x24xf32>
    %cst_102 = arith.constant 0.353553385 : f32
    %306 = vector.broadcast %cst_102 : f32 to vector<16x24xf32>
    %307 = arith.mulf %305, %306 : vector<16x24xf32>
    %cst_103 = arith.constant dense<0xFF800000> : vector<16xf32>
    %308 = vector.multi_reduction <maximumf>, %307, %cst_103 [1] : vector<16x24xf32> to vector<16xf32>
    %309 = vector.shape_cast %308 : vector<16xf32> to vector<16x1xf32>
    %310 = vector.broadcast %309 : vector<16x1xf32> to vector<16x24xf32>
    %311 = arith.subf %307, %310 : vector<16x24xf32>
    %312 = math.exp %311 : vector<16x24xf32>
    %cst_104 = arith.constant dense<0.000000e+00> : vector<16xf32>
    %313 = vector.multi_reduction <add>, %312, %cst_104 [1] : vector<16x24xf32> to vector<16xf32>
    %314 = vector.shape_cast %313 : vector<16xf32> to vector<16x1xf32>
    %315 = vector.broadcast %314 : vector<16x1xf32> to vector<16x24xf32>
    %316 = arith.divf %312, %315 : vector<16x24xf32>
    %cst_105 = arith.constant dense<0.000000e+00> : vector<16x8xf32>
    %317 = tpu.matmul %316, %304, %cst_105 {dimension_numbers = #tpu.dot_dimension_numbers<[1], [0], [0], [1], [0, 0, 1, 1], [], []>} : vector<16x24xf32>, vector<24x8xf32>, vector<16x8xf32> -> vector<16x8xf32>
    %318 = tpu.concatenate %205, %221, %237, %253, %269, %285, %301, %317 in 1 : vector<16x8xf32>, vector<16x8xf32>, vector<16x8xf32>, vector<16x8xf32>, vector<16x8xf32>, vector<16x8xf32>, vector<16x8xf32>, vector<16x8xf32> -> vector<16x64xf32>
    %319 = vector.extract_strided_slice %54 {offsets = [8, 0], sizes = [16, 64], strides = [1, 1]} : vector<24x64xf32> to vector<16x64xf32>
    %320 = vector.extract_strided_slice %319 {offsets = [0, 0], sizes = [16, 8], strides = [1, 1]} : vector<16x64xf32> to vector<16x8xf32>
    %321 = vector.extract_strided_slice %55 {offsets = [0, 0], sizes = [24, 8], strides = [1, 1]} : vector<24x64xf32> to vector<24x8xf32>
    %322 = vector.extract_strided_slice %56 {offsets = [0, 0], sizes = [24, 8], strides = [1, 1]} : vector<24x64xf32> to vector<24x8xf32>
    %cst_106 = arith.constant dense<0.000000e+00> : vector<16x24xf32>
    %323 = tpu.matmul %320, %321, %cst_106 {dimension_numbers = #tpu.dot_dimension_numbers<[1], [1], [0], [0], [0, 0, 1, 0], [], []>} : vector<16x8xf32>, vector<24x8xf32>, vector<16x24xf32> -> vector<16x24xf32>
    %cst_107 = arith.constant 0.353553385 : f32
    %324 = vector.broadcast %cst_107 : f32 to vector<16x24xf32>
    %325 = arith.mulf %323, %324 : vector<16x24xf32>
    %cst_108 = arith.constant dense<0xFF800000> : vector<16xf32>
    %326 = vector.multi_reduction <maximumf>, %325, %cst_108 [1] : vector<16x24xf32> to vector<16xf32>
    %327 = vector.shape_cast %326 : vector<16xf32> to vector<16x1xf32>
    %328 = vector.broadcast %327 : vector<16x1xf32> to vector<16x24xf32>
    %329 = arith.subf %325, %328 : vector<16x24xf32>
    %330 = math.exp %329 : vector<16x24xf32>
    %cst_109 = arith.constant dense<0.000000e+00> : vector<16xf32>
    %331 = vector.multi_reduction <add>, %330, %cst_109 [1] : vector<16x24xf32> to vector<16xf32>
    %332 = vector.shape_cast %331 : vector<16xf32> to vector<16x1xf32>
    %333 = vector.broadcast %332 : vector<16x1xf32> to vector<16x24xf32>
    %334 = arith.divf %330, %333 : vector<16x24xf32>
    %cst_110 = arith.constant dense<0.000000e+00> : vector<16x8xf32>
    %335 = tpu.matmul %334, %322, %cst_110 {dimension_numbers = #tpu.dot_dimension_numbers<[1], [0], [0], [1], [0, 0, 1, 1], [], []>} : vector<16x24xf32>, vector<24x8xf32>, vector<16x8xf32> -> vector<16x8xf32>
    %336 = vector.extract_strided_slice %319 {offsets = [0, 8], sizes = [16, 8], strides = [1, 1]} : vector<16x64xf32> to vector<16x8xf32>
    %337 = vector.extract_strided_slice %55 {offsets = [0, 8], sizes = [24, 8], strides = [1, 1]} : vector<24x64xf32> to vector<24x8xf32>
    %338 = vector.extract_strided_slice %56 {offsets = [0, 8], sizes = [24, 8], strides = [1, 1]} : vector<24x64xf32> to vector<24x8xf32>
    %cst_111 = arith.constant dense<0.000000e+00> : vector<16x24xf32>
    %339 = tpu.matmul %336, %337, %cst_111 {dimension_numbers = #tpu.dot_dimension_numbers<[1], [1], [0], [0], [0, 0, 1, 0], [], []>} : vector<16x8xf32>, vector<24x8xf32>, vector<16x24xf32> -> vector<16x24xf32>
    %cst_112 = arith.constant 0.353553385 : f32
    %340 = vector.broadcast %cst_112 : f32 to vector<16x24xf32>
    %341 = arith.mulf %339, %340 : vector<16x24xf32>
    %cst_113 = arith.constant dense<0xFF800000> : vector<16xf32>
    %342 = vector.multi_reduction <maximumf>, %341, %cst_113 [1] : vector<16x24xf32> to vector<16xf32>
    %343 = vector.shape_cast %342 : vector<16xf32> to vector<16x1xf32>
    %344 = vector.broadcast %343 : vector<16x1xf32> to vector<16x24xf32>
    %345 = arith.subf %341, %344 : vector<16x24xf32>
    %346 = math.exp %345 : vector<16x24xf32>
    %cst_114 = arith.constant dense<0.000000e+00> : vector<16xf32>
    %347 = vector.multi_reduction <add>, %346, %cst_114 [1] : vector<16x24xf32> to vector<16xf32>
    %348 = vector.shape_cast %347 : vector<16xf32> to vector<16x1xf32>
    %349 = vector.broadcast %348 : vector<16x1xf32> to vector<16x24xf32>
    %350 = arith.divf %346, %349 : vector<16x24xf32>
    %cst_115 = arith.constant dense<0.000000e+00> : vector<16x8xf32>
    %351 = tpu.matmul %350, %338, %cst_115 {dimension_numbers = #tpu.dot_dimension_numbers<[1], [0], [0], [1], [0, 0, 1, 1], [], []>} : vector<16x24xf32>, vector<24x8xf32>, vector<16x8xf32> -> vector<16x8xf32>
    %352 = vector.extract_strided_slice %319 {offsets = [0, 16], sizes = [16, 8], strides = [1, 1]} : vector<16x64xf32> to vector<16x8xf32>
    %353 = vector.extract_strided_slice %55 {offsets = [0, 16], sizes = [24, 8], strides = [1, 1]} : vector<24x64xf32> to vector<24x8xf32>
    %354 = vector.extract_strided_slice %56 {offsets = [0, 16], sizes = [24, 8], strides = [1, 1]} : vector<24x64xf32> to vector<24x8xf32>
    %cst_116 = arith.constant dense<0.000000e+00> : vector<16x24xf32>
    %355 = tpu.matmul %352, %353, %cst_116 {dimension_numbers = #tpu.dot_dimension_numbers<[1], [1], [0], [0], [0, 0, 1, 0], [], []>} : vector<16x8xf32>, vector<24x8xf32>, vector<16x24xf32> -> vector<16x24xf32>
    %cst_117 = arith.constant 0.353553385 : f32
    %356 = vector.broadcast %cst_117 : f32 to vector<16x24xf32>
    %357 = arith.mulf %355, %356 : vector<16x24xf32>
    %cst_118 = arith.constant dense<0xFF800000> : vector<16xf32>
    %358 = vector.multi_reduction <maximumf>, %357, %cst_118 [1] : vector<16x24xf32> to vector<16xf32>
    %359 = vector.shape_cast %358 : vector<16xf32> to vector<16x1xf32>
    %360 = vector.broadcast %359 : vector<16x1xf32> to vector<16x24xf32>
    %361 = arith.subf %357, %360 : vector<16x24xf32>
    %362 = math.exp %361 : vector<16x24xf32>
    %cst_119 = arith.constant dense<0.000000e+00> : vector<16xf32>
    %363 = vector.multi_reduction <add>, %362, %cst_119 [1] : vector<16x24xf32> to vector<16xf32>
    %364 = vector.shape_cast %363 : vector<16xf32> to vector<16x1xf32>
    %365 = vector.broadcast %364 : vector<16x1xf32> to vector<16x24xf32>
    %366 = arith.divf %362, %365 : vector<16x24xf32>
    %cst_120 = arith.constant dense<0.000000e+00> : vector<16x8xf32>
    %367 = tpu.matmul %366, %354, %cst_120 {dimension_numbers = #tpu.dot_dimension_numbers<[1], [0], [0], [1], [0, 0, 1, 1], [], []>} : vector<16x24xf32>, vector<24x8xf32>, vector<16x8xf32> -> vector<16x8xf32>
    %368 = vector.extract_strided_slice %319 {offsets = [0, 24], sizes = [16, 8], strides = [1, 1]} : vector<16x64xf32> to vector<16x8xf32>
    %369 = vector.extract_strided_slice %55 {offsets = [0, 24], sizes = [24, 8], strides = [1, 1]} : vector<24x64xf32> to vector<24x8xf32>
    %370 = vector.extract_strided_slice %56 {offsets = [0, 24], sizes = [24, 8], strides = [1, 1]} : vector<24x64xf32> to vector<24x8xf32>
    %cst_121 = arith.constant dense<0.000000e+00> : vector<16x24xf32>
    %371 = tpu.matmul %368, %369, %cst_121 {dimension_numbers = #tpu.dot_dimension_numbers<[1], [1], [0], [0], [0, 0, 1, 0], [], []>} : vector<16x8xf32>, vector<24x8xf32>, vector<16x24xf32> -> vector<16x24xf32>
    %cst_122 = arith.constant 0.353553385 : f32
    %372 = vector.broadcast %cst_122 : f32 to vector<16x24xf32>
    %373 = arith.mulf %371, %372 : vector<16x24xf32>
    %cst_123 = arith.constant dense<0xFF800000> : vector<16xf32>
    %374 = vector.multi_reduction <maximumf>, %373, %cst_123 [1] : vector<16x24xf32> to vector<16xf32>
    %375 = vector.shape_cast %374 : vector<16xf32> to vector<16x1xf32>
    %376 = vector.broadcast %375 : vector<16x1xf32> to vector<16x24xf32>
    %377 = arith.subf %373, %376 : vector<16x24xf32>
    %378 = math.exp %377 : vector<16x24xf32>
    %cst_124 = arith.constant dense<0.000000e+00> : vector<16xf32>
    %379 = vector.multi_reduction <add>, %378, %cst_124 [1] : vector<16x24xf32> to vector<16xf32>
    %380 = vector.shape_cast %379 : vector<16xf32> to vector<16x1xf32>
    %381 = vector.broadcast %380 : vector<16x1xf32> to vector<16x24xf32>
    %382 = arith.divf %378, %381 : vector<16x24xf32>
    %cst_125 = arith.constant dense<0.000000e+00> : vector<16x8xf32>
    %383 = tpu.matmul %382, %370, %cst_125 {dimension_numbers = #tpu.dot_dimension_numbers<[1], [0], [0], [1], [0, 0, 1, 1], [], []>} : vector<16x24xf32>, vector<24x8xf32>, vector<16x8xf32> -> vector<16x8xf32>
    %384 = vector.extract_strided_slice %319 {offsets = [0, 32], sizes = [16, 8], strides = [1, 1]} : vector<16x64xf32> to vector<16x8xf32>
    %385 = vector.extract_strided_slice %55 {offsets = [0, 32], sizes = [24, 8], strides = [1, 1]} : vector<24x64xf32> to vector<24x8xf32>
    %386 = vector.extract_strided_slice %56 {offsets = [0, 32], sizes = [24, 8], strides = [1, 1]} : vector<24x64xf32> to vector<24x8xf32>
    %cst_126 = arith.constant dense<0.000000e+00> : vector<16x24xf32>
    %387 = tpu.matmul %384, %385, %cst_126 {dimension_numbers = #tpu.dot_dimension_numbers<[1], [1], [0], [0], [0, 0, 1, 0], [], []>} : vector<16x8xf32>, vector<24x8xf32>, vector<16x24xf32> -> vector<16x24xf32>
    %cst_127 = arith.constant 0.353553385 : f32
    %388 = vector.broadcast %cst_127 : f32 to vector<16x24xf32>
    %389 = arith.mulf %387, %388 : vector<16x24xf32>
    %cst_128 = arith.constant dense<0xFF800000> : vector<16xf32>
    %390 = vector.multi_reduction <maximumf>, %389, %cst_128 [1] : vector<16x24xf32> to vector<16xf32>
    %391 = vector.shape_cast %390 : vector<16xf32> to vector<16x1xf32>
    %392 = vector.broadcast %391 : vector<16x1xf32> to vector<16x24xf32>
    %393 = arith.subf %389, %392 : vector<16x24xf32>
    %394 = math.exp %393 : vector<16x24xf32>
    %cst_129 = arith.constant dense<0.000000e+00> : vector<16xf32>
    %395 = vector.multi_reduction <add>, %394, %cst_129 [1] : vector<16x24xf32> to vector<16xf32>
    %396 = vector.shape_cast %395 : vector<16xf32> to vector<16x1xf32>
    %397 = vector.broadcast %396 : vector<16x1xf32> to vector<16x24xf32>
    %398 = arith.divf %394, %397 : vector<16x24xf32>
    %cst_130 = arith.constant dense<0.000000e+00> : vector<16x8xf32>
    %399 = tpu.matmul %398, %386, %cst_130 {dimension_numbers = #tpu.dot_dimension_numbers<[1], [0], [0], [1], [0, 0, 1, 1], [], []>} : vector<16x24xf32>, vector<24x8xf32>, vector<16x8xf32> -> vector<16x8xf32>
    %400 = vector.extract_strided_slice %319 {offsets = [0, 40], sizes = [16, 8], strides = [1, 1]} : vector<16x64xf32> to vector<16x8xf32>
    %401 = vector.extract_strided_slice %55 {offsets = [0, 40], sizes = [24, 8], strides = [1, 1]} : vector<24x64xf32> to vector<24x8xf32>
    %402 = vector.extract_strided_slice %56 {offsets = [0, 40], sizes = [24, 8], strides = [1, 1]} : vector<24x64xf32> to vector<24x8xf32>
    %cst_131 = arith.constant dense<0.000000e+00> : vector<16x24xf32>
    %403 = tpu.matmul %400, %401, %cst_131 {dimension_numbers = #tpu.dot_dimension_numbers<[1], [1], [0], [0], [0, 0, 1, 0], [], []>} : vector<16x8xf32>, vector<24x8xf32>, vector<16x24xf32> -> vector<16x24xf32>
    %cst_132 = arith.constant 0.353553385 : f32
    %404 = vector.broadcast %cst_132 : f32 to vector<16x24xf32>
    %405 = arith.mulf %403, %404 : vector<16x24xf32>
    %cst_133 = arith.constant dense<0xFF800000> : vector<16xf32>
    %406 = vector.multi_reduction <maximumf>, %405, %cst_133 [1] : vector<16x24xf32> to vector<16xf32>
    %407 = vector.shape_cast %406 : vector<16xf32> to vector<16x1xf32>
    %408 = vector.broadcast %407 : vector<16x1xf32> to vector<16x24xf32>
    %409 = arith.subf %405, %408 : vector<16x24xf32>
    %410 = math.exp %409 : vector<16x24xf32>
    %cst_134 = arith.constant dense<0.000000e+00> : vector<16xf32>
    %411 = vector.multi_reduction <add>, %410, %cst_134 [1] : vector<16x24xf32> to vector<16xf32>
    %412 = vector.shape_cast %411 : vector<16xf32> to vector<16x1xf32>
    %413 = vector.broadcast %412 : vector<16x1xf32> to vector<16x24xf32>
    %414 = arith.divf %410, %413 : vector<16x24xf32>
    %cst_135 = arith.constant dense<0.000000e+00> : vector<16x8xf32>
    %415 = tpu.matmul %414, %402, %cst_135 {dimension_numbers = #tpu.dot_dimension_numbers<[1], [0], [0], [1], [0, 0, 1, 1], [], []>} : vector<16x24xf32>, vector<24x8xf32>, vector<16x8xf32> -> vector<16x8xf32>
    %416 = vector.extract_strided_slice %319 {offsets = [0, 48], sizes = [16, 8], strides = [1, 1]} : vector<16x64xf32> to vector<16x8xf32>
    %417 = vector.extract_strided_slice %55 {offsets = [0, 48], sizes = [24, 8], strides = [1, 1]} : vector<24x64xf32> to vector<24x8xf32>
    %418 = vector.extract_strided_slice %56 {offsets = [0, 48], sizes = [24, 8], strides = [1, 1]} : vector<24x64xf32> to vector<24x8xf32>
    %cst_136 = arith.constant dense<0.000000e+00> : vector<16x24xf32>
    %419 = tpu.matmul %416, %417, %cst_136 {dimension_numbers = #tpu.dot_dimension_numbers<[1], [1], [0], [0], [0, 0, 1, 0], [], []>} : vector<16x8xf32>, vector<24x8xf32>, vector<16x24xf32> -> vector<16x24xf32>
    %cst_137 = arith.constant 0.353553385 : f32
    %420 = vector.broadcast %cst_137 : f32 to vector<16x24xf32>
    %421 = arith.mulf %419, %420 : vector<16x24xf32>
    %cst_138 = arith.constant dense<0xFF800000> : vector<16xf32>
    %422 = vector.multi_reduction <maximumf>, %421, %cst_138 [1] : vector<16x24xf32> to vector<16xf32>
    %423 = vector.shape_cast %422 : vector<16xf32> to vector<16x1xf32>
    %424 = vector.broadcast %423 : vector<16x1xf32> to vector<16x24xf32>
    %425 = arith.subf %421, %424 : vector<16x24xf32>
    %426 = math.exp %425 : vector<16x24xf32>
    %cst_139 = arith.constant dense<0.000000e+00> : vector<16xf32>
    %427 = vector.multi_reduction <add>, %426, %cst_139 [1] : vector<16x24xf32> to vector<16xf32>
    %428 = vector.shape_cast %427 : vector<16xf32> to vector<16x1xf32>
    %429 = vector.broadcast %428 : vector<16x1xf32> to vector<16x24xf32>
    %430 = arith.divf %426, %429 : vector<16x24xf32>
    %cst_140 = arith.constant dense<0.000000e+00> : vector<16x8xf32>
    %431 = tpu.matmul %430, %418, %cst_140 {dimension_numbers = #tpu.dot_dimension_numbers<[1], [0], [0], [1], [0, 0, 1, 1], [], []>} : vector<16x24xf32>, vector<24x8xf32>, vector<16x8xf32> -> vector<16x8xf32>
    %432 = vector.extract_strided_slice %319 {offsets = [0, 56], sizes = [16, 8], strides = [1, 1]} : vector<16x64xf32> to vector<16x8xf32>
    %433 = vector.extract_strided_slice %55 {offsets = [0, 56], sizes = [24, 8], strides = [1, 1]} : vector<24x64xf32> to vector<24x8xf32>
    %434 = vector.extract_strided_slice %56 {offsets = [0, 56], sizes = [24, 8], strides = [1, 1]} : vector<24x64xf32> to vector<24x8xf32>
    %cst_141 = arith.constant dense<0.000000e+00> : vector<16x24xf32>
    %435 = tpu.matmul %432, %433, %cst_141 {dimension_numbers = #tpu.dot_dimension_numbers<[1], [1], [0], [0], [0, 0, 1, 0], [], []>} : vector<16x8xf32>, vector<24x8xf32>, vector<16x24xf32> -> vector<16x24xf32>
    %cst_142 = arith.constant 0.353553385 : f32
    %436 = vector.broadcast %cst_142 : f32 to vector<16x24xf32>
    %437 = arith.mulf %435, %436 : vector<16x24xf32>
    %cst_143 = arith.constant dense<0xFF800000> : vector<16xf32>
    %438 = vector.multi_reduction <maximumf>, %437, %cst_143 [1] : vector<16x24xf32> to vector<16xf32>
    %439 = vector.shape_cast %438 : vector<16xf32> to vector<16x1xf32>
    %440 = vector.broadcast %439 : vector<16x1xf32> to vector<16x24xf32>
    %441 = arith.subf %437, %440 : vector<16x24xf32>
    %442 = math.exp %441 : vector<16x24xf32>
    %cst_144 = arith.constant dense<0.000000e+00> : vector<16xf32>
    %443 = vector.multi_reduction <add>, %442, %cst_144 [1] : vector<16x24xf32> to vector<16xf32>
    %444 = vector.shape_cast %443 : vector<16xf32> to vector<16x1xf32>
    %445 = vector.broadcast %444 : vector<16x1xf32> to vector<16x24xf32>
    %446 = arith.divf %442, %445 : vector<16x24xf32>
    %cst_145 = arith.constant dense<0.000000e+00> : vector<16x8xf32>
    %447 = tpu.matmul %446, %434, %cst_145 {dimension_numbers = #tpu.dot_dimension_numbers<[1], [0], [0], [1], [0, 0, 1, 1], [], []>} : vector<16x24xf32>, vector<24x8xf32>, vector<16x8xf32> -> vector<16x8xf32>
    %448 = tpu.concatenate %335, %351, %367, %383, %399, %415, %431, %447 in 1 : vector<16x8xf32>, vector<16x8xf32>, vector<16x8xf32>, vector<16x8xf32>, vector<16x8xf32>, vector<16x8xf32>, vector<16x8xf32>, vector<16x8xf32> -> vector<16x64xf32>
    %c0_146 = arith.constant 0 : index
    %c0_147 = arith.constant 0 : index
    %449 = vector.load %arg6[%c0_146, %c0_147] : memref<64x64xf32, #tpu.memory_space<vmem>>, vector<64x64xf32>
    %c0_148 = arith.constant 0 : index
    %c0_149 = arith.constant 0 : index
    %450 = vector.load %arg7[%c0_148, %c0_149] : memref<1x64xf32, #tpu.memory_space<vmem>>, vector<1x64xf32>
    %451 = tpu.concatenate %188, %318 in 0 : vector<8x64xf32>, vector<16x64xf32> -> vector<24x64xf32>
    %452 = tpu.concatenate %188, %448 in 0 : vector<8x64xf32>, vector<16x64xf32> -> vector<24x64xf32>
    %cst_150 = arith.constant dense<0.000000e+00> : vector<24x64xf32>
    %453 = tpu.matmul %451, %449, %cst_150 {dimension_numbers = #tpu.dot_dimension_numbers<[1], [0], [0], [1], [0, 0, 1, 1], [], []>} : vector<24x64xf32>, vector<64x64xf32>, vector<24x64xf32> -> vector<24x64xf32>
    %454 = arith.addf %1, %453 : vector<24x64xf32>
    %455 = vector.broadcast %450 : vector<1x64xf32> to vector<24x64xf32>
    %456 = arith.addf %454, %455 : vector<24x64xf32>
    %cst_151 = arith.constant dense<0.000000e+00> : vector<24x64xf32>
    %457 = tpu.matmul %452, %449, %cst_151 {dimension_numbers = #tpu.dot_dimension_numbers<[1], [0], [0], [1], [0, 0, 1, 1], [], []>} : vector<24x64xf32>, vector<64x64xf32>, vector<24x64xf32> -> vector<24x64xf32>
    %458 = arith.addf %3, %457 : vector<24x64xf32>
    %459 = vector.broadcast %450 : vector<1x64xf32> to vector<24x64xf32>
    %460 = arith.addf %458, %459 : vector<24x64xf32>
    %c0_152 = arith.constant 0 : index
    %c0_153 = arith.constant 0 : index
    %461 = vector.load %arg10[%c0_152, %c0_153] : memref<64x256xf32, #tpu.memory_space<vmem>>, vector<64x256xf32>
    %c0_154 = arith.constant 0 : index
    %c0_155 = arith.constant 0 : index
    %462 = vector.load %arg11[%c0_154, %c0_155] : memref<1x256xf32, #tpu.memory_space<vmem>>, vector<1x256xf32>
    %c0_156 = arith.constant 0 : index
    %c0_157 = arith.constant 0 : index
    %463 = vector.load %arg12[%c0_156, %c0_157] : memref<256x64xf32, #tpu.memory_space<vmem>>, vector<256x64xf32>
    %c0_158 = arith.constant 0 : index
    %c0_159 = arith.constant 0 : index
    %464 = vector.load %arg13[%c0_158, %c0_159] : memref<1x64xf32, #tpu.memory_space<vmem>>, vector<1x64xf32>
    %cst_160 = arith.constant dense<0.000000e+00> : vector<24xf32>
    %465 = vector.multi_reduction <add>, %456, %cst_160 [1] : vector<24x64xf32> to vector<24xf32>
    %466 = vector.shape_cast %465 : vector<24xf32> to vector<24x1xf32>
    %cst_161 = arith.constant 6.400000e+01 : f32
    %467 = vector.broadcast %cst_161 : f32 to vector<24x1xf32>
    %468 = arith.divf %466, %467 : vector<24x1xf32>
    %469 = vector.broadcast %468 : vector<24x1xf32> to vector<24x64xf32>
    %470 = arith.subf %456, %469 : vector<24x64xf32>
    %471 = arith.mulf %470, %470 : vector<24x64xf32>
    %cst_162 = arith.constant dense<0.000000e+00> : vector<24xf32>
    %472 = vector.multi_reduction <add>, %471, %cst_162 [1] : vector<24x64xf32> to vector<24xf32>
    %473 = vector.shape_cast %472 : vector<24xf32> to vector<24x1xf32>
    %cst_163 = arith.constant 6.400000e+01 : f32
    %474 = vector.broadcast %cst_163 : f32 to vector<24x1xf32>
    %475 = arith.divf %473, %474 : vector<24x1xf32>
    %cst_164 = arith.constant 9.99999974E-6 : f32
    %476 = vector.broadcast %cst_164 : f32 to vector<24x1xf32>
    %477 = arith.addf %475, %476 : vector<24x1xf32>
    %478 = math.rsqrt %477 : vector<24x1xf32>
    %479 = vector.broadcast %478 : vector<24x1xf32> to vector<24x64xf32>
    %480 = arith.mulf %470, %479 : vector<24x64xf32>
    %481 = vector.broadcast %6 : vector<1x64xf32> to vector<24x64xf32>
    %482 = arith.mulf %480, %481 : vector<24x64xf32>
    %483 = vector.broadcast %7 : vector<1x64xf32> to vector<24x64xf32>
    %484 = arith.addf %482, %483 : vector<24x64xf32>
    %cst_165 = arith.constant dense<0.000000e+00> : vector<24x256xf32>
    %485 = tpu.matmul %484, %461, %cst_165 {dimension_numbers = #tpu.dot_dimension_numbers<[1], [0], [0], [1], [0, 0, 1, 1], [], []>} : vector<24x64xf32>, vector<64x256xf32>, vector<24x256xf32> -> vector<24x256xf32>
    %486 = vector.broadcast %462 : vector<1x256xf32> to vector<24x256xf32>
    %487 = arith.addf %485, %486 : vector<24x256xf32>
    %cst_166 = arith.constant 5.000000e-01 : f32
    %488 = vector.broadcast %cst_166 : f32 to vector<24x256xf32>
    %489 = arith.mulf %488, %487 : vector<24x256xf32>
    %cst_167 = arith.constant 0.707106769 : f32
    %490 = vector.broadcast %cst_167 : f32 to vector<24x256xf32>
    %491 = arith.mulf %487, %490 : vector<24x256xf32>
    %492 = math.absf %491 : vector<24x256xf32>
    %cst_168 = arith.constant 0.327591091 : f32
    %493 = vector.broadcast %cst_168 : f32 to vector<24x256xf32>
    %494 = arith.mulf %493, %492 : vector<24x256xf32>
    %cst_169 = arith.constant 1.000000e+00 : f32
    %495 = vector.broadcast %cst_169 : f32 to vector<24x256xf32>
    %496 = arith.addf %495, %494 : vector<24x256xf32>
    %cst_170 = arith.constant 1.000000e+00 : f32
    %497 = vector.broadcast %cst_170 : f32 to vector<24x256xf32>
    %498 = arith.divf %497, %496 : vector<24x256xf32>
    %cst_171 = arith.constant 1.06140542 : f32
    %499 = vector.broadcast %cst_171 : f32 to vector<24x256xf32>
    %500 = arith.mulf %499, %498 : vector<24x256xf32>
    %cst_172 = arith.constant -1.45315206 : f32
    %501 = vector.broadcast %cst_172 : f32 to vector<24x256xf32>
    %502 = arith.addf %500, %501 : vector<24x256xf32>
    %503 = arith.mulf %502, %498 : vector<24x256xf32>
    %cst_173 = arith.constant 1.42141378 : f32
    %504 = vector.broadcast %cst_173 : f32 to vector<24x256xf32>
    %505 = arith.addf %503, %504 : vector<24x256xf32>
    %506 = arith.mulf %505, %498 : vector<24x256xf32>
    %cst_174 = arith.constant -0.284496725 : f32
    %507 = vector.broadcast %cst_174 : f32 to vector<24x256xf32>
    %508 = arith.addf %506, %507 : vector<24x256xf32>
    %509 = arith.mulf %508, %498 : vector<24x256xf32>
    %cst_175 = arith.constant 0.254829586 : f32
    %510 = vector.broadcast %cst_175 : f32 to vector<24x256xf32>
    %511 = arith.addf %509, %510 : vector<24x256xf32>
    %512 = arith.mulf %511, %498 : vector<24x256xf32>
    %513 = arith.mulf %492, %492 : vector<24x256xf32>
    %cst_176 = arith.constant 0.000000e+00 : f32
    %514 = vector.broadcast %cst_176 : f32 to vector<24x256xf32>
    %515 = arith.subf %514, %513 : vector<24x256xf32>
    %516 = math.exp %515 : vector<24x256xf32>
    %517 = arith.mulf %512, %516 : vector<24x256xf32>
    %cst_177 = arith.constant 1.000000e+00 : f32
    %518 = vector.broadcast %cst_177 : f32 to vector<24x256xf32>
    %519 = arith.subf %518, %517 : vector<24x256xf32>
    %cst_178 = arith.constant 0.000000e+00 : f32
    %520 = vector.broadcast %cst_178 : f32 to vector<24x256xf32>
    %521 = arith.cmpf olt, %491, %520 : vector<24x256xf32>
    %cst_179 = arith.constant 0.000000e+00 : f32
    %522 = vector.broadcast %cst_179 : f32 to vector<24x256xf32>
    %523 = arith.subf %522, %519 : vector<24x256xf32>
    %524 = arith.select %521, %523, %519 : vector<24x256xi1>, vector<24x256xf32>
    %cst_180 = arith.constant 1.000000e+00 : f32
    %525 = vector.broadcast %cst_180 : f32 to vector<24x256xf32>
    %526 = arith.addf %525, %524 : vector<24x256xf32>
    %527 = arith.mulf %489, %526 : vector<24x256xf32>
    %cst_181 = arith.constant dense<0.000000e+00> : vector<24x64xf32>
    %528 = tpu.matmul %527, %463, %cst_181 {dimension_numbers = #tpu.dot_dimension_numbers<[1], [0], [0], [1], [0, 0, 1, 1], [], []>} : vector<24x256xf32>, vector<256x64xf32>, vector<24x64xf32> -> vector<24x64xf32>
    %529 = vector.broadcast %464 : vector<1x64xf32> to vector<24x64xf32>
    %530 = arith.addf %528, %529 : vector<24x64xf32>
    %531 = arith.addf %456, %530 : vector<24x64xf32>
    %cst_182 = arith.constant dense<0.000000e+00> : vector<24xf32>
    %532 = vector.multi_reduction <add>, %460, %cst_182 [1] : vector<24x64xf32> to vector<24xf32>
    %533 = vector.shape_cast %532 : vector<24xf32> to vector<24x1xf32>
    %cst_183 = arith.constant 6.400000e+01 : f32
    %534 = vector.broadcast %cst_183 : f32 to vector<24x1xf32>
    %535 = arith.divf %533, %534 : vector<24x1xf32>
    %536 = vector.broadcast %535 : vector<24x1xf32> to vector<24x64xf32>
    %537 = arith.subf %460, %536 : vector<24x64xf32>
    %538 = arith.mulf %537, %537 : vector<24x64xf32>
    %cst_184 = arith.constant dense<0.000000e+00> : vector<24xf32>
    %539 = vector.multi_reduction <add>, %538, %cst_184 [1] : vector<24x64xf32> to vector<24xf32>
    %540 = vector.shape_cast %539 : vector<24xf32> to vector<24x1xf32>
    %cst_185 = arith.constant 6.400000e+01 : f32
    %541 = vector.broadcast %cst_185 : f32 to vector<24x1xf32>
    %542 = arith.divf %540, %541 : vector<24x1xf32>
    %cst_186 = arith.constant 9.99999974E-6 : f32
    %543 = vector.broadcast %cst_186 : f32 to vector<24x1xf32>
    %544 = arith.addf %542, %543 : vector<24x1xf32>
    %545 = math.rsqrt %544 : vector<24x1xf32>
    %546 = vector.broadcast %545 : vector<24x1xf32> to vector<24x64xf32>
    %547 = arith.mulf %537, %546 : vector<24x64xf32>
    %548 = vector.broadcast %6 : vector<1x64xf32> to vector<24x64xf32>
    %549 = arith.mulf %547, %548 : vector<24x64xf32>
    %550 = vector.broadcast %7 : vector<1x64xf32> to vector<24x64xf32>
    %551 = arith.addf %549, %550 : vector<24x64xf32>
    %cst_187 = arith.constant dense<0.000000e+00> : vector<24x256xf32>
    %552 = tpu.matmul %551, %461, %cst_187 {dimension_numbers = #tpu.dot_dimension_numbers<[1], [0], [0], [1], [0, 0, 1, 1], [], []>} : vector<24x64xf32>, vector<64x256xf32>, vector<24x256xf32> -> vector<24x256xf32>
    %553 = vector.broadcast %462 : vector<1x256xf32> to vector<24x256xf32>
    %554 = arith.addf %552, %553 : vector<24x256xf32>
    %cst_188 = arith.constant 5.000000e-01 : f32
    %555 = vector.broadcast %cst_188 : f32 to vector<24x256xf32>
    %556 = arith.mulf %555, %554 : vector<24x256xf32>
    %cst_189 = arith.constant 0.707106769 : f32
    %557 = vector.broadcast %cst_189 : f32 to vector<24x256xf32>
    %558 = arith.mulf %554, %557 : vector<24x256xf32>
    %559 = math.absf %558 : vector<24x256xf32>
    %cst_190 = arith.constant 0.327591091 : f32
    %560 = vector.broadcast %cst_190 : f32 to vector<24x256xf32>
    %561 = arith.mulf %560, %559 : vector<24x256xf32>
    %cst_191 = arith.constant 1.000000e+00 : f32
    %562 = vector.broadcast %cst_191 : f32 to vector<24x256xf32>
    %563 = arith.addf %562, %561 : vector<24x256xf32>
    %cst_192 = arith.constant 1.000000e+00 : f32
    %564 = vector.broadcast %cst_192 : f32 to vector<24x256xf32>
    %565 = arith.divf %564, %563 : vector<24x256xf32>
    %cst_193 = arith.constant 1.06140542 : f32
    %566 = vector.broadcast %cst_193 : f32 to vector<24x256xf32>
    %567 = arith.mulf %566, %565 : vector<24x256xf32>
    %cst_194 = arith.constant -1.45315206 : f32
    %568 = vector.broadcast %cst_194 : f32 to vector<24x256xf32>
    %569 = arith.addf %567, %568 : vector<24x256xf32>
    %570 = arith.mulf %569, %565 : vector<24x256xf32>
    %cst_195 = arith.constant 1.42141378 : f32
    %571 = vector.broadcast %cst_195 : f32 to vector<24x256xf32>
    %572 = arith.addf %570, %571 : vector<24x256xf32>
    %573 = arith.mulf %572, %565 : vector<24x256xf32>
    %cst_196 = arith.constant -0.284496725 : f32
    %574 = vector.broadcast %cst_196 : f32 to vector<24x256xf32>
    %575 = arith.addf %573, %574 : vector<24x256xf32>
    %576 = arith.mulf %575, %565 : vector<24x256xf32>
    %cst_197 = arith.constant 0.254829586 : f32
    %577 = vector.broadcast %cst_197 : f32 to vector<24x256xf32>
    %578 = arith.addf %576, %577 : vector<24x256xf32>
    %579 = arith.mulf %578, %565 : vector<24x256xf32>
    %580 = arith.mulf %559, %559 : vector<24x256xf32>
    %cst_198 = arith.constant 0.000000e+00 : f32
    %581 = vector.broadcast %cst_198 : f32 to vector<24x256xf32>
    %582 = arith.subf %581, %580 : vector<24x256xf32>
    %583 = math.exp %582 : vector<24x256xf32>
    %584 = arith.mulf %579, %583 : vector<24x256xf32>
    %cst_199 = arith.constant 1.000000e+00 : f32
    %585 = vector.broadcast %cst_199 : f32 to vector<24x256xf32>
    %586 = arith.subf %585, %584 : vector<24x256xf32>
    %cst_200 = arith.constant 0.000000e+00 : f32
    %587 = vector.broadcast %cst_200 : f32 to vector<24x256xf32>
    %588 = arith.cmpf olt, %558, %587 : vector<24x256xf32>
    %cst_201 = arith.constant 0.000000e+00 : f32
    %589 = vector.broadcast %cst_201 : f32 to vector<24x256xf32>
    %590 = arith.subf %589, %586 : vector<24x256xf32>
    %591 = arith.select %588, %590, %586 : vector<24x256xi1>, vector<24x256xf32>
    %cst_202 = arith.constant 1.000000e+00 : f32
    %592 = vector.broadcast %cst_202 : f32 to vector<24x256xf32>
    %593 = arith.addf %592, %591 : vector<24x256xf32>
    %594 = arith.mulf %556, %593 : vector<24x256xf32>
    %cst_203 = arith.constant dense<0.000000e+00> : vector<24x64xf32>
    %595 = tpu.matmul %594, %463, %cst_203 {dimension_numbers = #tpu.dot_dimension_numbers<[1], [0], [0], [1], [0, 0, 1, 1], [], []>} : vector<24x256xf32>, vector<256x64xf32>, vector<24x64xf32> -> vector<24x64xf32>
    %596 = vector.broadcast %464 : vector<1x64xf32> to vector<24x64xf32>
    %597 = arith.addf %595, %596 : vector<24x64xf32>
    %598 = arith.addf %460, %597 : vector<24x64xf32>
    %c0_204 = arith.constant 0 : index
    %c0_205 = arith.constant 0 : index
    %c0_206 = arith.constant 0 : index
    %599 = vector.load %arg14[%c0_204, %c0_205, %c0_206] : memref<1x24x64xf32, #tpu.memory_space<vmem>>, vector<1x24x64xf32>
    %600 = vector.shape_cast %599 : vector<1x24x64xf32> to vector<24x64xf32>
    %601 = vector.shape_cast %531 : vector<24x64xf32> to vector<1x24x64xf32>
    tpu.vector_store %arg14[%c0_204, %c0_205, %c0_206], %601 {strides = array<i32>} : memref<1x24x64xf32, #tpu.memory_space<vmem>>, vector<1x24x64xf32>,
    %c0_207 = arith.constant 0 : index
    %c0_208 = arith.constant 0 : index
    %c0_209 = arith.constant 0 : index
    %602 = vector.load %arg15[%c0_207, %c0_208, %c0_209] : memref<1x24x64xf32, #tpu.memory_space<vmem>>, vector<1x24x64xf32>
    %603 = vector.shape_cast %602 : vector<1x24x64xf32> to vector<24x64xf32>
    %604 = vector.shape_cast %598 : vector<24x64xf32> to vector<1x24x64xf32>
    tpu.vector_store %arg15[%c0_207, %c0_208, %c0_209], %604 {strides = array<i32>} : memref<1x24x64xf32, #tpu.memory_space<vmem>>, vector<1x24x64xf32>,
    return
  }
  func.func @transform_0(%arg0: i32) -> (i32, i32, i32) {
    %c0_i32 = arith.constant 0 : i32
    %c0_i32_0 = arith.constant 0 : i32
    %c0_i32_1 = arith.constant 0 : i32
    return %arg0, %c0_i32, %c0_i32_0 : i32, i32, i32
  }
  func.func @transform_1(%arg0: i32) -> (i32, i32, i32) {
    %c0_i32 = arith.constant 0 : i32
    %c0_i32_0 = arith.constant 0 : i32
    %c0_i32_1 = arith.constant 0 : i32
    return %arg0, %c0_i32, %c0_i32_0 : i32, i32, i32
  }
  func.func @transform_2(%arg0: i32) -> (i32, i32) {
    %c0_i32 = arith.constant 0 : i32
    %c0_i32_0 = arith.constant 0 : i32
    %c0_i32_1 = arith.constant 0 : i32
    return %c0_i32, %c0_i32_0 : i32, i32
  }
  func.func @transform_3(%arg0: i32) -> (i32, i32) {
    %c0_i32 = arith.constant 0 : i32
    %c0_i32_0 = arith.constant 0 : i32
    %c0_i32_1 = arith.constant 0 : i32
    return %c0_i32, %c0_i32_0 : i32, i32
  }
  func.func @transform_4(%arg0: i32) -> (i32, i32) {
    %c0_i32 = arith.constant 0 : i32
    %c0_i32_0 = arith.constant 0 : i32
    %c0_i32_1 = arith.constant 0 : i32
    return %c0_i32, %c0_i32_0 : i32, i32
  }
  func.func @transform_5(%arg0: i32) -> (i32, i32) {
    %c0_i32 = arith.constant 0 : i32
    %c0_i32_0 = arith.constant 0 : i32
    %c0_i32_1 = arith.constant 0 : i32
    return %c0_i32, %c0_i32_0 : i32, i32
  }
  func.func @transform_6(%arg0: i32) -> (i32, i32) {
    %c0_i32 = arith.constant 0 : i32
    %c0_i32_0 = arith.constant 0 : i32
    %c0_i32_1 = arith.constant 0 : i32
    return %c0_i32, %c0_i32_0 : i32, i32
  }
  func.func @transform_7(%arg0: i32) -> (i32, i32) {
    %c0_i32 = arith.constant 0 : i32
    %c0_i32_0 = arith.constant 0 : i32
    %c0_i32_1 = arith.constant 0 : i32
    return %c0_i32, %c0_i32_0 : i32, i32
  }
  func.func @transform_8(%arg0: i32) -> (i32, i32) {
    %c0_i32 = arith.constant 0 : i32
    %c0_i32_0 = arith.constant 0 : i32
    %c0_i32_1 = arith.constant 0 : i32
    return %c0_i32, %c0_i32_0 : i32, i32
  }
  func.func @transform_9(%arg0: i32) -> (i32, i32) {
    %c0_i32 = arith.constant 0 : i32
    %c0_i32_0 = arith.constant 0 : i32
    %c0_i32_1 = arith.constant 0 : i32
    return %c0_i32, %c0_i32_0 : i32, i32
  }
  func.func @transform_10(%arg0: i32) -> (i32, i32) {
    %c0_i32 = arith.constant 0 : i32
    %c0_i32_0 = arith.constant 0 : i32
    %c0_i32_1 = arith.constant 0 : i32
    return %c0_i32, %c0_i32_0 : i32, i32
  }
  func.func @transform_11(%arg0: i32) -> (i32, i32) {
    %c0_i32 = arith.constant 0 : i32
    %c0_i32_0 = arith.constant 0 : i32
    %c0_i32_1 = arith.constant 0 : i32
    return %c0_i32, %c0_i32_0 : i32, i32
  }
  func.func @transform_12(%arg0: i32) -> (i32, i32) {
    %c0_i32 = arith.constant 0 : i32
    %c0_i32_0 = arith.constant 0 : i32
    %c0_i32_1 = arith.constant 0 : i32
    return %c0_i32, %c0_i32_0 : i32, i32
  }
  func.func @transform_13(%arg0: i32) -> (i32, i32, i32) {
    %c0_i32 = arith.constant 0 : i32
    %c0_i32_0 = arith.constant 0 : i32
    %c0_i32_1 = arith.constant 0 : i32
    return %arg0, %c0_i32, %c0_i32_0 : i32, i32, i32
  }
  func.func @transform_14(%arg0: i32) -> (i32, i32, i32) {
    %c0_i32 = arith.constant 0 : i32
    %c0_i32_0 = arith.constant 0 : i32
    %c0_i32_1 = arith.constant 0 : i32
    return %arg0, %c0_i32, %c0_i32_0 : i32, i32, i32
  }
}

</mosaic_0001>

<llo_original>
// kernel: block_forward.1
$region0: #{block_forward.1}
  #allocation0 [shape = 'u32[]', space=smem, size = 0x4, offset = 0x4, fixed_abs, tag = 'smem constant byte address 0x4 - core index']
  #allocation1 [shape = 'u32[144,128]{1,0:T(1,128)}', space=vmem, size = 0x12000, scoped, tag = 'internal scratch']
  %s0 = inlined_call_operand.vmem [shape: f32[2,24,64], index: 0, kind: input, shape index: {}]
  %s1 = inlined_call_operand.hbm [shape: f32[2,24,64], index: 1, kind: input, shape index: {}]
  %s2 = inlined_call_operand.vmem [shape: f32[1,64], index: 2, kind: input, shape index: {}]
  %s3 = inlined_call_operand.vmem [shape: f32[1,64], index: 3, kind: input, shape index: {}]
  %s4 = inlined_call_operand.vmem [shape: f32[64,192], index: 4, kind: input, shape index: {}]
  %s5 = inlined_call_operand.vmem [shape: f32[64,64], index: 5, kind: input, shape index: {}]
  %s6 = inlined_call_operand.vmem [shape: f32[1,64], index: 6, kind: input, shape index: {}]
  %s7 = inlined_call_operand.vmem [shape: f32[1,64], index: 7, kind: input, shape index: {}]
  %s8 = inlined_call_operand.vmem [shape: f32[1,64], index: 8, kind: input, shape index: {}]
  %s9 = inlined_call_operand.vmem [shape: f32[64,256], index: 9, kind: input, shape index: {}]
  %s10 = inlined_call_operand.vmem [shape: f32[1,256], index: 10, kind: input, shape index: {}]
  %s11 = inlined_call_operand.vmem [shape: f32[256,64], index: 11, kind: input, shape index: {}]
  %s12 = inlined_call_operand.vmem [shape: f32[1,64], index: 12, kind: input, shape index: {}]
  %s13 = inlined_call_operand.hbm [shape: f32[2,24,64], index: 13, kind: output, shape index: {0}]
  %s14 = inlined_call_operand.hbm [shape: f32[2,24,64], index: 14, kind: output, shape index: {1}]
  %15 = xla_tuple %s13, %s14
  %s16 = sld [smem:[#allocation0]]
  $region97: #{block_forward.1} parent=0
    _
  %s18 = ssub.s32 1, %s16
  %s19 = scalar_select 0, %s18, %s16
  $region1: #{block_forward.1} parent=0
    #allocation2 [shape = 'u8[24576]{0}', space=vmem, size = 0x6000, scoped, tag = 'input window, operand 1']
    #allocation3 [shape = 's32[2]{0}', space=sflag, size = 0x8, scoped, tag = 'scoped memory for block_forward.1']
    #allocation4 [shape = 's32[2]{0}', space=sflag, size = 0x8, scoped, tag = 'scoped memory for block_forward.1']
    #allocation5 [shape = 'u8[24576]{0}', space=vmem, size = 0x6000, scoped, tag = 'output window, operand 0']
    #allocation6 [shape = 'u8[24576]{0}', space=vmem, size = 0x6000, scoped, tag = 'output window, operand 1']
    #allocation7 [shape = 's32[2]{0}', space=sflag, size = 0x8, scoped, tag = 'scoped memory for block_forward.1']
    %20 = vsyncpa [#allocation3], 0
    %s21 = scalar_lea.sflag [#allocation3], 1
    %22 = vsyncpa %s21, 0
    %23 = vsyncpa [#allocation4], 0
    %s24 = scalar_lea.sflag [#allocation4], 1
    %25 = vsyncpa %s24, 0
    %26 = vsyncpa [#allocation7], 0
    %s27 = scalar_lea.sflag [#allocation7], 1
    %28 = vsyncpa %s27, 0
    loop: start=0, step=1, limit=4
    $region2: #{block_forward.1} parent=1 // loop_pre_header
      _
    $region3: #{block_forward.1} parent=1 // loop_header
      %s30 = sphi 0, %s34
      %p31 = scmp.ge.s32.totalorder %s30, 4
      %s40 = sphi 0, %s42
      %s43 = sphi 0, %s40
      %s44 = sphi 0, %s43
      %s60 = sphi 0, %s44
      %s66 = sphi 0, %s68
      %s69 = sphi 0, %s66
      %s70 = sphi 0, %s69
      %s86 = sphi 0, %s70
      %s90 = sphi 0, %s90
      %s92 = sphi 0, %s90
      %s93 = sphi 0, %s92
      %s107 = sphi 0, %s93
      %s111 = sphi 0, %s111
      %s113 = sphi 0, %s111
      %s114 = sphi 0, %s113
      %s128 = sphi 0, %s114
      %s132 = sphi 0, %s132
      %s134 = sphi 0, %s132
      %s135 = sphi 0, %s134
      %s149 = sphi 0, %s135
      %s153 = sphi 0, %s153
      %s155 = sphi 0, %s153
      %s156 = sphi 0, %s155
      %s170 = sphi 0, %s156
      %s174 = sphi 0, %s174
      %s176 = sphi 0, %s174
      %s177 = sphi 0, %s176
      %s191 = sphi 0, %s177
      %s195 = sphi 0, %s195
      %s197 = sphi 0, %s195
      %s198 = sphi 0, %s197
      %s212 = sphi 0, %s198
      %s216 = sphi 0, %s216
      %s218 = sphi 0, %s216
      %s219 = sphi 0, %s218
      %s233 = sphi 0, %s219
      %s237 = sphi 0, %s237
      %s239 = sphi 0, %s237
      %s240 = sphi 0, %s239
      %s254 = sphi 0, %s240
      %s258 = sphi 0, %s258
      %s260 = sphi 0, %s258
      %s261 = sphi 0, %s260
      %s275 = sphi 0, %s261
      %s279 = sphi 0, %s279
      %s281 = sphi 0, %s279
      %s282 = sphi 0, %s281
      %s296 = sphi 0, %s282
      %s300 = sphi 0, %s300
      %s302 = sphi 0, %s300
      %s303 = sphi 0, %s302
      %s317 = sphi 0, %s303
      %s323 = sphi 0, %s325
      %s326 = sphi 0, %s323
      %s327 = sphi 0, %s326
      %s343 = sphi 0, %s327
      %s349 = sphi 0, %s351
      %s352 = sphi 0, %s349
      %s353 = sphi 0, %s352
      %s369 = sphi 0, %s353
    $region4: #{block_forward.1} parent=1 // loop_header_branch
      %33 = sbr.rel (%p31) target = $region8
    $region5: #{block_forward.1} parent=1 // loop_body
      %s35 = ssub.s32 %s30, 1
      %s36 = ssub.s32 %s30, 2
      %s37 = sadd.s32 %s30, 1
      %s38 = ssub.s32 %s30, %s37
      %p39 = scmp.eq.s32.totalorder %s38, 0
      %s41 = sadd.s32 %s40, 1
      %s42 = scalar_select %p39, %s40, %s41
      %p45 = pneg %p39
      %p46 = scmp.eq.s32.totalorder %s30, 1
      %p47 = por %p45, %p46
      %p48 = scmp.ne.s32.totalorder %s40, %s43
      %p49 = scmp.eq.s32.totalorder %s30, 0
      %p50 = por %p48, %p49
      %p51 = scmp.ne.s32.totalorder %s40, %s43
      %p52 = scmp.eq.s32.totalorder %s35, 1
      %p53 = por %p51, %p52
      %p54 = scmp.ne.s32.totalorder %s43, %s44
      %p55 = scmp.eq.s32.totalorder %s35, 0
      %p56 = por %p54, %p55
      %p57 = scmp.ne.s32.totalorder %s43, %s44
      %p58 = scmp.eq.s32.totalorder %s36, 1
      %p59 = por %p57, %p58
      %p61 = scmp.ne.s32.totalorder %s44, %s60
      %p62 = scmp.eq.s32.totalorder %s36, 0
      %p63 = por %p61, %p62
      %s64 = ssub.s32 %s30, %s37
      %p65 = scmp.eq.s32.totalorder %s64, 0
      %s67 = sadd.s32 %s66, 1
      %s68 = scalar_select %p65, %s66, %s67
      %p71 = pneg %p65
      %p72 = scmp.eq.s32.totalorder %s30, 1
      %p73 = por %p71, %p72
      %p74 = scmp.ne.s32.totalorder %s66, %s69
      %p75 = scmp.eq.s32.totalorder %s30, 0
      %p76 = por %p74, %p75
      %p77 = scmp.ne.s32.totalorder %s66, %s69
      %p78 = scmp.eq.s32.totalorder %s35, 1
      %p79 = por %p77, %p78
      %p80 = scmp.ne.s32.totalorder %s69, %s70
      %p81 = scmp.eq.s32.totalorder %s35, 0
      %p82 = por %p80, %p81
      %p83 = scmp.ne.s32.totalorder %s69, %s70
      %p84 = scmp.eq.s32.totalorder %s36, 1
      %p85 = por %p83, %p84
      %p87 = scmp.ne.s32.totalorder %s70, %s86
      %p88 = scmp.eq.s32.totalorder %s36, 0
      %p89 = por %p87, %p88
      %s91 = sadd.s32 %s90, 1
      %p94 = scmp.eq.s32.totalorder %s30, 1
      %p95 = scmp.ne.s32.totalorder %s90, %s92
      %p96 = scmp.eq.s32.totalorder %s30, 0
      %p97 = por %p95, %p96
      %p98 = scmp.ne.s32.totalorder %s90, %s92
      %p99 = scmp.eq.s32.totalorder %s35, 1
      %p100 = por %p98, %p99
      %p101 = scmp.ne.s32.totalorder %s92, %s93
      %p102 = scmp.eq.s32.totalorder %s35, 0
      %p103 = por %p101, %p102
      %p104 = scmp.ne.s32.totalorder %s92, %s93
      %p105 = scmp.eq.s32.totalorder %s36, 1
      %p106 = por %p104, %p105
      %p108 = scmp.ne.s32.totalorder %s93, %s107
      %p109 = scmp.eq.s32.totalorder %s36, 0
      %p110 = por %p108, %p109
      %s112 = sadd.s32 %s111, 1
      %p115 = scmp.eq.s32.totalorder %s30, 1
      %p116 = scmp.ne.s32.totalorder %s111, %s113
      %p117 = scmp.eq.s32.totalorder %s30, 0
      %p118 = por %p116, %p117
      %p119 = scmp.ne.s32.totalorder %s111, %s113
      %p120 = scmp.eq.s32.totalorder %s35, 1
      %p121 = por %p119, %p120
      %p122 = scmp.ne.s32.totalorder %s113, %s114
      %p123 = scmp.eq.s32.totalorder %s35, 0
      %p124 = por %p122, %p123
      %p125 = scmp.ne.s32.totalorder %s113, %s114
      %p126 = scmp.eq.s32.totalorder %s36, 1
      %p127 = por %p125, %p126
      %p129 = scmp.ne.s32.totalorder %s114, %s128
      %p130 = scmp.eq.s32.totalorder %s36, 0
      %p131 = por %p129, %p130
      %s133 = sadd.s32 %s132, 1
      %p136 = scmp.eq.s32.totalorder %s30, 1
      %p137 = scmp.ne.s32.totalorder %s132, %s134
      %p138 = scmp.eq.s32.totalorder %s30, 0
      %p139 = por %p137, %p138
      %p140 = scmp.ne.s32.totalorder %s132, %s134
      %p141 = scmp.eq.s32.totalorder %s35, 1
      %p142 = por %p140, %p141
      %p143 = scmp.ne.s32.totalorder %s134, %s135
      %p144 = scmp.eq.s32.totalorder %s35, 0
      %p145 = por %p143, %p144
      %p146 = scmp.ne.s32.totalorder %s134, %s135
      %p147 = scmp.eq.s32.totalorder %s36, 1
      %p148 = por %p146, %p147
      %p150 = scmp.ne.s32.totalorder %s135, %s149
      %p151 = scmp.eq.s32.totalorder %s36, 0
      %p152 = por %p150, %p151
      %s154 = sadd.s32 %s153, 1
      %p157 = scmp.eq.s32.totalorder %s30, 1
      %p158 = scmp.ne.s32.totalorder %s153, %s155
      %p159 = scmp.eq.s32.totalorder %s30, 0
      %p160 = por %p158, %p159
      %p161 = scmp.ne.s32.totalorder %s153, %s155
      %p162 = scmp.eq.s32.totalorder %s35, 1
      %p163 = por %p161, %p162
      %p164 = scmp.ne.s32.totalorder %s155, %s156
      %p165 = scmp.eq.s32.totalorder %s35, 0
      %p166 = por %p164, %p165
      %p167 = scmp.ne.s32.totalorder %s155, %s156
      %p168 = scmp.eq.s32.totalorder %s36, 1
      %p169 = por %p167, %p168
      %p171 = scmp.ne.s32.totalorder %s156, %s170
      %p172 = scmp.eq.s32.totalorder %s36, 0
      %p173 = por %p171, %p172
      %s175 = sadd.s32 %s174, 1
      %p178 = scmp.eq.s32.totalorder %s30, 1
      %p179 = scmp.ne.s32.totalorder %s174, %s176
      %p180 = scmp.eq.s32.totalorder %s30, 0
      %p181 = por %p179, %p180
      %p182 = scmp.ne.s32.totalorder %s174, %s176
      %p183 = scmp.eq.s32.totalorder %s35, 1
      %p184 = por %p182, %p183
      %p185 = scmp.ne.s32.totalorder %s176, %s177
      %p186 = scmp.eq.s32.totalorder %s35, 0
      %p187 = por %p185, %p186
      %p188 = scmp.ne.s32.totalorder %s176, %s177
      %p189 = scmp.eq.s32.totalorder %s36, 1
      %p190 = por %p188, %p189
      %p192 = scmp.ne.s32.totalorder %s177, %s191
      %p193 = scmp.eq.s32.totalorder %s36, 0
      %p194 = por %p192, %p193
      %s196 = sadd.s32 %s195, 1
      %p199 = scmp.eq.s32.totalorder %s30, 1
      %p200 = scmp.ne.s32.totalorder %s195, %s197
      %p201 = scmp.eq.s32.totalorder %s30, 0
      %p202 = por %p200, %p201
      %p203 = scmp.ne.s32.totalorder %s195, %s197
      %p204 = scmp.eq.s32.totalorder %s35, 1
      %p205 = por %p203, %p204
      %p206 = scmp.ne.s32.totalorder %s197, %s198
      %p207 = scmp.eq.s32.totalorder %s35, 0
      %p208 = por %p206, %p207
      %p209 = scmp.ne.s32.totalorder %s197, %s198
      %p210 = scmp.eq.s32.totalorder %s36, 1
      %p211 = por %p209, %p210
      %p213 = scmp.ne.s32.totalorder %s198, %s212
      %p214 = scmp.eq.s32.totalorder %s36, 0
      %p215 = por %p213, %p214
      %s217 = sadd.s32 %s216, 1
      %p220 = scmp.eq.s32.totalorder %s30, 1
      %p221 = scmp.ne.s32.totalorder %s216, %s218
      %p222 = scmp.eq.s32.totalorder %s30, 0
      %p223 = por %p221, %p222
      %p224 = scmp.ne.s32.totalorder %s216, %s218
      %p225 = scmp.eq.s32.totalorder %s35, 1
      %p226 = por %p224, %p225
      %p227 = scmp.ne.s32.totalorder %s218, %s219
      %p228 = scmp.eq.s32.totalorder %s35, 0
      %p229 = por %p227, %p228
      %p230 = scmp.ne.s32.totalorder %s218, %s219
      %p231 = scmp.eq.s32.totalorder %s36, 1
      %p232 = por %p230, %p231
      %p234 = scmp.ne.s32.totalorder %s219, %s233
      %p235 = scmp.eq.s32.totalorder %s36, 0
      %p236 = por %p234, %p235
      %s238 = sadd.s32 %s237, 1
      %p241 = scmp.eq.s32.totalorder %s30, 1
      %p242 = scmp.ne.s32.totalorder %s237, %s239
      %p243 = scmp.eq.s32.totalorder %s30, 0
      %p244 = por %p242, %p243
      %p245 = scmp.ne.s32.totalorder %s237, %s239
      %p246 = scmp.eq.s32.totalorder %s35, 1
      %p247 = por %p245, %p246
      %p248 = scmp.ne.s32.totalorder %s239, %s240
      %p249 = scmp.eq.s32.totalorder %s35, 0
      %p250 = por %p248, %p249
      %p251 = scmp.ne.s32.totalorder %s239, %s240
      %p252 = scmp.eq.s32.totalorder %s36, 1
      %p253 = por %p251, %p252
      %p255 = scmp.ne.s32.totalorder %s240, %s254
      %p256 = scmp.eq.s32.totalorder %s36, 0
      %p257 = por %p255, %p256
      %s259 = sadd.s32 %s258, 1
      %p262 = scmp.eq.s32.totalorder %s30, 1
      %p263 = scmp.ne.s32.totalorder %s258, %s260
      %p264 = scmp.eq.s32.totalorder %s30, 0
      %p265 = por %p263, %p264
      %p266 = scmp.ne.s32.totalorder %s258, %s260
      %p267 = scmp.eq.s32.totalorder %s35, 1
      %p268 = por %p266, %p267
      %p269 = scmp.ne.s32.totalorder %s260, %s261
      %p270 = scmp.eq.s32.totalorder %s35, 0
      %p271 = por %p269, %p270
      %p272 = scmp.ne.s32.totalorder %s260, %s261
      %p273 = scmp.eq.s32.totalorder %s36, 1
      %p274 = por %p272, %p273
      %p276 = scmp.ne.s32.totalorder %s261, %s275
      %p277 = scmp.eq.s32.totalorder %s36, 0
      %p278 = por %p276, %p277
      %s280 = sadd.s32 %s279, 1
      %p283 = scmp.eq.s32.totalorder %s30, 1
      %p284 = scmp.ne.s32.totalorder %s279, %s281
      %p285 = scmp.eq.s32.totalorder %s30, 0
      %p286 = por %p284, %p285
      %p287 = scmp.ne.s32.totalorder %s279, %s281
      %p288 = scmp.eq.s32.totalorder %s35, 1
      %p289 = por %p287, %p288
      %p290 = scmp.ne.s32.totalorder %s281, %s282
      %p291 = scmp.eq.s32.totalorder %s35, 0
      %p292 = por %p290, %p291
      %p293 = scmp.ne.s32.totalorder %s281, %s282
      %p294 = scmp.eq.s32.totalorder %s36, 1
      %p295 = por %p293, %p294
      %p297 = scmp.ne.s32.totalorder %s282, %s296
      %p298 = scmp.eq.s32.totalorder %s36, 0
      %p299 = por %p297, %p298
      %s301 = sadd.s32 %s300, 1
      %p304 = scmp.eq.s32.totalorder %s30, 1
      %p305 = scmp.ne.s32.totalorder %s300, %s302
      %p306 = scmp.eq.s32.totalorder %s30, 0
      %p307 = por %p305, %p306
      %p308 = scmp.ne.s32.totalorder %s300, %s302
      %p309 = scmp.eq.s32.totalorder %s35, 1
      %p310 = por %p308, %p309
      %p311 = scmp.ne.s32.totalorder %s302, %s303
      %p312 = scmp.eq.s32.totalorder %s35, 0
      %p313 = por %p311, %p312
      %p314 = scmp.ne.s32.totalorder %s302, %s303
      %p315 = scmp.eq.s32.totalorder %s36, 1
      %p316 = por %p314, %p315
      %p318 = scmp.ne.s32.totalorder %s303, %s317
      %p319 = scmp.eq.s32.totalorder %s36, 0
      %p320 = por %p318, %p319
      %s321 = ssub.s32 %s30, %s37
      %p322 = scmp.eq.s32.totalorder %s321, 0
      %s324 = sadd.s32 %s323, 1
      %s325 = scalar_select %p322, %s323, %s324
      %p328 = pneg %p322
      %p329 = scmp.eq.s32.totalorder %s30, 1
      %p330 = por %p328, %p329
      %p331 = scmp.ne.s32.totalorder %s323, %s326
      %p332 = scmp.eq.s32.totalorder %s30, 0
      %p333 = por %p331, %p332
      %p334 = scmp.ne.s32.totalorder %s323, %s326
      %p335 = scmp.eq.s32.totalorder %s35, 1
      %p336 = por %p334, %p335
      %p337 = scmp.ne.s32.totalorder %s326, %s327
      %p338 = scmp.eq.s32.totalorder %s35, 0
      %p339 = por %p337, %p338
      %p340 = scmp.ne.s32.totalorder %s326, %s327
      %p341 = scmp.eq.s32.totalorder %s36, 1
      %p342 = por %p340, %p341
      %p344 = scmp.ne.s32.totalorder %s327, %s343
      %p345 = scmp.eq.s32.totalorder %s36, 0
      %p346 = por %p344, %p345
      %s347 = ssub.s32 %s30, %s37
      %p348 = scmp.eq.s32.totalorder %s347, 0
      %s350 = sadd.s32 %s349, 1
      %s351 = scalar_select %p348, %s349, %s350
      %p354 = pneg %p348
      %p355 = scmp.eq.s32.totalorder %s30, 1
      %p356 = por %p354, %p355
      %p357 = scmp.ne.s32.totalorder %s349, %s352
      %p358 = scmp.eq.s32.totalorder %s30, 0
      %p359 = por %p357, %p358
      %p360 = scmp.ne.s32.totalorder %s349, %s352
      %p361 = scmp.eq.s32.totalorder %s35, 1
      %p362 = por %p360, %p361
      %p363 = scmp.ne.s32.totalorder %s352, %s353
      %p364 = scmp.eq.s32.totalorder %s35, 0
      %p365 = por %p363, %p364
      %p366 = scmp.ne.s32.totalorder %s352, %s353
      %p367 = scmp.eq.s32.totalorder %s36, 1
      %p368 = por %p366, %p367
      %p370 = scmp.ne.s32.totalorder %s353, %s369
      %p371 = scmp.eq.s32.totalorder %s36, 0
      %p372 = por %p370, %p371
      %p373 = scmp.le.s32.totalorder 1, %s30
      %p374 = scmp.lt.s32.totalorder %s30, 3
      %p375 = pnand %p373, %p374
      %p376 = pneg %p375
      // Predicated region
      $region9: #{block_forward.1} parent=5 // pred_check
        _
      $region10: #{block_forward.1} parent=5 // pred_check_branch
        %378 = sbr.rel (%p375) target = $region12
      $region11: #{block_forward.1} parent=5 // pred_region
        %s379 = ssub.s32 %s30, 1
        // Predicated region
        $region13: #{block_forward.1} parent=11 // pred_check
          %p380 = pneg %p103
        $region14: #{block_forward.1} parent=11 // pred_check_branch
          %382 = sbr.rel (%p380) target = $region16
        $region15: #{block_forward.1} parent=11 // pred_region
          _
        $region16: #{block_forward.1} parent=11 // pred_fallthru
          _
        // Predicated region
        $region17: #{block_forward.1} parent=11 // pred_check
          %p383 = pneg %p124
        $region18: #{block_forward.1} parent=11 // pred_check_branch
          %385 = sbr.rel (%p383) target = $region20
        $region19: #{block_forward.1} parent=11 // pred_region
          _
        $region20: #{block_forward.1} parent=11 // pred_fallthru
          _
        // Predicated region
        $region21: #{block_forward.1} parent=11 // pred_check
          %p386 = pneg %p145
        $region22: #{block_forward.1} parent=11 // pred_check_branch
          %388 = sbr.rel (%p386) target = $region24
        $region23: #{block_forward.1} parent=11 // pred_region
          _
        $region24: #{block_forward.1} parent=11 // pred_fallthru
          _
        // Predicated region
        $region25: #{block_forward.1} parent=11 // pred_check
          %p389 = pneg %p166
        $region26: #{block_forward.1} parent=11 // pred_check_branch
          %391 = sbr.rel (%p389) target = $region28
        $region27: #{block_forward.1} parent=11 // pred_region
          _
        $region28: #{block_forward.1} parent=11 // pred_fallthru
          _
        // Predicated region
        $region29: #{block_forward.1} parent=11 // pred_check
          %p392 = pneg %p187
        $region30: #{block_forward.1} parent=11 // pred_check_branch
          %394 = sbr.rel (%p392) target = $region32
        $region31: #{block_forward.1} parent=11 // pred_region
          _
        $region32: #{block_forward.1} parent=11 // pred_fallthru
          _
        // Predicated region
        $region33: #{block_forward.1} parent=11 // pred_check
          %p395 = pneg %p208
        $region34: #{block_forward.1} parent=11 // pred_check_branch
          %397 = sbr.rel (%p395) target = $region36
        $region35: #{block_forward.1} parent=11 // pred_region
          _
        $region36: #{block_forward.1} parent=11 // pred_fallthru
          _
        // Predicated region
        $region37: #{block_forward.1} parent=11 // pred_check
          %p398 = pneg %p229
        $region38: #{block_forward.1} parent=11 // pred_check_branch
          %400 = sbr.rel (%p398) target = $region40
        $region39: #{block_forward.1} parent=11 // pred_region
          _
        $region40: #{block_forward.1} parent=11 // pred_fallthru
          _
        // Predicated region
        $region41: #{block_forward.1} parent=11 // pred_check
          %p401 = pneg %p250
        $region42: #{block_forward.1} parent=11 // pred_check_branch
          %403 = sbr.rel (%p401) target = $region44
        $region43: #{block_forward.1} parent=11 // pred_region
          _
        $region44: #{block_forward.1} parent=11 // pred_fallthru
          _
        // Predicated region
        $region45: #{block_forward.1} parent=11 // pred_check
          %p404 = pneg %p271
        $region46: #{block_forward.1} parent=11 // pred_check_branch
          %406 = sbr.rel (%p404) target = $region48
        $region47: #{block_forward.1} parent=11 // pred_region
          _
        $region48: #{block_forward.1} parent=11 // pred_fallthru
          _
        // Predicated region
        $region49: #{block_forward.1} parent=11 // pred_check
          %p407 = pneg %p292
        $region50: #{block_forward.1} parent=11 // pred_check_branch
          %409 = sbr.rel (%p407) target = $region52
        $region51: #{block_forward.1} parent=11 // pred_region
          _
        $region52: #{block_forward.1} parent=11 // pred_fallthru
          _
        // Predicated region
        $region53: #{block_forward.1} parent=11 // pred_check
          %p410 = pneg %p313
        $region54: #{block_forward.1} parent=11 // pred_check_branch
          %412 = sbr.rel (%p410) target = $region56
        $region55: #{block_forward.1} parent=11 // pred_region
          _
        $region56: #{block_forward.1} parent=11 // pred_fallthru
          _
      $region12: #{block_forward.1} parent=5 // pred_fallthru
        _
      %p413 = scmp.lt.s32.totalorder %s30, 2
      // Predicated region
      $region57: #{block_forward.1} parent=5 // pred_check
        %p414 = pneg %p413
      $region58: #{block_forward.1} parent=5 // pred_check_branch
        %416 = sbr.rel (%p414) target = $region60
      $region59: #{block_forward.1} parent=5 // pred_region
        // Predicated region
        $region61: #{block_forward.1} parent=59 // pred_check
          %p417 = pneg %p50
        $region62: #{block_forward.1} parent=59 // pred_check_branch
          %419 = sbr.rel (%p417) target = $region64
        $region63: #{block_forward.1} parent=59 // pred_region
          %p420 = scmp.lt.s32.totalorder %s30, 1
          %s421 = scalar_select %p420, %s30, 1
          %s422 = smul.addr %s421, 3
          %s423 = smul.addr %s422, 8
          %s424 = scalar_lea.vmem %s0, %s423
        $region64: #{block_forward.1} parent=59 // pred_fallthru
          _
        // Predicated region
        $region65: #{block_forward.1} parent=59 // pred_check
          %p425 = pneg %p76
        $region66: #{block_forward.1} parent=59 // pred_check_branch
          %427 = sbr.rel (%p425) target = $region68
        $region67: #{block_forward.1} parent=59 // pred_region
          %s428 = sand.u32 %s66, 1
          %s429 = scalar_lea.sflag [#allocation3], %s428
          %s430 = sand.u32 %s66, 1
          %s431 = smul.addr %s430, 24
          %s432 = scalar_lea.vmem [#allocation2], %s431
          %s434 = ssub.s32 384, 384
          %435 = vsyncadd %s429, %s434
          %s436 = smul.addr %s30, 3
          %s437 = smul.addr %s436, 128
          %s438 = scalar_lea.hbm %s1, %s437
          %s439 = sshll.u32 %s432, 4
          %s440 = int_to_ptr.vmem [resolvable:$true] %s439
          %445 = dma.hbm_to_vmem [thread:$0]  %s438, 384, %s440, %s429, 128, 128, 8
        $region68: #{block_forward.1} parent=59 // pred_fallthru
          _
      $region60: #{block_forward.1} parent=5 // pred_fallthru
        _
      %p446 = scmp.le.s32.totalorder 1, %s30
      %p447 = scmp.lt.s32.totalorder %s30, 3
      %p448 = pnand %p446, %p447
      %p449 = pneg %p448
      // Predicated region
      $region69: #{block_forward.1} parent=5 // pred_check
        _
      $region70: #{block_forward.1} parent=5 // pred_check_branch
        %451 = sbr.rel (%p448) target = $region72
      $region71: #{block_forward.1} parent=5 // pred_region
        %s452 = ssub.s32 %s30, 1
        %s453 = sand.u32 %s69, 1
        %s454 = scalar_lea.sflag [#allocation3], %s453
        %s455 = sand.u32 %s69, 1
        %s456 = smul.addr %s455, 24
        %s457 = scalar_lea.vmem [#allocation2], %s456
        // Predicated region
        $region73: #{block_forward.1} parent=71 // pred_check
          %p458 = pneg %p82
        $region74: #{block_forward.1} parent=71 // pred_check_branch
          %460 = sbr.rel (%p458) target = $region76
        $region75: #{block_forward.1} parent=71 // pred_region
          %461 = dma.done %s454, 384
        $region76: #{block_forward.1} parent=71 // pred_fallthru
          _
        %p462 = scmp.lt.s32.totalorder %s35, 1
        %s463 = scalar_select %p462, %s35, 1
        %s464 = smul.addr %s463, 3
        %s465 = smul.addr %s464, 8
        %s466 = scalar_lea.vmem %s0, %s465
        %p467 = pneg %p56
        %p468 = pneg %p53
        %s469 = sand.u32 %s69, 1
        %s470 = scalar_lea.sflag [#allocation3], %s469
        %s471 = sand.u32 %s69, 1
        %s472 = smul.addr %s471, 24
        %s473 = scalar_lea.vmem [#allocation2], %s472
        %p474 = pneg %p82
        %p475 = pneg %p79
        %p476 = pneg %p103
        %p477 = pneg %p100
        %p478 = pneg %p124
        %p479 = pneg %p121
        %p480 = pneg %p145
        %p481 = pneg %p142
        %p482 = pneg %p166
        %p483 = pneg %p163
        %p484 = pneg %p187
        %p485 = pneg %p184
        %p486 = pneg %p208
        %p487 = pneg %p205
        %p488 = pneg %p229
        %p489 = pneg %p226
        %p490 = pneg %p250
        %p491 = pneg %p247
        %p492 = pneg %p271
        %p493 = pneg %p268
        %p494 = pneg %p292
        %p495 = pneg %p289
        %p496 = pneg %p313
        %p497 = pneg %p310
        %p498 = pneg %p339
        %p499 = pneg %p336
        %s500 = sand.u32 %s326, 1
        %s501 = scalar_lea.sflag [#allocation4], %s500
        %s502 = sand.u32 %s326, 1
        %s503 = smul.addr %s502, 24
        %s504 = scalar_lea.vmem [#allocation5], %s503
        %p505 = pneg %p365
        %p506 = pneg %p362
        %s507 = sand.u32 %s352, 1
        %s508 = scalar_lea.sflag [#allocation7], %s507
        %s509 = sand.u32 %s352, 1
        %s510 = smul.addr %s509, 24
        %s511 = scalar_lea.vmem [#allocation6], %s510
        %p512 = scmp.lt.s32.totalorder %s35, 1
        %s513 = scalar_select %p512, %s35, 1
        %s514 = smul.addr %s513, 3
        %s515 = smul.addr %s514, 8
        %s516 = scalar_lea.vmem %s0, %s515
        %v517 = vld [vmem:[%s516] sm:$0xff]
        %v518 = vld [vmem:[%s516 + $0x8] sm:$0xff]
        %v519 = vld [vmem:[%s516 + $0x10] sm:$0xff]
        %v520 = vld [vmem:[%s457] sm:$0xff]
        %v521 = vld [vmem:[%s457 + $0x8] sm:$0xff]
        %v522 = vld [vmem:[%s457 + $0x10] sm:$0xff]
        %v523 = vld [vmem:[%s2] sm:$0x1]
        %v524 = vld [vmem:[%s3] sm:$0x1]
        %v525 = vld [vmem:[%s7] sm:$0x1]
        %v526 = vld [vmem:[%s8] sm:$0x1]
        %v527 = vld [vmem:[%s4] sm:$0xff]
        %v528 = vld [vmem:[%s4 + $0x8] sm:$0xff]
        %v529 = vld [vmem:[%s4 + $0x10] sm:$0xff]
        %v530 = vld [vmem:[%s4 + $0x18] sm:$0xff]
        %v531 = vld [vmem:[%s4 + $0x20] sm:$0xff]
        %v532 = vld [vmem:[%s4 + $0x28] sm:$0xff]
        %v533 = vld [vmem:[%s4 + $0x30] sm:$0xff]
        %v534 = vld [vmem:[%s4 + $0x38] sm:$0xff]
        %v535 = vld [vmem:[%s4 + $0x40] sm:$0xff]
        %v536 = vld [vmem:[%s4 + $0x48] sm:$0xff]
        %v537 = vld [vmem:[%s4 + $0x50] sm:$0xff]
        %v538 = vld [vmem:[%s4 + $0x58] sm:$0xff]
        %v539 = vld [vmem:[%s4 + $0x60] sm:$0xff]
        %v540 = vld [vmem:[%s4 + $0x68] sm:$0xff]
        %v541 = vld [vmem:[%s4 + $0x70] sm:$0xff]
        %v542 = vld [vmem:[%s4 + $0x78] sm:$0xff]
        %vm543 = vcmask 523264
        %v544 = vsel %vm543, %v517, 0.0
        %545 = vadd.xlane.f32.xlu0 %v544
        %v546 = vpop.xlane.xlu0 %545
        %v547 = vsel %vm543, %v518, 0.0
        %548 = vadd.xlane.f32.xlu0 %v547
        %v549 = vpop.xlane.xlu0 %548
        %v550 = vsel %vm543, %v519, 0.0
        %551 = vadd.xlane.f32.xlu0 %v550
        %v552 = vpop.xlane.xlu0 %551
        %v553 = vrcp.pop 64.0
        %v554 = vmul.f32 %v546, %v553
        %v555 = vmul.f32 %v549, %v553
        %v556 = vmul.f32 %v552, %v553
        %v557 = vsub.f32 %v517, %v554
        %v558 = vsub.f32 %v518, %v555
        %v559 = vsub.f32 %v519, %v556
        %v560 = vmul.f32 %v557, %v557
        %v561 = vmul.f32 %v558, %v558
        %v562 = vmul.f32 %v559, %v559
        %v563 = vsel %vm543, %v560, 0.0
        %564 = vadd.xlane.f32.xlu0 %v563
        %v565 = vpop.xlane.xlu0 %564
        %v566 = vsel %vm543, %v561, 0.0
        %567 = vadd.xlane.f32.xlu0 %v566
        %v568 = vpop.xlane.xlu0 %567
        %v569 = vsel %vm543, %v562, 0.0
        %570 = vadd.xlane.f32.xlu0 %v569
        %v571 = vpop.xlane.xlu0 %570
        %v572 = vmul.f32 %v565, %v553
        %v573 = vmul.f32 %v568, %v553
        %v574 = vmul.f32 %v571, %v553
        %v575 = vadd.f32 %v572, 1e-05
        %v576 = vadd.f32 %v573, 1e-05
        %v577 = vadd.f32 %v574, 1e-05
        %v578 = vrsqrt.pop %v575
        %v579 = vrsqrt.pop %v576
        %v580 = vrsqrt.pop %v577
        %v581 = vmul.f32 %v557, %v578
        %v582 = vmul.f32 %v558, %v579
        %v583 = vmul.f32 %v559, %v580
        %v585 = vlaneseq
        %v586 = vshrl.u32 %v585, 7
        %v587 = vsub.s32 0, %v586
        %v588 = vrot.slane %v523, %v587
        %v590 = vmul.f32 %v581, %v588
        %v591 = vmul.f32 %v582, %v588
        %v592 = vmul.f32 %v583, %v588
        %v594 = vlaneseq
        %v595 = vshrl.u32 %v594, 7
        %v596 = vsub.s32 0, %v595
        %v597 = vrot.slane %v524, %v596
        %v599 = vadd.f32 %v590, %v597
        %v600 = vadd.f32 %v591, %v597
        %v601 = vadd.f32 %v592, %v597
        %v602 = vsel %vm543, %v520, 0.0
        %603 = vadd.xlane.f32.xlu0 %v602
        %v604 = vpop.xlane.xlu0 %603
        %v605 = vsel %vm543, %v521, 0.0
        %606 = vadd.xlane.f32.xlu0 %v605
        %v607 = vpop.xlane.xlu0 %606
        %v608 = vsel %vm543, %v522, 0.0
        %609 = vadd.xlane.f32.xlu0 %v608
        %v610 = vpop.xlane.xlu0 %609
        %v611 = vmul.f32 %v604, %v553
        %v612 = vmul.f32 %v607, %v553
        %v613 = vmul.f32 %v610, %v553
        %v614 = vsub.f32 %v520, %v611
        %v615 = vsub.f32 %v521, %v612
        %v616 = vsub.f32 %v522, %v613
        %v617 = vmul.f32 %v614, %v614
        %v618 = vmul.f32 %v615, %v615
        %v619 = vmul.f32 %v616, %v616
        %v620 = vsel %vm543, %v617, 0.0
        %621 = vadd.xlane.f32.xlu0 %v620
        %v622 = vpop.xlane.xlu0 %621
        %v623 = vsel %vm543, %v618, 0.0
        %624 = vadd.xlane.f32.xlu0 %v623
        %v625 = vpop.xlane.xlu0 %624
        %v626 = vsel %vm543, %v619, 0.0
        %627 = vadd.xlane.f32.xlu0 %v626
        %v628 = vpop.xlane.xlu0 %627
        %v629 = vmul.f32 %v622, %v553
        %v630 = vmul.f32 %v625, %v553
        %v631 = vmul.f32 %v628, %v553
        %v632 = vadd.f32 %v629, 1e-05
        %v633 = vadd.f32 %v630, 1e-05
        %v634 = vadd.f32 %v631, 1e-05
        %v635 = vrsqrt.pop %v632
        %v636 = vrsqrt.pop %v633
        %v637 = vrsqrt.pop %v634
        %v638 = vmul.f32 %v614, %v635
        %v639 = vmul.f32 %v615, %v636
        %v640 = vmul.f32 %v616, %v637
        %v641 = vmul.f32 %v638, %v588
        %v642 = vmul.f32 %v639, %v588
        %v643 = vmul.f32 %v640, %v588
        %v644 = vadd.f32 %v641, %v597
        %v645 = vadd.f32 %v642, %v597
        %v646 = vadd.f32 %v643, %v597
        %v648 = vsel %vm543, %v599, 0
        %v651 = vsel %vm543, %v600, 0
        %v654 = vsel %vm543, %v601, 0
        %656 = vmatprep.subr.mxu0 %v528
        %657 = vmatpush1.msra.mxu0 %v527
        %658 = vmatprep.subr.mxu0 %v530
        %659 = vmatpush1.msra.mxu0 %v529
        %660 = vmatprep.subr.mxu0 %v532
        %661 = vmatpush1.msra.mxu0 %v531
        %662 = vmatprep.subr.mxu0 %v534
        %663 = vmatpush1.msra.mxu0 %v533
        %664 = vmatprep.subr.mxu0 %v536
        %665 = vmatpush1.msra.mxu0 %v535
        %666 = vmatprep.subr.mxu0 %v538
        %667 = vmatpush1.msra.mxu0 %v537
        %668 = vmatprep.subr.mxu0 %v540
        %669 = vmatpush1.msra.mxu0 %v539
        %670 = vmatprep.subr.mxu0 %v542
        %671 = vmatpush1.msra.mxu0 %v541
        %672 = vmatprep.subr.mxu0 0.0
        %673 = vmatpush1.msra.mxu0 0.0
        %674 = vmatprep.subr.mxu0 0.0
        %675 = vmatpush1.msra.mxu0 0.0
        %676 = vmatprep.subr.mxu0 0.0
        %677 = vmatpush1.msra.mxu0 0.0
        %678 = vmatprep.subr.mxu0 0.0
        %679 = vmatpush1.msra.mxu0 0.0
        %680 = vmatprep.subr.mxu0 0.0
        %681 = vmatpush1.msra.mxu0 0.0
        %682 = vmatprep.subr.mxu0 0.0
        %683 = vmatpush1.msra.mxu0 0.0
        %684 = vmatprep.subr.mxu0 0.0
        %685 = vmatpush1.msra.mxu0 0.0
        %686 = vmatprep.subr.mxu0 0.0
        %687 = vmatpush1.msra.mxu0 0.0
        %688 = vmatprep.subr.mxu0 0.0
        %689 = vmatpush1.msra.mxu0 0.0
        %690 = vmatprep.subr.mxu0 0.0
        %691 = vmatpush1.msra.mxu0 0.0
        %692 = vmatprep.subr.mxu0 0.0
        %693 = vmatpush1.msra.mxu0 0.0
        %694 = vmatprep.subr.mxu0 0.0
        %695 = vmatpush1.msra.mxu0 0.0
        %696 = vmatprep.subr.mxu0 0.0
        %697 = vmatpush1.msra.mxu0 0.0
        %698 = vmatprep.subr.mxu0 0.0
        %699 = vmatpush1.msra.mxu0 0.0
        %700 = vmatprep.subr.mxu0 0.0
        %701 = vmatpush1.msra.mxu0 0.0
        %702 = vmatprep.subr.mxu0 0.0
        %703 = vmatpush1.msra.mxu0 0.0
        %704 = vmatprep.subr.mxu0 0.0
        %705 = vmatpush1.msra.mxu0 0.0
        %706 = vmatprep.subr.mxu0 0.0
        %707 = vmatpush1.msra.mxu0 0.0
        %708 = vmatprep.subr.mxu0 0.0
        %709 = vmatpush1.msra.mxu0 0.0
        %710 = vmatprep.subr.mxu0 0.0
        %711 = vmatpush1.msra.mxu0 0.0
        %712 = vmatprep.subr.mxu0 0.0
        %713 = vmatpush1.msra.mxu0 0.0
        %714 = vmatprep.subr.mxu0 0.0
        %715 = vmatpush1.msra.mxu0 0.0
        %716 = vmatprep.subr.mxu0 0.0
        %717 = vmatpush1.msra.mxu0 0.0
        %718 = vmatprep.subr.mxu0 0.0
        %719 = vmatpush1.msra.mxu0 0.0
        %720 = vmatprep.mubr.f32.mxu0 0.0
        %721 = vmatmul.mubr.f32.gmra.mrb[0].mxu0 %v648
        %v722 = vpop.f32.mrb[0].mxu0
        %v723 = vadd.f32 0.0, %v722
        %v724 = vpop.f32.mrb[0].mxu0
        %v725 = vadd.f32 0.0, %v724
        %726 = vmatprep.mubr.f32.mxu0 0.0
        %727 = vmatmul.mubr.f32.gmra.mrb[0].mxu0 %v651
        %v728 = vpop.f32.mrb[0].mxu0
        %v729 = vadd.f32 0.0, %v728
        %v730 = vpop.f32.mrb[0].mxu0
        %v731 = vadd.f32 0.0, %v730
        %732 = vmatprep.mubr.f32.mxu0 0.0
        %733 = vmatmul.mubr.f32.gmra.mrb[0].mxu0 %v654
        %v734 = vpop.f32.mrb[0].mxu0
        %v735 = vadd.f32 0.0, %v734
        %v736 = vpop.f32.mrb[0].mxu0
        %v737 = vadd.f32 0.0, %v736
        %738 = vdwg.mxu0
        %v740 = vsel %vm543, %v644, 0
        %v743 = vsel %vm543, %v645, 0
        %v746 = vsel %vm543, %v646, 0
        %748 = vmatprep.subr.mxu0 %v528
        %749 = vmatpush1.msra.mxu0 %v527
        %750 = vmatprep.subr.mxu0 %v530
        %751 = vmatpush1.msra.mxu0 %v529
        %752 = vmatprep.subr.mxu0 %v532
        %753 = vmatpush1.msra.mxu0 %v531
        %754 = vmatprep.subr.mxu0 %v534
        %755 = vmatpush1.msra.mxu0 %v533
        %756 = vmatprep.subr.mxu0 %v536
        %757 = vmatpush1.msra.mxu0 %v535
        %758 = vmatprep.subr.mxu0 %v538
        %759 = vmatpush1.msra.mxu0 %v537
        %760 = vmatprep.subr.mxu0 %v540
        %761 = vmatpush1.msra.mxu0 %v539
        %762 = vmatprep.subr.mxu0 %v542
        %763 = vmatpush1.msra.mxu0 %v541
        %764 = vmatprep.subr.mxu0 0.0
        %765 = vmatpush1.msra.mxu0 0.0
        %766 = vmatprep.subr.mxu0 0.0
        %767 = vmatpush1.msra.mxu0 0.0
        %768 = vmatprep.subr.mxu0 0.0
        %769 = vmatpush1.msra.mxu0 0.0
        %770 = vmatprep.subr.mxu0 0.0
        %771 = vmatpush1.msra.mxu0 0.0
        %772 = vmatprep.subr.mxu0 0.0
        %773 = vmatpush1.msra.mxu0 0.0
        %774 = vmatprep.subr.mxu0 0.0
        %775 = vmatpush1.msra.mxu0 0.0
        %776 = vmatprep.subr.mxu0 0.0
        %777 = vmatpush1.msra.mxu0 0.0
        %778 = vmatprep.subr.mxu0 0.0
        %779 = vmatpush1.msra.mxu0 0.0
        %780 = vmatprep.subr.mxu0 0.0
        %781 = vmatpush1.msra.mxu0 0.0
        %782 = vmatprep.subr.mxu0 0.0
        %783 = vmatpush1.msra.mxu0 0.0
        %784 = vmatprep.subr.mxu0 0.0
        %785 = vmatpush1.msra.mxu0 0.0
        %786 = vmatprep.subr.mxu0 0.0
        %787 = vmatpush1.msra.mxu0 0.0
        %788 = vmatprep.subr.mxu0 0.0
        %789 = vmatpush1.msra.mxu0 0.0
        %790 = vmatprep.subr.mxu0 0.0
        %791 = vmatpush1.msra.mxu0 0.0
        %792 = vmatprep.subr.mxu0 0.0
        %793 = vmatpush1.msra.mxu0 0.0
        %794 = vmatprep.subr.mxu0 0.0
        %795 = vmatpush1.msra.mxu0 0.0
        %796 = vmatprep.subr.mxu0 0.0
        %797 = vmatpush1.msra.mxu0 0.0
        %798 = vmatprep.subr.mxu0 0.0
        %799 = vmatpush1.msra.mxu0 0.0
        %800 = vmatprep.subr.mxu0 0.0
        %801 = vmatpush1.msra.mxu0 0.0
        %802 = vmatprep.subr.mxu0 0.0
        %803 = vmatpush1.msra.mxu0 0.0
        %804 = vmatprep.subr.mxu0 0.0
        %805 = vmatpush1.msra.mxu0 0.0
        %806 = vmatprep.subr.mxu0 0.0
        %807 = vmatpush1.msra.mxu0 0.0
        %808 = vmatprep.subr.mxu0 0.0
        %809 = vmatpush1.msra.mxu0 0.0
        %810 = vmatprep.subr.mxu0 0.0
        %811 = vmatpush1.msra.mxu0 0.0
        %812 = vmatprep.mubr.f32.mxu0 0.0
        %813 = vmatmul.mubr.f32.gmra.mrb[0].mxu0 %v740
        %v814 = vpop.f32.mrb[0].mxu0
        %v815 = vadd.f32 0.0, %v814
        %v816 = vpop.f32.mrb[0].mxu0
        %v817 = vadd.f32 0.0, %v816
        %818 = vmatprep.mubr.f32.mxu0 0.0
        %819 = vmatmul.mubr.f32.gmra.mrb[0].mxu0 %v743
        %v820 = vpop.f32.mrb[0].mxu0
        %v821 = vadd.f32 0.0, %v820
        %v822 = vpop.f32.mrb[0].mxu0
        %v823 = vadd.f32 0.0, %v822
        %824 = vmatprep.mubr.f32.mxu0 0.0
        %825 = vmatmul.mubr.f32.gmra.mrb[0].mxu0 %v746
        %v826 = vpop.f32.mrb[0].mxu0
        %v827 = vadd.f32 0.0, %v826
        %v828 = vpop.f32.mrb[0].mxu0
        %v829 = vadd.f32 0.0, %v828
        %830 = vdwg.mxu0
        %832 = vrot.lane.b32.xlu0 %v723, 64
        %v833 = vpop.permute.xlu0 %832
        %vm834 = vcmask 64512
        %v835 = vsel %vm834, %v723, 0
        %v837 = vsel %vm834, %v833, 0
        %839 = vmatprep.subr.mxu0 0.0
        %840 = vmatpush1.xpose.msra.mxu0 %v837
        %841 = vmatprep.subr.mxu0 0.0
        %842 = vmatpush1.xpose.msra.mxu0 0.0
        %843 = vmatprep.subr.mxu0 0.0
        %844 = vmatpush1.xpose.msra.mxu0 0.0
        %845 = vmatprep.subr.mxu0 0.0
        %846 = vmatpush1.xpose.msra.mxu0 0.0
        %847 = vmatprep.subr.mxu0 0.0
        %848 = vmatpush1.xpose.msra.mxu0 0.0
        %849 = vmatprep.subr.mxu0 0.0
        %850 = vmatpush1.xpose.msra.mxu0 0.0
        %851 = vmatprep.subr.mxu0 0.0
        %852 = vmatpush1.xpose.msra.mxu0 0.0
        %853 = vmatprep.subr.mxu0 0.0
        %854 = vmatpush1.xpose.msra.mxu0 0.0
        %855 = vmatprep.subr.mxu0 0.0
        %856 = vmatpush1.xpose.msra.mxu0 0.0
        %857 = vmatprep.subr.mxu0 0.0
        %858 = vmatpush1.xpose.msra.mxu0 0.0
        %859 = vmatprep.subr.mxu0 0.0
        %860 = vmatpush1.xpose.msra.mxu0 0.0
        %861 = vmatprep.subr.mxu0 0.0
        %862 = vmatpush1.xpose.msra.mxu0 0.0
        %863 = vmatprep.subr.mxu0 0.0
        %864 = vmatpush1.xpose.msra.mxu0 0.0
        %865 = vmatprep.subr.mxu0 0.0
        %866 = vmatpush1.xpose.msra.mxu0 0.0
        %867 = vmatprep.subr.mxu0 0.0
        %868 = vmatpush1.xpose.msra.mxu0 0.0
        %869 = vmatprep.subr.mxu0 0.0
        %870 = vmatpush1.xpose.msra.mxu0 0.0
        %871 = vmatprep.subr.mxu0 0.0
        %872 = vmatpush1.xpose.msra.mxu0 0.0
        %873 = vmatprep.subr.mxu0 0.0
        %874 = vmatpush1.xpose.msra.mxu0 0.0
        %875 = vmatprep.subr.mxu0 0.0
        %876 = vmatpush1.xpose.msra.mxu0 0.0
        %877 = vmatprep.subr.mxu0 0.0
        %878 = vmatpush1.xpose.msra.mxu0 0.0
        %879 = vmatprep.subr.mxu0 0.0
        %880 = vmatpush1.xpose.msra.mxu0 0.0
        %881 = vmatprep.subr.mxu0 0.0
        %882 = vmatpush1.xpose.msra.mxu0 0.0
        %883 = vmatprep.subr.mxu0 0.0
        %884 = vmatpush1.xpose.msra.mxu0 0.0
        %885 = vmatprep.subr.mxu0 0.0
        %886 = vmatpush1.xpose.msra.mxu0 0.0
        %887 = vmatprep.subr.mxu0 0.0
        %888 = vmatpush1.xpose.msra.mxu0 0.0
        %889 = vmatprep.subr.mxu0 0.0
        %890 = vmatpush1.xpose.msra.mxu0 0.0
        %891 = vmatprep.subr.mxu0 0.0
        %892 = vmatpush1.xpose.msra.mxu0 0.0
        %893 = vmatprep.subr.mxu0 0.0
        %894 = vmatpush1.xpose.msra.mxu0 0.0
        %895 = vmatprep.subr.mxu0 0.0
        %896 = vmatpush1.xpose.msra.mxu0 0.0
        %897 = vmatprep.subr.mxu0 0.0
        %898 = vmatpush1.xpose.msra.mxu0 0.0
        %899 = vmatprep.subr.mxu0 0.0
        %900 = vmatpush1.xpose.msra.mxu0 0.0
        %901 = vmatprep.subr.mxu0 0.0
        %902 = vmatpush1.xpose.msra.mxu0 0.0
        %903 = vmatprep.mubr.f32.mxu0 0.0
        %904 = vmatmul.mubr.f32.gmra.mrb[0].mxu0 %v835
        %v905 = vpop.f32.mrb[0].mxu0
        %v906 = vadd.f32 0.0, %v905
        %v907 = vpop.f32.mrb[0].mxu0
        %908 = vdwg.mxu0
        %v909 = vmul.f32 %v906, 0.35355338
        %v910 = vsel %vm834, %v909, -inf
        %911 = vmax.xlane.f32.xlu0 %v910
        %v912 = vpop.xlane.xlu0 %911
        %v913 = vsub.f32 %v909, %v912
        %v914 = vmul.f32 %v913, 1.442695
        %v915 = vpow.pop %v914
        %v916 = vsel %vm834, %v915, 0.0
        %917 = vadd.xlane.f32.xlu0 %v916
        %v918 = vpop.xlane.xlu0 %917
        %v919 = vrcp.pop %v918
        %v920 = vmul.f32 %v915, %v919
        %v922 = vsel %vm834, %v920, 0
        %924 = vmatprep.subr.mxu0 0.0
        %925 = vmatpush1.msra.mxu0 %v725
        %926 = vmatprep.subr.mxu0 0.0
        %927 = vmatpush1.msra.mxu0 0.0
        %928 = vmatprep.subr.mxu0 0.0
        %929 = vmatpush1.msra.mxu0 0.0
        %930 = vmatprep.subr.mxu0 0.0
        %931 = vmatpush1.msra.mxu0 0.0
        %932 = vmatprep.subr.mxu0 0.0
        %933 = vmatpush1.msra.mxu0 0.0
        %934 = vmatprep.subr.mxu0 0.0
        %935 = vmatpush1.msra.mxu0 0.0
        %936 = vmatprep.subr.mxu0 0.0
        %937 = vmatpush1.msra.mxu0 0.0
        %938 = vmatprep.subr.mxu0 0.0
        %939 = vmatpush1.msra.mxu0 0.0
        %940 = vmatprep.subr.mxu0 0.0
        %941 = vmatpush1.msra.mxu0 0.0
        %942 = vmatprep.subr.mxu0 0.0
        %943 = vmatpush1.msra.mxu0 0.0
        %944 = vmatprep.subr.mxu0 0.0
        %945 = vmatpush1.msra.mxu0 0.0
        %946 = vmatprep.subr.mxu0 0.0
        %947 = vmatpush1.msra.mxu0 0.0
        %948 = vmatprep.subr.mxu0 0.0
        %949 = vmatpush1.msra.mxu0 0.0
        %950 = vmatprep.subr.mxu0 0.0
        %951 = vmatpush1.msra.mxu0 0.0
        %952 = vmatprep.subr.mxu0 0.0
        %953 = vmatpush1.msra.mxu0 0.0
        %954 = vmatprep.subr.mxu0 0.0
        %955 = vmatpush1.msra.mxu0 0.0
        %956 = vmatprep.subr.mxu0 0.0
        %957 = vmatpush1.msra.mxu0 0.0
        %958 = vmatprep.subr.mxu0 0.0
        %959 = vmatpush1.msra.mxu0 0.0
        %960 = vmatprep.subr.mxu0 0.0
        %961 = vmatpush1.msra.mxu0 0.0
        %962 = vmatprep.subr.mxu0 0.0
        %963 = vmatpush1.msra.mxu0 0.0
        %964 = vmatprep.subr.mxu0 0.0
        %965 = vmatpush1.msra.mxu0 0.0
        %966 = vmatprep.subr.mxu0 0.0
        %967 = vmatpush1.msra.mxu0 0.0
        %968 = vmatprep.subr.mxu0 0.0
        %969 = vmatpush1.msra.mxu0 0.0
        %970 = vmatprep.subr.mxu0 0.0
        %971 = vmatpush1.msra.mxu0 0.0
        %972 = vmatprep.subr.mxu0 0.0
        %973 = vmatpush1.msra.mxu0 0.0
        %974 = vmatprep.subr.mxu0 0.0
        %975 = vmatpush1.msra.mxu0 0.0
        %976 = vmatprep.subr.mxu0 0.0
        %977 = vmatpush1.msra.mxu0 0.0
        %978 = vmatprep.subr.mxu0 0.0
        %979 = vmatpush1.msra.mxu0 0.0
        %980 = vmatprep.subr.mxu0 0.0
        %981 = vmatpush1.msra.mxu0 0.0
        %982 = vmatprep.subr.mxu0 0.0
        %983 = vmatpush1.msra.mxu0 0.0
        %984 = vmatprep.subr.mxu0 0.0
        %985 = vmatpush1.msra.mxu0 0.0
        %986 = vmatprep.subr.mxu0 0.0
        %987 = vmatpush1.msra.mxu0 0.0
        %988 = vmatprep.mubr.f32.mxu0 0.0
        %989 = vmatmul.mubr.f32.gmra.mrb[0].mxu0 %v922
        %v990 = vpop.f32.mrb[0].mxu0
        %v991 = vadd.f32 0.0, %v990
        %v992 = vpop.f32.mrb[0].mxu0
        %993 = vdwg.mxu0
        %994 = vrot.lane.b32.xlu0 %v723, 120
        %v995 = vpop.permute.xlu0 %994
        %996 = vrot.lane.b32.xlu0 %v723, 56
        %v997 = vpop.permute.xlu0 %996
        %v998 = vsel %vm834, %v995, 0
        %v1000 = vsel %vm834, %v997, 0
        %1002 = vmatprep.subr.mxu0 0.0
        %1003 = vmatpush1.xpose.msra.mxu0 %v1000
        %1004 = vmatprep.subr.mxu0 0.0
        %1005 = vmatpush1.xpose.msra.mxu0 0.0
        %1006 = vmatprep.subr.mxu0 0.0
        %1007 = vmatpush1.xpose.msra.mxu0 0.0
        %1008 = vmatprep.subr.mxu0 0.0
        %1009 = vmatpush1.xpose.msra.mxu0 0.0
        %1010 = vmatprep.subr.mxu0 0.0
        %1011 = vmatpush1.xpose.msra.mxu0 0.0
        %1012 = vmatprep.subr.mxu0 0.0
        %1013 = vmatpush1.xpose.msra.mxu0 0.0
        %1014 = vmatprep.subr.mxu0 0.0
        %1015 = vmatpush1.xpose.msra.mxu0 0.0
        %1016 = vmatprep.subr.mxu0 0.0
        %1017 = vmatpush1.xpose.msra.mxu0 0.0
        %1018 = vmatprep.subr.mxu0 0.0
        %1019 = vmatpush1.xpose.msra.mxu0 0.0
        %1020 = vmatprep.subr.mxu0 0.0
        %1021 = vmatpush1.xpose.msra.mxu0 0.0
        %1022 = vmatprep.subr.mxu0 0.0
        %1023 = vmatpush1.xpose.msra.mxu0 0.0
        %1024 = vmatprep.subr.mxu0 0.0
        %1025 = vmatpush1.xpose.msra.mxu0 0.0
        %1026 = vmatprep.subr.mxu0 0.0
        %1027 = vmatpush1.xpose.msra.mxu0 0.0
        %1028 = vmatprep.subr.mxu0 0.0
        %1029 = vmatpush1.xpose.msra.mxu0 0.0
        %1030 = vmatprep.subr.mxu0 0.0
        %1031 = vmatpush1.xpose.msra.mxu0 0.0
        %1032 = vmatprep.subr.mxu0 0.0
        %1033 = vmatpush1.xpose.msra.mxu0 0.0
        %1034 = vmatprep.subr.mxu0 0.0
        %1035 = vmatpush1.xpose.msra.mxu0 0.0
        %1036 = vmatprep.subr.mxu0 0.0
        %1037 = vmatpush1.xpose.msra.mxu0 0.0
        %1038 = vmatprep.subr.mxu0 0.0
        %1039 = vmatpush1.xpose.msra.mxu0 0.0
        %1040 = vmatprep.subr.mxu0 0.0
        %1041 = vmatpush1.xpose.msra.mxu0 0.0
        %1042 = vmatprep.subr.mxu0 0.0
        %1043 = vmatpush1.xpose.msra.mxu0 0.0
        %1044 = vmatprep.subr.mxu0 0.0
        %1045 = vmatpush1.xpose.msra.mxu0 0.0
        %1046 = vmatprep.subr.mxu0 0.0
        %1047 = vmatpush1.xpose.msra.mxu0 0.0
        %1048 = vmatprep.subr.mxu0 0.0
        %1049 = vmatpush1.xpose.msra.mxu0 0.0
        %1050 = vmatprep.subr.mxu0 0.0
        %1051 = vmatpush1.xpose.msra.mxu0 0.0
        %1052 = vmatprep.subr.mxu0 0.0
        %1053 = vmatpush1.xpose.msra.mxu0 0.0
        %1054 = vmatprep.subr.mxu0 0.0
        %1055 = vmatpush1.xpose.msra.mxu0 0.0
        %1056 = vmatprep.subr.mxu0 0.0
        %1057 = vmatpush1.xpose.msra.mxu0 0.0
        %1058 = vmatprep.subr.mxu0 0.0
        %1059 = vmatpush1.xpose.msra.mxu0 0.0
        %1060 = vmatprep.subr.mxu0 0.0
        %1061 = vmatpush1.xpose.msra.mxu0 0.0
        %1062 = vmatprep.subr.mxu0 0.0
        %1063 = vmatpush1.xpose.msra.mxu0 0.0
        %1064 = vmatprep.subr.mxu0 0.0
        %1065 = vmatpush1.xpose.msra.mxu0 0.0
        %1066 = vmatprep.mubr.f32.mxu0 0.0
        %1067 = vmatmul.mubr.f32.gmra.mrb[0].mxu0 %v998
        %v1068 = vpop.f32.mrb[0].mxu0
        %v1069 = vadd.f32 0.0, %v1068
        %v1070 = vpop.f32.mrb[0].mxu0
        %1071 = vdwg.mxu0
        %v1072 = vmul.f32 %v1069, 0.35355338
        %v1073 = vsel %vm834, %v1072, -inf
        %1074 = vmax.xlane.f32.xlu0 %v1073
        %v1075 = vpop.xlane.xlu0 %1074
        %v1076 = vsub.f32 %v1072, %v1075
        %v1077 = vmul.f32 %v1076, 1.442695
        %v1078 = vpow.pop %v1077
        %v1079 = vsel %vm834, %v1078, 0.0
        %1080 = vadd.xlane.f32.xlu0 %v1079
        %v1081 = vpop.xlane.xlu0 %1080
        %v1082 = vrcp.pop %v1081
        %v1083 = vmul.f32 %v1078, %v1082
        %1085 = vrot.lane.b32.xlu0 %v725, 120
        %v1086 = vpop.permute.xlu0 %1085
        %v1089 = vsel %vm834, %v1083, 0
        %1091 = vmatprep.subr.mxu0 0.0
        %1092 = vmatpush1.msra.mxu0 %v1086
        %1093 = vmatprep.subr.mxu0 0.0
        %1094 = vmatpush1.msra.mxu0 0.0
        %1095 = vmatprep.subr.mxu0 0.0
        %1096 = vmatpush1.msra.mxu0 0.0
        %1097 = vmatprep.subr.mxu0 0.0
        %1098 = vmatpush1.msra.mxu0 0.0
        %1099 = vmatprep.subr.mxu0 0.0
        %1100 = vmatpush1.msra.mxu0 0.0
        %1101 = vmatprep.subr.mxu0 0.0
        %1102 = vmatpush1.msra.mxu0 0.0
        %1103 = vmatprep.subr.mxu0 0.0
        %1104 = vmatpush1.msra.mxu0 0.0
        %1105 = vmatprep.subr.mxu0 0.0
        %1106 = vmatpush1.msra.mxu0 0.0
        %1107 = vmatprep.subr.mxu0 0.0
        %1108 = vmatpush1.msra.mxu0 0.0
        %1109 = vmatprep.subr.mxu0 0.0
        %1110 = vmatpush1.msra.mxu0 0.0
        %1111 = vmatprep.subr.mxu0 0.0
        %1112 = vmatpush1.msra.mxu0 0.0
        %1113 = vmatprep.subr.mxu0 0.0
        %1114 = vmatpush1.msra.mxu0 0.0
        %1115 = vmatprep.subr.mxu0 0.0
        %1116 = vmatpush1.msra.mxu0 0.0
        %1117 = vmatprep.subr.mxu0 0.0
        %1118 = vmatpush1.msra.mxu0 0.0
        %1119 = vmatprep.subr.mxu0 0.0
        %1120 = vmatpush1.msra.mxu0 0.0
        %1121 = vmatprep.subr.mxu0 0.0
        %1122 = vmatpush1.msra.mxu0 0.0
        %1123 = vmatprep.subr.mxu0 0.0
        %1124 = vmatpush1.msra.mxu0 0.0
        %1125 = vmatprep.subr.mxu0 0.0
        %1126 = vmatpush1.msra.mxu0 0.0
        %1127 = vmatprep.subr.mxu0 0.0
        %1128 = vmatpush1.msra.mxu0 0.0
        %1129 = vmatprep.subr.mxu0 0.0
        %1130 = vmatpush1.msra.mxu0 0.0
        %1131 = vmatprep.subr.mxu0 0.0
        %1132 = vmatpush1.msra.mxu0 0.0
        %1133 = vmatprep.subr.mxu0 0.0
        %1134 = vmatpush1.msra.mxu0 0.0
        %1135 = vmatprep.subr.mxu0 0.0
        %1136 = vmatpush1.msra.mxu0 0.0
        %1137 = vmatprep.subr.mxu0 0.0
        %1138 = vmatpush1.msra.mxu0 0.0
        %1139 = vmatprep.subr.mxu0 0.0
        %1140 = vmatpush1.msra.mxu0 0.0
        %1141 = vmatprep.subr.mxu0 0.0
        %1142 = vmatpush1.msra.mxu0 0.0
        %1143 = vmatprep.subr.mxu0 0.0
        %1144 = vmatpush1.msra.mxu0 0.0
        %1145 = vmatprep.subr.mxu0 0.0
        %1146 = vmatpush1.msra.mxu0 0.0
        %1147 = vmatprep.subr.mxu0 0.0
        %1148 = vmatpush1.msra.mxu0 0.0
        %1149 = vmatprep.subr.mxu0 0.0
        %1150 = vmatpush1.msra.mxu0 0.0
        %1151 = vmatprep.subr.mxu0 0.0
        %1152 = vmatpush1.msra.mxu0 0.0
        %1153 = vmatprep.subr.mxu0 0.0
        %1154 = vmatpush1.msra.mxu0 0.0
        %1155 = vmatprep.mubr.f32.mxu0 0.0
        %1156 = vmatmul.mubr.f32.gmra.mrb[0].mxu0 %v1089
        %v1157 = vpop.f32.mrb[0].mxu0
        %v1158 = vadd.f32 0.0, %v1157
        %v1159 = vpop.f32.mrb[0].mxu0
        %1160 = vdwg.mxu0
        %1161 = vrot.lane.b32.xlu0 %v723, 112
        %v1162 = vpop.permute.xlu0 %1161
        %1163 = vrot.lane.b32.xlu0 %v723, 48
        %v1164 = vpop.permute.xlu0 %1163
        %v1165 = vsel %vm834, %v1162, 0
        %v1167 = vsel %vm834, %v1164, 0
        %1169 = vmatprep.subr.mxu0 0.0
        %1170 = vmatpush1.xpose.msra.mxu0 %v1167
        %1171 = vmatprep.subr.mxu0 0.0
        %1172 = vmatpush1.xpose.msra.mxu0 0.0
        %1173 = vmatprep.subr.mxu0 0.0
        %1174 = vmatpush1.xpose.msra.mxu0 0.0
        %1175 = vmatprep.subr.mxu0 0.0
        %1176 = vmatpush1.xpose.msra.mxu0 0.0
        %1177 = vmatprep.subr.mxu0 0.0
        %1178 = vmatpush1.xpose.msra.mxu0 0.0
        %1179 = vmatprep.subr.mxu0 0.0
        %1180 = vmatpush1.xpose.msra.mxu0 0.0
        %1181 = vmatprep.subr.mxu0 0.0
        %1182 = vmatpush1.xpose.msra.mxu0 0.0
        %1183 = vmatprep.subr.mxu0 0.0
        %1184 = vmatpush1.xpose.msra.mxu0 0.0
        %1185 = vmatprep.subr.mxu0 0.0
        %1186 = vmatpush1.xpose.msra.mxu0 0.0
        %1187 = vmatprep.subr.mxu0 0.0
        %1188 = vmatpush1.xpose.msra.mxu0 0.0
        %1189 = vmatprep.subr.mxu0 0.0
        %1190 = vmatpush1.xpose.msra.mxu0 0.0
        %1191 = vmatprep.subr.mxu0 0.0
        %1192 = vmatpush1.xpose.msra.mxu0 0.0
        %1193 = vmatprep.subr.mxu0 0.0
        %1194 = vmatpush1.xpose.msra.mxu0 0.0
        %1195 = vmatprep.subr.mxu0 0.0
        %1196 = vmatpush1.xpose.msra.mxu0 0.0
        %1197 = vmatprep.subr.mxu0 0.0
        %1198 = vmatpush1.xpose.msra.mxu0 0.0
        %1199 = vmatprep.subr.mxu0 0.0
        %1200 = vmatpush1.xpose.msra.mxu0 0.0
        %1201 = vmatprep.subr.mxu0 0.0
        %1202 = vmatpush1.xpose.msra.mxu0 0.0
        %1203 = vmatprep.subr.mxu0 0.0
        %1204 = vmatpush1.xpose.msra.mxu0 0.0
        %1205 = vmatprep.subr.mxu0 0.0
        %1206 = vmatpush1.xpose.msra.mxu0 0.0
        %1207 = vmatprep.subr.mxu0 0.0
        %1208 = vmatpush1.xpose.msra.mxu0 0.0
        %1209 = vmatprep.subr.mxu0 0.0
        %1210 = vmatpush1.xpose.msra.mxu0 0.0
        %1211 = vmatprep.subr.mxu0 0.0
        %1212 = vmatpush1.xpose.msra.mxu0 0.0
        %1213 = vmatprep.subr.mxu0 0.0
        %1214 = vmatpush1.xpose.msra.mxu0 0.0
        %1215 = vmatprep.subr.mxu0 0.0
        %1216 = vmatpush1.xpose.msra.mxu0 0.0
        %1217 = vmatprep.subr.mxu0 0.0
        %1218 = vmatpush1.xpose.msra.mxu0 0.0
        %1219 = vmatprep.subr.mxu0 0.0
        %1220 = vmatpush1.xpose.msra.mxu0 0.0
        %1221 = vmatprep.subr.mxu0 0.0
        %1222 = vmatpush1.xpose.msra.mxu0 0.0
        %1223 = vmatprep.subr.mxu0 0.0
        %1224 = vmatpush1.xpose.msra.mxu0 0.0
        %1225 = vmatprep.subr.mxu0 0.0
        %1226 = vmatpush1.xpose.msra.mxu0 0.0
        %1227 = vmatprep.subr.mxu0 0.0
        %1228 = vmatpush1.xpose.msra.mxu0 0.0
        %1229 = vmatprep.subr.mxu0 0.0
        %1230 = vmatpush1.xpose.msra.mxu0 0.0
        %1231 = vmatprep.subr.mxu0 0.0
        %1232 = vmatpush1.xpose.msra.mxu0 0.0
        %1233 = vmatprep.mubr.f32.mxu0 0.0
        %1234 = vmatmul.mubr.f32.gmra.mrb[0].mxu0 %v1165
        %v1235 = vpop.f32.mrb[0].mxu0
        %v1236 = vadd.f32 0.0, %v1235
        %v1237 = vpop.f32.mrb[0].mxu0
        %1238 = vdwg.mxu0
        %v1239 = vmul.f32 %v1236, 0.35355338
        %v1240 = vsel %vm834, %v1239, -inf
        %1241 = vmax.xlane.f32.xlu0 %v1240
        %v1242 = vpop.xlane.xlu0 %1241
        %v1243 = vsub.f32 %v1239, %v1242
        %v1244 = vmul.f32 %v1243, 1.442695
        %v1245 = vpow.pop %v1244
        %v1246 = vsel %vm834, %v1245, 0.0
        %1247 = vadd.xlane.f32.xlu0 %v1246
        %v1248 = vpop.xlane.xlu0 %1247
        %v1249 = vrcp.pop %v1248
        %v1250 = vmul.f32 %v1245, %v1249
        %1251 = vrot.lane.b32.xlu0 %v725, 112
        %v1252 = vpop.permute.xlu0 %1251
        %v1255 = vsel %vm834, %v1250, 0
        %1257 = vmatprep.subr.mxu0 0.0
        %1258 = vmatpush1.msra.mxu0 %v1252
        %1259 = vmatprep.subr.mxu0 0.0
        %1260 = vmatpush1.msra.mxu0 0.0
        %1261 = vmatprep.subr.mxu0 0.0
        %1262 = vmatpush1.msra.mxu0 0.0
        %1263 = vmatprep.subr.mxu0 0.0
        %1264 = vmatpush1.msra.mxu0 0.0
        %1265 = vmatprep.subr.mxu0 0.0
        %1266 = vmatpush1.msra.mxu0 0.0
        %1267 = vmatprep.subr.mxu0 0.0
        %1268 = vmatpush1.msra.mxu0 0.0
        %1269 = vmatprep.subr.mxu0 0.0
        %1270 = vmatpush1.msra.mxu0 0.0
        %1271 = vmatprep.subr.mxu0 0.0
        %1272 = vmatpush1.msra.mxu0 0.0
        %1273 = vmatprep.subr.mxu0 0.0
        %1274 = vmatpush1.msra.mxu0 0.0
        %1275 = vmatprep.subr.mxu0 0.0
        %1276 = vmatpush1.msra.mxu0 0.0
        %1277 = vmatprep.subr.mxu0 0.0
        %1278 = vmatpush1.msra.mxu0 0.0
        %1279 = vmatprep.subr.mxu0 0.0
        %1280 = vmatpush1.msra.mxu0 0.0
        %1281 = vmatprep.subr.mxu0 0.0
        %1282 = vmatpush1.msra.mxu0 0.0
        %1283 = vmatprep.subr.mxu0 0.0
        %1284 = vmatpush1.msra.mxu0 0.0
        %1285 = vmatprep.subr.mxu0 0.0
        %1286 = vmatpush1.msra.mxu0 0.0
        %1287 = vmatprep.subr.mxu0 0.0
        %1288 = vmatpush1.msra.mxu0 0.0
        %1289 = vmatprep.subr.mxu0 0.0
        %1290 = vmatpush1.msra.mxu0 0.0
        %1291 = vmatprep.subr.mxu0 0.0
        %1292 = vmatpush1.msra.mxu0 0.0
        %1293 = vmatprep.subr.mxu0 0.0
        %1294 = vmatpush1.msra.mxu0 0.0
        %1295 = vmatprep.subr.mxu0 0.0
        %1296 = vmatpush1.msra.mxu0 0.0
        %1297 = vmatprep.subr.mxu0 0.0
        %1298 = vmatpush1.msra.mxu0 0.0
        %1299 = vmatprep.subr.mxu0 0.0
        %1300 = vmatpush1.msra.mxu0 0.0
        %1301 = vmatprep.subr.mxu0 0.0
        %1302 = vmatpush1.msra.mxu0 0.0
        %1303 = vmatprep.subr.mxu0 0.0
        %1304 = vmatpush1.msra.mxu0 0.0
        %1305 = vmatprep.subr.mxu0 0.0
        %1306 = vmatpush1.msra.mxu0 0.0
        %1307 = vmatprep.subr.mxu0 0.0
        %1308 = vmatpush1.msra.mxu0 0.0
        %1309 = vmatprep.subr.mxu0 0.0
        %1310 = vmatpush1.msra.mxu0 0.0
        %1311 = vmatprep.subr.mxu0 0.0
        %1312 = vmatpush1.msra.mxu0 0.0
        %1313 = vmatprep.subr.mxu0 0.0
        %1314 = vmatpush1.msra.mxu0 0.0
        %1315 = vmatprep.subr.mxu0 0.0
        %1316 = vmatpush1.msra.mxu0 0.0
        %1317 = vmatprep.subr.mxu0 0.0
        %1318 = vmatpush1.msra.mxu0 0.0
        %1319 = vmatprep.subr.mxu0 0.0
        %1320 = vmatpush1.msra.mxu0 0.0
        %1321 = vmatprep.mubr.f32.mxu0 0.0
        %1322 = vmatmul.mubr.f32.gmra.mrb[0].mxu0 %v1255
        %v1323 = vpop.f32.mrb[0].mxu0
        %v1324 = vadd.f32 0.0, %v1323
        %v1325 = vpop.f32.mrb[0].mxu0
        %1326 = vdwg.mxu0
        %1327 = vrot.lane.b32.xlu0 %v723, 104
        %v1328 = vpop.permute.xlu0 %1327
        %1329 = vrot.lane.b32.xlu0 %v723, 40
        %v1330 = vpop.permute.xlu0 %1329
        %v1331 = vsel %vm834, %v1328, 0
        %v1333 = vsel %vm834, %v1330, 0
        %1335 = vmatprep.subr.mxu0 0.0
        %1336 = vmatpush1.xpose.msra.mxu0 %v1333
        %1337 = vmatprep.subr.mxu0 0.0
        %1338 = vmatpush1.xpose.msra.mxu0 0.0
        %1339 = vmatprep.subr.mxu0 0.0
        %1340 = vmatpush1.xpose.msra.mxu0 0.0
        %1341 = vmatprep.subr.mxu0 0.0
        %1342 = vmatpush1.xpose.msra.mxu0 0.0
        %1343 = vmatprep.subr.mxu0 0.0
        %1344 = vmatpush1.xpose.msra.mxu0 0.0
        %1345 = vmatprep.subr.mxu0 0.0
        %1346 = vmatpush1.xpose.msra.mxu0 0.0
        %1347 = vmatprep.subr.mxu0 0.0
        %1348 = vmatpush1.xpose.msra.mxu0 0.0
        %1349 = vmatprep.subr.mxu0 0.0
        %1350 = vmatpush1.xpose.msra.mxu0 0.0
        %1351 = vmatprep.subr.mxu0 0.0
        %1352 = vmatpush1.xpose.msra.mxu0 0.0
        %1353 = vmatprep.subr.mxu0 0.0
        %1354 = vmatpush1.xpose.msra.mxu0 0.0
        %1355 = vmatprep.subr.mxu0 0.0
        %1356 = vmatpush1.xpose.msra.mxu0 0.0
        %1357 = vmatprep.subr.mxu0 0.0
        %1358 = vmatpush1.xpose.msra.mxu0 0.0
        %1359 = vmatprep.subr.mxu0 0.0
        %1360 = vmatpush1.xpose.msra.mxu0 0.0
        %1361 = vmatprep.subr.mxu0 0.0
        %1362 = vmatpush1.xpose.msra.mxu0 0.0
        %1363 = vmatprep.subr.mxu0 0.0
        %1364 = vmatpush1.xpose.msra.mxu0 0.0
        %1365 = vmatprep.subr.mxu0 0.0
        %1366 = vmatpush1.xpose.msra.mxu0 0.0
        %1367 = vmatprep.subr.mxu0 0.0
        %1368 = vmatpush1.xpose.msra.mxu0 0.0
        %1369 = vmatprep.subr.mxu0 0.0
        %1370 = vmatpush1.xpose.msra.mxu0 0.0
        %1371 = vmatprep.subr.mxu0 0.0
        %1372 = vmatpush1.xpose.msra.mxu0 0.0
        %1373 = vmatprep.subr.mxu0 0.0
        %1374 = vmatpush1.xpose.msra.mxu0 0.0
        %1375 = vmatprep.subr.mxu0 0.0
        %1376 = vmatpush1.xpose.msra.mxu0 0.0
        %1377 = vmatprep.subr.mxu0 0.0
        %1378 = vmatpush1.xpose.msra.mxu0 0.0
        %1379 = vmatprep.subr.mxu0 0.0
        %1380 = vmatpush1.xpose.msra.mxu0 0.0
        %1381 = vmatprep.subr.mxu0 0.0
        %1382 = vmatpush1.xpose.msra.mxu0 0.0
        %1383 = vmatprep.subr.mxu0 0.0
        %1384 = vmatpush1.xpose.msra.mxu0 0.0
        %1385 = vmatprep.subr.mxu0 0.0
        %1386 = vmatpush1.xpose.msra.mxu0 0.0
        %1387 = vmatprep.subr.mxu0 0.0
        %1388 = vmatpush1.xpose.msra.mxu0 0.0
        %1389 = vmatprep.subr.mxu0 0.0
        %1390 = vmatpush1.xpose.msra.mxu0 0.0
        %1391 = vmatprep.subr.mxu0 0.0
        %1392 = vmatpush1.xpose.msra.mxu0 0.0
        %1393 = vmatprep.subr.mxu0 0.0
        %1394 = vmatpush1.xpose.msra.mxu0 0.0
        %1395 = vmatprep.subr.mxu0 0.0
        %1396 = vmatpush1.xpose.msra.mxu0 0.0
        %1397 = vmatprep.subr.mxu0 0.0
        %1398 = vmatpush1.xpose.msra.mxu0 0.0
        %1399 = vmatprep.mubr.f32.mxu0 0.0
        %1400 = vmatmul.mubr.f32.gmra.mrb[0].mxu0 %v1331
        %v1401 = vpop.f32.mrb[0].mxu0
        %v1402 = vadd.f32 0.0, %v1401
        %v1403 = vpop.f32.mrb[0].mxu0
        %1404 = vdwg.mxu0
        %v1405 = vmul.f32 %v1402, 0.35355338
        %v1406 = vsel %vm834, %v1405, -inf
        %1407 = vmax.xlane.f32.xlu0 %v1406
        %v1408 = vpop.xlane.xlu0 %1407
        %v1409 = vsub.f32 %v1405, %v1408
        %v1410 = vmul.f32 %v1409, 1.442695
        %v1411 = vpow.pop %v1410
        %v1412 = vsel %vm834, %v1411, 0.0
        %1413 = vadd.xlane.f32.xlu0 %v1412
        %v1414 = vpop.xlane.xlu0 %1413
        %v1415 = vrcp.pop %v1414
        %v1416 = vmul.f32 %v1411, %v1415
        %1417 = vrot.lane.b32.xlu0 %v725, 104
        %v1418 = vpop.permute.xlu0 %1417
        %v1421 = vsel %vm834, %v1416, 0
        %1423 = vmatprep.subr.mxu0 0.0
        %1424 = vmatpush1.msra.mxu0 %v1418
        %1425 = vmatprep.subr.mxu0 0.0
        %1426 = vmatpush1.msra.mxu0 0.0
        %1427 = vmatprep.subr.mxu0 0.0
        %1428 = vmatpush1.msra.mxu0 0.0
        %1429 = vmatprep.subr.mxu0 0.0
        %1430 = vmatpush1.msra.mxu0 0.0
        %1431 = vmatprep.subr.mxu0 0.0
        %1432 = vmatpush1.msra.mxu0 0.0
        %1433 = vmatprep.subr.mxu0 0.0
        %1434 = vmatpush1.msra.mxu0 0.0
        %1435 = vmatprep.subr.mxu0 0.0
        %1436 = vmatpush1.msra.mxu0 0.0
        %1437 = vmatprep.subr.mxu0 0.0
        %1438 = vmatpush1.msra.mxu0 0.0
        %1439 = vmatprep.subr.mxu0 0.0
        %1440 = vmatpush1.msra.mxu0 0.0
        %1441 = vmatprep.subr.mxu0 0.0
        %1442 = vmatpush1.msra.mxu0 0.0
        %1443 = vmatprep.subr.mxu0 0.0
        %1444 = vmatpush1.msra.mxu0 0.0
        %1445 = vmatprep.subr.mxu0 0.0
        %1446 = vmatpush1.msra.mxu0 0.0
        %1447 = vmatprep.subr.mxu0 0.0
        %1448 = vmatpush1.msra.mxu0 0.0
        %1449 = vmatprep.subr.mxu0 0.0
        %1450 = vmatpush1.msra.mxu0 0.0
        %1451 = vmatprep.subr.mxu0 0.0
        %1452 = vmatpush1.msra.mxu0 0.0
        %1453 = vmatprep.subr.mxu0 0.0
        %1454 = vmatpush1.msra.mxu0 0.0
        %1455 = vmatprep.subr.mxu0 0.0
        %1456 = vmatpush1.msra.mxu0 0.0
        %1457 = vmatprep.subr.mxu0 0.0
        %1458 = vmatpush1.msra.mxu0 0.0
        %1459 = vmatprep.subr.mxu0 0.0
        %1460 = vmatpush1.msra.mxu0 0.0
        %1461 = vmatprep.subr.mxu0 0.0
        %1462 = vmatpush1.msra.mxu0 0.0
        %1463 = vmatprep.subr.mxu0 0.0
        %1464 = vmatpush1.msra.mxu0 0.0
        %1465 = vmatprep.subr.mxu0 0.0
        %1466 = vmatpush1.msra.mxu0 0.0
        %1467 = vmatprep.subr.mxu0 0.0
        %1468 = vmatpush1.msra.mxu0 0.0
        %1469 = vmatprep.subr.mxu0 0.0
        %1470 = vmatpush1.msra.mxu0 0.0
        %1471 = vmatprep.subr.mxu0 0.0
        %1472 = vmatpush1.msra.mxu0 0.0
        %1473 = vmatprep.subr.mxu0 0.0
        %1474 = vmatpush1.msra.mxu0 0.0
        %1475 = vmatprep.subr.mxu0 0.0
        %1476 = vmatpush1.msra.mxu0 0.0
        %1477 = vmatprep.subr.mxu0 0.0
        %1478 = vmatpush1.msra.mxu0 0.0
        %1479 = vmatprep.subr.mxu0 0.0
        %1480 = vmatpush1.msra.mxu0 0.0
        %1481 = vmatprep.subr.mxu0 0.0
        %1482 = vmatpush1.msra.mxu0 0.0
        %1483 = vmatprep.subr.mxu0 0.0
        %1484 = vmatpush1.msra.mxu0 0.0
        %1485 = vmatprep.subr.mxu0 0.0
        %1486 = vmatpush1.msra.mxu0 0.0
        %1487 = vmatprep.mubr.f32.mxu0 0.0
        %1488 = vmatmul.mubr.f32.gmra.mrb[0].mxu0 %v1421
        %v1489 = vpop.f32.mrb[0].mxu0
        %v1490 = vadd.f32 0.0, %v1489
        %v1491 = vpop.f32.mrb[0].mxu0
        %1492 = vdwg.mxu0
        %1493 = vrot.lane.b32.xlu0 %v723, 96
        %v1494 = vpop.permute.xlu0 %1493
        %1495 = vrot.lane.b32.xlu0 %v723, 32
        %v1496 = vpop.permute.xlu0 %1495
        %v1497 = vsel %vm834, %v1494, 0
        %v1499 = vsel %vm834, %v1496, 0
        %1501 = vmatprep.subr.mxu0 0.0
        %1502 = vmatpush1.xpose.msra.mxu0 %v1499
        %1503 = vmatprep.subr.mxu0 0.0
        %1504 = vmatpush1.xpose.msra.mxu0 0.0
        %1505 = vmatprep.subr.mxu0 0.0
        %1506 = vmatpush1.xpose.msra.mxu0 0.0
        %1507 = vmatprep.subr.mxu0 0.0
        %1508 = vmatpush1.xpose.msra.mxu0 0.0
        %1509 = vmatprep.subr.mxu0 0.0
        %1510 = vmatpush1.xpose.msra.mxu0 0.0
        %1511 = vmatprep.subr.mxu0 0.0
        %1512 = vmatpush1.xpose.msra.mxu0 0.0
        %1513 = vmatprep.subr.mxu0 0.0
        %1514 = vmatpush1.xpose.msra.mxu0 0.0
        %1515 = vmatprep.subr.mxu0 0.0
        %1516 = vmatpush1.xpose.msra.mxu0 0.0
        %1517 = vmatprep.subr.mxu0 0.0
        %1518 = vmatpush1.xpose.msra.mxu0 0.0
        %1519 = vmatprep.subr.mxu0 0.0
        %1520 = vmatpush1.xpose.msra.mxu0 0.0
        %1521 = vmatprep.subr.mxu0 0.0
        %1522 = vmatpush1.xpose.msra.mxu0 0.0
        %1523 = vmatprep.subr.mxu0 0.0
        %1524 = vmatpush1.xpose.msra.mxu0 0.0
        %1525 = vmatprep.subr.mxu0 0.0
        %1526 = vmatpush1.xpose.msra.mxu0 0.0
        %1527 = vmatprep.subr.mxu0 0.0
        %1528 = vmatpush1.xpose.msra.mxu0 0.0
        %1529 = vmatprep.subr.mxu0 0.0
        %1530 = vmatpush1.xpose.msra.mxu0 0.0
        %1531 = vmatprep.subr.mxu0 0.0
        %1532 = vmatpush1.xpose.msra.mxu0 0.0
        %1533 = vmatprep.subr.mxu0 0.0
        %1534 = vmatpush1.xpose.msra.mxu0 0.0
        %1535 = vmatprep.subr.mxu0 0.0
        %1536 = vmatpush1.xpose.msra.mxu0 0.0
        %1537 = vmatprep.subr.mxu0 0.0
        %1538 = vmatpush1.xpose.msra.mxu0 0.0
        %1539 = vmatprep.subr.mxu0 0.0
        %1540 = vmatpush1.xpose.msra.mxu0 0.0
        %1541 = vmatprep.subr.mxu0 0.0
        %1542 = vmatpush1.xpose.msra.mxu0 0.0
        %1543 = vmatprep.subr.mxu0 0.0
        %1544 = vmatpush1.xpose.msra.mxu0 0.0
        %1545 = vmatprep.subr.mxu0 0.0
        %1546 = vmatpush1.xpose.msra.mxu0 0.0
        %1547 = vmatprep.subr.mxu0 0.0
        %1548 = vmatpush1.xpose.msra.mxu0 0.0
        %1549 = vmatprep.subr.mxu0 0.0
        %1550 = vmatpush1.xpose.msra.mxu0 0.0
        %1551 = vmatprep.subr.mxu0 0.0
        %1552 = vmatpush1.xpose.msra.mxu0 0.0
        %1553 = vmatprep.subr.mxu0 0.0
        %1554 = vmatpush1.xpose.msra.mxu0 0.0
        %1555 = vmatprep.subr.mxu0 0.0
        %1556 = vmatpush1.xpose.msra.mxu0 0.0
        %1557 = vmatprep.subr.mxu0 0.0
        %1558 = vmatpush1.xpose.msra.mxu0 0.0
        %1559 = vmatprep.subr.mxu0 0.0
        %1560 = vmatpush1.xpose.msra.mxu0 0.0
        %1561 = vmatprep.subr.mxu0 0.0
        %1562 = vmatpush1.xpose.msra.mxu0 0.0
        %1563 = vmatprep.subr.mxu0 0.0
        %1564 = vmatpush1.xpose.msra.mxu0 0.0
        %1565 = vmatprep.mubr.f32.mxu0 0.0
        %1566 = vmatmul.mubr.f32.gmra.mrb[0].mxu0 %v1497
        %v1567 = vpop.f32.mrb[0].mxu0
        %v1568 = vadd.f32 0.0, %v1567
        %v1569 = vpop.f32.mrb[0].mxu0
        %1570 = vdwg.mxu0
        %v1571 = vmul.f32 %v1568, 0.35355338
        %v1572 = vsel %vm834, %v1571, -inf
        %1573 = vmax.xlane.f32.xlu0 %v1572
        %v1574 = vpop.xlane.xlu0 %1573
        %v1575 = vsub.f32 %v1571, %v1574
        %v1576 = vmul.f32 %v1575, 1.442695
        %v1577 = vpow.pop %v1576
        %v1578 = vsel %vm834, %v1577, 0.0
        %1579 = vadd.xlane.f32.xlu0 %v1578
        %v1580 = vpop.xlane.xlu0 %1579
        %v1581 = vrcp.pop %v1580
        %v1582 = vmul.f32 %v1577, %v1581
        %1583 = vrot.lane.b32.xlu0 %v725, 96
        %v1584 = vpop.permute.xlu0 %1583
        %v1587 = vsel %vm834, %v1582, 0
        %1589 = vmatprep.subr.mxu0 0.0
        %1590 = vmatpush1.msra.mxu0 %v1584
        %1591 = vmatprep.subr.mxu0 0.0
        %1592 = vmatpush1.msra.mxu0 0.0
        %1593 = vmatprep.subr.mxu0 0.0
        %1594 = vmatpush1.msra.mxu0 0.0
        %1595 = vmatprep.subr.mxu0 0.0
        %1596 = vmatpush1.msra.mxu0 0.0
        %1597 = vmatprep.subr.mxu0 0.0
        %1598 = vmatpush1.msra.mxu0 0.0
        %1599 = vmatprep.subr.mxu0 0.0
        %1600 = vmatpush1.msra.mxu0 0.0
        %1601 = vmatprep.subr.mxu0 0.0
        %1602 = vmatpush1.msra.mxu0 0.0
        %1603 = vmatprep.subr.mxu0 0.0
        %1604 = vmatpush1.msra.mxu0 0.0
        %1605 = vmatprep.subr.mxu0 0.0
        %1606 = vmatpush1.msra.mxu0 0.0
        %1607 = vmatprep.subr.mxu0 0.0
        %1608 = vmatpush1.msra.mxu0 0.0
        %1609 = vmatprep.subr.mxu0 0.0
        %1610 = vmatpush1.msra.mxu0 0.0
        %1611 = vmatprep.subr.mxu0 0.0
        %1612 = vmatpush1.msra.mxu0 0.0
        %1613 = vmatprep.subr.mxu0 0.0
        %1614 = vmatpush1.msra.mxu0 0.0
        %1615 = vmatprep.subr.mxu0 0.0
        %1616 = vmatpush1.msra.mxu0 0.0
        %1617 = vmatprep.subr.mxu0 0.0
        %1618 = vmatpush1.msra.mxu0 0.0
        %1619 = vmatprep.subr.mxu0 0.0
        %1620 = vmatpush1.msra.mxu0 0.0
        %1621 = vmatprep.subr.mxu0 0.0
        %1622 = vmatpush1.msra.mxu0 0.0
        %1623 = vmatprep.subr.mxu0 0.0
        %1624 = vmatpush1.msra.mxu0 0.0
        %1625 = vmatprep.subr.mxu0 0.0
        %1626 = vmatpush1.msra.mxu0 0.0
        %1627 = vmatprep.subr.mxu0 0.0
        %1628 = vmatpush1.msra.mxu0 0.0
        %1629 = vmatprep.subr.mxu0 0.0
        %1630 = vmatpush1.msra.mxu0 0.0
        %1631 = vmatprep.subr.mxu0 0.0
        %1632 = vmatpush1.msra.mxu0 0.0
        %1633 = vmatprep.subr.mxu0 0.0
        %1634 = vmatpush1.msra.mxu0 0.0
        %1635 = vmatprep.subr.mxu0 0.0
        %1636 = vmatpush1.msra.mxu0 0.0
        %1637 = vmatprep.subr.mxu0 0.0
        %1638 = vmatpush1.msra.mxu0 0.0
        %1639 = vmatprep.subr.mxu0 0.0
        %1640 = vmatpush1.msra.mxu0 0.0
        %1641 = vmatprep.subr.mxu0 0.0
        %1642 = vmatpush1.msra.mxu0 0.0
        %1643 = vmatprep.subr.mxu0 0.0
        %1644 = vmatpush1.msra.mxu0 0.0
        %1645 = vmatprep.subr.mxu0 0.0
        %1646 = vmatpush1.msra.mxu0 0.0
        %1647 = vmatprep.subr.mxu0 0.0
        %1648 = vmatpush1.msra.mxu0 0.0
        %1649 = vmatprep.subr.mxu0 0.0
        %1650 = vmatpush1.msra.mxu0 0.0
        %1651 = vmatprep.subr.mxu0 0.0
        %1652 = vmatpush1.msra.mxu0 0.0
        %1653 = vmatprep.mubr.f32.mxu0 0.0
        %1654 = vmatmul.mubr.f32.gmra.mrb[0].mxu0 %v1587
        %v1655 = vpop.f32.mrb[0].mxu0
        %v1656 = vadd.f32 0.0, %v1655
        %v1657 = vpop.f32.mrb[0].mxu0
        %1658 = vdwg.mxu0
        %1659 = vrot.lane.b32.xlu0 %v723, 88
        %v1660 = vpop.permute.xlu0 %1659
        %1661 = vrot.lane.b32.xlu0 %v723, 24
        %v1662 = vpop.permute.xlu0 %1661
        %v1663 = vsel %vm834, %v1660, 0
        %v1665 = vsel %vm834, %v1662, 0
        %1667 = vmatprep.subr.mxu0 0.0
        %1668 = vmatpush1.xpose.msra.mxu0 %v1665
        %1669 = vmatprep.subr.mxu0 0.0
        %1670 = vmatpush1.xpose.msra.mxu0 0.0
        %1671 = vmatprep.subr.mxu0 0.0
        %1672 = vmatpush1.xpose.msra.mxu0 0.0
        %1673 = vmatprep.subr.mxu0 0.0
        %1674 = vmatpush1.xpose.msra.mxu0 0.0
        %1675 = vmatprep.subr.mxu0 0.0
        %1676 = vmatpush1.xpose.msra.mxu0 0.0
        %1677 = vmatprep.subr.mxu0 0.0
        %1678 = vmatpush1.xpose.msra.mxu0 0.0
        %1679 = vmatprep.subr.mxu0 0.0
        %1680 = vmatpush1.xpose.msra.mxu0 0.0
        %1681 = vmatprep.subr.mxu0 0.0
        %1682 = vmatpush1.xpose.msra.mxu0 0.0
        %1683 = vmatprep.subr.mxu0 0.0
        %1684 = vmatpush1.xpose.msra.mxu0 0.0
        %1685 = vmatprep.subr.mxu0 0.0
        %1686 = vmatpush1.xpose.msra.mxu0 0.0
        %1687 = vmatprep.subr.mxu0 0.0
        %1688 = vmatpush1.xpose.msra.mxu0 0.0
        %1689 = vmatprep.subr.mxu0 0.0
        %1690 = vmatpush1.xpose.msra.mxu0 0.0
        %1691 = vmatprep.subr.mxu0 0.0
        %1692 = vmatpush1.xpose.msra.mxu0 0.0
        %1693 = vmatprep.subr.mxu0 0.0
        %1694 = vmatpush1.xpose.msra.mxu0 0.0
        %1695 = vmatprep.subr.mxu0 0.0
        %1696 = vmatpush1.xpose.msra.mxu0 0.0
        %1697 = vmatprep.subr.mxu0 0.0
        %1698 = vmatpush1.xpose.msra.mxu0 0.0
        %1699 = vmatprep.subr.mxu0 0.0
        %1700 = vmatpush1.xpose.msra.mxu0 0.0
        %1701 = vmatprep.subr.mxu0 0.0
        %1702 = vmatpush1.xpose.msra.mxu0 0.0
        %1703 = vmatprep.subr.mxu0 0.0
        %1704 = vmatpush1.xpose.msra.mxu0 0.0
        %1705 = vmatprep.subr.mxu0 0.0
        %1706 = vmatpush1.xpose.msra.mxu0 0.0
        %1707 = vmatprep.subr.mxu0 0.0
        %1708 = vmatpush1.xpose.msra.mxu0 0.0
        %1709 = vmatprep.subr.mxu0 0.0
        %1710 = vmatpush1.xpose.msra.mxu0 0.0
        %1711 = vmatprep.subr.mxu0 0.0
        %1712 = vmatpush1.xpose.msra.mxu0 0.0
        %1713 = vmatprep.subr.mxu0 0.0
        %1714 = vmatpush1.xpose.msra.mxu0 0.0
        %1715 = vmatprep.subr.mxu0 0.0
        %1716 = vmatpush1.xpose.msra.mxu0 0.0
        %1717 = vmatprep.subr.mxu0 0.0
        %1718 = vmatpush1.xpose.msra.mxu0 0.0
        %1719 = vmatprep.subr.mxu0 0.0
        %1720 = vmatpush1.xpose.msra.mxu0 0.0
        %1721 = vmatprep.subr.mxu0 0.0
        %1722 = vmatpush1.xpose.msra.mxu0 0.0
        %1723 = vmatprep.subr.mxu0 0.0
        %1724 = vmatpush1.xpose.msra.mxu0 0.0
        %1725 = vmatprep.subr.mxu0 0.0
        %1726 = vmatpush1.xpose.msra.mxu0 0.0
        %1727 = vmatprep.subr.mxu0 0.0
        %1728 = vmatpush1.xpose.msra.mxu0 0.0
        %1729 = vmatprep.subr.mxu0 0.0
        %1730 = vmatpush1.xpose.msra.mxu0 0.0
        %1731 = vmatprep.mubr.f32.mxu0 0.0
        %1732 = vmatmul.mubr.f32.gmra.mrb[0].mxu0 %v1663
        %v1733 = vpop.f32.mrb[0].mxu0
        %v1734 = vadd.f32 0.0, %v1733
        %v1735 = vpop.f32.mrb[0].mxu0
        %1736 = vdwg.mxu0
        %v1737 = vmul.f32 %v1734, 0.35355338
        %v1738 = vsel %vm834, %v1737, -inf
        %1739 = vmax.xlane.f32.xlu0 %v1738
        %v1740 = vpop.xlane.xlu0 %1739
        %v1741 = vsub.f32 %v1737, %v1740
        %v1742 = vmul.f32 %v1741, 1.442695
        %v1743 = vpow.pop %v1742
        %v1744 = vsel %vm834, %v1743, 0.0
        %1745 = vadd.xlane.f32.xlu0 %v1744
        %v1746 = vpop.xlane.xlu0 %1745
        %v1747 = vrcp.pop %v1746
        %v1748 = vmul.f32 %v1743, %v1747
        %1749 = vrot.lane.b32.xlu0 %v725, 88
        %v1750 = vpop.permute.xlu0 %1749
        %v1753 = vsel %vm834, %v1748, 0
        %1755 = vmatprep.subr.mxu0 0.0
        %1756 = vmatpush1.msra.mxu0 %v1750
        %1757 = vmatprep.subr.mxu0 0.0
        %1758 = vmatpush1.msra.mxu0 0.0
        %1759 = vmatprep.subr.mxu0 0.0
        %1760 = vmatpush1.msra.mxu0 0.0
        %1761 = vmatprep.subr.mxu0 0.0
        %1762 = vmatpush1.msra.mxu0 0.0
        %1763 = vmatprep.subr.mxu0 0.0
        %1764 = vmatpush1.msra.mxu0 0.0
        %1765 = vmatprep.subr.mxu0 0.0
        %1766 = vmatpush1.msra.mxu0 0.0
        %1767 = vmatprep.subr.mxu0 0.0
        %1768 = vmatpush1.msra.mxu0 0.0
        %1769 = vmatprep.subr.mxu0 0.0
        %1770 = vmatpush1.msra.mxu0 0.0
        %1771 = vmatprep.subr.mxu0 0.0
        %1772 = vmatpush1.msra.mxu0 0.0
        %1773 = vmatprep.subr.mxu0 0.0
        %1774 = vmatpush1.msra.mxu0 0.0
        %1775 = vmatprep.subr.mxu0 0.0
        %1776 = vmatpush1.msra.mxu0 0.0
        %1777 = vmatprep.subr.mxu0 0.0
        %1778 = vmatpush1.msra.mxu0 0.0
        %1779 = vmatprep.subr.mxu0 0.0
        %1780 = vmatpush1.msra.mxu0 0.0
        %1781 = vmatprep.subr.mxu0 0.0
        %1782 = vmatpush1.msra.mxu0 0.0
        %1783 = vmatprep.subr.mxu0 0.0
        %1784 = vmatpush1.msra.mxu0 0.0
        %1785 = vmatprep.subr.mxu0 0.0
        %1786 = vmatpush1.msra.mxu0 0.0
        %1787 = vmatprep.subr.mxu0 0.0
        %1788 = vmatpush1.msra.mxu0 0.0
        %1789 = vmatprep.subr.mxu0 0.0
        %1790 = vmatpush1.msra.mxu0 0.0
        %1791 = vmatprep.subr.mxu0 0.0
        %1792 = vmatpush1.msra.mxu0 0.0
        %1793 = vmatprep.subr.mxu0 0.0
        %1794 = vmatpush1.msra.mxu0 0.0
        %1795 = vmatprep.subr.mxu0 0.0
        %1796 = vmatpush1.msra.mxu0 0.0
        %1797 = vmatprep.subr.mxu0 0.0
        %1798 = vmatpush1.msra.mxu0 0.0
        %1799 = vmatprep.subr.mxu0 0.0
        %1800 = vmatpush1.msra.mxu0 0.0
        %1801 = vmatprep.subr.mxu0 0.0
        %1802 = vmatpush1.msra.mxu0 0.0
        %1803 = vmatprep.subr.mxu0 0.0
        %1804 = vmatpush1.msra.mxu0 0.0
        %1805 = vmatprep.subr.mxu0 0.0
        %1806 = vmatpush1.msra.mxu0 0.0
        %1807 = vmatprep.subr.mxu0 0.0
        %1808 = vmatpush1.msra.mxu0 0.0
        %1809 = vmatprep.subr.mxu0 0.0
        %1810 = vmatpush1.msra.mxu0 0.0
        %1811 = vmatprep.subr.mxu0 0.0
        %1812 = vmatpush1.msra.mxu0 0.0
        %1813 = vmatprep.subr.mxu0 0.0
        %1814 = vmatpush1.msra.mxu0 0.0
        %1815 = vmatprep.subr.mxu0 0.0
        %1816 = vmatpush1.msra.mxu0 0.0
        %1817 = vmatprep.subr.mxu0 0.0
        %1818 = vmatpush1.msra.mxu0 0.0
        %1819 = vmatprep.mubr.f32.mxu0 0.0
        %1820 = vmatmul.mubr.f32.gmra.mrb[0].mxu0 %v1753
        %v1821 = vpop.f32.mrb[0].mxu0
        %v1822 = vadd.f32 0.0, %v1821
        %v1823 = vpop.f32.mrb[0].mxu0
        %1824 = vdwg.mxu0
        %1825 = vrot.lane.b32.xlu0 %v723, 80
        %v1826 = vpop.permute.xlu0 %1825
        %1827 = vrot.lane.b32.xlu0 %v723, 16
        %v1828 = vpop.permute.xlu0 %1827
        %v1829 = vsel %vm834, %v1826, 0
        %v1831 = vsel %vm834, %v1828, 0
        %1833 = vmatprep.subr.mxu0 0.0
        %1834 = vmatpush1.xpose.msra.mxu0 %v1831
        %1835 = vmatprep.subr.mxu0 0.0
        %1836 = vmatpush1.xpose.msra.mxu0 0.0
        %1837 = vmatprep.subr.mxu0 0.0
        %1838 = vmatpush1.xpose.msra.mxu0 0.0
        %1839 = vmatprep.subr.mxu0 0.0
        %1840 = vmatpush1.xpose.msra.mxu0 0.0
        %1841 = vmatprep.subr.mxu0 0.0
        %1842 = vmatpush1.xpose.msra.mxu0 0.0
        %1843 = vmatprep.subr.mxu0 0.0
        %1844 = vmatpush1.xpose.msra.mxu0 0.0
        %1845 = vmatprep.subr.mxu0 0.0
        %1846 = vmatpush1.xpose.msra.mxu0 0.0
        %1847 = vmatprep.subr.mxu0 0.0
        %1848 = vmatpush1.xpose.msra.mxu0 0.0
        %1849 = vmatprep.subr.mxu0 0.0
        %1850 = vmatpush1.xpose.msra.mxu0 0.0
        %1851 = vmatprep.subr.mxu0 0.0
        %1852 = vmatpush1.xpose.msra.mxu0 0.0
        %1853 = vmatprep.subr.mxu0 0.0
        %1854 = vmatpush1.xpose.msra.mxu0 0.0
        %1855 = vmatprep.subr.mxu0 0.0
        %1856 = vmatpush1.xpose.msra.mxu0 0.0
        %1857 = vmatprep.subr.mxu0 0.0
        %1858 = vmatpush1.xpose.msra.mxu0 0.0
        %1859 = vmatprep.subr.mxu0 0.0
        %1860 = vmatpush1.xpose.msra.mxu0 0.0
        %1861 = vmatprep.subr.mxu0 0.0
        %1862 = vmatpush1.xpose.msra.mxu0 0.0
        %1863 = vmatprep.subr.mxu0 0.0
        %1864 = vmatpush1.xpose.msra.mxu0 0.0
        %1865 = vmatprep.subr.mxu0 0.0
        %1866 = vmatpush1.xpose.msra.mxu0 0.0
        %1867 = vmatprep.subr.mxu0 0.0
        %1868 = vmatpush1.xpose.msra.mxu0 0.0
        %1869 = vmatprep.subr.mxu0 0.0
        %1870 = vmatpush1.xpose.msra.mxu0 0.0
        %1871 = vmatprep.subr.mxu0 0.0
        %1872 = vmatpush1.xpose.msra.mxu0 0.0
        %1873 = vmatprep.subr.mxu0 0.0
        %1874 = vmatpush1.xpose.msra.mxu0 0.0
        %1875 = vmatprep.subr.mxu0 0.0
        %1876 = vmatpush1.xpose.msra.mxu0 0.0
        %1877 = vmatprep.subr.mxu0 0.0
        %1878 = vmatpush1.xpose.msra.mxu0 0.0
        %1879 = vmatprep.subr.mxu0 0.0
        %1880 = vmatpush1.xpose.msra.mxu0 0.0
        %1881 = vmatprep.subr.mxu0 0.0
        %1882 = vmatpush1.xpose.msra.mxu0 0.0
        %1883 = vmatprep.subr.mxu0 0.0
        %1884 = vmatpush1.xpose.msra.mxu0 0.0
        %1885 = vmatprep.subr.mxu0 0.0
        %1886 = vmatpush1.xpose.msra.mxu0 0.0
        %1887 = vmatprep.subr.mxu0 0.0
        %1888 = vmatpush1.xpose.msra.mxu0 0.0
        %1889 = vmatprep.subr.mxu0 0.0
        %1890 = vmatpush1.xpose.msra.mxu0 0.0
        %1891 = vmatprep.subr.mxu0 0.0
        %1892 = vmatpush1.xpose.msra.mxu0 0.0
        %1893 = vmatprep.subr.mxu0 0.0
        %1894 = vmatpush1.xpose.msra.mxu0 0.0
        %1895 = vmatprep.subr.mxu0 0.0
        %1896 = vmatpush1.xpose.msra.mxu0 0.0
        %1897 = vmatprep.mubr.f32.mxu0 0.0
        %1898 = vmatmul.mubr.f32.gmra.mrb[0].mxu0 %v1829
        %v1899 = vpop.f32.mrb[0].mxu0
        %v1900 = vadd.f32 0.0, %v1899
        %v1901 = vpop.f32.mrb[0].mxu0
        %1902 = vdwg.mxu0
        %v1903 = vmul.f32 %v1900, 0.35355338
        %v1904 = vsel %vm834, %v1903, -inf
        %1905 = vmax.xlane.f32.xlu0 %v1904
        %v1906 = vpop.xlane.xlu0 %1905
        %v1907 = vsub.f32 %v1903, %v1906
        %v1908 = vmul.f32 %v1907, 1.442695
        %v1909 = vpow.pop %v1908
        %v1910 = vsel %vm834, %v1909, 0.0
        %1911 = vadd.xlane.f32.xlu0 %v1910
        %v1912 = vpop.xlane.xlu0 %1911
        %v1913 = vrcp.pop %v1912
        %v1914 = vmul.f32 %v1909, %v1913
        %1915 = vrot.lane.b32.xlu0 %v725, 80
        %v1916 = vpop.permute.xlu0 %1915
        %v1919 = vsel %vm834, %v1914, 0
        %1921 = vmatprep.subr.mxu0 0.0
        %1922 = vmatpush1.msra.mxu0 %v1916
        %1923 = vmatprep.subr.mxu0 0.0
        %1924 = vmatpush1.msra.mxu0 0.0
        %1925 = vmatprep.subr.mxu0 0.0
        %1926 = vmatpush1.msra.mxu0 0.0
        %1927 = vmatprep.subr.mxu0 0.0
        %1928 = vmatpush1.msra.mxu0 0.0
        %1929 = vmatprep.subr.mxu0 0.0
        %1930 = vmatpush1.msra.mxu0 0.0
        %1931 = vmatprep.subr.mxu0 0.0
        %1932 = vmatpush1.msra.mxu0 0.0
        %1933 = vmatprep.subr.mxu0 0.0
        %1934 = vmatpush1.msra.mxu0 0.0
        %1935 = vmatprep.subr.mxu0 0.0
        %1936 = vmatpush1.msra.mxu0 0.0
        %1937 = vmatprep.subr.mxu0 0.0
        %1938 = vmatpush1.msra.mxu0 0.0
        %1939 = vmatprep.subr.mxu0 0.0
        %1940 = vmatpush1.msra.mxu0 0.0
        %1941 = vmatprep.subr.mxu0 0.0
        %1942 = vmatpush1.msra.mxu0 0.0
        %1943 = vmatprep.subr.mxu0 0.0
        %1944 = vmatpush1.msra.mxu0 0.0
        %1945 = vmatprep.subr.mxu0 0.0
        %1946 = vmatpush1.msra.mxu0 0.0
        %1947 = vmatprep.subr.mxu0 0.0
        %1948 = vmatpush1.msra.mxu0 0.0
        %1949 = vmatprep.subr.mxu0 0.0
        %1950 = vmatpush1.msra.mxu0 0.0
        %1951 = vmatprep.subr.mxu0 0.0
        %1952 = vmatpush1.msra.mxu0 0.0
        %1953 = vmatprep.subr.mxu0 0.0
        %1954 = vmatpush1.msra.mxu0 0.0
        %1955 = vmatprep.subr.mxu0 0.0
        %1956 = vmatpush1.msra.mxu0 0.0
        %1957 = vmatprep.subr.mxu0 0.0
        %1958 = vmatpush1.msra.mxu0 0.0
        %1959 = vmatprep.subr.mxu0 0.0
        %1960 = vmatpush1.msra.mxu0 0.0
        %1961 = vmatprep.subr.mxu0 0.0
        %1962 = vmatpush1.msra.mxu0 0.0
        %1963 = vmatprep.subr.mxu0 0.0
        %1964 = vmatpush1.msra.mxu0 0.0
        %1965 = vmatprep.subr.mxu0 0.0
        %1966 = vmatpush1.msra.mxu0 0.0
        %1967 = vmatprep.subr.mxu0 0.0
        %1968 = vmatpush1.msra.mxu0 0.0
        %1969 = vmatprep.subr.mxu0 0.0
        %1970 = vmatpush1.msra.mxu0 0.0
        %1971 = vmatprep.subr.mxu0 0.0
        %1972 = vmatpush1.msra.mxu0 0.0
        %1973 = vmatprep.subr.mxu0 0.0
        %1974 = vmatpush1.msra.mxu0 0.0
        %1975 = vmatprep.subr.mxu0 0.0
        %1976 = vmatpush1.msra.mxu0 0.0
        %1977 = vmatprep.subr.mxu0 0.0
        %1978 = vmatpush1.msra.mxu0 0.0
        %1979 = vmatprep.subr.mxu0 0.0
        %1980 = vmatpush1.msra.mxu0 0.0
        %1981 = vmatprep.subr.mxu0 0.0
        %1982 = vmatpush1.msra.mxu0 0.0
        %1983 = vmatprep.subr.mxu0 0.0
        %1984 = vmatpush1.msra.mxu0 0.0
        %1985 = vmatprep.mubr.f32.mxu0 0.0
        %1986 = vmatmul.mubr.f32.gmra.mrb[0].mxu0 %v1919
        %v1987 = vpop.f32.mrb[0].mxu0
        %v1988 = vadd.f32 0.0, %v1987
        %v1989 = vpop.f32.mrb[0].mxu0
        %1990 = vdwg.mxu0
        %1991 = vrot.lane.b32.xlu0 %v723, 72
        %v1992 = vpop.permute.xlu0 %1991
        %1993 = vrot.lane.b32.xlu0 %v723, 8
        %v1994 = vpop.permute.xlu0 %1993
        %v1995 = vsel %vm834, %v1992, 0
        %v1997 = vsel %vm834, %v1994, 0
        %1999 = vmatprep.subr.mxu0 0.0
        %2000 = vmatpush1.xpose.msra.mxu0 %v1997
        %2001 = vmatprep.subr.mxu0 0.0
        %2002 = vmatpush1.xpose.msra.mxu0 0.0
        %2003 = vmatprep.subr.mxu0 0.0
        %2004 = vmatpush1.xpose.msra.mxu0 0.0
        %2005 = vmatprep.subr.mxu0 0.0
        %2006 = vmatpush1.xpose.msra.mxu0 0.0
        %2007 = vmatprep.subr.mxu0 0.0
        %2008 = vmatpush1.xpose.msra.mxu0 0.0
        %2009 = vmatprep.subr.mxu0 0.0
        %2010 = vmatpush1.xpose.msra.mxu0 0.0
        %2011 = vmatprep.subr.mxu0 0.0
        %2012 = vmatpush1.xpose.msra.mxu0 0.0
        %2013 = vmatprep.subr.mxu0 0.0
        %2014 = vmatpush1.xpose.msra.mxu0 0.0
        %2015 = vmatprep.subr.mxu0 0.0
        %2016 = vmatpush1.xpose.msra.mxu0 0.0
        %2017 = vmatprep.subr.mxu0 0.0
        %2018 = vmatpush1.xpose.msra.mxu0 0.0
        %2019 = vmatprep.subr.mxu0 0.0
        %2020 = vmatpush1.xpose.msra.mxu0 0.0
        %2021 = vmatprep.subr.mxu0 0.0
        %2022 = vmatpush1.xpose.msra.mxu0 0.0
        %2023 = vmatprep.subr.mxu0 0.0
        %2024 = vmatpush1.xpose.msra.mxu0 0.0
        %2025 = vmatprep.subr.mxu0 0.0
        %2026 = vmatpush1.xpose.msra.mxu0 0.0
        %2027 = vmatprep.subr.mxu0 0.0
        %2028 = vmatpush1.xpose.msra.mxu0 0.0
        %2029 = vmatprep.subr.mxu0 0.0
        %2030 = vmatpush1.xpose.msra.mxu0 0.0
        %2031 = vmatprep.subr.mxu0 0.0
        %2032 = vmatpush1.xpose.msra.mxu0 0.0
        %2033 = vmatprep.subr.mxu0 0.0
        %2034 = vmatpush1.xpose.msra.mxu0 0.0
        %2035 = vmatprep.subr.mxu0 0.0
        %2036 = vmatpush1.xpose.msra.mxu0 0.0
        %2037 = vmatprep.subr.mxu0 0.0
        %2038 = vmatpush1.xpose.msra.mxu0 0.0
        %2039 = vmatprep.subr.mxu0 0.0
        %2040 = vmatpush1.xpose.msra.mxu0 0.0
        %2041 = vmatprep.subr.mxu0 0.0
        %2042 = vmatpush1.xpose.msra.mxu0 0.0
        %2043 = vmatprep.subr.mxu0 0.0
        %2044 = vmatpush1.xpose.msra.mxu0 0.0
        %2045 = vmatprep.subr.mxu0 0.0
        %2046 = vmatpush1.xpose.msra.mxu0 0.0
        %2047 = vmatprep.subr.mxu0 0.0
        %2048 = vmatpush1.xpose.msra.mxu0 0.0
        %2049 = vmatprep.subr.mxu0 0.0
        %2050 = vmatpush1.xpose.msra.mxu0 0.0
        %2051 = vmatprep.subr.mxu0 0.0
        %2052 = vmatpush1.xpose.msra.mxu0 0.0
        %2053 = vmatprep.subr.mxu0 0.0
        %2054 = vmatpush1.xpose.msra.mxu0 0.0
        %2055 = vmatprep.subr.mxu0 0.0
        %2056 = vmatpush1.xpose.msra.mxu0 0.0
        %2057 = vmatprep.subr.mxu0 0.0
        %2058 = vmatpush1.xpose.msra.mxu0 0.0
        %2059 = vmatprep.subr.mxu0 0.0
        %2060 = vmatpush1.xpose.msra.mxu0 0.0
        %2061 = vmatprep.subr.mxu0 0.0
        %2062 = vmatpush1.xpose.msra.mxu0 0.0
        %2063 = vmatprep.mubr.f32.mxu0 0.0
        %2064 = vmatmul.mubr.f32.gmra.mrb[0].mxu0 %v1995
        %v2065 = vpop.f32.mrb[0].mxu0
        %v2066 = vadd.f32 0.0, %v2065
        %v2067 = vpop.f32.mrb[0].mxu0
        %2068 = vdwg.mxu0
        %v2069 = vmul.f32 %v2066, 0.35355338
        %v2070 = vsel %vm834, %v2069, -inf
        %2071 = vmax.xlane.f32.xlu0 %v2070
        %v2072 = vpop.xlane.xlu0 %2071
        %v2073 = vsub.f32 %v2069, %v2072
        %v2074 = vmul.f32 %v2073, 1.442695
        %v2075 = vpow.pop %v2074
        %v2076 = vsel %vm834, %v2075, 0.0
        %2077 = vadd.xlane.f32.xlu0 %v2076
        %v2078 = vpop.xlane.xlu0 %2077
        %v2079 = vrcp.pop %v2078
        %v2080 = vmul.f32 %v2075, %v2079
        %2081 = vrot.lane.b32.xlu0 %v725, 72
        %v2082 = vpop.permute.xlu0 %2081
        %v2085 = vsel %vm834, %v2080, 0
        %2087 = vmatprep.subr.mxu0 0.0
        %2088 = vmatpush1.msra.mxu0 %v2082
        %2089 = vmatprep.subr.mxu0 0.0
        %2090 = vmatpush1.msra.mxu0 0.0
        %2091 = vmatprep.subr.mxu0 0.0
        %2092 = vmatpush1.msra.mxu0 0.0
        %2093 = vmatprep.subr.mxu0 0.0
        %2094 = vmatpush1.msra.mxu0 0.0
        %2095 = vmatprep.subr.mxu0 0.0
        %2096 = vmatpush1.msra.mxu0 0.0
        %2097 = vmatprep.subr.mxu0 0.0
        %2098 = vmatpush1.msra.mxu0 0.0
        %2099 = vmatprep.subr.mxu0 0.0
        %2100 = vmatpush1.msra.mxu0 0.0
        %2101 = vmatprep.subr.mxu0 0.0
        %2102 = vmatpush1.msra.mxu0 0.0
        %2103 = vmatprep.subr.mxu0 0.0
        %2104 = vmatpush1.msra.mxu0 0.0
        %2105 = vmatprep.subr.mxu0 0.0
        %2106 = vmatpush1.msra.mxu0 0.0
        %2107 = vmatprep.subr.mxu0 0.0
        %2108 = vmatpush1.msra.mxu0 0.0
        %2109 = vmatprep.subr.mxu0 0.0
        %2110 = vmatpush1.msra.mxu0 0.0
        %2111 = vmatprep.subr.mxu0 0.0
        %2112 = vmatpush1.msra.mxu0 0.0
        %2113 = vmatprep.subr.mxu0 0.0
        %2114 = vmatpush1.msra.mxu0 0.0
        %2115 = vmatprep.subr.mxu0 0.0
        %2116 = vmatpush1.msra.mxu0 0.0
        %2117 = vmatprep.subr.mxu0 0.0
        %2118 = vmatpush1.msra.mxu0 0.0
        %2119 = vmatprep.subr.mxu0 0.0
        %2120 = vmatpush1.msra.mxu0 0.0
        %2121 = vmatprep.subr.mxu0 0.0
        %2122 = vmatpush1.msra.mxu0 0.0
        %2123 = vmatprep.subr.mxu0 0.0
        %2124 = vmatpush1.msra.mxu0 0.0
        %2125 = vmatprep.subr.mxu0 0.0
        %2126 = vmatpush1.msra.mxu0 0.0
        %2127 = vmatprep.subr.mxu0 0.0
        %2128 = vmatpush1.msra.mxu0 0.0
        %2129 = vmatprep.subr.mxu0 0.0
        %2130 = vmatpush1.msra.mxu0 0.0
        %2131 = vmatprep.subr.mxu0 0.0
        %2132 = vmatpush1.msra.mxu0 0.0
        %2133 = vmatprep.subr.mxu0 0.0
        %2134 = vmatpush1.msra.mxu0 0.0
        %2135 = vmatprep.subr.mxu0 0.0
        %2136 = vmatpush1.msra.mxu0 0.0
        %2137 = vmatprep.subr.mxu0 0.0
        %2138 = vmatpush1.msra.mxu0 0.0
        %2139 = vmatprep.subr.mxu0 0.0
        %2140 = vmatpush1.msra.mxu0 0.0
        %2141 = vmatprep.subr.mxu0 0.0
        %2142 = vmatpush1.msra.mxu0 0.0
        %2143 = vmatprep.subr.mxu0 0.0
        %2144 = vmatpush1.msra.mxu0 0.0
        %2145 = vmatprep.subr.mxu0 0.0
        %2146 = vmatpush1.msra.mxu0 0.0
        %2147 = vmatprep.subr.mxu0 0.0
        %2148 = vmatpush1.msra.mxu0 0.0
        %2149 = vmatprep.subr.mxu0 0.0
        %2150 = vmatpush1.msra.mxu0 0.0
        %2151 = vmatprep.mubr.f32.mxu0 0.0
        %2152 = vmatmul.mubr.f32.gmra.mrb[0].mxu0 %v2085
        %v2153 = vpop.f32.mrb[0].mxu0
        %v2154 = vadd.f32 0.0, %v2153
        %v2155 = vpop.f32.mrb[0].mxu0
        %2156 = vdwg.mxu0
        %2158 = vrot.lane.b32.xlu0 %v1158, 8
        %v2159 = vpop.permute.xlu0 %2158
        %2162 = vrot.lane.b32.xlu0 %v1324, 16
        %v2163 = vpop.permute.xlu0 %2162
        %2166 = vrot.lane.b32.xlu0 %v1490, 24
        %v2167 = vpop.permute.xlu0 %2166
        %2170 = vrot.lane.b32.xlu0 %v1656, 32
        %v2171 = vpop.permute.xlu0 %2170
        %2174 = vrot.lane.b32.xlu0 %v1822, 40
        %v2175 = vpop.permute.xlu0 %2174
        %2178 = vrot.lane.b32.xlu0 %v1988, 48
        %v2179 = vpop.permute.xlu0 %2178
        %2182 = vrot.lane.b32.xlu0 %v2154, 56
        %v2183 = vpop.permute.xlu0 %2182
        %v2185 = vsel %vm834, %v991, %v2159
        %vm2186 = vcmask 130048
        %v2187 = vsel %vm2186, %v2185, %v2163
        %vm2188 = vcmask 195584
        %v2189 = vsel %vm2188, %v2187, %v2167
        %vm2190 = vcmask 261120
        %v2191 = vsel %vm2190, %v2189, %v2171
        %vm2192 = vcmask 326656
        %v2193 = vsel %vm2192, %v2191, %v2175
        %vm2194 = vcmask 392192
        %v2195 = vsel %vm2194, %v2193, %v2179
        %vm2196 = vcmask 457728
        %v2197 = vsel %vm2196, %v2195, %v2183
        %2200 = vrot.lane.b32.xlu0 %v729, 64
        %v2201 = vpop.permute.xlu0 %2200
        %2202 = vrot.lane.b32.xlu0 %v735, 64
        %v2203 = vpop.permute.xlu0 %2202
        %v2204 = vsel %vm834, %v729, 0
        %v2206 = vsel %vm834, %v735, 0
        %v2208 = vsel %vm834, %v2201, 0
        %v2210 = vsel %vm834, %v2203, 0
        %2212 = vmatprep.subr.mxu0 0.0
        %2213 = vmatpush1.xpose.msra.mxu0 %v837
        %2214 = vmatprep.subr.mxu0 0.0
        %2215 = vmatpush1.xpose.msra.mxu0 %v2208
        %2216 = vmatprep.subr.mxu0 0.0
        %2217 = vmatpush1.xpose.msra.mxu0 %v2210
        %2218 = vmatprep.subr.mxu0 0.0
        %2219 = vmatpush1.xpose.msra.mxu0 0.0
        %2220 = vmatprep.subr.mxu0 0.0
        %2221 = vmatpush1.xpose.msra.mxu0 0.0
        %2222 = vmatprep.subr.mxu0 0.0
        %2223 = vmatpush1.xpose.msra.mxu0 0.0
        %2224 = vmatprep.subr.mxu0 0.0
        %2225 = vmatpush1.xpose.msra.mxu0 0.0
        %2226 = vmatprep.subr.mxu0 0.0
        %2227 = vmatpush1.xpose.msra.mxu0 0.0
        %2228 = vmatprep.subr.mxu0 0.0
        %2229 = vmatpush1.xpose.msra.mxu0 0.0
        %2230 = vmatprep.subr.mxu0 0.0
        %2231 = vmatpush1.xpose.msra.mxu0 0.0
        %2232 = vmatprep.subr.mxu0 0.0
        %2233 = vmatpush1.xpose.msra.mxu0 0.0
        %2234 = vmatprep.subr.mxu0 0.0
        %2235 = vmatpush1.xpose.msra.mxu0 0.0
        %2236 = vmatprep.subr.mxu0 0.0
        %2237 = vmatpush1.xpose.msra.mxu0 0.0
        %2238 = vmatprep.subr.mxu0 0.0
        %2239 = vmatpush1.xpose.msra.mxu0 0.0
        %2240 = vmatprep.subr.mxu0 0.0
        %2241 = vmatpush1.xpose.msra.mxu0 0.0
        %2242 = vmatprep.subr.mxu0 0.0
        %2243 = vmatpush1.xpose.msra.mxu0 0.0
        %2244 = vmatprep.subr.mxu0 0.0
        %2245 = vmatpush1.xpose.msra.mxu0 0.0
        %2246 = vmatprep.subr.mxu0 0.0
        %2247 = vmatpush1.xpose.msra.mxu0 0.0
        %2248 = vmatprep.subr.mxu0 0.0
        %2249 = vmatpush1.xpose.msra.mxu0 0.0
        %2250 = vmatprep.subr.mxu0 0.0
        %2251 = vmatpush1.xpose.msra.mxu0 0.0
        %2252 = vmatprep.subr.mxu0 0.0
        %2253 = vmatpush1.xpose.msra.mxu0 0.0
        %2254 = vmatprep.subr.mxu0 0.0
        %2255 = vmatpush1.xpose.msra.mxu0 0.0
        %2256 = vmatprep.subr.mxu0 0.0
        %2257 = vmatpush1.xpose.msra.mxu0 0.0
        %2258 = vmatprep.subr.mxu0 0.0
        %2259 = vmatpush1.xpose.msra.mxu0 0.0
        %2260 = vmatprep.subr.mxu0 0.0
        %2261 = vmatpush1.xpose.msra.mxu0 0.0
        %2262 = vmatprep.subr.mxu0 0.0
        %2263 = vmatpush1.xpose.msra.mxu0 0.0
        %2264 = vmatprep.subr.mxu0 0.0
        %2265 = vmatpush1.xpose.msra.mxu0 0.0
        %2266 = vmatprep.subr.mxu0 0.0
        %2267 = vmatpush1.xpose.msra.mxu0 0.0
        %2268 = vmatprep.subr.mxu0 0.0
        %2269 = vmatpush1.xpose.msra.mxu0 0.0
        %2270 = vmatprep.subr.mxu0 0.0
        %2271 = vmatpush1.xpose.msra.mxu0 0.0
        %2272 = vmatprep.subr.mxu0 0.0
        %2273 = vmatpush1.xpose.msra.mxu0 0.0
        %2274 = vmatprep.subr.mxu0 0.0
        %2275 = vmatpush1.xpose.msra.mxu0 0.0
        %2276 = vmatprep.mubr.f32.mxu0 0.0
        %2277 = vmatmul.mubr.f32.gmra.mrb[0].mxu0 %v2204
        %v2278 = vpop.f32.mrb[0].mxu0
        %v2279 = vadd.f32 0.0, %v2278
        %v2280 = vpop.f32.mrb[0].mxu0
        %2281 = vmatprep.mubr.f32.mxu0 0.0
        %2282 = vmatmul.mubr.f32.gmra.mrb[0].mxu0 %v2206
        %v2283 = vpop.f32.mrb[0].mxu0
        %v2284 = vadd.f32 0.0, %v2283
        %v2285 = vpop.f32.mrb[0].mxu0
        %2286 = vdwg.mxu0
        %v2287 = vmul.f32 %v2279, 0.35355338
        %v2288 = vmul.f32 %v2284, 0.35355338
        %v2289 = vsel %vm2188, %v2287, -inf
        %2290 = vmax.xlane.f32.xlu0 %v2289
        %v2291 = vpop.xlane.xlu0 %2290
        %v2292 = vsel %vm2188, %v2288, -inf
        %2293 = vmax.xlane.f32.xlu0 %v2292
        %v2294 = vpop.xlane.xlu0 %2293
        %v2295 = vsub.f32 %v2287, %v2291
        %v2296 = vsub.f32 %v2288, %v2294
        %v2297 = vmul.f32 %v2295, 1.442695
        %v2298 = vpow.pop %v2297
        %v2299 = vmul.f32 %v2296, 1.442695
        %v2300 = vpow.pop %v2299
        %v2301 = vsel %vm2188, %v2298, 0.0
        %2302 = vadd.xlane.f32.xlu0 %v2301
        %v2303 = vpop.xlane.xlu0 %2302
        %v2304 = vsel %vm2188, %v2300, 0.0
        %2305 = vadd.xlane.f32.xlu0 %v2304
        %v2306 = vpop.xlane.xlu0 %2305
        %v2307 = vrcp.pop %v2303
        %v2308 = vmul.f32 %v2298, %v2307
        %v2309 = vrcp.pop %v2306
        %v2310 = vmul.f32 %v2300, %v2309
        %v2312 = vsel %vm2188, %v2308, 0
        %v2315 = vsel %vm2188, %v2310, 0
        %2317 = vmatprep.subr.mxu0 0.0
        %2318 = vmatpush1.msra.mxu0 %v725
        %2319 = vmatprep.subr.mxu0 0.0
        %2320 = vmatpush1.msra.mxu0 %v731
        %2321 = vmatprep.subr.mxu0 0.0
        %2322 = vmatpush1.msra.mxu0 %v737
        %2323 = vmatprep.subr.mxu0 0.0
        %2324 = vmatpush1.msra.mxu0 0.0
        %2325 = vmatprep.subr.mxu0 0.0
        %2326 = vmatpush1.msra.mxu0 0.0
        %2327 = vmatprep.subr.mxu0 0.0
        %2328 = vmatpush1.msra.mxu0 0.0
        %2329 = vmatprep.subr.mxu0 0.0
        %2330 = vmatpush1.msra.mxu0 0.0
        %2331 = vmatprep.subr.mxu0 0.0
        %2332 = vmatpush1.msra.mxu0 0.0
        %2333 = vmatprep.subr.mxu0 0.0
        %2334 = vmatpush1.msra.mxu0 0.0
        %2335 = vmatprep.subr.mxu0 0.0
        %2336 = vmatpush1.msra.mxu0 0.0
        %2337 = vmatprep.subr.mxu0 0.0
        %2338 = vmatpush1.msra.mxu0 0.0
        %2339 = vmatprep.subr.mxu0 0.0
        %2340 = vmatpush1.msra.mxu0 0.0
        %2341 = vmatprep.subr.mxu0 0.0
        %2342 = vmatpush1.msra.mxu0 0.0
        %2343 = vmatprep.subr.mxu0 0.0
        %2344 = vmatpush1.msra.mxu0 0.0
        %2345 = vmatprep.subr.mxu0 0.0
        %2346 = vmatpush1.msra.mxu0 0.0
        %2347 = vmatprep.subr.mxu0 0.0
        %2348 = vmatpush1.msra.mxu0 0.0
        %2349 = vmatprep.subr.mxu0 0.0
        %2350 = vmatpush1.msra.mxu0 0.0
        %2351 = vmatprep.subr.mxu0 0.0
        %2352 = vmatpush1.msra.mxu0 0.0
        %2353 = vmatprep.subr.mxu0 0.0
        %2354 = vmatpush1.msra.mxu0 0.0
        %2355 = vmatprep.subr.mxu0 0.0
        %2356 = vmatpush1.msra.mxu0 0.0
        %2357 = vmatprep.subr.mxu0 0.0
        %2358 = vmatpush1.msra.mxu0 0.0
        %2359 = vmatprep.subr.mxu0 0.0
        %2360 = vmatpush1.msra.mxu0 0.0
        %2361 = vmatprep.subr.mxu0 0.0
        %2362 = vmatpush1.msra.mxu0 0.0
        %2363 = vmatprep.subr.mxu0 0.0
        %2364 = vmatpush1.msra.mxu0 0.0
        %2365 = vmatprep.subr.mxu0 0.0
        %2366 = vmatpush1.msra.mxu0 0.0
        %2367 = vmatprep.subr.mxu0 0.0
        %2368 = vmatpush1.msra.mxu0 0.0
        %2369 = vmatprep.subr.mxu0 0.0
        %2370 = vmatpush1.msra.mxu0 0.0
        %2371 = vmatprep.subr.mxu0 0.0
        %2372 = vmatpush1.msra.mxu0 0.0
        %2373 = vmatprep.subr.mxu0 0.0
        %2374 = vmatpush1.msra.mxu0 0.0
        %2375 = vmatprep.subr.mxu0 0.0
        %2376 = vmatpush1.msra.mxu0 0.0
        %2377 = vmatprep.subr.mxu0 0.0
        %2378 = vmatpush1.msra.mxu0 0.0
        %2379 = vmatprep.subr.mxu0 0.0
        %2380 = vmatpush1.msra.mxu0 0.0
        %2381 = vmatprep.mubr.f32.mxu0 0.0
        %2382 = vmatmul.mubr.f32.gmra.mrb[0].mxu0 %v2312
        %v2383 = vpop.f32.mrb[0].mxu0
        %v2384 = vadd.f32 0.0, %v2383
        %v2385 = vpop.f32.mrb[0].mxu0
        %2386 = vmatprep.mubr.f32.mxu0 0.0
        %2387 = vmatmul.mubr.f32.gmra.mrb[0].mxu0 %v2315
        %v2388 = vpop.f32.mrb[0].mxu0
        %v2389 = vadd.f32 0.0, %v2388
        %v2390 = vpop.f32.mrb[0].mxu0
        %2391 = vdwg.mxu0
        %2392 = vrot.lane.b32.xlu0 %v729, 120
        %v2393 = vpop.permute.xlu0 %2392
        %2394 = vrot.lane.b32.xlu0 %v735, 120
        %v2395 = vpop.permute.xlu0 %2394
        %2396 = vrot.lane.b32.xlu0 %v729, 56
        %v2397 = vpop.permute.xlu0 %2396
        %2398 = vrot.lane.b32.xlu0 %v735, 56
        %v2399 = vpop.permute.xlu0 %2398
        %v2400 = vsel %vm834, %v2393, 0
        %v2402 = vsel %vm834, %v2395, 0
        %v2404 = vsel %vm834, %v2397, 0
        %v2406 = vsel %vm834, %v2399, 0
        %2408 = vmatprep.subr.mxu0 0.0
        %2409 = vmatpush1.xpose.msra.mxu0 %v1000
        %2410 = vmatprep.subr.mxu0 0.0
        %2411 = vmatpush1.xpose.msra.mxu0 %v2404
        %2412 = vmatprep.subr.mxu0 0.0
        %2413 = vmatpush1.xpose.msra.mxu0 %v2406
        %2414 = vmatprep.subr.mxu0 0.0
        %2415 = vmatpush1.xpose.msra.mxu0 0.0
        %2416 = vmatprep.subr.mxu0 0.0
        %2417 = vmatpush1.xpose.msra.mxu0 0.0
        %2418 = vmatprep.subr.mxu0 0.0
        %2419 = vmatpush1.xpose.msra.mxu0 0.0
        %2420 = vmatprep.subr.mxu0 0.0
        %2421 = vmatpush1.xpose.msra.mxu0 0.0
        %2422 = vmatprep.subr.mxu0 0.0
        %2423 = vmatpush1.xpose.msra.mxu0 0.0
        %2424 = vmatprep.subr.mxu0 0.0
        %2425 = vmatpush1.xpose.msra.mxu0 0.0
        %2426 = vmatprep.subr.mxu0 0.0
        %2427 = vmatpush1.xpose.msra.mxu0 0.0
        %2428 = vmatprep.subr.mxu0 0.0
        %2429 = vmatpush1.xpose.msra.mxu0 0.0
        %2430 = vmatprep.subr.mxu0 0.0
        %2431 = vmatpush1.xpose.msra.mxu0 0.0
        %2432 = vmatprep.subr.mxu0 0.0
        %2433 = vmatpush1.xpose.msra.mxu0 0.0
        %2434 = vmatprep.subr.mxu0 0.0
        %2435 = vmatpush1.xpose.msra.mxu0 0.0
        %2436 = vmatprep.subr.mxu0 0.0
        %2437 = vmatpush1.xpose.msra.mxu0 0.0
        %2438 = vmatprep.subr.mxu0 0.0
        %2439 = vmatpush1.xpose.msra.mxu0 0.0
        %2440 = vmatprep.subr.mxu0 0.0
        %2441 = vmatpush1.xpose.msra.mxu0 0.0
        %2442 = vmatprep.subr.mxu0 0.0
        %2443 = vmatpush1.xpose.msra.mxu0 0.0
        %2444 = vmatprep.subr.mxu0 0.0
        %2445 = vmatpush1.xpose.msra.mxu0 0.0
        %2446 = vmatprep.subr.mxu0 0.0
        %2447 = vmatpush1.xpose.msra.mxu0 0.0
        %2448 = vmatprep.subr.mxu0 0.0
        %2449 = vmatpush1.xpose.msra.mxu0 0.0
        %2450 = vmatprep.subr.mxu0 0.0
        %2451 = vmatpush1.xpose.msra.mxu0 0.0
        %2452 = vmatprep.subr.mxu0 0.0
        %2453 = vmatpush1.xpose.msra.mxu0 0.0
        %2454 = vmatprep.subr.mxu0 0.0
        %2455 = vmatpush1.xpose.msra.mxu0 0.0
        %2456 = vmatprep.subr.mxu0 0.0
        %2457 = vmatpush1.xpose.msra.mxu0 0.0
        %2458 = vmatprep.subr.mxu0 0.0
        %2459 = vmatpush1.xpose.msra.mxu0 0.0
        %2460 = vmatprep.subr.mxu0 0.0
        %2461 = vmatpush1.xpose.msra.mxu0 0.0
        %2462 = vmatprep.subr.mxu0 0.0
        %2463 = vmatpush1.xpose.msra.mxu0 0.0
        %2464 = vmatprep.subr.mxu0 0.0
        %2465 = vmatpush1.xpose.msra.mxu0 0.0
        %2466 = vmatprep.subr.mxu0 0.0
        %2467 = vmatpush1.xpose.msra.mxu0 0.0
        %2468 = vmatprep.subr.mxu0 0.0
        %2469 = vmatpush1.xpose.msra.mxu0 0.0
        %2470 = vmatprep.subr.mxu0 0.0
        %2471 = vmatpush1.xpose.msra.mxu0 0.0
        %2472 = vmatprep.mubr.f32.mxu0 0.0
        %2473 = vmatmul.mubr.f32.gmra.mrb[0].mxu0 %v2400
        %v2474 = vpop.f32.mrb[0].mxu0
        %v2475 = vadd.f32 0.0, %v2474
        %v2476 = vpop.f32.mrb[0].mxu0
        %2477 = vmatprep.mubr.f32.mxu0 0.0
        %2478 = vmatmul.mubr.f32.gmra.mrb[0].mxu0 %v2402
        %v2479 = vpop.f32.mrb[0].mxu0
        %v2480 = vadd.f32 0.0, %v2479
        %v2481 = vpop.f32.mrb[0].mxu0
        %2482 = vdwg.mxu0
        %v2483 = vmul.f32 %v2475, 0.35355338
        %v2484 = vmul.f32 %v2480, 0.35355338
        %v2485 = vsel %vm2188, %v2483, -inf
        %2486 = vmax.xlane.f32.xlu0 %v2485
        %v2487 = vpop.xlane.xlu0 %2486
        %v2488 = vsel %vm2188, %v2484, -inf
        %2489 = vmax.xlane.f32.xlu0 %v2488
        %v2490 = vpop.xlane.xlu0 %2489
        %v2491 = vsub.f32 %v2483, %v2487
        %v2492 = vsub.f32 %v2484, %v2490
        %v2493 = vmul.f32 %v2491, 1.442695
        %v2494 = vpow.pop %v2493
        %v2495 = vmul.f32 %v2492, 1.442695
        %v2496 = vpow.pop %v2495
        %v2497 = vsel %vm2188, %v2494, 0.0
        %2498 = vadd.xlane.f32.xlu0 %v2497
        %v2499 = vpop.xlane.xlu0 %2498
        %v2500 = vsel %vm2188, %v2496, 0.0
        %2501 = vadd.xlane.f32.xlu0 %v2500
        %v2502 = vpop.xlane.xlu0 %2501
        %v2503 = vrcp.pop %v2499
        %v2504 = vmul.f32 %v2494, %v2503
        %v2505 = vrcp.pop %v2502
        %v2506 = vmul.f32 %v2496, %v2505
        %2509 = vrot.lane.b32.xlu0 %v731, 120
        %v2510 = vpop.permute.xlu0 %2509
        %2511 = vrot.lane.b32.xlu0 %v737, 120
        %v2512 = vpop.permute.xlu0 %2511
        %v2516 = vsel %vm2188, %v2504, 0
        %v2519 = vsel %vm2188, %v2506, 0
        %2521 = vmatprep.subr.mxu0 0.0
        %2522 = vmatpush1.msra.mxu0 %v1086
        %2523 = vmatprep.subr.mxu0 0.0
        %2524 = vmatpush1.msra.mxu0 %v2510
        %2525 = vmatprep.subr.mxu0 0.0
        %2526 = vmatpush1.msra.mxu0 %v2512
        %2527 = vmatprep.subr.mxu0 0.0
        %2528 = vmatpush1.msra.mxu0 0.0
        %2529 = vmatprep.subr.mxu0 0.0
        %2530 = vmatpush1.msra.mxu0 0.0
        %2531 = vmatprep.subr.mxu0 0.0
        %2532 = vmatpush1.msra.mxu0 0.0
        %2533 = vmatprep.subr.mxu0 0.0
        %2534 = vmatpush1.msra.mxu0 0.0
        %2535 = vmatprep.subr.mxu0 0.0
        %2536 = vmatpush1.msra.mxu0 0.0
        %2537 = vmatprep.subr.mxu0 0.0
        %2538 = vmatpush1.msra.mxu0 0.0
        %2539 = vmatprep.subr.mxu0 0.0
        %2540 = vmatpush1.msra.mxu0 0.0
        %2541 = vmatprep.subr.mxu0 0.0
        %2542 = vmatpush1.msra.mxu0 0.0
        %2543 = vmatprep.subr.mxu0 0.0
        %2544 = vmatpush1.msra.mxu0 0.0
        %2545 = vmatprep.subr.mxu0 0.0
        %2546 = vmatpush1.msra.mxu0 0.0
        %2547 = vmatprep.subr.mxu0 0.0
        %2548 = vmatpush1.msra.mxu0 0.0
        %2549 = vmatprep.subr.mxu0 0.0
        %2550 = vmatpush1.msra.mxu0 0.0
        %2551 = vmatprep.subr.mxu0 0.0
        %2552 = vmatpush1.msra.mxu0 0.0
        %2553 = vmatprep.subr.mxu0 0.0
        %2554 = vmatpush1.msra.mxu0 0.0
        %2555 = vmatprep.subr.mxu0 0.0
        %2556 = vmatpush1.msra.mxu0 0.0
        %2557 = vmatprep.subr.mxu0 0.0
        %2558 = vmatpush1.msra.mxu0 0.0
        %2559 = vmatprep.subr.mxu0 0.0
        %2560 = vmatpush1.msra.mxu0 0.0
        %2561 = vmatprep.subr.mxu0 0.0
        %2562 = vmatpush1.msra.mxu0 0.0
        %2563 = vmatprep.subr.mxu0 0.0
        %2564 = vmatpush1.msra.mxu0 0.0
        %2565 = vmatprep.subr.mxu0 0.0
        %2566 = vmatpush1.msra.mxu0 0.0
        %2567 = vmatprep.subr.mxu0 0.0
        %2568 = vmatpush1.msra.mxu0 0.0
        %2569 = vmatprep.subr.mxu0 0.0
        %2570 = vmatpush1.msra.mxu0 0.0
        %2571 = vmatprep.subr.mxu0 0.0
        %2572 = vmatpush1.msra.mxu0 0.0
        %2573 = vmatprep.subr.mxu0 0.0
        %2574 = vmatpush1.msra.mxu0 0.0
        %2575 = vmatprep.subr.mxu0 0.0
        %2576 = vmatpush1.msra.mxu0 0.0
        %2577 = vmatprep.subr.mxu0 0.0
        %2578 = vmatpush1.msra.mxu0 0.0
        %2579 = vmatprep.subr.mxu0 0.0
        %2580 = vmatpush1.msra.mxu0 0.0
        %2581 = vmatprep.subr.mxu0 0.0
        %2582 = vmatpush1.msra.mxu0 0.0
        %2583 = vmatprep.subr.mxu0 0.0
        %2584 = vmatpush1.msra.mxu0 0.0
        %2585 = vmatprep.mubr.f32.mxu0 0.0
        %2586 = vmatmul.mubr.f32.gmra.mrb[0].mxu0 %v2516
        %v2587 = vpop.f32.mrb[0].mxu0
        %v2588 = vadd.f32 0.0, %v2587
        %v2589 = vpop.f32.mrb[0].mxu0
        %2590 = vmatprep.mubr.f32.mxu0 0.0
        %2591 = vmatmul.mubr.f32.gmra.mrb[0].mxu0 %v2519
        %v2592 = vpop.f32.mrb[0].mxu0
        %v2593 = vadd.f32 0.0, %v2592
        %v2594 = vpop.f32.mrb[0].mxu0
        %2595 = vdwg.mxu0
        %2596 = vrot.lane.b32.xlu0 %v729, 112
        %v2597 = vpop.permute.xlu0 %2596
        %2598 = vrot.lane.b32.xlu0 %v735, 112
        %v2599 = vpop.permute.xlu0 %2598
        %2600 = vrot.lane.b32.xlu0 %v729, 48
        %v2601 = vpop.permute.xlu0 %2600
        %2602 = vrot.lane.b32.xlu0 %v735, 48
        %v2603 = vpop.permute.xlu0 %2602
        %v2604 = vsel %vm834, %v2597, 0
        %v2606 = vsel %vm834, %v2599, 0
        %v2608 = vsel %vm834, %v2601, 0
        %v2610 = vsel %vm834, %v2603, 0
        %2612 = vmatprep.subr.mxu0 0.0
        %2613 = vmatpush1.xpose.msra.mxu0 %v1167
        %2614 = vmatprep.subr.mxu0 0.0
        %2615 = vmatpush1.xpose.msra.mxu0 %v2608
        %2616 = vmatprep.subr.mxu0 0.0
        %2617 = vmatpush1.xpose.msra.mxu0 %v2610
        %2618 = vmatprep.subr.mxu0 0.0
        %2619 = vmatpush1.xpose.msra.mxu0 0.0
        %2620 = vmatprep.subr.mxu0 0.0
        %2621 = vmatpush1.xpose.msra.mxu0 0.0
        %2622 = vmatprep.subr.mxu0 0.0
        %2623 = vmatpush1.xpose.msra.mxu0 0.0
        %2624 = vmatprep.subr.mxu0 0.0
        %2625 = vmatpush1.xpose.msra.mxu0 0.0
        %2626 = vmatprep.subr.mxu0 0.0
        %2627 = vmatpush1.xpose.msra.mxu0 0.0
        %2628 = vmatprep.subr.mxu0 0.0
        %2629 = vmatpush1.xpose.msra.mxu0 0.0
        %2630 = vmatprep.subr.mxu0 0.0
        %2631 = vmatpush1.xpose.msra.mxu0 0.0
        %2632 = vmatprep.subr.mxu0 0.0
        %2633 = vmatpush1.xpose.msra.mxu0 0.0
        %2634 = vmatprep.subr.mxu0 0.0
        %2635 = vmatpush1.xpose.msra.mxu0 0.0
        %2636 = vmatprep.subr.mxu0 0.0
        %2637 = vmatpush1.xpose.msra.mxu0 0.0
        %2638 = vmatprep.subr.mxu0 0.0
        %2639 = vmatpush1.xpose.msra.mxu0 0.0
        %2640 = vmatprep.subr.mxu0 0.0
        %2641 = vmatpush1.xpose.msra.mxu0 0.0
        %2642 = vmatprep.subr.mxu0 0.0
        %2643 = vmatpush1.xpose.msra.mxu0 0.0
        %2644 = vmatprep.subr.mxu0 0.0
        %2645 = vmatpush1.xpose.msra.mxu0 0.0
        %2646 = vmatprep.subr.mxu0 0.0
        %2647 = vmatpush1.xpose.msra.mxu0 0.0
        %2648 = vmatprep.subr.mxu0 0.0
        %2649 = vmatpush1.xpose.msra.mxu0 0.0
        %2650 = vmatprep.subr.mxu0 0.0
        %2651 = vmatpush1.xpose.msra.mxu0 0.0
        %2652 = vmatprep.subr.mxu0 0.0
        %2653 = vmatpush1.xpose.msra.mxu0 0.0
        %2654 = vmatprep.subr.mxu0 0.0
        %2655 = vmatpush1.xpose.msra.mxu0 0.0
        %2656 = vmatprep.subr.mxu0 0.0
        %2657 = vmatpush1.xpose.msra.mxu0 0.0
        %2658 = vmatprep.subr.mxu0 0.0
        %2659 = vmatpush1.xpose.msra.mxu0 0.0
        %2660 = vmatprep.subr.mxu0 0.0
        %2661 = vmatpush1.xpose.msra.mxu0 0.0
        %2662 = vmatprep.subr.mxu0 0.0
        %2663 = vmatpush1.xpose.msra.mxu0 0.0
        %2664 = vmatprep.subr.mxu0 0.0
        %2665 = vmatpush1.xpose.msra.mxu0 0.0
        %2666 = vmatprep.subr.mxu0 0.0
        %2667 = vmatpush1.xpose.msra.mxu0 0.0
        %2668 = vmatprep.subr.mxu0 0.0
        %2669 = vmatpush1.xpose.msra.mxu0 0.0
        %2670 = vmatprep.subr.mxu0 0.0
        %2671 = vmatpush1.xpose.msra.mxu0 0.0
        %2672 = vmatprep.subr.mxu0 0.0
        %2673 = vmatpush1.xpose.msra.mxu0 0.0
        %2674 = vmatprep.subr.mxu0 0.0
        %2675 = vmatpush1.xpose.msra.mxu0 0.0
        %2676 = vmatprep.mubr.f32.mxu0 0.0
        %2677 = vmatmul.mubr.f32.gmra.mrb[0].mxu0 %v2604
        %v2678 = vpop.f32.mrb[0].mxu0
        %v2679 = vadd.f32 0.0, %v2678
        %v2680 = vpop.f32.mrb[0].mxu0
        %2681 = vmatprep.mubr.f32.mxu0 0.0
        %2682 = vmatmul.mubr.f32.gmra.mrb[0].mxu0 %v2606
        %v2683 = vpop.f32.mrb[0].mxu0
        %v2684 = vadd.f32 0.0, %v2683
        %v2685 = vpop.f32.mrb[0].mxu0
        %2686 = vdwg.mxu0
        %v2687 = vmul.f32 %v2679, 0.35355338
        %v2688 = vmul.f32 %v2684, 0.35355338
        %v2689 = vsel %vm2188, %v2687, -inf
        %2690 = vmax.xlane.f32.xlu0 %v2689
        %v2691 = vpop.xlane.xlu0 %2690
        %v2692 = vsel %vm2188, %v2688, -inf
        %2693 = vmax.xlane.f32.xlu0 %v2692
        %v2694 = vpop.xlane.xlu0 %2693
        %v2695 = vsub.f32 %v2687, %v2691
        %v2696 = vsub.f32 %v2688, %v2694
        %v2697 = vmul.f32 %v2695, 1.442695
        %v2698 = vpow.pop %v2697
        %v2699 = vmul.f32 %v2696, 1.442695
        %v2700 = vpow.pop %v2699
        %v2701 = vsel %vm2188, %v2698, 0.0
        %2702 = vadd.xlane.f32.xlu0 %v2701
        %v2703 = vpop.xlane.xlu0 %2702
        %v2704 = vsel %vm2188, %v2700, 0.0
        %2705 = vadd.xlane.f32.xlu0 %v2704
        %v2706 = vpop.xlane.xlu0 %2705
        %v2707 = vrcp.pop %v2703
        %v2708 = vmul.f32 %v2698, %v2707
        %v2709 = vrcp.pop %v2706
        %v2710 = vmul.f32 %v2700, %v2709
        %2711 = vrot.lane.b32.xlu0 %v731, 112
        %v2712 = vpop.permute.xlu0 %2711
        %2713 = vrot.lane.b32.xlu0 %v737, 112
        %v2714 = vpop.permute.xlu0 %2713
        %v2718 = vsel %vm2188, %v2708, 0
        %v2721 = vsel %vm2188, %v2710, 0
        %2723 = vmatprep.subr.mxu0 0.0
        %2724 = vmatpush1.msra.mxu0 %v1252
        %2725 = vmatprep.subr.mxu0 0.0
        %2726 = vmatpush1.msra.mxu0 %v2712
        %2727 = vmatprep.subr.mxu0 0.0
        %2728 = vmatpush1.msra.mxu0 %v2714
        %2729 = vmatprep.subr.mxu0 0.0
        %2730 = vmatpush1.msra.mxu0 0.0
        %2731 = vmatprep.subr.mxu0 0.0
        %2732 = vmatpush1.msra.mxu0 0.0
        %2733 = vmatprep.subr.mxu0 0.0
        %2734 = vmatpush1.msra.mxu0 0.0
        %2735 = vmatprep.subr.mxu0 0.0
        %2736 = vmatpush1.msra.mxu0 0.0
        %2737 = vmatprep.subr.mxu0 0.0
        %2738 = vmatpush1.msra.mxu0 0.0
        %2739 = vmatprep.subr.mxu0 0.0
        %2740 = vmatpush1.msra.mxu0 0.0
        %2741 = vmatprep.subr.mxu0 0.0
        %2742 = vmatpush1.msra.mxu0 0.0
        %2743 = vmatprep.subr.mxu0 0.0
        %2744 = vmatpush1.msra.mxu0 0.0
        %2745 = vmatprep.subr.mxu0 0.0
        %2746 = vmatpush1.msra.mxu0 0.0
        %2747 = vmatprep.subr.mxu0 0.0
        %2748 = vmatpush1.msra.mxu0 0.0
        %2749 = vmatprep.subr.mxu0 0.0
        %2750 = vmatpush1.msra.mxu0 0.0
        %2751 = vmatprep.subr.mxu0 0.0
        %2752 = vmatpush1.msra.mxu0 0.0
        %2753 = vmatprep.subr.mxu0 0.0
        %2754 = vmatpush1.msra.mxu0 0.0
        %2755 = vmatprep.subr.mxu0 0.0
        %2756 = vmatpush1.msra.mxu0 0.0
        %2757 = vmatprep.subr.mxu0 0.0
        %2758 = vmatpush1.msra.mxu0 0.0
        %2759 = vmatprep.subr.mxu0 0.0
        %2760 = vmatpush1.msra.mxu0 0.0
        %2761 = vmatprep.subr.mxu0 0.0
        %2762 = vmatpush1.msra.mxu0 0.0
        %2763 = vmatprep.subr.mxu0 0.0
        %2764 = vmatpush1.msra.mxu0 0.0
        %2765 = vmatprep.subr.mxu0 0.0
        %2766 = vmatpush1.msra.mxu0 0.0
        %2767 = vmatprep.subr.mxu0 0.0
        %2768 = vmatpush1.msra.mxu0 0.0
        %2769 = vmatprep.subr.mxu0 0.0
        %2770 = vmatpush1.msra.mxu0 0.0
        %2771 = vmatprep.subr.mxu0 0.0
        %2772 = vmatpush1.msra.mxu0 0.0
        %2773 = vmatprep.subr.mxu0 0.0
        %2774 = vmatpush1.msra.mxu0 0.0
        %2775 = vmatprep.subr.mxu0 0.0
        %2776 = vmatpush1.msra.mxu0 0.0
        %2777 = vmatprep.subr.mxu0 0.0
        %2778 = vmatpush1.msra.mxu0 0.0
        %2779 = vmatprep.subr.mxu0 0.0
        %2780 = vmatpush1.msra.mxu0 0.0
        %2781 = vmatprep.subr.mxu0 0.0
        %2782 = vmatpush1.msra.mxu0 0.0
        %2783 = vmatprep.subr.mxu0 0.0
        %2784 = vmatpush1.msra.mxu0 0.0
        %2785 = vmatprep.subr.mxu0 0.0
        %2786 = vmatpush1.msra.mxu0 0.0
        %2787 = vmatprep.mubr.f32.mxu0 0.0
        %2788 = vmatmul.mubr.f32.gmra.mrb[0].mxu0 %v2718
        %v2789 = vpop.f32.mrb[0].mxu0
        %v2790 = vadd.f32 0.0, %v2789
        %v2791 = vpop.f32.mrb[0].mxu0
        %2792 = vmatprep.mubr.f32.mxu0 0.0
        %2793 = vmatmul.mubr.f32.gmra.mrb[0].mxu0 %v2721
        %v2794 = vpop.f32.mrb[0].mxu0
        %v2795 = vadd.f32 0.0, %v2794
        %v2796 = vpop.f32.mrb[0].mxu0
        %2797 = vdwg.mxu0
        %2798 = vrot.lane.b32.xlu0 %v729, 104
        %v2799 = vpop.permute.xlu0 %2798
        %2800 = vrot.lane.b32.xlu0 %v735, 104
        %v2801 = vpop.permute.xlu0 %2800
        %2802 = vrot.lane.b32.xlu0 %v729, 40
        %v2803 = vpop.permute.xlu0 %2802
        %2804 = vrot.lane.b32.xlu0 %v735, 40
        %v2805 = vpop.permute.xlu0 %2804
        %v2806 = vsel %vm834, %v2799, 0
        %v2808 = vsel %vm834, %v2801, 0
        %v2810 = vsel %vm834, %v2803, 0
        %v2812 = vsel %vm834, %v2805, 0
        %2814 = vmatprep.subr.mxu0 0.0
        %2815 = vmatpush1.xpose.msra.mxu0 %v1333
        %2816 = vmatprep.subr.mxu0 0.0
        %2817 = vmatpush1.xpose.msra.mxu0 %v2810
        %2818 = vmatprep.subr.mxu0 0.0
        %2819 = vmatpush1.xpose.msra.mxu0 %v2812
        %2820 = vmatprep.subr.mxu0 0.0
        %2821 = vmatpush1.xpose.msra.mxu0 0.0
        %2822 = vmatprep.subr.mxu0 0.0
        %2823 = vmatpush1.xpose.msra.mxu0 0.0
        %2824 = vmatprep.subr.mxu0 0.0
        %2825 = vmatpush1.xpose.msra.mxu0 0.0
        %2826 = vmatprep.subr.mxu0 0.0
        %2827 = vmatpush1.xpose.msra.mxu0 0.0
        %2828 = vmatprep.subr.mxu0 0.0
        %2829 = vmatpush1.xpose.msra.mxu0 0.0
        %2830 = vmatprep.subr.mxu0 0.0
        %2831 = vmatpush1.xpose.msra.mxu0 0.0
        %2832 = vmatprep.subr.mxu0 0.0
        %2833 = vmatpush1.xpose.msra.mxu0 0.0
        %2834 = vmatprep.subr.mxu0 0.0
        %2835 = vmatpush1.xpose.msra.mxu0 0.0
        %2836 = vmatprep.subr.mxu0 0.0
        %2837 = vmatpush1.xpose.msra.mxu0 0.0
        %2838 = vmatprep.subr.mxu0 0.0
        %2839 = vmatpush1.xpose.msra.mxu0 0.0
        %2840 = vmatprep.subr.mxu0 0.0
        %2841 = vmatpush1.xpose.msra.mxu0 0.0
        %2842 = vmatprep.subr.mxu0 0.0
        %2843 = vmatpush1.xpose.msra.mxu0 0.0
        %2844 = vmatprep.subr.mxu0 0.0
        %2845 = vmatpush1.xpose.msra.mxu0 0.0
        %2846 = vmatprep.subr.mxu0 0.0
        %2847 = vmatpush1.xpose.msra.mxu0 0.0
        %2848 = vmatprep.subr.mxu0 0.0
        %2849 = vmatpush1.xpose.msra.mxu0 0.0
        %2850 = vmatprep.subr.mxu0 0.0
        %2851 = vmatpush1.xpose.msra.mxu0 0.0
        %2852 = vmatprep.subr.mxu0 0.0
        %2853 = vmatpush1.xpose.msra.mxu0 0.0
        %2854 = vmatprep.subr.mxu0 0.0
        %2855 = vmatpush1.xpose.msra.mxu0 0.0
        %2856 = vmatprep.subr.mxu0 0.0
        %2857 = vmatpush1.xpose.msra.mxu0 0.0
        %2858 = vmatprep.subr.mxu0 0.0
        %2859 = vmatpush1.xpose.msra.mxu0 0.0
        %2860 = vmatprep.subr.mxu0 0.0
        %2861 = vmatpush1.xpose.msra.mxu0 0.0
        %2862 = vmatprep.subr.mxu0 0.0
        %2863 = vmatpush1.xpose.msra.mxu0 0.0
        %2864 = vmatprep.subr.mxu0 0.0
        %2865 = vmatpush1.xpose.msra.mxu0 0.0
        %2866 = vmatprep.subr.mxu0 0.0
        %2867 = vmatpush1.xpose.msra.mxu0 0.0
        %2868 = vmatprep.subr.mxu0 0.0
        %2869 = vmatpush1.xpose.msra.mxu0 0.0
        %2870 = vmatprep.subr.mxu0 0.0
        %2871 = vmatpush1.xpose.msra.mxu0 0.0
        %2872 = vmatprep.subr.mxu0 0.0
        %2873 = vmatpush1.xpose.msra.mxu0 0.0
        %2874 = vmatprep.subr.mxu0 0.0
        %2875 = vmatpush1.xpose.msra.mxu0 0.0
        %2876 = vmatprep.subr.mxu0 0.0
        %2877 = vmatpush1.xpose.msra.mxu0 0.0
        %2878 = vmatprep.mubr.f32.mxu0 0.0
        %2879 = vmatmul.mubr.f32.gmra.mrb[0].mxu0 %v2806
        %v2880 = vpop.f32.mrb[0].mxu0
        %v2881 = vadd.f32 0.0, %v2880
        %v2882 = vpop.f32.mrb[0].mxu0
        %2883 = vmatprep.mubr.f32.mxu0 0.0
        %2884 = vmatmul.mubr.f32.gmra.mrb[0].mxu0 %v2808
        %v2885 = vpop.f32.mrb[0].mxu0
        %v2886 = vadd.f32 0.0, %v2885
        %v2887 = vpop.f32.mrb[0].mxu0
        %2888 = vdwg.mxu0
        %v2889 = vmul.f32 %v2881, 0.35355338
        %v2890 = vmul.f32 %v2886, 0.35355338
        %v2891 = vsel %vm2188, %v2889, -inf
        %2892 = vmax.xlane.f32.xlu0 %v2891
        %v2893 = vpop.xlane.xlu0 %2892
        %v2894 = vsel %vm2188, %v2890, -inf
        %2895 = vmax.xlane.f32.xlu0 %v2894
        %v2896 = vpop.xlane.xlu0 %2895
        %v2897 = vsub.f32 %v2889, %v2893
        %v2898 = vsub.f32 %v2890, %v2896
        %v2899 = vmul.f32 %v2897, 1.442695
        %v2900 = vpow.pop %v2899
        %v2901 = vmul.f32 %v2898, 1.442695
        %v2902 = vpow.pop %v2901
        %v2903 = vsel %vm2188, %v2900, 0.0
        %2904 = vadd.xlane.f32.xlu0 %v2903
        %v2905 = vpop.xlane.xlu0 %2904
        %v2906 = vsel %vm2188, %v2902, 0.0
        %2907 = vadd.xlane.f32.xlu0 %v2906
        %v2908 = vpop.xlane.xlu0 %2907
        %v2909 = vrcp.pop %v2905
        %v2910 = vmul.f32 %v2900, %v2909
        %v2911 = vrcp.pop %v2908
        %v2912 = vmul.f32 %v2902, %v2911
        %2913 = vrot.lane.b32.xlu0 %v731, 104
        %v2914 = vpop.permute.xlu0 %2913
        %2915 = vrot.lane.b32.xlu0 %v737, 104
        %v2916 = vpop.permute.xlu0 %2915
        %v2920 = vsel %vm2188, %v2910, 0
        %v2923 = vsel %vm2188, %v2912, 0
        %2925 = vmatprep.subr.mxu0 0.0
        %2926 = vmatpush1.msra.mxu0 %v1418
        %2927 = vmatprep.subr.mxu0 0.0
        %2928 = vmatpush1.msra.mxu0 %v2914
        %2929 = vmatprep.subr.mxu0 0.0
        %2930 = vmatpush1.msra.mxu0 %v2916
        %2931 = vmatprep.subr.mxu0 0.0
        %2932 = vmatpush1.msra.mxu0 0.0
        %2933 = vmatprep.subr.mxu0 0.0
        %2934 = vmatpush1.msra.mxu0 0.0
        %2935 = vmatprep.subr.mxu0 0.0
        %2936 = vmatpush1.msra.mxu0 0.0
        %2937 = vmatprep.subr.mxu0 0.0
        %2938 = vmatpush1.msra.mxu0 0.0
        %2939 = vmatprep.subr.mxu0 0.0
        %2940 = vmatpush1.msra.mxu0 0.0
        %2941 = vmatprep.subr.mxu0 0.0
        %2942 = vmatpush1.msra.mxu0 0.0
        %2943 = vmatprep.subr.mxu0 0.0
        %2944 = vmatpush1.msra.mxu0 0.0
        %2945 = vmatprep.subr.mxu0 0.0
        %2946 = vmatpush1.msra.mxu0 0.0
        %2947 = vmatprep.subr.mxu0 0.0
        %2948 = vmatpush1.msra.mxu0 0.0
        %2949 = vmatprep.subr.mxu0 0.0
        %2950 = vmatpush1.msra.mxu0 0.0
        %2951 = vmatprep.subr.mxu0 0.0
        %2952 = vmatpush1.msra.mxu0 0.0
        %2953 = vmatprep.subr.mxu0 0.0
        %2954 = vmatpush1.msra.mxu0 0.0
        %2955 = vmatprep.subr.mxu0 0.0
        %2956 = vmatpush1.msra.mxu0 0.0
        %2957 = vmatprep.subr.mxu0 0.0
        %2958 = vmatpush1.msra.mxu0 0.0
        %2959 = vmatprep.subr.mxu0 0.0
        %2960 = vmatpush1.msra.mxu0 0.0
        %2961 = vmatprep.subr.mxu0 0.0
        %2962 = vmatpush1.msra.mxu0 0.0
        %2963 = vmatprep.subr.mxu0 0.0
        %2964 = vmatpush1.msra.mxu0 0.0
        %2965 = vmatprep.subr.mxu0 0.0
        %2966 = vmatpush1.msra.mxu0 0.0
        %2967 = vmatprep.subr.mxu0 0.0
        %2968 = vmatpush1.msra.mxu0 0.0
        %2969 = vmatprep.subr.mxu0 0.0
        %2970 = vmatpush1.msra.mxu0 0.0
        %2971 = vmatprep.subr.mxu0 0.0
        %2972 = vmatpush1.msra.mxu0 0.0
        %2973 = vmatprep.subr.mxu0 0.0
        %2974 = vmatpush1.msra.mxu0 0.0
        %2975 = vmatprep.subr.mxu0 0.0
        %2976 = vmatpush1.msra.mxu0 0.0
        %2977 = vmatprep.subr.mxu0 0.0
        %2978 = vmatpush1.msra.mxu0 0.0
        %2979 = vmatprep.subr.mxu0 0.0
        %2980 = vmatpush1.msra.mxu0 0.0
        %2981 = vmatprep.subr.mxu0 0.0
        %2982 = vmatpush1.msra.mxu0 0.0
        %2983 = vmatprep.subr.mxu0 0.0
        %2984 = vmatpush1.msra.mxu0 0.0
        %2985 = vmatprep.subr.mxu0 0.0
        %2986 = vmatpush1.msra.mxu0 0.0
        %2987 = vmatprep.subr.mxu0 0.0
        %2988 = vmatpush1.msra.mxu0 0.0
        %2989 = vmatprep.mubr.f32.mxu0 0.0
        %2990 = vmatmul.mubr.f32.gmra.mrb[0].mxu0 %v2920
        %v2991 = vpop.f32.mrb[0].mxu0
        %v2992 = vadd.f32 0.0, %v2991
        %v2993 = vpop.f32.mrb[0].mxu0
        %2994 = vmatprep.mubr.f32.mxu0 0.0
        %2995 = vmatmul.mubr.f32.gmra.mrb[0].mxu0 %v2923
        %v2996 = vpop.f32.mrb[0].mxu0
        %v2997 = vadd.f32 0.0, %v2996
        %v2998 = vpop.f32.mrb[0].mxu0
        %2999 = vdwg.mxu0
        %3000 = vrot.lane.b32.xlu0 %v729, 96
        %v3001 = vpop.permute.xlu0 %3000
        %3002 = vrot.lane.b32.xlu0 %v735, 96
        %v3003 = vpop.permute.xlu0 %3002
        %3004 = vrot.lane.b32.xlu0 %v729, 32
        %v3005 = vpop.permute.xlu0 %3004
        %3006 = vrot.lane.b32.xlu0 %v735, 32
        %v3007 = vpop.permute.xlu0 %3006
        %v3008 = vsel %vm834, %v3001, 0
        %v3010 = vsel %vm834, %v3003, 0
        %v3012 = vsel %vm834, %v3005, 0
        %v3014 = vsel %vm834, %v3007, 0
        %3016 = vmatprep.subr.mxu0 0.0
        %3017 = vmatpush1.xpose.msra.mxu0 %v1499
        %3018 = vmatprep.subr.mxu0 0.0
        %3019 = vmatpush1.xpose.msra.mxu0 %v3012
        %3020 = vmatprep.subr.mxu0 0.0
        %3021 = vmatpush1.xpose.msra.mxu0 %v3014
        %3022 = vmatprep.subr.mxu0 0.0
        %3023 = vmatpush1.xpose.msra.mxu0 0.0
        %3024 = vmatprep.subr.mxu0 0.0
        %3025 = vmatpush1.xpose.msra.mxu0 0.0
        %3026 = vmatprep.subr.mxu0 0.0
        %3027 = vmatpush1.xpose.msra.mxu0 0.0
        %3028 = vmatprep.subr.mxu0 0.0
        %3029 = vmatpush1.xpose.msra.mxu0 0.0
        %3030 = vmatprep.subr.mxu0 0.0
        %3031 = vmatpush1.xpose.msra.mxu0 0.0
        %3032 = vmatprep.subr.mxu0 0.0
        %3033 = vmatpush1.xpose.msra.mxu0 0.0
        %3034 = vmatprep.subr.mxu0 0.0
        %3035 = vmatpush1.xpose.msra.mxu0 0.0
        %3036 = vmatprep.subr.mxu0 0.0
        %3037 = vmatpush1.xpose.msra.mxu0 0.0
        %3038 = vmatprep.subr.mxu0 0.0
        %3039 = vmatpush1.xpose.msra.mxu0 0.0
        %3040 = vmatprep.subr.mxu0 0.0
        %3041 = vmatpush1.xpose.msra.mxu0 0.0
        %3042 = vmatprep.subr.mxu0 0.0
        %3043 = vmatpush1.xpose.msra.mxu0 0.0
        %3044 = vmatprep.subr.mxu0 0.0
        %3045 = vmatpush1.xpose.msra.mxu0 0.0
        %3046 = vmatprep.subr.mxu0 0.0
        %3047 = vmatpush1.xpose.msra.mxu0 0.0
        %3048 = vmatprep.subr.mxu0 0.0
        %3049 = vmatpush1.xpose.msra.mxu0 0.0
        %3050 = vmatprep.subr.mxu0 0.0
        %3051 = vmatpush1.xpose.msra.mxu0 0.0
        %3052 = vmatprep.subr.mxu0 0.0
        %3053 = vmatpush1.xpose.msra.mxu0 0.0
        %3054 = vmatprep.subr.mxu0 0.0
        %3055 = vmatpush1.xpose.msra.mxu0 0.0
        %3056 = vmatprep.subr.mxu0 0.0
        %3057 = vmatpush1.xpose.msra.mxu0 0.0
        %3058 = vmatprep.subr.mxu0 0.0
        %3059 = vmatpush1.xpose.msra.mxu0 0.0
        %3060 = vmatprep.subr.mxu0 0.0
        %3061 = vmatpush1.xpose.msra.mxu0 0.0
        %3062 = vmatprep.subr.mxu0 0.0
        %3063 = vmatpush1.xpose.msra.mxu0 0.0
        %3064 = vmatprep.subr.mxu0 0.0
        %3065 = vmatpush1.xpose.msra.mxu0 0.0
        %3066 = vmatprep.subr.mxu0 0.0
        %3067 = vmatpush1.xpose.msra.mxu0 0.0
        %3068 = vmatprep.subr.mxu0 0.0
        %3069 = vmatpush1.xpose.msra.mxu0 0.0
        %3070 = vmatprep.subr.mxu0 0.0
        %3071 = vmatpush1.xpose.msra.mxu0 0.0
        %3072 = vmatprep.subr.mxu0 0.0
        %3073 = vmatpush1.xpose.msra.mxu0 0.0
        %3074 = vmatprep.subr.mxu0 0.0
        %3075 = vmatpush1.xpose.msra.mxu0 0.0
        %3076 = vmatprep.subr.mxu0 0.0
        %3077 = vmatpush1.xpose.msra.mxu0 0.0
        %3078 = vmatprep.subr.mxu0 0.0
        %3079 = vmatpush1.xpose.msra.mxu0 0.0
        %3080 = vmatprep.mubr.f32.mxu0 0.0
        %3081 = vmatmul.mubr.f32.gmra.mrb[0].mxu0 %v3008
        %v3082 = vpop.f32.mrb[0].mxu0
        %v3083 = vadd.f32 0.0, %v3082
        %v3084 = vpop.f32.mrb[0].mxu0
        %3085 = vmatprep.mubr.f32.mxu0 0.0
        %3086 = vmatmul.mubr.f32.gmra.mrb[0].mxu0 %v3010
        %v3087 = vpop.f32.mrb[0].mxu0
        %v3088 = vadd.f32 0.0, %v3087
        %v3089 = vpop.f32.mrb[0].mxu0
        %3090 = vdwg.mxu0
        %v3091 = vmul.f32 %v3083, 0.35355338
        %v3092 = vmul.f32 %v3088, 0.35355338
        %v3093 = vsel %vm2188, %v3091, -inf
        %3094 = vmax.xlane.f32.xlu0 %v3093
        %v3095 = vpop.xlane.xlu0 %3094
        %v3096 = vsel %vm2188, %v3092, -inf
        %3097 = vmax.xlane.f32.xlu0 %v3096
        %v3098 = vpop.xlane.xlu0 %3097
        %v3099 = vsub.f32 %v3091, %v3095
        %v3100 = vsub.f32 %v3092, %v3098
        %v3101 = vmul.f32 %v3099, 1.442695
        %v3102 = vpow.pop %v3101
        %v3103 = vmul.f32 %v3100, 1.442695
        %v3104 = vpow.pop %v3103
        %v3105 = vsel %vm2188, %v3102, 0.0
        %3106 = vadd.xlane.f32.xlu0 %v3105
        %v3107 = vpop.xlane.xlu0 %3106
        %v3108 = vsel %vm2188, %v3104, 0.0
        %3109 = vadd.xlane.f32.xlu0 %v3108
        %v3110 = vpop.xlane.xlu0 %3109
        %v3111 = vrcp.pop %v3107
        %v3112 = vmul.f32 %v3102, %v3111
        %v3113 = vrcp.pop %v3110
        %v3114 = vmul.f32 %v3104, %v3113
        %3115 = vrot.lane.b32.xlu0 %v731, 96
        %v3116 = vpop.permute.xlu0 %3115
        %3117 = vrot.lane.b32.xlu0 %v737, 96
        %v3118 = vpop.permute.xlu0 %3117
        %v3122 = vsel %vm2188, %v3112, 0
        %v3125 = vsel %vm2188, %v3114, 0
        %3127 = vmatprep.subr.mxu0 0.0
        %3128 = vmatpush1.msra.mxu0 %v1584
        %3129 = vmatprep.subr.mxu0 0.0
        %3130 = vmatpush1.msra.mxu0 %v3116
        %3131 = vmatprep.subr.mxu0 0.0
        %3132 = vmatpush1.msra.mxu0 %v3118
        %3133 = vmatprep.subr.mxu0 0.0
        %3134 = vmatpush1.msra.mxu0 0.0
        %3135 = vmatprep.subr.mxu0 0.0
        %3136 = vmatpush1.msra.mxu0 0.0
        %3137 = vmatprep.subr.mxu0 0.0
        %3138 = vmatpush1.msra.mxu0 0.0
        %3139 = vmatprep.subr.mxu0 0.0
        %3140 = vmatpush1.msra.mxu0 0.0
        %3141 = vmatprep.subr.mxu0 0.0
        %3142 = vmatpush1.msra.mxu0 0.0
        %3143 = vmatprep.subr.mxu0 0.0
        %3144 = vmatpush1.msra.mxu0 0.0
        %3145 = vmatprep.subr.mxu0 0.0
        %3146 = vmatpush1.msra.mxu0 0.0
        %3147 = vmatprep.subr.mxu0 0.0
        %3148 = vmatpush1.msra.mxu0 0.0
        %3149 = vmatprep.subr.mxu0 0.0
        %3150 = vmatpush1.msra.mxu0 0.0
        %3151 = vmatprep.subr.mxu0 0.0
        %3152 = vmatpush1.msra.mxu0 0.0
        %3153 = vmatprep.subr.mxu0 0.0
        %3154 = vmatpush1.msra.mxu0 0.0
        %3155 = vmatprep.subr.mxu0 0.0
        %3156 = vmatpush1.msra.mxu0 0.0
        %3157 = vmatprep.subr.mxu0 0.0
        %3158 = vmatpush1.msra.mxu0 0.0
        %3159 = vmatprep.subr.mxu0 0.0
        %3160 = vmatpush1.msra.mxu0 0.0
        %3161 = vmatprep.subr.mxu0 0.0
        %3162 = vmatpush1.msra.mxu0 0.0
        %3163 = vmatprep.subr.mxu0 0.0
        %3164 = vmatpush1.msra.mxu0 0.0
        %3165 = vmatprep.subr.mxu0 0.0
        %3166 = vmatpush1.msra.mxu0 0.0
        %3167 = vmatprep.subr.mxu0 0.0
        %3168 = vmatpush1.msra.mxu0 0.0
        %3169 = vmatprep.subr.mxu0 0.0
        %3170 = vmatpush1.msra.mxu0 0.0
        %3171 = vmatprep.subr.mxu0 0.0
        %3172 = vmatpush1.msra.mxu0 0.0
        %3173 = vmatprep.subr.mxu0 0.0
        %3174 = vmatpush1.msra.mxu0 0.0
        %3175 = vmatprep.subr.mxu0 0.0
        %3176 = vmatpush1.msra.mxu0 0.0
        %3177 = vmatprep.subr.mxu0 0.0
        %3178 = vmatpush1.msra.mxu0 0.0
        %3179 = vmatprep.subr.mxu0 0.0
        %3180 = vmatpush1.msra.mxu0 0.0
        %3181 = vmatprep.subr.mxu0 0.0
        %3182 = vmatpush1.msra.mxu0 0.0
        %3183 = vmatprep.subr.mxu0 0.0
        %3184 = vmatpush1.msra.mxu0 0.0
        %3185 = vmatprep.subr.mxu0 0.0
        %3186 = vmatpush1.msra.mxu0 0.0
        %3187 = vmatprep.subr.mxu0 0.0
        %3188 = vmatpush1.msra.mxu0 0.0
        %3189 = vmatprep.subr.mxu0 0.0
        %3190 = vmatpush1.msra.mxu0 0.0
        %3191 = vmatprep.mubr.f32.mxu0 0.0
        %3192 = vmatmul.mubr.f32.gmra.mrb[0].mxu0 %v3122
        %v3193 = vpop.f32.mrb[0].mxu0
        %v3194 = vadd.f32 0.0, %v3193
        %v3195 = vpop.f32.mrb[0].mxu0
        %3196 = vmatprep.mubr.f32.mxu0 0.0
        %3197 = vmatmul.mubr.f32.gmra.mrb[0].mxu0 %v3125
        %v3198 = vpop.f32.mrb[0].mxu0
        %v3199 = vadd.f32 0.0, %v3198
        %v3200 = vpop.f32.mrb[0].mxu0
        %3201 = vdwg.mxu0
        %3202 = vrot.lane.b32.xlu0 %v729, 88
        %v3203 = vpop.permute.xlu0 %3202
        %3204 = vrot.lane.b32.xlu0 %v735, 88
        %v3205 = vpop.permute.xlu0 %3204
        %3206 = vrot.lane.b32.xlu0 %v729, 24
        %v3207 = vpop.permute.xlu0 %3206
        %3208 = vrot.lane.b32.xlu0 %v735, 24
        %v3209 = vpop.permute.xlu0 %3208
        %v3210 = vsel %vm834, %v3203, 0
        %v3212 = vsel %vm834, %v3205, 0
        %v3214 = vsel %vm834, %v3207, 0
        %v3216 = vsel %vm834, %v3209, 0
        %3218 = vmatprep.subr.mxu0 0.0
        %3219 = vmatpush1.xpose.msra.mxu0 %v1665
        %3220 = vmatprep.subr.mxu0 0.0
        %3221 = vmatpush1.xpose.msra.mxu0 %v3214
        %3222 = vmatprep.subr.mxu0 0.0
        %3223 = vmatpush1.xpose.msra.mxu0 %v3216
        %3224 = vmatprep.subr.mxu0 0.0
        %3225 = vmatpush1.xpose.msra.mxu0 0.0
        %3226 = vmatprep.subr.mxu0 0.0
        %3227 = vmatpush1.xpose.msra.mxu0 0.0
        %3228 = vmatprep.subr.mxu0 0.0
        %3229 = vmatpush1.xpose.msra.mxu0 0.0
        %3230 = vmatprep.subr.mxu0 0.0
        %3231 = vmatpush1.xpose.msra.mxu0 0.0
        %3232 = vmatprep.subr.mxu0 0.0
        %3233 = vmatpush1.xpose.msra.mxu0 0.0
        %3234 = vmatprep.subr.mxu0 0.0
        %3235 = vmatpush1.xpose.msra.mxu0 0.0
        %3236 = vmatprep.subr.mxu0 0.0
        %3237 = vmatpush1.xpose.msra.mxu0 0.0
        %3238 = vmatprep.subr.mxu0 0.0
        %3239 = vmatpush1.xpose.msra.mxu0 0.0
        %3240 = vmatprep.subr.mxu0 0.0
        %3241 = vmatpush1.xpose.msra.mxu0 0.0
        %3242 = vmatprep.subr.mxu0 0.0
        %3243 = vmatpush1.xpose.msra.mxu0 0.0
        %3244 = vmatprep.subr.mxu0 0.0
        %3245 = vmatpush1.xpose.msra.mxu0 0.0
        %3246 = vmatprep.subr.mxu0 0.0
        %3247 = vmatpush1.xpose.msra.mxu0 0.0
        %3248 = vmatprep.subr.mxu0 0.0
        %3249 = vmatpush1.xpose.msra.mxu0 0.0
        %3250 = vmatprep.subr.mxu0 0.0
        %3251 = vmatpush1.xpose.msra.mxu0 0.0
        %3252 = vmatprep.subr.mxu0 0.0
        %3253 = vmatpush1.xpose.msra.mxu0 0.0
        %3254 = vmatprep.subr.mxu0 0.0
        %3255 = vmatpush1.xpose.msra.mxu0 0.0
        %3256 = vmatprep.subr.mxu0 0.0
        %3257 = vmatpush1.xpose.msra.mxu0 0.0
        %3258 = vmatprep.subr.mxu0 0.0
        %3259 = vmatpush1.xpose.msra.mxu0 0.0
        %3260 = vmatprep.subr.mxu0 0.0
        %3261 = vmatpush1.xpose.msra.mxu0 0.0
        %3262 = vmatprep.subr.mxu0 0.0
        %3263 = vmatpush1.xpose.msra.mxu0 0.0
        %3264 = vmatprep.subr.mxu0 0.0
        %3265 = vmatpush1.xpose.msra.mxu0 0.0
        %3266 = vmatprep.subr.mxu0 0.0
        %3267 = vmatpush1.xpose.msra.mxu0 0.0
        %3268 = vmatprep.subr.mxu0 0.0
        %3269 = vmatpush1.xpose.msra.mxu0 0.0
        %3270 = vmatprep.subr.mxu0 0.0
        %3271 = vmatpush1.xpose.msra.mxu0 0.0
        %3272 = vmatprep.subr.mxu0 0.0
        %3273 = vmatpush1.xpose.msra.mxu0 0.0
        %3274 = vmatprep.subr.mxu0 0.0
        %3275 = vmatpush1.xpose.msra.mxu0 0.0
        %3276 = vmatprep.subr.mxu0 0.0
        %3277 = vmatpush1.xpose.msra.mxu0 0.0
        %3278 = vmatprep.subr.mxu0 0.0
        %3279 = vmatpush1.xpose.msra.mxu0 0.0
        %3280 = vmatprep.subr.mxu0 0.0
        %3281 = vmatpush1.xpose.msra.mxu0 0.0
        %3282 = vmatprep.mubr.f32.mxu0 0.0
        %3283 = vmatmul.mubr.f32.gmra.mrb[0].mxu0 %v3210
        %v3284 = vpop.f32.mrb[0].mxu0
        %v3285 = vadd.f32 0.0, %v3284
        %v3286 = vpop.f32.mrb[0].mxu0
        %3287 = vmatprep.mubr.f32.mxu0 0.0
        %3288 = vmatmul.mubr.f32.gmra.mrb[0].mxu0 %v3212
        %v3289 = vpop.f32.mrb[0].mxu0
        %v3290 = vadd.f32 0.0, %v3289
        %v3291 = vpop.f32.mrb[0].mxu0
        %3292 = vdwg.mxu0
        %v3293 = vmul.f32 %v3285, 0.35355338
        %v3294 = vmul.f32 %v3290, 0.35355338
        %v3295 = vsel %vm2188, %v3293, -inf
        %3296 = vmax.xlane.f32.xlu0 %v3295
        %v3297 = vpop.xlane.xlu0 %3296
        %v3298 = vsel %vm2188, %v3294, -inf
        %3299 = vmax.xlane.f32.xlu0 %v3298
        %v3300 = vpop.xlane.xlu0 %3299
        %v3301 = vsub.f32 %v3293, %v3297
        %v3302 = vsub.f32 %v3294, %v3300
        %v3303 = vmul.f32 %v3301, 1.442695
        %v3304 = vpow.pop %v3303
        %v3305 = vmul.f32 %v3302, 1.442695
        %v3306 = vpow.pop %v3305
        %v3307 = vsel %vm2188, %v3304, 0.0
        %3308 = vadd.xlane.f32.xlu0 %v3307
        %v3309 = vpop.xlane.xlu0 %3308
        %v3310 = vsel %vm2188, %v3306, 0.0
        %3311 = vadd.xlane.f32.xlu0 %v3310
        %v3312 = vpop.xlane.xlu0 %3311
        %v3313 = vrcp.pop %v3309
        %v3314 = vmul.f32 %v3304, %v3313
        %v3315 = vrcp.pop %v3312
        %v3316 = vmul.f32 %v3306, %v3315
        %3317 = vrot.lane.b32.xlu0 %v731, 88
        %v3318 = vpop.permute.xlu0 %3317
        %3319 = vrot.lane.b32.xlu0 %v737, 88
        %v3320 = vpop.permute.xlu0 %3319
        %v3324 = vsel %vm2188, %v3314, 0
        %v3327 = vsel %vm2188, %v3316, 0
        %3329 = vmatprep.subr.mxu0 0.0
        %3330 = vmatpush1.msra.mxu0 %v1750
        %3331 = vmatprep.subr.mxu0 0.0
        %3332 = vmatpush1.msra.mxu0 %v3318
        %3333 = vmatprep.subr.mxu0 0.0
        %3334 = vmatpush1.msra.mxu0 %v3320
        %3335 = vmatprep.subr.mxu0 0.0
        %3336 = vmatpush1.msra.mxu0 0.0
        %3337 = vmatprep.subr.mxu0 0.0
        %3338 = vmatpush1.msra.mxu0 0.0
        %3339 = vmatprep.subr.mxu0 0.0
        %3340 = vmatpush1.msra.mxu0 0.0
        %3341 = vmatprep.subr.mxu0 0.0
        %3342 = vmatpush1.msra.mxu0 0.0
        %3343 = vmatprep.subr.mxu0 0.0
        %3344 = vmatpush1.msra.mxu0 0.0
        %3345 = vmatprep.subr.mxu0 0.0
        %3346 = vmatpush1.msra.mxu0 0.0
        %3347 = vmatprep.subr.mxu0 0.0
        %3348 = vmatpush1.msra.mxu0 0.0
        %3349 = vmatprep.subr.mxu0 0.0
        %3350 = vmatpush1.msra.mxu0 0.0
        %3351 = vmatprep.subr.mxu0 0.0
        %3352 = vmatpush1.msra.mxu0 0.0
        %3353 = vmatprep.subr.mxu0 0.0
        %3354 = vmatpush1.msra.mxu0 0.0
        %3355 = vmatprep.subr.mxu0 0.0
        %3356 = vmatpush1.msra.mxu0 0.0
        %3357 = vmatprep.subr.mxu0 0.0
        %3358 = vmatpush1.msra.mxu0 0.0
        %3359 = vmatprep.subr.mxu0 0.0
        %3360 = vmatpush1.msra.mxu0 0.0
        %3361 = vmatprep.subr.mxu0 0.0
        %3362 = vmatpush1.msra.mxu0 0.0
        %3363 = vmatprep.subr.mxu0 0.0
        %3364 = vmatpush1.msra.mxu0 0.0
        %3365 = vmatprep.subr.mxu0 0.0
        %3366 = vmatpush1.msra.mxu0 0.0
        %3367 = vmatprep.subr.mxu0 0.0
        %3368 = vmatpush1.msra.mxu0 0.0
        %3369 = vmatprep.subr.mxu0 0.0
        %3370 = vmatpush1.msra.mxu0 0.0
        %3371 = vmatprep.subr.mxu0 0.0
        %3372 = vmatpush1.msra.mxu0 0.0
        %3373 = vmatprep.subr.mxu0 0.0
        %3374 = vmatpush1.msra.mxu0 0.0
        %3375 = vmatprep.subr.mxu0 0.0
        %3376 = vmatpush1.msra.mxu0 0.0
        %3377 = vmatprep.subr.mxu0 0.0
        %3378 = vmatpush1.msra.mxu0 0.0
        %3379 = vmatprep.subr.mxu0 0.0
        %3380 = vmatpush1.msra.mxu0 0.0
        %3381 = vmatprep.subr.mxu0 0.0
        %3382 = vmatpush1.msra.mxu0 0.0
        %3383 = vmatprep.subr.mxu0 0.0
        %3384 = vmatpush1.msra.mxu0 0.0
        %3385 = vmatprep.subr.mxu0 0.0
        %3386 = vmatpush1.msra.mxu0 0.0
        %3387 = vmatprep.subr.mxu0 0.0
        %3388 = vmatpush1.msra.mxu0 0.0
        %3389 = vmatprep.subr.mxu0 0.0
        %3390 = vmatpush1.msra.mxu0 0.0
        %3391 = vmatprep.subr.mxu0 0.0
        %3392 = vmatpush1.msra.mxu0 0.0
        %3393 = vmatprep.mubr.f32.mxu0 0.0
        %3394 = vmatmul.mubr.f32.gmra.mrb[0].mxu0 %v3324
        %v3395 = vpop.f32.mrb[0].mxu0
        %v3396 = vadd.f32 0.0, %v3395
        %v3397 = vpop.f32.mrb[0].mxu0
        %3398 = vmatprep.mubr.f32.mxu0 0.0
        %3399 = vmatmul.mubr.f32.gmra.mrb[0].mxu0 %v3327
        %v3400 = vpop.f32.mrb[0].mxu0
        %v3401 = vadd.f32 0.0, %v3400
        %v3402 = vpop.f32.mrb[0].mxu0
        %3403 = vdwg.mxu0
        %3404 = vrot.lane.b32.xlu0 %v729, 80
        %v3405 = vpop.permute.xlu0 %3404
        %3406 = vrot.lane.b32.xlu0 %v735, 80
        %v3407 = vpop.permute.xlu0 %3406
        %3408 = vrot.lane.b32.xlu0 %v729, 16
        %v3409 = vpop.permute.xlu0 %3408
        %3410 = vrot.lane.b32.xlu0 %v735, 16
        %v3411 = vpop.permute.xlu0 %3410
        %v3412 = vsel %vm834, %v3405, 0
        %v3414 = vsel %vm834, %v3407, 0
        %v3416 = vsel %vm834, %v3409, 0
        %v3418 = vsel %vm834, %v3411, 0
        %3420 = vmatprep.subr.mxu0 0.0
        %3421 = vmatpush1.xpose.msra.mxu0 %v1831
        %3422 = vmatprep.subr.mxu0 0.0
        %3423 = vmatpush1.xpose.msra.mxu0 %v3416
        %3424 = vmatprep.subr.mxu0 0.0
        %3425 = vmatpush1.xpose.msra.mxu0 %v3418
        %3426 = vmatprep.subr.mxu0 0.0
        %3427 = vmatpush1.xpose.msra.mxu0 0.0
        %3428 = vmatprep.subr.mxu0 0.0
        %3429 = vmatpush1.xpose.msra.mxu0 0.0
        %3430 = vmatprep.subr.mxu0 0.0
        %3431 = vmatpush1.xpose.msra.mxu0 0.0
        %3432 = vmatprep.subr.mxu0 0.0
        %3433 = vmatpush1.xpose.msra.mxu0 0.0
        %3434 = vmatprep.subr.mxu0 0.0
        %3435 = vmatpush1.xpose.msra.mxu0 0.0
        %3436 = vmatprep.subr.mxu0 0.0
        %3437 = vmatpush1.xpose.msra.mxu0 0.0
        %3438 = vmatprep.subr.mxu0 0.0
        %3439 = vmatpush1.xpose.msra.mxu0 0.0
        %3440 = vmatprep.subr.mxu0 0.0
        %3441 = vmatpush1.xpose.msra.mxu0 0.0
        %3442 = vmatprep.subr.mxu0 0.0
        %3443 = vmatpush1.xpose.msra.mxu0 0.0
        %3444 = vmatprep.subr.mxu0 0.0
        %3445 = vmatpush1.xpose.msra.mxu0 0.0
        %3446 = vmatprep.subr.mxu0 0.0
        %3447 = vmatpush1.xpose.msra.mxu0 0.0
        %3448 = vmatprep.subr.mxu0 0.0
        %3449 = vmatpush1.xpose.msra.mxu0 0.0
        %3450 = vmatprep.subr.mxu0 0.0
        %3451 = vmatpush1.xpose.msra.mxu0 0.0
        %3452 = vmatprep.subr.mxu0 0.0
        %3453 = vmatpush1.xpose.msra.mxu0 0.0
        %3454 = vmatprep.subr.mxu0 0.0
        %3455 = vmatpush1.xpose.msra.mxu0 0.0
        %3456 = vmatprep.subr.mxu0 0.0
        %3457 = vmatpush1.xpose.msra.mxu0 0.0
        %3458 = vmatprep.subr.mxu0 0.0
        %3459 = vmatpush1.xpose.msra.mxu0 0.0
        %3460 = vmatprep.subr.mxu0 0.0
        %3461 = vmatpush1.xpose.msra.mxu0 0.0
        %3462 = vmatprep.subr.mxu0 0.0
        %3463 = vmatpush1.xpose.msra.mxu0 0.0
        %3464 = vmatprep.subr.mxu0 0.0
        %3465 = vmatpush1.xpose.msra.mxu0 0.0
        %3466 = vmatprep.subr.mxu0 0.0
        %3467 = vmatpush1.xpose.msra.mxu0 0.0
        %3468 = vmatprep.subr.mxu0 0.0
        %3469 = vmatpush1.xpose.msra.mxu0 0.0
        %3470 = vmatprep.subr.mxu0 0.0
        %3471 = vmatpush1.xpose.msra.mxu0 0.0
        %3472 = vmatprep.subr.mxu0 0.0
        %3473 = vmatpush1.xpose.msra.mxu0 0.0
        %3474 = vmatprep.subr.mxu0 0.0
        %3475 = vmatpush1.xpose.msra.mxu0 0.0
        %3476 = vmatprep.subr.mxu0 0.0
        %3477 = vmatpush1.xpose.msra.mxu0 0.0
        %3478 = vmatprep.subr.mxu0 0.0
        %3479 = vmatpush1.xpose.msra.mxu0 0.0
        %3480 = vmatprep.subr.mxu0 0.0
        %3481 = vmatpush1.xpose.msra.mxu0 0.0
        %3482 = vmatprep.subr.mxu0 0.0
        %3483 = vmatpush1.xpose.msra.mxu0 0.0
        %3484 = vmatprep.mubr.f32.mxu0 0.0
        %3485 = vmatmul.mubr.f32.gmra.mrb[0].mxu0 %v3412
        %v3486 = vpop.f32.mrb[0].mxu0
        %v3487 = vadd.f32 0.0, %v3486
        %v3488 = vpop.f32.mrb[0].mxu0
        %3489 = vmatprep.mubr.f32.mxu0 0.0
        %3490 = vmatmul.mubr.f32.gmra.mrb[0].mxu0 %v3414
        %v3491 = vpop.f32.mrb[0].mxu0
        %v3492 = vadd.f32 0.0, %v3491
        %v3493 = vpop.f32.mrb[0].mxu0
        %3494 = vdwg.mxu0
        %v3495 = vmul.f32 %v3487, 0.35355338
        %v3496 = vmul.f32 %v3492, 0.35355338
        %v3497 = vsel %vm2188, %v3495, -inf
        %3498 = vmax.xlane.f32.xlu0 %v3497
        %v3499 = vpop.xlane.xlu0 %3498
        %v3500 = vsel %vm2188, %v3496, -inf
        %3501 = vmax.xlane.f32.xlu0 %v3500
        %v3502 = vpop.xlane.xlu0 %3501
        %v3503 = vsub.f32 %v3495, %v3499
        %v3504 = vsub.f32 %v3496, %v3502
        %v3505 = vmul.f32 %v3503, 1.442695
        %v3506 = vpow.pop %v3505
        %v3507 = vmul.f32 %v3504, 1.442695
        %v3508 = vpow.pop %v3507
        %v3509 = vsel %vm2188, %v3506, 0.0
        %3510 = vadd.xlane.f32.xlu0 %v3509
        %v3511 = vpop.xlane.xlu0 %3510
        %v3512 = vsel %vm2188, %v3508, 0.0
        %3513 = vadd.xlane.f32.xlu0 %v3512
        %v3514 = vpop.xlane.xlu0 %3513
        %v3515 = vrcp.pop %v3511
        %v3516 = vmul.f32 %v3506, %v3515
        %v3517 = vrcp.pop %v3514
        %v3518 = vmul.f32 %v3508, %v3517
        %3519 = vrot.lane.b32.xlu0 %v731, 80
        %v3520 = vpop.permute.xlu0 %3519
        %3521 = vrot.lane.b32.xlu0 %v737, 80
        %v3522 = vpop.permute.xlu0 %3521
        %v3526 = vsel %vm2188, %v3516, 0
        %v3529 = vsel %vm2188, %v3518, 0
        %3531 = vmatprep.subr.mxu0 0.0
        %3532 = vmatpush1.msra.mxu0 %v1916
        %3533 = vmatprep.subr.mxu0 0.0
        %3534 = vmatpush1.msra.mxu0 %v3520
        %3535 = vmatprep.subr.mxu0 0.0
        %3536 = vmatpush1.msra.mxu0 %v3522
        %3537 = vmatprep.subr.mxu0 0.0
        %3538 = vmatpush1.msra.mxu0 0.0
        %3539 = vmatprep.subr.mxu0 0.0
        %3540 = vmatpush1.msra.mxu0 0.0
        %3541 = vmatprep.subr.mxu0 0.0
        %3542 = vmatpush1.msra.mxu0 0.0
        %3543 = vmatprep.subr.mxu0 0.0
        %3544 = vmatpush1.msra.mxu0 0.0
        %3545 = vmatprep.subr.mxu0 0.0
        %3546 = vmatpush1.msra.mxu0 0.0
        %3547 = vmatprep.subr.mxu0 0.0
        %3548 = vmatpush1.msra.mxu0 0.0
        %3549 = vmatprep.subr.mxu0 0.0
        %3550 = vmatpush1.msra.mxu0 0.0
        %3551 = vmatprep.subr.mxu0 0.0
        %3552 = vmatpush1.msra.mxu0 0.0
        %3553 = vmatprep.subr.mxu0 0.0
        %3554 = vmatpush1.msra.mxu0 0.0
        %3555 = vmatprep.subr.mxu0 0.0
        %3556 = vmatpush1.msra.mxu0 0.0
        %3557 = vmatprep.subr.mxu0 0.0
        %3558 = vmatpush1.msra.mxu0 0.0
        %3559 = vmatprep.subr.mxu0 0.0
        %3560 = vmatpush1.msra.mxu0 0.0
        %3561 = vmatprep.subr.mxu0 0.0
        %3562 = vmatpush1.msra.mxu0 0.0
        %3563 = vmatprep.subr.mxu0 0.0
        %3564 = vmatpush1.msra.mxu0 0.0
        %3565 = vmatprep.subr.mxu0 0.0
        %3566 = vmatpush1.msra.mxu0 0.0
        %3567 = vmatprep.subr.mxu0 0.0
        %3568 = vmatpush1.msra.mxu0 0.0
        %3569 = vmatprep.subr.mxu0 0.0
        %3570 = vmatpush1.msra.mxu0 0.0
        %3571 = vmatprep.subr.mxu0 0.0
        %3572 = vmatpush1.msra.mxu0 0.0
        %3573 = vmatprep.subr.mxu0 0.0
        %3574 = vmatpush1.msra.mxu0 0.0
        %3575 = vmatprep.subr.mxu0 0.0
        %3576 = vmatpush1.msra.mxu0 0.0
        %3577 = vmatprep.subr.mxu0 0.0
        %3578 = vmatpush1.msra.mxu0 0.0
        %3579 = vmatprep.subr.mxu0 0.0
        %3580 = vmatpush1.msra.mxu0 0.0
        %3581 = vmatprep.subr.mxu0 0.0
        %3582 = vmatpush1.msra.mxu0 0.0
        %3583 = vmatprep.subr.mxu0 0.0
        %3584 = vmatpush1.msra.mxu0 0.0
        %3585 = vmatprep.subr.mxu0 0.0
        %3586 = vmatpush1.msra.mxu0 0.0
        %3587 = vmatprep.subr.mxu0 0.0
        %3588 = vmatpush1.msra.mxu0 0.0
        %3589 = vmatprep.subr.mxu0 0.0
        %3590 = vmatpush1.msra.mxu0 0.0
        %3591 = vmatprep.subr.mxu0 0.0
        %3592 = vmatpush1.msra.mxu0 0.0
        %3593 = vmatprep.subr.mxu0 0.0
        %3594 = vmatpush1.msra.mxu0 0.0
        %3595 = vmatprep.mubr.f32.mxu0 0.0
        %3596 = vmatmul.mubr.f32.gmra.mrb[0].mxu0 %v3526
        %v3597 = vpop.f32.mrb[0].mxu0
        %v3598 = vadd.f32 0.0, %v3597
        %v3599 = vpop.f32.mrb[0].mxu0
        %3600 = vmatprep.mubr.f32.mxu0 0.0
        %3601 = vmatmul.mubr.f32.gmra.mrb[0].mxu0 %v3529
        %v3602 = vpop.f32.mrb[0].mxu0
        %v3603 = vadd.f32 0.0, %v3602
        %v3604 = vpop.f32.mrb[0].mxu0
        %3605 = vdwg.mxu0
        %3606 = vrot.lane.b32.xlu0 %v729, 72
        %v3607 = vpop.permute.xlu0 %3606
        %3608 = vrot.lane.b32.xlu0 %v735, 72
        %v3609 = vpop.permute.xlu0 %3608
        %3610 = vrot.lane.b32.xlu0 %v729, 8
        %v3611 = vpop.permute.xlu0 %3610
        %3612 = vrot.lane.b32.xlu0 %v735, 8
        %v3613 = vpop.permute.xlu0 %3612
        %v3614 = vsel %vm834, %v3607, 0
        %v3616 = vsel %vm834, %v3609, 0
        %v3618 = vsel %vm834, %v3611, 0
        %v3620 = vsel %vm834, %v3613, 0
        %3622 = vmatprep.subr.mxu0 0.0
        %3623 = vmatpush1.xpose.msra.mxu0 %v1997
        %3624 = vmatprep.subr.mxu0 0.0
        %3625 = vmatpush1.xpose.msra.mxu0 %v3618
        %3626 = vmatprep.subr.mxu0 0.0
        %3627 = vmatpush1.xpose.msra.mxu0 %v3620
        %3628 = vmatprep.subr.mxu0 0.0
        %3629 = vmatpush1.xpose.msra.mxu0 0.0
        %3630 = vmatprep.subr.mxu0 0.0
        %3631 = vmatpush1.xpose.msra.mxu0 0.0
        %3632 = vmatprep.subr.mxu0 0.0
        %3633 = vmatpush1.xpose.msra.mxu0 0.0
        %3634 = vmatprep.subr.mxu0 0.0
        %3635 = vmatpush1.xpose.msra.mxu0 0.0
        %3636 = vmatprep.subr.mxu0 0.0
        %3637 = vmatpush1.xpose.msra.mxu0 0.0
        %3638 = vmatprep.subr.mxu0 0.0
        %3639 = vmatpush1.xpose.msra.mxu0 0.0
        %3640 = vmatprep.subr.mxu0 0.0
        %3641 = vmatpush1.xpose.msra.mxu0 0.0
        %3642 = vmatprep.subr.mxu0 0.0
        %3643 = vmatpush1.xpose.msra.mxu0 0.0
        %3644 = vmatprep.subr.mxu0 0.0
        %3645 = vmatpush1.xpose.msra.mxu0 0.0
        %3646 = vmatprep.subr.mxu0 0.0
        %3647 = vmatpush1.xpose.msra.mxu0 0.0
        %3648 = vmatprep.subr.mxu0 0.0
        %3649 = vmatpush1.xpose.msra.mxu0 0.0
        %3650 = vmatprep.subr.mxu0 0.0
        %3651 = vmatpush1.xpose.msra.mxu0 0.0
        %3652 = vmatprep.subr.mxu0 0.0
        %3653 = vmatpush1.xpose.msra.mxu0 0.0
        %3654 = vmatprep.subr.mxu0 0.0
        %3655 = vmatpush1.xpose.msra.mxu0 0.0
        %3656 = vmatprep.subr.mxu0 0.0
        %3657 = vmatpush1.xpose.msra.mxu0 0.0
        %3658 = vmatprep.subr.mxu0 0.0
        %3659 = vmatpush1.xpose.msra.mxu0 0.0
        %3660 = vmatprep.subr.mxu0 0.0
        %3661 = vmatpush1.xpose.msra.mxu0 0.0
        %3662 = vmatprep.subr.mxu0 0.0
        %3663 = vmatpush1.xpose.msra.mxu0 0.0
        %3664 = vmatprep.subr.mxu0 0.0
        %3665 = vmatpush1.xpose.msra.mxu0 0.0
        %3666 = vmatprep.subr.mxu0 0.0
        %3667 = vmatpush1.xpose.msra.mxu0 0.0
        %3668 = vmatprep.subr.mxu0 0.0
        %3669 = vmatpush1.xpose.msra.mxu0 0.0
        %3670 = vmatprep.subr.mxu0 0.0
        %3671 = vmatpush1.xpose.msra.mxu0 0.0
        %3672 = vmatprep.subr.mxu0 0.0
        %3673 = vmatpush1.xpose.msra.mxu0 0.0
        %3674 = vmatprep.subr.mxu0 0.0
        %3675 = vmatpush1.xpose.msra.mxu0 0.0
        %3676 = vmatprep.subr.mxu0 0.0
        %3677 = vmatpush1.xpose.msra.mxu0 0.0
        %3678 = vmatprep.subr.mxu0 0.0
        %3679 = vmatpush1.xpose.msra.mxu0 0.0
        %3680 = vmatprep.subr.mxu0 0.0
        %3681 = vmatpush1.xpose.msra.mxu0 0.0
        %3682 = vmatprep.subr.mxu0 0.0
        %3683 = vmatpush1.xpose.msra.mxu0 0.0
        %3684 = vmatprep.subr.mxu0 0.0
        %3685 = vmatpush1.xpose.msra.mxu0 0.0
        %3686 = vmatprep.mubr.f32.mxu0 0.0
        %3687 = vmatmul.mubr.f32.gmra.mrb[0].mxu0 %v3614
        %v3688 = vpop.f32.mrb[0].mxu0
        %v3689 = vadd.f32 0.0, %v3688
        %v3690 = vpop.f32.mrb[0].mxu0
        %3691 = vmatprep.mubr.f32.mxu0 0.0
        %3692 = vmatmul.mubr.f32.gmra.mrb[0].mxu0 %v3616
        %v3693 = vpop.f32.mrb[0].mxu0
        %v3694 = vadd.f32 0.0, %v3693
        %v3695 = vpop.f32.mrb[0].mxu0
        %3696 = vdwg.mxu0
        %v3697 = vmul.f32 %v3689, 0.35355338
        %v3698 = vmul.f32 %v3694, 0.35355338
        %v3699 = vsel %vm2188, %v3697, -inf
        %3700 = vmax.xlane.f32.xlu0 %v3699
        %v3701 = vpop.xlane.xlu0 %3700
        %v3702 = vsel %vm2188, %v3698, -inf
        %3703 = vmax.xlane.f32.xlu0 %v3702
        %v3704 = vpop.xlane.xlu0 %3703
        %v3705 = vsub.f32 %v3697, %v3701
        %v3706 = vsub.f32 %v3698, %v3704
        %v3707 = vmul.f32 %v3705, 1.442695
        %v3708 = vpow.pop %v3707
        %v3709 = vmul.f32 %v3706, 1.442695
        %v3710 = vpow.pop %v3709
        %v3711 = vsel %vm2188, %v3708, 0.0
        %3712 = vadd.xlane.f32.xlu0 %v3711
        %v3713 = vpop.xlane.xlu0 %3712
        %v3714 = vsel %vm2188, %v3710, 0.0
        %3715 = vadd.xlane.f32.xlu0 %v3714
        %v3716 = vpop.xlane.xlu0 %3715
        %v3717 = vrcp.pop %v3713
        %v3718 = vmul.f32 %v3708, %v3717
        %v3719 = vrcp.pop %v3716
        %v3720 = vmul.f32 %v3710, %v3719
        %3721 = vrot.lane.b32.xlu0 %v731, 72
        %v3722 = vpop.permute.xlu0 %3721
        %3723 = vrot.lane.b32.xlu0 %v737, 72
        %v3724 = vpop.permute.xlu0 %3723
        %v3728 = vsel %vm2188, %v3718, 0
        %v3731 = vsel %vm2188, %v3720, 0
        %3733 = vmatprep.subr.mxu0 0.0
        %3734 = vmatpush1.msra.mxu0 %v2082
        %3735 = vmatprep.subr.mxu0 0.0
        %3736 = vmatpush1.msra.mxu0 %v3722
        %3737 = vmatprep.subr.mxu0 0.0
        %3738 = vmatpush1.msra.mxu0 %v3724
        %3739 = vmatprep.subr.mxu0 0.0
        %3740 = vmatpush1.msra.mxu0 0.0
        %3741 = vmatprep.subr.mxu0 0.0
        %3742 = vmatpush1.msra.mxu0 0.0
        %3743 = vmatprep.subr.mxu0 0.0
        %3744 = vmatpush1.msra.mxu0 0.0
        %3745 = vmatprep.subr.mxu0 0.0
        %3746 = vmatpush1.msra.mxu0 0.0
        %3747 = vmatprep.subr.mxu0 0.0
        %3748 = vmatpush1.msra.mxu0 0.0
        %3749 = vmatprep.subr.mxu0 0.0
        %3750 = vmatpush1.msra.mxu0 0.0
        %3751 = vmatprep.subr.mxu0 0.0
        %3752 = vmatpush1.msra.mxu0 0.0
        %3753 = vmatprep.subr.mxu0 0.0
        %3754 = vmatpush1.msra.mxu0 0.0
        %3755 = vmatprep.subr.mxu0 0.0
        %3756 = vmatpush1.msra.mxu0 0.0
        %3757 = vmatprep.subr.mxu0 0.0
        %3758 = vmatpush1.msra.mxu0 0.0
        %3759 = vmatprep.subr.mxu0 0.0
        %3760 = vmatpush1.msra.mxu0 0.0
        %3761 = vmatprep.subr.mxu0 0.0
        %3762 = vmatpush1.msra.mxu0 0.0
        %3763 = vmatprep.subr.mxu0 0.0
        %3764 = vmatpush1.msra.mxu0 0.0
        %3765 = vmatprep.subr.mxu0 0.0
        %3766 = vmatpush1.msra.mxu0 0.0
        %3767 = vmatprep.subr.mxu0 0.0
        %3768 = vmatpush1.msra.mxu0 0.0
        %3769 = vmatprep.subr.mxu0 0.0
        %3770 = vmatpush1.msra.mxu0 0.0
        %3771 = vmatprep.subr.mxu0 0.0
        %3772 = vmatpush1.msra.mxu0 0.0
        %3773 = vmatprep.subr.mxu0 0.0
        %3774 = vmatpush1.msra.mxu0 0.0
        %3775 = vmatprep.subr.mxu0 0.0
        %3776 = vmatpush1.msra.mxu0 0.0
        %3777 = vmatprep.subr.mxu0 0.0
        %3778 = vmatpush1.msra.mxu0 0.0
        %3779 = vmatprep.subr.mxu0 0.0
        %3780 = vmatpush1.msra.mxu0 0.0
        %3781 = vmatprep.subr.mxu0 0.0
        %3782 = vmatpush1.msra.mxu0 0.0
        %3783 = vmatprep.subr.mxu0 0.0
        %3784 = vmatpush1.msra.mxu0 0.0
        %3785 = vmatprep.subr.mxu0 0.0
        %3786 = vmatpush1.msra.mxu0 0.0
        %3787 = vmatprep.subr.mxu0 0.0
        %3788 = vmatpush1.msra.mxu0 0.0
        %3789 = vmatprep.subr.mxu0 0.0
        %3790 = vmatpush1.msra.mxu0 0.0
        %3791 = vmatprep.subr.mxu0 0.0
        %3792 = vmatpush1.msra.mxu0 0.0
        %3793 = vmatprep.subr.mxu0 0.0
        %3794 = vmatpush1.msra.mxu0 0.0
        %3795 = vmatprep.subr.mxu0 0.0
        %3796 = vmatpush1.msra.mxu0 0.0
        %3797 = vmatprep.mubr.f32.mxu0 0.0
        %3798 = vmatmul.mubr.f32.gmra.mrb[0].mxu0 %v3728
        %v3799 = vpop.f32.mrb[0].mxu0
        %v3800 = vadd.f32 0.0, %v3799
        %v3801 = vpop.f32.mrb[0].mxu0
        %3802 = vmatprep.mubr.f32.mxu0 0.0
        %3803 = vmatmul.mubr.f32.gmra.mrb[0].mxu0 %v3731
        %v3804 = vpop.f32.mrb[0].mxu0
        %v3805 = vadd.f32 0.0, %v3804
        %v3806 = vpop.f32.mrb[0].mxu0
        %3807 = vdwg.mxu0
        %3810 = vrot.lane.b32.xlu0 %v2588, 8
        %v3811 = vpop.permute.xlu0 %3810
        %3812 = vrot.lane.b32.xlu0 %v2593, 8
        %v3813 = vpop.permute.xlu0 %3812
        %3818 = vrot.lane.b32.xlu0 %v2790, 16
        %v3819 = vpop.permute.xlu0 %3818
        %3820 = vrot.lane.b32.xlu0 %v2795, 16
        %v3821 = vpop.permute.xlu0 %3820
        %3826 = vrot.lane.b32.xlu0 %v2992, 24
        %v3827 = vpop.permute.xlu0 %3826
        %3828 = vrot.lane.b32.xlu0 %v2997, 24
        %v3829 = vpop.permute.xlu0 %3828
        %3834 = vrot.lane.b32.xlu0 %v3194, 32
        %v3835 = vpop.permute.xlu0 %3834
        %3836 = vrot.lane.b32.xlu0 %v3199, 32
        %v3837 = vpop.permute.xlu0 %3836
        %3842 = vrot.lane.b32.xlu0 %v3396, 40
        %v3843 = vpop.permute.xlu0 %3842
        %3844 = vrot.lane.b32.xlu0 %v3401, 40
        %v3845 = vpop.permute.xlu0 %3844
        %3850 = vrot.lane.b32.xlu0 %v3598, 48
        %v3851 = vpop.permute.xlu0 %3850
        %3852 = vrot.lane.b32.xlu0 %v3603, 48
        %v3853 = vpop.permute.xlu0 %3852
        %3858 = vrot.lane.b32.xlu0 %v3800, 56
        %v3859 = vpop.permute.xlu0 %3858
        %3860 = vrot.lane.b32.xlu0 %v3805, 56
        %v3861 = vpop.permute.xlu0 %3860
        %v3864 = vsel %vm834, %v2384, %v3811
        %v3865 = vsel %vm834, %v2389, %v3813
        %v3866 = vsel %vm2186, %v3864, %v3819
        %v3867 = vsel %vm2186, %v3865, %v3821
        %v3868 = vsel %vm2188, %v3866, %v3827
        %v3869 = vsel %vm2188, %v3867, %v3829
        %v3870 = vsel %vm2190, %v3868, %v3835
        %v3871 = vsel %vm2190, %v3869, %v3837
        %v3872 = vsel %vm2192, %v3870, %v3843
        %v3873 = vsel %vm2192, %v3871, %v3845
        %v3874 = vsel %vm2194, %v3872, %v3851
        %v3875 = vsel %vm2194, %v3873, %v3853
        %v3876 = vsel %vm2196, %v3874, %v3859
        %v3877 = vsel %vm2196, %v3875, %v3861
        %3881 = vrot.lane.b32.xlu0 %v815, 64
        %v3882 = vpop.permute.xlu0 %3881
        %3883 = vrot.lane.b32.xlu0 %v821, 64
        %v3884 = vpop.permute.xlu0 %3883
        %3885 = vrot.lane.b32.xlu0 %v827, 64
        %v3886 = vpop.permute.xlu0 %3885
        %v3887 = vsel %vm834, %v821, 0
        %v3889 = vsel %vm834, %v827, 0
        %v3891 = vsel %vm834, %v3882, 0
        %v3893 = vsel %vm834, %v3884, 0
        %v3895 = vsel %vm834, %v3886, 0
        %3897 = vmatprep.subr.mxu0 0.0
        %3898 = vmatpush1.xpose.msra.mxu0 %v3891
        %3899 = vmatprep.subr.mxu0 0.0
        %3900 = vmatpush1.xpose.msra.mxu0 %v3893
        %3901 = vmatprep.subr.mxu0 0.0
        %3902 = vmatpush1.xpose.msra.mxu0 %v3895
        %3903 = vmatprep.subr.mxu0 0.0
        %3904 = vmatpush1.xpose.msra.mxu0 0.0
        %3905 = vmatprep.subr.mxu0 0.0
        %3906 = vmatpush1.xpose.msra.mxu0 0.0
        %3907 = vmatprep.subr.mxu0 0.0
        %3908 = vmatpush1.xpose.msra.mxu0 0.0
        %3909 = vmatprep.subr.mxu0 0.0
        %3910 = vmatpush1.xpose.msra.mxu0 0.0
        %3911 = vmatprep.subr.mxu0 0.0
        %3912 = vmatpush1.xpose.msra.mxu0 0.0
        %3913 = vmatprep.subr.mxu0 0.0
        %3914 = vmatpush1.xpose.msra.mxu0 0.0
        %3915 = vmatprep.subr.mxu0 0.0
        %3916 = vmatpush1.xpose.msra.mxu0 0.0
        %3917 = vmatprep.subr.mxu0 0.0
        %3918 = vmatpush1.xpose.msra.mxu0 0.0
        %3919 = vmatprep.subr.mxu0 0.0
        %3920 = vmatpush1.xpose.msra.mxu0 0.0
        %3921 = vmatprep.subr.mxu0 0.0
        %3922 = vmatpush1.xpose.msra.mxu0 0.0
        %3923 = vmatprep.subr.mxu0 0.0
        %3924 = vmatpush1.xpose.msra.mxu0 0.0
        %3925 = vmatprep.subr.mxu0 0.0
        %3926 = vmatpush1.xpose.msra.mxu0 0.0
        %3927 = vmatprep.subr.mxu0 0.0
        %3928 = vmatpush1.xpose.msra.mxu0 0.0
        %3929 = vmatprep.subr.mxu0 0.0
        %3930 = vmatpush1.xpose.msra.mxu0 0.0
        %3931 = vmatprep.subr.mxu0 0.0
        %3932 = vmatpush1.xpose.msra.mxu0 0.0
        %3933 = vmatprep.subr.mxu0 0.0
        %3934 = vmatpush1.xpose.msra.mxu0 0.0
        %3935 = vmatprep.subr.mxu0 0.0
        %3936 = vmatpush1.xpose.msra.mxu0 0.0
        %3937 = vmatprep.subr.mxu0 0.0
        %3938 = vmatpush1.xpose.msra.mxu0 0.0
        %3939 = vmatprep.subr.mxu0 0.0
        %3940 = vmatpush1.xpose.msra.mxu0 0.0
        %3941 = vmatprep.subr.mxu0 0.0
        %3942 = vmatpush1.xpose.msra.mxu0 0.0
        %3943 = vmatprep.subr.mxu0 0.0
        %3944 = vmatpush1.xpose.msra.mxu0 0.0
        %3945 = vmatprep.subr.mxu0 0.0
        %3946 = vmatpush1.xpose.msra.mxu0 0.0
        %3947 = vmatprep.subr.mxu0 0.0
        %3948 = vmatpush1.xpose.msra.mxu0 0.0
        %3949 = vmatprep.subr.mxu0 0.0
        %3950 = vmatpush1.xpose.msra.mxu0 0.0
        %3951 = vmatprep.subr.mxu0 0.0
        %3952 = vmatpush1.xpose.msra.mxu0 0.0
        %3953 = vmatprep.subr.mxu0 0.0
        %3954 = vmatpush1.xpose.msra.mxu0 0.0
        %3955 = vmatprep.subr.mxu0 0.0
        %3956 = vmatpush1.xpose.msra.mxu0 0.0
        %3957 = vmatprep.subr.mxu0 0.0
        %3958 = vmatpush1.xpose.msra.mxu0 0.0
        %3959 = vmatprep.subr.mxu0 0.0
        %3960 = vmatpush1.xpose.msra.mxu0 0.0
        %3961 = vmatprep.mubr.f32.mxu0 0.0
        %3962 = vmatmul.mubr.f32.gmra.mrb[0].mxu0 %v3887
        %v3963 = vpop.f32.mrb[0].mxu0
        %v3964 = vadd.f32 0.0, %v3963
        %v3965 = vpop.f32.mrb[0].mxu0
        %3966 = vmatprep.mubr.f32.mxu0 0.0
        %3967 = vmatmul.mubr.f32.gmra.mrb[0].mxu0 %v3889
        %v3968 = vpop.f32.mrb[0].mxu0
        %v3969 = vadd.f32 0.0, %v3968
        %v3970 = vpop.f32.mrb[0].mxu0
        %3971 = vdwg.mxu0
        %v3972 = vmul.f32 %v3964, 0.35355338
        %v3973 = vmul.f32 %v3969, 0.35355338
        %v3974 = vsel %vm2188, %v3972, -inf
        %3975 = vmax.xlane.f32.xlu0 %v3974
        %v3976 = vpop.xlane.xlu0 %3975
        %v3977 = vsel %vm2188, %v3973, -inf
        %3978 = vmax.xlane.f32.xlu0 %v3977
        %v3979 = vpop.xlane.xlu0 %3978
        %v3980 = vsub.f32 %v3972, %v3976
        %v3981 = vsub.f32 %v3973, %v3979
        %v3982 = vmul.f32 %v3980, 1.442695
        %v3983 = vpow.pop %v3982
        %v3984 = vmul.f32 %v3981, 1.442695
        %v3985 = vpow.pop %v3984
        %v3986 = vsel %vm2188, %v3983, 0.0
        %3987 = vadd.xlane.f32.xlu0 %v3986
        %v3988 = vpop.xlane.xlu0 %3987
        %v3989 = vsel %vm2188, %v3985, 0.0
        %3990 = vadd.xlane.f32.xlu0 %v3989
        %v3991 = vpop.xlane.xlu0 %3990
        %v3992 = vrcp.pop %v3988
        %v3993 = vmul.f32 %v3983, %v3992
        %v3994 = vrcp.pop %v3991
        %v3995 = vmul.f32 %v3985, %v3994
        %v3997 = vsel %vm2188, %v3993, 0
        %v4000 = vsel %vm2188, %v3995, 0
        %4002 = vmatprep.subr.mxu0 0.0
        %4003 = vmatpush1.msra.mxu0 %v817
        %4004 = vmatprep.subr.mxu0 0.0
        %4005 = vmatpush1.msra.mxu0 %v823
        %4006 = vmatprep.subr.mxu0 0.0
        %4007 = vmatpush1.msra.mxu0 %v829
        %4008 = vmatprep.subr.mxu0 0.0
        %4009 = vmatpush1.msra.mxu0 0.0
        %4010 = vmatprep.subr.mxu0 0.0
        %4011 = vmatpush1.msra.mxu0 0.0
        %4012 = vmatprep.subr.mxu0 0.0
        %4013 = vmatpush1.msra.mxu0 0.0
        %4014 = vmatprep.subr.mxu0 0.0
        %4015 = vmatpush1.msra.mxu0 0.0
        %4016 = vmatprep.subr.mxu0 0.0
        %4017 = vmatpush1.msra.mxu0 0.0
        %4018 = vmatprep.subr.mxu0 0.0
        %4019 = vmatpush1.msra.mxu0 0.0
        %4020 = vmatprep.subr.mxu0 0.0
        %4021 = vmatpush1.msra.mxu0 0.0
        %4022 = vmatprep.subr.mxu0 0.0
        %4023 = vmatpush1.msra.mxu0 0.0
        %4024 = vmatprep.subr.mxu0 0.0
        %4025 = vmatpush1.msra.mxu0 0.0
        %4026 = vmatprep.subr.mxu0 0.0
        %4027 = vmatpush1.msra.mxu0 0.0
        %4028 = vmatprep.subr.mxu0 0.0
        %4029 = vmatpush1.msra.mxu0 0.0
        %4030 = vmatprep.subr.mxu0 0.0
        %4031 = vmatpush1.msra.mxu0 0.0
        %4032 = vmatprep.subr.mxu0 0.0
        %4033 = vmatpush1.msra.mxu0 0.0
        %4034 = vmatprep.subr.mxu0 0.0
        %4035 = vmatpush1.msra.mxu0 0.0
        %4036 = vmatprep.subr.mxu0 0.0
        %4037 = vmatpush1.msra.mxu0 0.0
        %4038 = vmatprep.subr.mxu0 0.0
        %4039 = vmatpush1.msra.mxu0 0.0
        %4040 = vmatprep.subr.mxu0 0.0
        %4041 = vmatpush1.msra.mxu0 0.0
        %4042 = vmatprep.subr.mxu0 0.0
        %4043 = vmatpush1.msra.mxu0 0.0
        %4044 = vmatprep.subr.mxu0 0.0
        %4045 = vmatpush1.msra.mxu0 0.0
        %4046 = vmatprep.subr.mxu0 0.0
        %4047 = vmatpush1.msra.mxu0 0.0
        %4048 = vmatprep.subr.mxu0 0.0
        %4049 = vmatpush1.msra.mxu0 0.0
        %4050 = vmatprep.subr.mxu0 0.0
        %4051 = vmatpush1.msra.mxu0 0.0
        %4052 = vmatprep.subr.mxu0 0.0
        %4053 = vmatpush1.msra.mxu0 0.0
        %4054 = vmatprep.subr.mxu0 0.0
        %4055 = vmatpush1.msra.mxu0 0.0
        %4056 = vmatprep.subr.mxu0 0.0
        %4057 = vmatpush1.msra.mxu0 0.0
        %4058 = vmatprep.subr.mxu0 0.0
        %4059 = vmatpush1.msra.mxu0 0.0
        %4060 = vmatprep.subr.mxu0 0.0
        %4061 = vmatpush1.msra.mxu0 0.0
        %4062 = vmatprep.subr.mxu0 0.0
        %4063 = vmatpush1.msra.mxu0 0.0
        %4064 = vmatprep.subr.mxu0 0.0
        %4065 = vmatpush1.msra.mxu0 0.0
        %4066 = vmatprep.mubr.f32.mxu0 0.0
        %4067 = vmatmul.mubr.f32.gmra.mrb[0].mxu0 %v3997
        %v4068 = vpop.f32.mrb[0].mxu0
        %v4069 = vadd.f32 0.0, %v4068
        %v4070 = vpop.f32.mrb[0].mxu0
        %4071 = vmatprep.mubr.f32.mxu0 0.0
        %4072 = vmatmul.mubr.f32.gmra.mrb[0].mxu0 %v4000
        %v4073 = vpop.f32.mrb[0].mxu0
        %v4074 = vadd.f32 0.0, %v4073
        %v4075 = vpop.f32.mrb[0].mxu0
        %4076 = vdwg.mxu0
        %4077 = vrot.lane.b32.xlu0 %v821, 120
        %v4078 = vpop.permute.xlu0 %4077
        %4079 = vrot.lane.b32.xlu0 %v827, 120
        %v4080 = vpop.permute.xlu0 %4079
        %4081 = vrot.lane.b32.xlu0 %v815, 56
        %v4082 = vpop.permute.xlu0 %4081
        %4083 = vrot.lane.b32.xlu0 %v821, 56
        %v4084 = vpop.permute.xlu0 %4083
        %4085 = vrot.lane.b32.xlu0 %v827, 56
        %v4086 = vpop.permute.xlu0 %4085
        %v4087 = vsel %vm834, %v4078, 0
        %v4089 = vsel %vm834, %v4080, 0
        %v4091 = vsel %vm834, %v4082, 0
        %v4093 = vsel %vm834, %v4084, 0
        %v4095 = vsel %vm834, %v4086, 0
        %4097 = vmatprep.subr.mxu0 0.0
        %4098 = vmatpush1.xpose.msra.mxu0 %v4091
        %4099 = vmatprep.subr.mxu0 0.0
        %4100 = vmatpush1.xpose.msra.mxu0 %v4093
        %4101 = vmatprep.subr.mxu0 0.0
        %4102 = vmatpush1.xpose.msra.mxu0 %v4095
        %4103 = vmatprep.subr.mxu0 0.0
        %4104 = vmatpush1.xpose.msra.mxu0 0.0
        %4105 = vmatprep.subr.mxu0 0.0
        %4106 = vmatpush1.xpose.msra.mxu0 0.0
        %4107 = vmatprep.subr.mxu0 0.0
        %4108 = vmatpush1.xpose.msra.mxu0 0.0
        %4109 = vmatprep.subr.mxu0 0.0
        %4110 = vmatpush1.xpose.msra.mxu0 0.0
        %4111 = vmatprep.subr.mxu0 0.0
        %4112 = vmatpush1.xpose.msra.mxu0 0.0
        %4113 = vmatprep.subr.mxu0 0.0
        %4114 = vmatpush1.xpose.msra.mxu0 0.0
        %4115 = vmatprep.subr.mxu0 0.0
        %4116 = vmatpush1.xpose.msra.mxu0 0.0
        %4117 = vmatprep.subr.mxu0 0.0
        %4118 = vmatpush1.xpose.msra.mxu0 0.0
        %4119 = vmatprep.subr.mxu0 0.0
        %4120 = vmatpush1.xpose.msra.mxu0 0.0
        %4121 = vmatprep.subr.mxu0 0.0
        %4122 = vmatpush1.xpose.msra.mxu0 0.0
        %4123 = vmatprep.subr.mxu0 0.0
        %4124 = vmatpush1.xpose.msra.mxu0 0.0
        %4125 = vmatprep.subr.mxu0 0.0
        %4126 = vmatpush1.xpose.msra.mxu0 0.0
        %4127 = vmatprep.subr.mxu0 0.0
        %4128 = vmatpush1.xpose.msra.mxu0 0.0
        %4129 = vmatprep.subr.mxu0 0.0
        %4130 = vmatpush1.xpose.msra.mxu0 0.0
        %4131 = vmatprep.subr.mxu0 0.0
        %4132 = vmatpush1.xpose.msra.mxu0 0.0
        %4133 = vmatprep.subr.mxu0 0.0
        %4134 = vmatpush1.xpose.msra.mxu0 0.0
        %4135 = vmatprep.subr.mxu0 0.0
        %4136 = vmatpush1.xpose.msra.mxu0 0.0
        %4137 = vmatprep.subr.mxu0 0.0
        %4138 = vmatpush1.xpose.msra.mxu0 0.0
        %4139 = vmatprep.subr.mxu0 0.0
        %4140 = vmatpush1.xpose.msra.mxu0 0.0
        %4141 = vmatprep.subr.mxu0 0.0
        %4142 = vmatpush1.xpose.msra.mxu0 0.0
        %4143 = vmatprep.subr.mxu0 0.0
        %4144 = vmatpush1.xpose.msra.mxu0 0.0
        %4145 = vmatprep.subr.mxu0 0.0
        %4146 = vmatpush1.xpose.msra.mxu0 0.0
        %4147 = vmatprep.subr.mxu0 0.0
        %4148 = vmatpush1.xpose.msra.mxu0 0.0
        %4149 = vmatprep.subr.mxu0 0.0
        %4150 = vmatpush1.xpose.msra.mxu0 0.0
        %4151 = vmatprep.subr.mxu0 0.0
        %4152 = vmatpush1.xpose.msra.mxu0 0.0
        %4153 = vmatprep.subr.mxu0 0.0
        %4154 = vmatpush1.xpose.msra.mxu0 0.0
        %4155 = vmatprep.subr.mxu0 0.0
        %4156 = vmatpush1.xpose.msra.mxu0 0.0
        %4157 = vmatprep.subr.mxu0 0.0
        %4158 = vmatpush1.xpose.msra.mxu0 0.0
        %4159 = vmatprep.subr.mxu0 0.0
        %4160 = vmatpush1.xpose.msra.mxu0 0.0
        %4161 = vmatprep.mubr.f32.mxu0 0.0
        %4162 = vmatmul.mubr.f32.gmra.mrb[0].mxu0 %v4087
        %v4163 = vpop.f32.mrb[0].mxu0
        %v4164 = vadd.f32 0.0, %v4163
        %v4165 = vpop.f32.mrb[0].mxu0
        %4166 = vmatprep.mubr.f32.mxu0 0.0
        %4167 = vmatmul.mubr.f32.gmra.mrb[0].mxu0 %v4089
        %v4168 = vpop.f32.mrb[0].mxu0
        %v4169 = vadd.f32 0.0, %v4168
        %v4170 = vpop.f32.mrb[0].mxu0
        %4171 = vdwg.mxu0
        %v4172 = vmul.f32 %v4164, 0.35355338
        %v4173 = vmul.f32 %v4169, 0.35355338
        %v4174 = vsel %vm2188, %v4172, -inf
        %4175 = vmax.xlane.f32.xlu0 %v4174
        %v4176 = vpop.xlane.xlu0 %4175
        %v4177 = vsel %vm2188, %v4173, -inf
        %4178 = vmax.xlane.f32.xlu0 %v4177
        %v4179 = vpop.xlane.xlu0 %4178
        %v4180 = vsub.f32 %v4172, %v4176
        %v4181 = vsub.f32 %v4173, %v4179
        %v4182 = vmul.f32 %v4180, 1.442695
        %v4183 = vpow.pop %v4182
        %v4184 = vmul.f32 %v4181, 1.442695
        %v4185 = vpow.pop %v4184
        %v4186 = vsel %vm2188, %v4183, 0.0
        %4187 = vadd.xlane.f32.xlu0 %v4186
        %v4188 = vpop.xlane.xlu0 %4187
        %v4189 = vsel %vm2188, %v4185, 0.0
        %4190 = vadd.xlane.f32.xlu0 %v4189
        %v4191 = vpop.xlane.xlu0 %4190
        %v4192 = vrcp.pop %v4188
        %v4193 = vmul.f32 %v4183, %v4192
        %v4194 = vrcp.pop %v4191
        %v4195 = vmul.f32 %v4185, %v4194
        %4199 = vrot.lane.b32.xlu0 %v817, 120
        %v4200 = vpop.permute.xlu0 %4199
        %4201 = vrot.lane.b32.xlu0 %v823, 120
        %v4202 = vpop.permute.xlu0 %4201
        %4203 = vrot.lane.b32.xlu0 %v829, 120
        %v4204 = vpop.permute.xlu0 %4203
        %v4209 = vsel %vm2188, %v4193, 0
        %v4212 = vsel %vm2188, %v4195, 0
        %4214 = vmatprep.subr.mxu0 0.0
        %4215 = vmatpush1.msra.mxu0 %v4200
        %4216 = vmatprep.subr.mxu0 0.0
        %4217 = vmatpush1.msra.mxu0 %v4202
        %4218 = vmatprep.subr.mxu0 0.0
        %4219 = vmatpush1.msra.mxu0 %v4204
        %4220 = vmatprep.subr.mxu0 0.0
        %4221 = vmatpush1.msra.mxu0 0.0
        %4222 = vmatprep.subr.mxu0 0.0
        %4223 = vmatpush1.msra.mxu0 0.0
        %4224 = vmatprep.subr.mxu0 0.0
        %4225 = vmatpush1.msra.mxu0 0.0
        %4226 = vmatprep.subr.mxu0 0.0
        %4227 = vmatpush1.msra.mxu0 0.0
        %4228 = vmatprep.subr.mxu0 0.0
        %4229 = vmatpush1.msra.mxu0 0.0
        %4230 = vmatprep.subr.mxu0 0.0
        %4231 = vmatpush1.msra.mxu0 0.0
        %4232 = vmatprep.subr.mxu0 0.0
        %4233 = vmatpush1.msra.mxu0 0.0
        %4234 = vmatprep.subr.mxu0 0.0
        %4235 = vmatpush1.msra.mxu0 0.0
        %4236 = vmatprep.subr.mxu0 0.0
        %4237 = vmatpush1.msra.mxu0 0.0
        %4238 = vmatprep.subr.mxu0 0.0
        %4239 = vmatpush1.msra.mxu0 0.0
        %4240 = vmatprep.subr.mxu0 0.0
        %4241 = vmatpush1.msra.mxu0 0.0
        %4242 = vmatprep.subr.mxu0 0.0
        %4243 = vmatpush1.msra.mxu0 0.0
        %4244 = vmatprep.subr.mxu0 0.0
        %4245 = vmatpush1.msra.mxu0 0.0
        %4246 = vmatprep.subr.mxu0 0.0
        %4247 = vmatpush1.msra.mxu0 0.0
        %4248 = vmatprep.subr.mxu0 0.0
        %4249 = vmatpush1.msra.mxu0 0.0
        %4250 = vmatprep.subr.mxu0 0.0
        %4251 = vmatpush1.msra.mxu0 0.0
        %4252 = vmatprep.subr.mxu0 0.0
        %4253 = vmatpush1.msra.mxu0 0.0
        %4254 = vmatprep.subr.mxu0 0.0
        %4255 = vmatpush1.msra.mxu0 0.0
        %4256 = vmatprep.subr.mxu0 0.0
        %4257 = vmatpush1.msra.mxu0 0.0
        %4258 = vmatprep.subr.mxu0 0.0
        %4259 = vmatpush1.msra.mxu0 0.0
        %4260 = vmatprep.subr.mxu0 0.0
        %4261 = vmatpush1.msra.mxu0 0.0
        %4262 = vmatprep.subr.mxu0 0.0
        %4263 = vmatpush1.msra.mxu0 0.0
        %4264 = vmatprep.subr.mxu0 0.0
        %4265 = vmatpush1.msra.mxu0 0.0
        %4266 = vmatprep.subr.mxu0 0.0
        %4267 = vmatpush1.msra.mxu0 0.0
        %4268 = vmatprep.subr.mxu0 0.0
        %4269 = vmatpush1.msra.mxu0 0.0
        %4270 = vmatprep.subr.mxu0 0.0
        %4271 = vmatpush1.msra.mxu0 0.0
        %4272 = vmatprep.subr.mxu0 0.0
        %4273 = vmatpush1.msra.mxu0 0.0
        %4274 = vmatprep.subr.mxu0 0.0
        %4275 = vmatpush1.msra.mxu0 0.0
        %4276 = vmatprep.subr.mxu0 0.0
        %4277 = vmatpush1.msra.mxu0 0.0
        %4278 = vmatprep.mubr.f32.mxu0 0.0
        %4279 = vmatmul.mubr.f32.gmra.mrb[0].mxu0 %v4209
        %v4280 = vpop.f32.mrb[0].mxu0
        %v4281 = vadd.f32 0.0, %v4280
        %v4282 = vpop.f32.mrb[0].mxu0
        %4283 = vmatprep.mubr.f32.mxu0 0.0
        %4284 = vmatmul.mubr.f32.gmra.mrb[0].mxu0 %v4212
        %v4285 = vpop.f32.mrb[0].mxu0
        %v4286 = vadd.f32 0.0, %v4285
        %v4287 = vpop.f32.mrb[0].mxu0
        %4288 = vdwg.mxu0
        %4289 = vrot.lane.b32.xlu0 %v821, 112
        %v4290 = vpop.permute.xlu0 %4289
        %4291 = vrot.lane.b32.xlu0 %v827, 112
        %v4292 = vpop.permute.xlu0 %4291
        %4293 = vrot.lane.b32.xlu0 %v815, 48
        %v4294 = vpop.permute.xlu0 %4293
        %4295 = vrot.lane.b32.xlu0 %v821, 48
        %v4296 = vpop.permute.xlu0 %4295
        %4297 = vrot.lane.b32.xlu0 %v827, 48
        %v4298 = vpop.permute.xlu0 %4297
        %v4299 = vsel %vm834, %v4290, 0
        %v4301 = vsel %vm834, %v4292, 0
        %v4303 = vsel %vm834, %v4294, 0
        %v4305 = vsel %vm834, %v4296, 0
        %v4307 = vsel %vm834, %v4298, 0
        %4309 = vmatprep.subr.mxu0 0.0
        %4310 = vmatpush1.xpose.msra.mxu0 %v4303
        %4311 = vmatprep.subr.mxu0 0.0
        %4312 = vmatpush1.xpose.msra.mxu0 %v4305
        %4313 = vmatprep.subr.mxu0 0.0
        %4314 = vmatpush1.xpose.msra.mxu0 %v4307
        %4315 = vmatprep.subr.mxu0 0.0
        %4316 = vmatpush1.xpose.msra.mxu0 0.0
        %4317 = vmatprep.subr.mxu0 0.0
        %4318 = vmatpush1.xpose.msra.mxu0 0.0
        %4319 = vmatprep.subr.mxu0 0.0
        %4320 = vmatpush1.xpose.msra.mxu0 0.0
        %4321 = vmatprep.subr.mxu0 0.0
        %4322 = vmatpush1.xpose.msra.mxu0 0.0
        %4323 = vmatprep.subr.mxu0 0.0
        %4324 = vmatpush1.xpose.msra.mxu0 0.0
        %4325 = vmatprep.subr.mxu0 0.0
        %4326 = vmatpush1.xpose.msra.mxu0 0.0
        %4327 = vmatprep.subr.mxu0 0.0
        %4328 = vmatpush1.xpose.msra.mxu0 0.0
        %4329 = vmatprep.subr.mxu0 0.0
        %4330 = vmatpush1.xpose.msra.mxu0 0.0
        %4331 = vmatprep.subr.mxu0 0.0
        %4332 = vmatpush1.xpose.msra.mxu0 0.0
        %4333 = vmatprep.subr.mxu0 0.0
        %4334 = vmatpush1.xpose.msra.mxu0 0.0
        %4335 = vmatprep.subr.mxu0 0.0
        %4336 = vmatpush1.xpose.msra.mxu0 0.0
        %4337 = vmatprep.subr.mxu0 0.0
        %4338 = vmatpush1.xpose.msra.mxu0 0.0
        %4339 = vmatprep.subr.mxu0 0.0
        %4340 = vmatpush1.xpose.msra.mxu0 0.0
        %4341 = vmatprep.subr.mxu0 0.0
        %4342 = vmatpush1.xpose.msra.mxu0 0.0
        %4343 = vmatprep.subr.mxu0 0.0
        %4344 = vmatpush1.xpose.msra.mxu0 0.0
        %4345 = vmatprep.subr.mxu0 0.0
        %4346 = vmatpush1.xpose.msra.mxu0 0.0
        %4347 = vmatprep.subr.mxu0 0.0
        %4348 = vmatpush1.xpose.msra.mxu0 0.0
        %4349 = vmatprep.subr.mxu0 0.0
        %4350 = vmatpush1.xpose.msra.mxu0 0.0
        %4351 = vmatprep.subr.mxu0 0.0
        %4352 = vmatpush1.xpose.msra.mxu0 0.0
        %4353 = vmatprep.subr.mxu0 0.0
        %4354 = vmatpush1.xpose.msra.mxu0 0.0
        %4355 = vmatprep.subr.mxu0 0.0
        %4356 = vmatpush1.xpose.msra.mxu0 0.0
        %4357 = vmatprep.subr.mxu0 0.0
        %4358 = vmatpush1.xpose.msra.mxu0 0.0
        %4359 = vmatprep.subr.mxu0 0.0
        %4360 = vmatpush1.xpose.msra.mxu0 0.0
        %4361 = vmatprep.subr.mxu0 0.0
        %4362 = vmatpush1.xpose.msra.mxu0 0.0
        %4363 = vmatprep.subr.mxu0 0.0
        %4364 = vmatpush1.xpose.msra.mxu0 0.0
        %4365 = vmatprep.subr.mxu0 0.0
        %4366 = vmatpush1.xpose.msra.mxu0 0.0
        %4367 = vmatprep.subr.mxu0 0.0
        %4368 = vmatpush1.xpose.msra.mxu0 0.0
        %4369 = vmatprep.subr.mxu0 0.0
        %4370 = vmatpush1.xpose.msra.mxu0 0.0
        %4371 = vmatprep.subr.mxu0 0.0
        %4372 = vmatpush1.xpose.msra.mxu0 0.0
        %4373 = vmatprep.mubr.f32.mxu0 0.0
        %4374 = vmatmul.mubr.f32.gmra.mrb[0].mxu0 %v4299
        %v4375 = vpop.f32.mrb[0].mxu0
        %v4376 = vadd.f32 0.0, %v4375
        %v4377 = vpop.f32.mrb[0].mxu0
        %4378 = vmatprep.mubr.f32.mxu0 0.0
        %4379 = vmatmul.mubr.f32.gmra.mrb[0].mxu0 %v4301
        %v4380 = vpop.f32.mrb[0].mxu0
        %v4381 = vadd.f32 0.0, %v4380
        %v4382 = vpop.f32.mrb[0].mxu0
        %4383 = vdwg.mxu0
        %v4384 = vmul.f32 %v4376, 0.35355338
        %v4385 = vmul.f32 %v4381, 0.35355338
        %v4386 = vsel %vm2188, %v4384, -inf
        %4387 = vmax.xlane.f32.xlu0 %v4386
        %v4388 = vpop.xlane.xlu0 %4387
        %v4389 = vsel %vm2188, %v4385, -inf
        %4390 = vmax.xlane.f32.xlu0 %v4389
        %v4391 = vpop.xlane.xlu0 %4390
        %v4392 = vsub.f32 %v4384, %v4388
        %v4393 = vsub.f32 %v4385, %v4391
        %v4394 = vmul.f32 %v4392, 1.442695
        %v4395 = vpow.pop %v4394
        %v4396 = vmul.f32 %v4393, 1.442695
        %v4397 = vpow.pop %v4396
        %v4398 = vsel %vm2188, %v4395, 0.0
        %4399 = vadd.xlane.f32.xlu0 %v4398
        %v4400 = vpop.xlane.xlu0 %4399
        %v4401 = vsel %vm2188, %v4397, 0.0
        %4402 = vadd.xlane.f32.xlu0 %v4401
        %v4403 = vpop.xlane.xlu0 %4402
        %v4404 = vrcp.pop %v4400
        %v4405 = vmul.f32 %v4395, %v4404
        %v4406 = vrcp.pop %v4403
        %v4407 = vmul.f32 %v4397, %v4406
        %4408 = vrot.lane.b32.xlu0 %v817, 112
        %v4409 = vpop.permute.xlu0 %4408
        %4410 = vrot.lane.b32.xlu0 %v823, 112
        %v4411 = vpop.permute.xlu0 %4410
        %4412 = vrot.lane.b32.xlu0 %v829, 112
        %v4413 = vpop.permute.xlu0 %4412
        %v4418 = vsel %vm2188, %v4405, 0
        %v4421 = vsel %vm2188, %v4407, 0
        %4423 = vmatprep.subr.mxu0 0.0
        %4424 = vmatpush1.msra.mxu0 %v4409
        %4425 = vmatprep.subr.mxu0 0.0
        %4426 = vmatpush1.msra.mxu0 %v4411
        %4427 = vmatprep.subr.mxu0 0.0
        %4428 = vmatpush1.msra.mxu0 %v4413
        %4429 = vmatprep.subr.mxu0 0.0
        %4430 = vmatpush1.msra.mxu0 0.0
        %4431 = vmatprep.subr.mxu0 0.0
        %4432 = vmatpush1.msra.mxu0 0.0
        %4433 = vmatprep.subr.mxu0 0.0
        %4434 = vmatpush1.msra.mxu0 0.0
        %4435 = vmatprep.subr.mxu0 0.0
        %4436 = vmatpush1.msra.mxu0 0.0
        %4437 = vmatprep.subr.mxu0 0.0
        %4438 = vmatpush1.msra.mxu0 0.0
        %4439 = vmatprep.subr.mxu0 0.0
        %4440 = vmatpush1.msra.mxu0 0.0
        %4441 = vmatprep.subr.mxu0 0.0
        %4442 = vmatpush1.msra.mxu0 0.0
        %4443 = vmatprep.subr.mxu0 0.0
        %4444 = vmatpush1.msra.mxu0 0.0
        %4445 = vmatprep.subr.mxu0 0.0
        %4446 = vmatpush1.msra.mxu0 0.0
        %4447 = vmatprep.subr.mxu0 0.0
        %4448 = vmatpush1.msra.mxu0 0.0
        %4449 = vmatprep.subr.mxu0 0.0
        %4450 = vmatpush1.msra.mxu0 0.0
        %4451 = vmatprep.subr.mxu0 0.0
        %4452 = vmatpush1.msra.mxu0 0.0
        %4453 = vmatprep.subr.mxu0 0.0
        %4454 = vmatpush1.msra.mxu0 0.0
        %4455 = vmatprep.subr.mxu0 0.0
        %4456 = vmatpush1.msra.mxu0 0.0
        %4457 = vmatprep.subr.mxu0 0.0
        %4458 = vmatpush1.msra.mxu0 0.0
        %4459 = vmatprep.subr.mxu0 0.0
        %4460 = vmatpush1.msra.mxu0 0.0
        %4461 = vmatprep.subr.mxu0 0.0
        %4462 = vmatpush1.msra.mxu0 0.0
        %4463 = vmatprep.subr.mxu0 0.0
        %4464 = vmatpush1.msra.mxu0 0.0
        %4465 = vmatprep.subr.mxu0 0.0
        %4466 = vmatpush1.msra.mxu0 0.0
        %4467 = vmatprep.subr.mxu0 0.0
        %4468 = vmatpush1.msra.mxu0 0.0
        %4469 = vmatprep.subr.mxu0 0.0
        %4470 = vmatpush1.msra.mxu0 0.0
        %4471 = vmatprep.subr.mxu0 0.0
        %4472 = vmatpush1.msra.mxu0 0.0
        %4473 = vmatprep.subr.mxu0 0.0
        %4474 = vmatpush1.msra.mxu0 0.0
        %4475 = vmatprep.subr.mxu0 0.0
        %4476 = vmatpush1.msra.mxu0 0.0
        %4477 = vmatprep.subr.mxu0 0.0
        %4478 = vmatpush1.msra.mxu0 0.0
        %4479 = vmatprep.subr.mxu0 0.0
        %4480 = vmatpush1.msra.mxu0 0.0
        %4481 = vmatprep.subr.mxu0 0.0
        %4482 = vmatpush1.msra.mxu0 0.0
        %4483 = vmatprep.subr.mxu0 0.0
        %4484 = vmatpush1.msra.mxu0 0.0
        %4485 = vmatprep.subr.mxu0 0.0
        %4486 = vmatpush1.msra.mxu0 0.0
        %4487 = vmatprep.mubr.f32.mxu0 0.0
        %4488 = vmatmul.mubr.f32.gmra.mrb[0].mxu0 %v4418
        %v4489 = vpop.f32.mrb[0].mxu0
        %v4490 = vadd.f32 0.0, %v4489
        %v4491 = vpop.f32.mrb[0].mxu0
        %4492 = vmatprep.mubr.f32.mxu0 0.0
        %4493 = vmatmul.mubr.f32.gmra.mrb[0].mxu0 %v4421
        %v4494 = vpop.f32.mrb[0].mxu0
        %v4495 = vadd.f32 0.0, %v4494
        %v4496 = vpop.f32.mrb[0].mxu0
        %4497 = vdwg.mxu0
        %4498 = vrot.lane.b32.xlu0 %v821, 104
        %v4499 = vpop.permute.xlu0 %4498
        %4500 = vrot.lane.b32.xlu0 %v827, 104
        %v4501 = vpop.permute.xlu0 %4500
        %4502 = vrot.lane.b32.xlu0 %v815, 40
        %v4503 = vpop.permute.xlu0 %4502
        %4504 = vrot.lane.b32.xlu0 %v821, 40
        %v4505 = vpop.permute.xlu0 %4504
        %4506 = vrot.lane.b32.xlu0 %v827, 40
        %v4507 = vpop.permute.xlu0 %4506
        %v4508 = vsel %vm834, %v4499, 0
        %v4510 = vsel %vm834, %v4501, 0
        %v4512 = vsel %vm834, %v4503, 0
        %v4514 = vsel %vm834, %v4505, 0
        %v4516 = vsel %vm834, %v4507, 0
        %4518 = vmatprep.subr.mxu0 0.0
        %4519 = vmatpush1.xpose.msra.mxu0 %v4512
        %4520 = vmatprep.subr.mxu0 0.0
        %4521 = vmatpush1.xpose.msra.mxu0 %v4514
        %4522 = vmatprep.subr.mxu0 0.0
        %4523 = vmatpush1.xpose.msra.mxu0 %v4516
        %4524 = vmatprep.subr.mxu0 0.0
        %4525 = vmatpush1.xpose.msra.mxu0 0.0
        %4526 = vmatprep.subr.mxu0 0.0
        %4527 = vmatpush1.xpose.msra.mxu0 0.0
        %4528 = vmatprep.subr.mxu0 0.0
        %4529 = vmatpush1.xpose.msra.mxu0 0.0
        %4530 = vmatprep.subr.mxu0 0.0
        %4531 = vmatpush1.xpose.msra.mxu0 0.0
        %4532 = vmatprep.subr.mxu0 0.0
        %4533 = vmatpush1.xpose.msra.mxu0 0.0
        %4534 = vmatprep.subr.mxu0 0.0
        %4535 = vmatpush1.xpose.msra.mxu0 0.0
        %4536 = vmatprep.subr.mxu0 0.0
        %4537 = vmatpush1.xpose.msra.mxu0 0.0
        %4538 = vmatprep.subr.mxu0 0.0
        %4539 = vmatpush1.xpose.msra.mxu0 0.0
        %4540 = vmatprep.subr.mxu0 0.0
        %4541 = vmatpush1.xpose.msra.mxu0 0.0
        %4542 = vmatprep.subr.mxu0 0.0
        %4543 = vmatpush1.xpose.msra.mxu0 0.0
        %4544 = vmatprep.subr.mxu0 0.0
        %4545 = vmatpush1.xpose.msra.mxu0 0.0
        %4546 = vmatprep.subr.mxu0 0.0
        %4547 = vmatpush1.xpose.msra.mxu0 0.0
        %4548 = vmatprep.subr.mxu0 0.0
        %4549 = vmatpush1.xpose.msra.mxu0 0.0
        %4550 = vmatprep.subr.mxu0 0.0
        %4551 = vmatpush1.xpose.msra.mxu0 0.0
        %4552 = vmatprep.subr.mxu0 0.0
        %4553 = vmatpush1.xpose.msra.mxu0 0.0
        %4554 = vmatprep.subr.mxu0 0.0
        %4555 = vmatpush1.xpose.msra.mxu0 0.0
        %4556 = vmatprep.subr.mxu0 0.0
        %4557 = vmatpush1.xpose.msra.mxu0 0.0
        %4558 = vmatprep.subr.mxu0 0.0
        %4559 = vmatpush1.xpose.msra.mxu0 0.0
        %4560 = vmatprep.subr.mxu0 0.0
        %4561 = vmatpush1.xpose.msra.mxu0 0.0
        %4562 = vmatprep.subr.mxu0 0.0
        %4563 = vmatpush1.xpose.msra.mxu0 0.0
        %4564 = vmatprep.subr.mxu0 0.0
        %4565 = vmatpush1.xpose.msra.mxu0 0.0
        %4566 = vmatprep.subr.mxu0 0.0
        %4567 = vmatpush1.xpose.msra.mxu0 0.0
        %4568 = vmatprep.subr.mxu0 0.0
        %4569 = vmatpush1.xpose.msra.mxu0 0.0
        %4570 = vmatprep.subr.mxu0 0.0
        %4571 = vmatpush1.xpose.msra.mxu0 0.0
        %4572 = vmatprep.subr.mxu0 0.0
        %4573 = vmatpush1.xpose.msra.mxu0 0.0
        %4574 = vmatprep.subr.mxu0 0.0
        %4575 = vmatpush1.xpose.msra.mxu0 0.0
        %4576 = vmatprep.subr.mxu0 0.0
        %4577 = vmatpush1.xpose.msra.mxu0 0.0
        %4578 = vmatprep.subr.mxu0 0.0
        %4579 = vmatpush1.xpose.msra.mxu0 0.0
        %4580 = vmatprep.subr.mxu0 0.0
        %4581 = vmatpush1.xpose.msra.mxu0 0.0
        %4582 = vmatprep.mubr.f32.mxu0 0.0
        %4583 = vmatmul.mubr.f32.gmra.mrb[0].mxu0 %v4508
        %v4584 = vpop.f32.mrb[0].mxu0
        %v4585 = vadd.f32 0.0, %v4584
        %v4586 = vpop.f32.mrb[0].mxu0
        %4587 = vmatprep.mubr.f32.mxu0 0.0
        %4588 = vmatmul.mubr.f32.gmra.mrb[0].mxu0 %v4510
        %v4589 = vpop.f32.mrb[0].mxu0
        %v4590 = vadd.f32 0.0, %v4589
        %v4591 = vpop.f32.mrb[0].mxu0
        %4592 = vdwg.mxu0
        %v4593 = vmul.f32 %v4585, 0.35355338
        %v4594 = vmul.f32 %v4590, 0.35355338
        %v4595 = vsel %vm2188, %v4593, -inf
        %4596 = vmax.xlane.f32.xlu0 %v4595
        %v4597 = vpop.xlane.xlu0 %4596
        %v4598 = vsel %vm2188, %v4594, -inf
        %4599 = vmax.xlane.f32.xlu0 %v4598
        %v4600 = vpop.xlane.xlu0 %4599
        %v4601 = vsub.f32 %v4593, %v4597
        %v4602 = vsub.f32 %v4594, %v4600
        %v4603 = vmul.f32 %v4601, 1.442695
        %v4604 = vpow.pop %v4603
        %v4605 = vmul.f32 %v4602, 1.442695
        %v4606 = vpow.pop %v4605
        %v4607 = vsel %vm2188, %v4604, 0.0
        %4608 = vadd.xlane.f32.xlu0 %v4607
        %v4609 = vpop.xlane.xlu0 %4608
        %v4610 = vsel %vm2188, %v4606, 0.0
        %4611 = vadd.xlane.f32.xlu0 %v4610
        %v4612 = vpop.xlane.xlu0 %4611
        %v4613 = vrcp.pop %v4609
        %v4614 = vmul.f32 %v4604, %v4613
        %v4615 = vrcp.pop %v4612
        %v4616 = vmul.f32 %v4606, %v4615
        %4617 = vrot.lane.b32.xlu0 %v817, 104
        %v4618 = vpop.permute.xlu0 %4617
        %4619 = vrot.lane.b32.xlu0 %v823, 104
        %v4620 = vpop.permute.xlu0 %4619
        %4621 = vrot.lane.b32.xlu0 %v829, 104
        %v4622 = vpop.permute.xlu0 %4621
        %v4627 = vsel %vm2188, %v4614, 0
        %v4630 = vsel %vm2188, %v4616, 0
        %4632 = vmatprep.subr.mxu0 0.0
        %4633 = vmatpush1.msra.mxu0 %v4618
        %4634 = vmatprep.subr.mxu0 0.0
        %4635 = vmatpush1.msra.mxu0 %v4620
        %4636 = vmatprep.subr.mxu0 0.0
        %4637 = vmatpush1.msra.mxu0 %v4622
        %4638 = vmatprep.subr.mxu0 0.0
        %4639 = vmatpush1.msra.mxu0 0.0
        %4640 = vmatprep.subr.mxu0 0.0
        %4641 = vmatpush1.msra.mxu0 0.0
        %4642 = vmatprep.subr.mxu0 0.0
        %4643 = vmatpush1.msra.mxu0 0.0
        %4644 = vmatprep.subr.mxu0 0.0
        %4645 = vmatpush1.msra.mxu0 0.0
        %4646 = vmatprep.subr.mxu0 0.0
        %4647 = vmatpush1.msra.mxu0 0.0
        %4648 = vmatprep.subr.mxu0 0.0
        %4649 = vmatpush1.msra.mxu0 0.0
        %4650 = vmatprep.subr.mxu0 0.0
        %4651 = vmatpush1.msra.mxu0 0.0
        %4652 = vmatprep.subr.mxu0 0.0
        %4653 = vmatpush1.msra.mxu0 0.0
        %4654 = vmatprep.subr.mxu0 0.0
        %4655 = vmatpush1.msra.mxu0 0.0
        %4656 = vmatprep.subr.mxu0 0.0
        %4657 = vmatpush1.msra.mxu0 0.0
        %4658 = vmatprep.subr.mxu0 0.0
        %4659 = vmatpush1.msra.mxu0 0.0
        %4660 = vmatprep.subr.mxu0 0.0
        %4661 = vmatpush1.msra.mxu0 0.0
        %4662 = vmatprep.subr.mxu0 0.0
        %4663 = vmatpush1.msra.mxu0 0.0
        %4664 = vmatprep.subr.mxu0 0.0
        %4665 = vmatpush1.msra.mxu0 0.0
        %4666 = vmatprep.subr.mxu0 0.0
        %4667 = vmatpush1.msra.mxu0 0.0
        %4668 = vmatprep.subr.mxu0 0.0
        %4669 = vmatpush1.msra.mxu0 0.0
        %4670 = vmatprep.subr.mxu0 0.0
        %4671 = vmatpush1.msra.mxu0 0.0
        %4672 = vmatprep.subr.mxu0 0.0
        %4673 = vmatpush1.msra.mxu0 0.0
        %4674 = vmatprep.subr.mxu0 0.0
        %4675 = vmatpush1.msra.mxu0 0.0
        %4676 = vmatprep.subr.mxu0 0.0
        %4677 = vmatpush1.msra.mxu0 0.0
        %4678 = vmatprep.subr.mxu0 0.0
        %4679 = vmatpush1.msra.mxu0 0.0
        %4680 = vmatprep.subr.mxu0 0.0
        %4681 = vmatpush1.msra.mxu0 0.0
        %4682 = vmatprep.subr.mxu0 0.0
        %4683 = vmatpush1.msra.mxu0 0.0
        %4684 = vmatprep.subr.mxu0 0.0
        %4685 = vmatpush1.msra.mxu0 0.0
        %4686 = vmatprep.subr.mxu0 0.0
        %4687 = vmatpush1.msra.mxu0 0.0
        %4688 = vmatprep.subr.mxu0 0.0
        %4689 = vmatpush1.msra.mxu0 0.0
        %4690 = vmatprep.subr.mxu0 0.0
        %4691 = vmatpush1.msra.mxu0 0.0
        %4692 = vmatprep.subr.mxu0 0.0
        %4693 = vmatpush1.msra.mxu0 0.0
        %4694 = vmatprep.subr.mxu0 0.0
        %4695 = vmatpush1.msra.mxu0 0.0
        %4696 = vmatprep.mubr.f32.mxu0 0.0
        %4697 = vmatmul.mubr.f32.gmra.mrb[0].mxu0 %v4627
        %v4698 = vpop.f32.mrb[0].mxu0
        %v4699 = vadd.f32 0.0, %v4698
        %v4700 = vpop.f32.mrb[0].mxu0
        %4701 = vmatprep.mubr.f32.mxu0 0.0
        %4702 = vmatmul.mubr.f32.gmra.mrb[0].mxu0 %v4630
        %v4703 = vpop.f32.mrb[0].mxu0
        %v4704 = vadd.f32 0.0, %v4703
        %v4705 = vpop.f32.mrb[0].mxu0
        %4706 = vdwg.mxu0
        %4707 = vrot.lane.b32.xlu0 %v821, 96
        %v4708 = vpop.permute.xlu0 %4707
        %4709 = vrot.lane.b32.xlu0 %v827, 96
        %v4710 = vpop.permute.xlu0 %4709
        %4711 = vrot.lane.b32.xlu0 %v815, 32
        %v4712 = vpop.permute.xlu0 %4711
        %4713 = vrot.lane.b32.xlu0 %v821, 32
        %v4714 = vpop.permute.xlu0 %4713
        %4715 = vrot.lane.b32.xlu0 %v827, 32
        %v4716 = vpop.permute.xlu0 %4715
        %v4717 = vsel %vm834, %v4708, 0
        %v4719 = vsel %vm834, %v4710, 0
        %v4721 = vsel %vm834, %v4712, 0
        %v4723 = vsel %vm834, %v4714, 0
        %v4725 = vsel %vm834, %v4716, 0
        %4727 = vmatprep.subr.mxu0 0.0
        %4728 = vmatpush1.xpose.msra.mxu0 %v4721
        %4729 = vmatprep.subr.mxu0 0.0
        %4730 = vmatpush1.xpose.msra.mxu0 %v4723
        %4731 = vmatprep.subr.mxu0 0.0
        %4732 = vmatpush1.xpose.msra.mxu0 %v4725
        %4733 = vmatprep.subr.mxu0 0.0
        %4734 = vmatpush1.xpose.msra.mxu0 0.0
        %4735 = vmatprep.subr.mxu0 0.0
        %4736 = vmatpush1.xpose.msra.mxu0 0.0
        %4737 = vmatprep.subr.mxu0 0.0
        %4738 = vmatpush1.xpose.msra.mxu0 0.0
        %4739 = vmatprep.subr.mxu0 0.0
        %4740 = vmatpush1.xpose.msra.mxu0 0.0
        %4741 = vmatprep.subr.mxu0 0.0
        %4742 = vmatpush1.xpose.msra.mxu0 0.0
        %4743 = vmatprep.subr.mxu0 0.0
        %4744 = vmatpush1.xpose.msra.mxu0 0.0
        %4745 = vmatprep.subr.mxu0 0.0
        %4746 = vmatpush1.xpose.msra.mxu0 0.0
        %4747 = vmatprep.subr.mxu0 0.0
        %4748 = vmatpush1.xpose.msra.mxu0 0.0
        %4749 = vmatprep.subr.mxu0 0.0
        %4750 = vmatpush1.xpose.msra.mxu0 0.0
        %4751 = vmatprep.subr.mxu0 0.0
        %4752 = vmatpush1.xpose.msra.mxu0 0.0
        %4753 = vmatprep.subr.mxu0 0.0
        %4754 = vmatpush1.xpose.msra.mxu0 0.0
        %4755 = vmatprep.subr.mxu0 0.0
        %4756 = vmatpush1.xpose.msra.mxu0 0.0
        %4757 = vmatprep.subr.mxu0 0.0
        %4758 = vmatpush1.xpose.msra.mxu0 0.0
        %4759 = vmatprep.subr.mxu0 0.0
        %4760 = vmatpush1.xpose.msra.mxu0 0.0
        %4761 = vmatprep.subr.mxu0 0.0
        %4762 = vmatpush1.xpose.msra.mxu0 0.0
        %4763 = vmatprep.subr.mxu0 0.0
        %4764 = vmatpush1.xpose.msra.mxu0 0.0
        %4765 = vmatprep.subr.mxu0 0.0
        %4766 = vmatpush1.xpose.msra.mxu0 0.0
        %4767 = vmatprep.subr.mxu0 0.0
        %4768 = vmatpush1.xpose.msra.mxu0 0.0
        %4769 = vmatprep.subr.mxu0 0.0
        %4770 = vmatpush1.xpose.msra.mxu0 0.0
        %4771 = vmatprep.subr.mxu0 0.0
        %4772 = vmatpush1.xpose.msra.mxu0 0.0
        %4773 = vmatprep.subr.mxu0 0.0
        %4774 = vmatpush1.xpose.msra.mxu0 0.0
        %4775 = vmatprep.subr.mxu0 0.0
        %4776 = vmatpush1.xpose.msra.mxu0 0.0
        %4777 = vmatprep.subr.mxu0 0.0
        %4778 = vmatpush1.xpose.msra.mxu0 0.0
        %4779 = vmatprep.subr.mxu0 0.0
        %4780 = vmatpush1.xpose.msra.mxu0 0.0
        %4781 = vmatprep.subr.mxu0 0.0
        %4782 = vmatpush1.xpose.msra.mxu0 0.0
        %4783 = vmatprep.subr.mxu0 0.0
        %4784 = vmatpush1.xpose.msra.mxu0 0.0
        %4785 = vmatprep.subr.mxu0 0.0
        %4786 = vmatpush1.xpose.msra.mxu0 0.0
        %4787 = vmatprep.subr.mxu0 0.0
        %4788 = vmatpush1.xpose.msra.mxu0 0.0
        %4789 = vmatprep.subr.mxu0 0.0
        %4790 = vmatpush1.xpose.msra.mxu0 0.0
        %4791 = vmatprep.mubr.f32.mxu0 0.0
        %4792 = vmatmul.mubr.f32.gmra.mrb[0].mxu0 %v4717
        %v4793 = vpop.f32.mrb[0].mxu0
        %v4794 = vadd.f32 0.0, %v4793
        %v4795 = vpop.f32.mrb[0].mxu0
        %4796 = vmatprep.mubr.f32.mxu0 0.0
        %4797 = vmatmul.mubr.f32.gmra.mrb[0].mxu0 %v4719
        %v4798 = vpop.f32.mrb[0].mxu0
        %v4799 = vadd.f32 0.0, %v4798
        %v4800 = vpop.f32.mrb[0].mxu0
        %4801 = vdwg.mxu0
        %v4802 = vmul.f32 %v4794, 0.35355338
        %v4803 = vmul.f32 %v4799, 0.35355338
        %v4804 = vsel %vm2188, %v4802, -inf
        %4805 = vmax.xlane.f32.xlu0 %v4804
        %v4806 = vpop.xlane.xlu0 %4805
        %v4807 = vsel %vm2188, %v4803, -inf
        %4808 = vmax.xlane.f32.xlu0 %v4807
        %v4809 = vpop.xlane.xlu0 %4808
        %v4810 = vsub.f32 %v4802, %v4806
        %v4811 = vsub.f32 %v4803, %v4809
        %v4812 = vmul.f32 %v4810, 1.442695
        %v4813 = vpow.pop %v4812
        %v4814 = vmul.f32 %v4811, 1.442695
        %v4815 = vpow.pop %v4814
        %v4816 = vsel %vm2188, %v4813, 0.0
        %4817 = vadd.xlane.f32.xlu0 %v4816
        %v4818 = vpop.xlane.xlu0 %4817
        %v4819 = vsel %vm2188, %v4815, 0.0
        %4820 = vadd.xlane.f32.xlu0 %v4819
        %v4821 = vpop.xlane.xlu0 %4820
        %v4822 = vrcp.pop %v4818
        %v4823 = vmul.f32 %v4813, %v4822
        %v4824 = vrcp.pop %v4821
        %v4825 = vmul.f32 %v4815, %v4824
        %4826 = vrot.lane.b32.xlu0 %v817, 96
        %v4827 = vpop.permute.xlu0 %4826
        %4828 = vrot.lane.b32.xlu0 %v823, 96
        %v4829 = vpop.permute.xlu0 %4828
        %4830 = vrot.lane.b32.xlu0 %v829, 96
        %v4831 = vpop.permute.xlu0 %4830
        %v4836 = vsel %vm2188, %v4823, 0
        %v4839 = vsel %vm2188, %v4825, 0
        %4841 = vmatprep.subr.mxu0 0.0
        %4842 = vmatpush1.msra.mxu0 %v4827
        %4843 = vmatprep.subr.mxu0 0.0
        %4844 = vmatpush1.msra.mxu0 %v4829
        %4845 = vmatprep.subr.mxu0 0.0
        %4846 = vmatpush1.msra.mxu0 %v4831
        %4847 = vmatprep.subr.mxu0 0.0
        %4848 = vmatpush1.msra.mxu0 0.0
        %4849 = vmatprep.subr.mxu0 0.0
        %4850 = vmatpush1.msra.mxu0 0.0
        %4851 = vmatprep.subr.mxu0 0.0
        %4852 = vmatpush1.msra.mxu0 0.0
        %4853 = vmatprep.subr.mxu0 0.0
        %4854 = vmatpush1.msra.mxu0 0.0
        %4855 = vmatprep.subr.mxu0 0.0
        %4856 = vmatpush1.msra.mxu0 0.0
        %4857 = vmatprep.subr.mxu0 0.0
        %4858 = vmatpush1.msra.mxu0 0.0
        %4859 = vmatprep.subr.mxu0 0.0
        %4860 = vmatpush1.msra.mxu0 0.0
        %4861 = vmatprep.subr.mxu0 0.0
        %4862 = vmatpush1.msra.mxu0 0.0
        %4863 = vmatprep.subr.mxu0 0.0
        %4864 = vmatpush1.msra.mxu0 0.0
        %4865 = vmatprep.subr.mxu0 0.0
        %4866 = vmatpush1.msra.mxu0 0.0
        %4867 = vmatprep.subr.mxu0 0.0
        %4868 = vmatpush1.msra.mxu0 0.0
        %4869 = vmatprep.subr.mxu0 0.0
        %4870 = vmatpush1.msra.mxu0 0.0
        %4871 = vmatprep.subr.mxu0 0.0
        %4872 = vmatpush1.msra.mxu0 0.0
        %4873 = vmatprep.subr.mxu0 0.0
        %4874 = vmatpush1.msra.mxu0 0.0
        %4875 = vmatprep.subr.mxu0 0.0
        %4876 = vmatpush1.msra.mxu0 0.0
        %4877 = vmatprep.subr.mxu0 0.0
        %4878 = vmatpush1.msra.mxu0 0.0
        %4879 = vmatprep.subr.mxu0 0.0
        %4880 = vmatpush1.msra.mxu0 0.0
        %4881 = vmatprep.subr.mxu0 0.0
        %4882 = vmatpush1.msra.mxu0 0.0
        %4883 = vmatprep.subr.mxu0 0.0
        %4884 = vmatpush1.msra.mxu0 0.0
        %4885 = vmatprep.subr.mxu0 0.0
        %4886 = vmatpush1.msra.mxu0 0.0
        %4887 = vmatprep.subr.mxu0 0.0
        %4888 = vmatpush1.msra.mxu0 0.0
        %4889 = vmatprep.subr.mxu0 0.0
        %4890 = vmatpush1.msra.mxu0 0.0
        %4891 = vmatprep.subr.mxu0 0.0
        %4892 = vmatpush1.msra.mxu0 0.0
        %4893 = vmatprep.subr.mxu0 0.0
        %4894 = vmatpush1.msra.mxu0 0.0
        %4895 = vmatprep.subr.mxu0 0.0
        %4896 = vmatpush1.msra.mxu0 0.0
        %4897 = vmatprep.subr.mxu0 0.0
        %4898 = vmatpush1.msra.mxu0 0.0
        %4899 = vmatprep.subr.mxu0 0.0
        %4900 = vmatpush1.msra.mxu0 0.0
        %4901 = vmatprep.subr.mxu0 0.0
        %4902 = vmatpush1.msra.mxu0 0.0
        %4903 = vmatprep.subr.mxu0 0.0
        %4904 = vmatpush1.msra.mxu0 0.0
        %4905 = vmatprep.mubr.f32.mxu0 0.0
        %4906 = vmatmul.mubr.f32.gmra.mrb[0].mxu0 %v4836
        %v4907 = vpop.f32.mrb[0].mxu0
        %v4908 = vadd.f32 0.0, %v4907
        %v4909 = vpop.f32.mrb[0].mxu0
        %4910 = vmatprep.mubr.f32.mxu0 0.0
        %4911 = vmatmul.mubr.f32.gmra.mrb[0].mxu0 %v4839
        %v4912 = vpop.f32.mrb[0].mxu0
        %v4913 = vadd.f32 0.0, %v4912
        %v4914 = vpop.f32.mrb[0].mxu0
        %4915 = vdwg.mxu0
        %4916 = vrot.lane.b32.xlu0 %v821, 88
        %v4917 = vpop.permute.xlu0 %4916
        %4918 = vrot.lane.b32.xlu0 %v827, 88
        %v4919 = vpop.permute.xlu0 %4918
        %4920 = vrot.lane.b32.xlu0 %v815, 24
        %v4921 = vpop.permute.xlu0 %4920
        %4922 = vrot.lane.b32.xlu0 %v821, 24
        %v4923 = vpop.permute.xlu0 %4922
        %4924 = vrot.lane.b32.xlu0 %v827, 24
        %v4925 = vpop.permute.xlu0 %4924
        %v4926 = vsel %vm834, %v4917, 0
        %v4928 = vsel %vm834, %v4919, 0
        %v4930 = vsel %vm834, %v4921, 0
        %v4932 = vsel %vm834, %v4923, 0
        %v4934 = vsel %vm834, %v4925, 0
        %4936 = vmatprep.subr.mxu0 0.0
        %4937 = vmatpush1.xpose.msra.mxu0 %v4930
        %4938 = vmatprep.subr.mxu0 0.0
        %4939 = vmatpush1.xpose.msra.mxu0 %v4932
        %4940 = vmatprep.subr.mxu0 0.0
        %4941 = vmatpush1.xpose.msra.mxu0 %v4934
        %4942 = vmatprep.subr.mxu0 0.0
        %4943 = vmatpush1.xpose.msra.mxu0 0.0
        %4944 = vmatprep.subr.mxu0 0.0
        %4945 = vmatpush1.xpose.msra.mxu0 0.0
        %4946 = vmatprep.subr.mxu0 0.0
        %4947 = vmatpush1.xpose.msra.mxu0 0.0
        %4948 = vmatprep.subr.mxu0 0.0
        %4949 = vmatpush1.xpose.msra.mxu0 0.0
        %4950 = vmatprep.subr.mxu0 0.0
        %4951 = vmatpush1.xpose.msra.mxu0 0.0
        %4952 = vmatprep.subr.mxu0 0.0
        %4953 = vmatpush1.xpose.msra.mxu0 0.0
        %4954 = vmatprep.subr.mxu0 0.0
        %4955 = vmatpush1.xpose.msra.mxu0 0.0
        %4956 = vmatprep.subr.mxu0 0.0
        %4957 = vmatpush1.xpose.msra.mxu0 0.0
        %4958 = vmatprep.subr.mxu0 0.0
        %4959 = vmatpush1.xpose.msra.mxu0 0.0
        %4960 = vmatprep.subr.mxu0 0.0
        %4961 = vmatpush1.xpose.msra.mxu0 0.0
        %4962 = vmatprep.subr.mxu0 0.0
        %4963 = vmatpush1.xpose.msra.mxu0 0.0
        %4964 = vmatprep.subr.mxu0 0.0
        %4965 = vmatpush1.xpose.msra.mxu0 0.0
        %4966 = vmatprep.subr.mxu0 0.0
        %4967 = vmatpush1.xpose.msra.mxu0 0.0
        %4968 = vmatprep.subr.mxu0 0.0
        %4969 = vmatpush1.xpose.msra.mxu0 0.0
        %4970 = vmatprep.subr.mxu0 0.0
        %4971 = vmatpush1.xpose.msra.mxu0 0.0
        %4972 = vmatprep.subr.mxu0 0.0
        %4973 = vmatpush1.xpose.msra.mxu0 0.0
        %4974 = vmatprep.subr.mxu0 0.0
        %4975 = vmatpush1.xpose.msra.mxu0 0.0
        %4976 = vmatprep.subr.mxu0 0.0
        %4977 = vmatpush1.xpose.msra.mxu0 0.0
        %4978 = vmatprep.subr.mxu0 0.0
        %4979 = vmatpush1.xpose.msra.mxu0 0.0
        %4980 = vmatprep.subr.mxu0 0.0
        %4981 = vmatpush1.xpose.msra.mxu0 0.0
        %4982 = vmatprep.subr.mxu0 0.0
        %4983 = vmatpush1.xpose.msra.mxu0 0.0
        %4984 = vmatprep.subr.mxu0 0.0
        %4985 = vmatpush1.xpose.msra.mxu0 0.0
        %4986 = vmatprep.subr.mxu0 0.0
        %4987 = vmatpush1.xpose.msra.mxu0 0.0
        %4988 = vmatprep.subr.mxu0 0.0
        %4989 = vmatpush1.xpose.msra.mxu0 0.0
        %4990 = vmatprep.subr.mxu0 0.0
        %4991 = vmatpush1.xpose.msra.mxu0 0.0
        %4992 = vmatprep.subr.mxu0 0.0
        %4993 = vmatpush1.xpose.msra.mxu0 0.0
        %4994 = vmatprep.subr.mxu0 0.0
        %4995 = vmatpush1.xpose.msra.mxu0 0.0
        %4996 = vmatprep.subr.mxu0 0.0
        %4997 = vmatpush1.xpose.msra.mxu0 0.0
        %4998 = vmatprep.subr.mxu0 0.0
        %4999 = vmatpush1.xpose.msra.mxu0 0.0
        %5000 = vmatprep.mubr.f32.mxu0 0.0
        %5001 = vmatmul.mubr.f32.gmra.mrb[0].mxu0 %v4926
        %v5002 = vpop.f32.mrb[0].mxu0
        %v5003 = vadd.f32 0.0, %v5002
        %v5004 = vpop.f32.mrb[0].mxu0
        %5005 = vmatprep.mubr.f32.mxu0 0.0
        %5006 = vmatmul.mubr.f32.gmra.mrb[0].mxu0 %v4928
        %v5007 = vpop.f32.mrb[0].mxu0
        %v5008 = vadd.f32 0.0, %v5007
        %v5009 = vpop.f32.mrb[0].mxu0
        %5010 = vdwg.mxu0
        %v5011 = vmul.f32 %v5003, 0.35355338
        %v5012 = vmul.f32 %v5008, 0.35355338
        %v5013 = vsel %vm2188, %v5011, -inf
        %5014 = vmax.xlane.f32.xlu0 %v5013
        %v5015 = vpop.xlane.xlu0 %5014
        %v5016 = vsel %vm2188, %v5012, -inf
        %5017 = vmax.xlane.f32.xlu0 %v5016
        %v5018 = vpop.xlane.xlu0 %5017
        %v5019 = vsub.f32 %v5011, %v5015
        %v5020 = vsub.f32 %v5012, %v5018
        %v5021 = vmul.f32 %v5019, 1.442695
        %v5022 = vpow.pop %v5021
        %v5023 = vmul.f32 %v5020, 1.442695
        %v5024 = vpow.pop %v5023
        %v5025 = vsel %vm2188, %v5022, 0.0
        %5026 = vadd.xlane.f32.xlu0 %v5025
        %v5027 = vpop.xlane.xlu0 %5026
        %v5028 = vsel %vm2188, %v5024, 0.0
        %5029 = vadd.xlane.f32.xlu0 %v5028
        %v5030 = vpop.xlane.xlu0 %5029
        %v5031 = vrcp.pop %v5027
        %v5032 = vmul.f32 %v5022, %v5031
        %v5033 = vrcp.pop %v5030
        %v5034 = vmul.f32 %v5024, %v5033
        %5035 = vrot.lane.b32.xlu0 %v817, 88
        %v5036 = vpop.permute.xlu0 %5035
        %5037 = vrot.lane.b32.xlu0 %v823, 88
        %v5038 = vpop.permute.xlu0 %5037
        %5039 = vrot.lane.b32.xlu0 %v829, 88
        %v5040 = vpop.permute.xlu0 %5039
        %v5045 = vsel %vm2188, %v5032, 0
        %v5048 = vsel %vm2188, %v5034, 0
        %5050 = vmatprep.subr.mxu0 0.0
        %5051 = vmatpush1.msra.mxu0 %v5036
        %5052 = vmatprep.subr.mxu0 0.0
        %5053 = vmatpush1.msra.mxu0 %v5038
        %5054 = vmatprep.subr.mxu0 0.0
        %5055 = vmatpush1.msra.mxu0 %v5040
        %5056 = vmatprep.subr.mxu0 0.0
        %5057 = vmatpush1.msra.mxu0 0.0
        %5058 = vmatprep.subr.mxu0 0.0
        %5059 = vmatpush1.msra.mxu0 0.0
        %5060 = vmatprep.subr.mxu0 0.0
        %5061 = vmatpush1.msra.mxu0 0.0
        %5062 = vmatprep.subr.mxu0 0.0
        %5063 = vmatpush1.msra.mxu0 0.0
        %5064 = vmatprep.subr.mxu0 0.0
        %5065 = vmatpush1.msra.mxu0 0.0
        %5066 = vmatprep.subr.mxu0 0.0
        %5067 = vmatpush1.msra.mxu0 0.0
        %5068 = vmatprep.subr.mxu0 0.0
        %5069 = vmatpush1.msra.mxu0 0.0
        %5070 = vmatprep.subr.mxu0 0.0
        %5071 = vmatpush1.msra.mxu0 0.0
        %5072 = vmatprep.subr.mxu0 0.0
        %5073 = vmatpush1.msra.mxu0 0.0
        %5074 = vmatprep.subr.mxu0 0.0
        %5075 = vmatpush1.msra.mxu0 0.0
        %5076 = vmatprep.subr.mxu0 0.0
        %5077 = vmatpush1.msra.mxu0 0.0
        %5078 = vmatprep.subr.mxu0 0.0
        %5079 = vmatpush1.msra.mxu0 0.0
        %5080 = vmatprep.subr.mxu0 0.0
        %5081 = vmatpush1.msra.mxu0 0.0
        %5082 = vmatprep.subr.mxu0 0.0
        %5083 = vmatpush1.msra.mxu0 0.0
        %5084 = vmatprep.subr.mxu0 0.0
        %5085 = vmatpush1.msra.mxu0 0.0
        %5086 = vmatprep.subr.mxu0 0.0
        %5087 = vmatpush1.msra.mxu0 0.0
        %5088 = vmatprep.subr.mxu0 0.0
        %5089 = vmatpush1.msra.mxu0 0.0
        %5090 = vmatprep.subr.mxu0 0.0
        %5091 = vmatpush1.msra.mxu0 0.0
        %5092 = vmatprep.subr.mxu0 0.0
        %5093 = vmatpush1.msra.mxu0 0.0
        %5094 = vmatprep.subr.mxu0 0.0
        %5095 = vmatpush1.msra.mxu0 0.0
        %5096 = vmatprep.subr.mxu0 0.0
        %5097 = vmatpush1.msra.mxu0 0.0
        %5098 = vmatprep.subr.mxu0 0.0
        %5099 = vmatpush1.msra.mxu0 0.0
        %5100 = vmatprep.subr.mxu0 0.0
        %5101 = vmatpush1.msra.mxu0 0.0
        %5102 = vmatprep.subr.mxu0 0.0
        %5103 = vmatpush1.msra.mxu0 0.0
        %5104 = vmatprep.subr.mxu0 0.0
        %5105 = vmatpush1.msra.mxu0 0.0
        %5106 = vmatprep.subr.mxu0 0.0
        %5107 = vmatpush1.msra.mxu0 0.0
        %5108 = vmatprep.subr.mxu0 0.0
        %5109 = vmatpush1.msra.mxu0 0.0
        %5110 = vmatprep.subr.mxu0 0.0
        %5111 = vmatpush1.msra.mxu0 0.0
        %5112 = vmatprep.subr.mxu0 0.0
        %5113 = vmatpush1.msra.mxu0 0.0
        %5114 = vmatprep.mubr.f32.mxu0 0.0
        %5115 = vmatmul.mubr.f32.gmra.mrb[0].mxu0 %v5045
        %v5116 = vpop.f32.mrb[0].mxu0
        %v5117 = vadd.f32 0.0, %v5116
        %v5118 = vpop.f32.mrb[0].mxu0
        %5119 = vmatprep.mubr.f32.mxu0 0.0
        %5120 = vmatmul.mubr.f32.gmra.mrb[0].mxu0 %v5048
        %v5121 = vpop.f32.mrb[0].mxu0
        %v5122 = vadd.f32 0.0, %v5121
        %v5123 = vpop.f32.mrb[0].mxu0
        %5124 = vdwg.mxu0
        %5125 = vrot.lane.b32.xlu0 %v821, 80
        %v5126 = vpop.permute.xlu0 %5125
        %5127 = vrot.lane.b32.xlu0 %v827, 80
        %v5128 = vpop.permute.xlu0 %5127
        %5129 = vrot.lane.b32.xlu0 %v815, 16
        %v5130 = vpop.permute.xlu0 %5129
        %5131 = vrot.lane.b32.xlu0 %v821, 16
        %v5132 = vpop.permute.xlu0 %5131
        %5133 = vrot.lane.b32.xlu0 %v827, 16
        %v5134 = vpop.permute.xlu0 %5133
        %v5135 = vsel %vm834, %v5126, 0
        %v5137 = vsel %vm834, %v5128, 0
        %v5139 = vsel %vm834, %v5130, 0
        %v5141 = vsel %vm834, %v5132, 0
        %v5143 = vsel %vm834, %v5134, 0
        %5145 = vmatprep.subr.mxu0 0.0
        %5146 = vmatpush1.xpose.msra.mxu0 %v5139
        %5147 = vmatprep.subr.mxu0 0.0
        %5148 = vmatpush1.xpose.msra.mxu0 %v5141
        %5149 = vmatprep.subr.mxu0 0.0
        %5150 = vmatpush1.xpose.msra.mxu0 %v5143
        %5151 = vmatprep.subr.mxu0 0.0
        %5152 = vmatpush1.xpose.msra.mxu0 0.0
        %5153 = vmatprep.subr.mxu0 0.0
        %5154 = vmatpush1.xpose.msra.mxu0 0.0
        %5155 = vmatprep.subr.mxu0 0.0
        %5156 = vmatpush1.xpose.msra.mxu0 0.0
        %5157 = vmatprep.subr.mxu0 0.0
        %5158 = vmatpush1.xpose.msra.mxu0 0.0
        %5159 = vmatprep.subr.mxu0 0.0
        %5160 = vmatpush1.xpose.msra.mxu0 0.0
        %5161 = vmatprep.subr.mxu0 0.0
        %5162 = vmatpush1.xpose.msra.mxu0 0.0
        %5163 = vmatprep.subr.mxu0 0.0
        %5164 = vmatpush1.xpose.msra.mxu0 0.0
        %5165 = vmatprep.subr.mxu0 0.0
        %5166 = vmatpush1.xpose.msra.mxu0 0.0
        %5167 = vmatprep.subr.mxu0 0.0
        %5168 = vmatpush1.xpose.msra.mxu0 0.0
        %5169 = vmatprep.subr.mxu0 0.0
        %5170 = vmatpush1.xpose.msra.mxu0 0.0
        %5171 = vmatprep.subr.mxu0 0.0
        %5172 = vmatpush1.xpose.msra.mxu0 0.0
        %5173 = vmatprep.subr.mxu0 0.0
        %5174 = vmatpush1.xpose.msra.mxu0 0.0
        %5175 = vmatprep.subr.mxu0 0.0
        %5176 = vmatpush1.xpose.msra.mxu0 0.0
        %5177 = vmatprep.subr.mxu0 0.0
        %5178 = vmatpush1.xpose.msra.mxu0 0.0
        %5179 = vmatprep.subr.mxu0 0.0
        %5180 = vmatpush1.xpose.msra.mxu0 0.0
        %5181 = vmatprep.subr.mxu0 0.0
        %5182 = vmatpush1.xpose.msra.mxu0 0.0
        %5183 = vmatprep.subr.mxu0 0.0
        %5184 = vmatpush1.xpose.msra.mxu0 0.0
        %5185 = vmatprep.subr.mxu0 0.0
        %5186 = vmatpush1.xpose.msra.mxu0 0.0
        %5187 = vmatprep.subr.mxu0 0.0
        %5188 = vmatpush1.xpose.msra.mxu0 0.0
        %5189 = vmatprep.subr.mxu0 0.0
        %5190 = vmatpush1.xpose.msra.mxu0 0.0
        %5191 = vmatprep.subr.mxu0 0.0
        %5192 = vmatpush1.xpose.msra.mxu0 0.0
        %5193 = vmatprep.subr.mxu0 0.0
        %5194 = vmatpush1.xpose.msra.mxu0 0.0
        %5195 = vmatprep.subr.mxu0 0.0
        %5196 = vmatpush1.xpose.msra.mxu0 0.0
        %5197 = vmatprep.subr.mxu0 0.0
        %5198 = vmatpush1.xpose.msra.mxu0 0.0
        %5199 = vmatprep.subr.mxu0 0.0
        %5200 = vmatpush1.xpose.msra.mxu0 0.0
        %5201 = vmatprep.subr.mxu0 0.0
        %5202 = vmatpush1.xpose.msra.mxu0 0.0
        %5203 = vmatprep.subr.mxu0 0.0
        %5204 = vmatpush1.xpose.msra.mxu0 0.0
        %5205 = vmatprep.subr.mxu0 0.0
        %5206 = vmatpush1.xpose.msra.mxu0 0.0
        %5207 = vmatprep.subr.mxu0 0.0
        %5208 = vmatpush1.xpose.msra.mxu0 0.0
        %5209 = vmatprep.mubr.f32.mxu0 0.0
        %5210 = vmatmul.mubr.f32.gmra.mrb[0].mxu0 %v5135
        %v5211 = vpop.f32.mrb[0].mxu0
        %v5212 = vadd.f32 0.0, %v5211
        %v5213 = vpop.f32.mrb[0].mxu0
        %5214 = vmatprep.mubr.f32.mxu0 0.0
        %5215 = vmatmul.mubr.f32.gmra.mrb[0].mxu0 %v5137
        %v5216 = vpop.f32.mrb[0].mxu0
        %v5217 = vadd.f32 0.0, %v5216
        %v5218 = vpop.f32.mrb[0].mxu0
        %5219 = vdwg.mxu0
        %v5220 = vmul.f32 %v5212, 0.35355338
        %v5221 = vmul.f32 %v5217, 0.35355338
        %v5222 = vsel %vm2188, %v5220, -inf
        %5223 = vmax.xlane.f32.xlu0 %v5222
        %v5224 = vpop.xlane.xlu0 %5223
        %v5225 = vsel %vm2188, %v5221, -inf
        %5226 = vmax.xlane.f32.xlu0 %v5225
        %v5227 = vpop.xlane.xlu0 %5226
        %v5228 = vsub.f32 %v5220, %v5224
        %v5229 = vsub.f32 %v5221, %v5227
        %v5230 = vmul.f32 %v5228, 1.442695
        %v5231 = vpow.pop %v5230
        %v5232 = vmul.f32 %v5229, 1.442695
        %v5233 = vpow.pop %v5232
        %v5234 = vsel %vm2188, %v5231, 0.0
        %5235 = vadd.xlane.f32.xlu0 %v5234
        %v5236 = vpop.xlane.xlu0 %5235
        %v5237 = vsel %vm2188, %v5233, 0.0
        %5238 = vadd.xlane.f32.xlu0 %v5237
        %v5239 = vpop.xlane.xlu0 %5238
        %v5240 = vrcp.pop %v5236
        %v5241 = vmul.f32 %v5231, %v5240
        %v5242 = vrcp.pop %v5239
        %v5243 = vmul.f32 %v5233, %v5242
        %5244 = vrot.lane.b32.xlu0 %v817, 80
        %v5245 = vpop.permute.xlu0 %5244
        %5246 = vrot.lane.b32.xlu0 %v823, 80
        %v5247 = vpop.permute.xlu0 %5246
        %5248 = vrot.lane.b32.xlu0 %v829, 80
        %v5249 = vpop.permute.xlu0 %5248
        %v5254 = vsel %vm2188, %v5241, 0
        %v5257 = vsel %vm2188, %v5243, 0
        %5259 = vmatprep.subr.mxu0 0.0
        %5260 = vmatpush1.msra.mxu0 %v5245
        %5261 = vmatprep.subr.mxu0 0.0
        %5262 = vmatpush1.msra.mxu0 %v5247
        %5263 = vmatprep.subr.mxu0 0.0
        %5264 = vmatpush1.msra.mxu0 %v5249
        %5265 = vmatprep.subr.mxu0 0.0
        %5266 = vmatpush1.msra.mxu0 0.0
        %5267 = vmatprep.subr.mxu0 0.0
        %5268 = vmatpush1.msra.mxu0 0.0
        %5269 = vmatprep.subr.mxu0 0.0
        %5270 = vmatpush1.msra.mxu0 0.0
        %5271 = vmatprep.subr.mxu0 0.0
        %5272 = vmatpush1.msra.mxu0 0.0
        %5273 = vmatprep.subr.mxu0 0.0
        %5274 = vmatpush1.msra.mxu0 0.0
        %5275 = vmatprep.subr.mxu0 0.0
        %5276 = vmatpush1.msra.mxu0 0.0
        %5277 = vmatprep.subr.mxu0 0.0
        %5278 = vmatpush1.msra.mxu0 0.0
        %5279 = vmatprep.subr.mxu0 0.0
        %5280 = vmatpush1.msra.mxu0 0.0
        %5281 = vmatprep.subr.mxu0 0.0
        %5282 = vmatpush1.msra.mxu0 0.0
        %5283 = vmatprep.subr.mxu0 0.0
        %5284 = vmatpush1.msra.mxu0 0.0
        %5285 = vmatprep.subr.mxu0 0.0
        %5286 = vmatpush1.msra.mxu0 0.0
        %5287 = vmatprep.subr.mxu0 0.0
        %5288 = vmatpush1.msra.mxu0 0.0
        %5289 = vmatprep.subr.mxu0 0.0
        %5290 = vmatpush1.msra.mxu0 0.0
        %5291 = vmatprep.subr.mxu0 0.0
        %5292 = vmatpush1.msra.mxu0 0.0
        %5293 = vmatprep.subr.mxu0 0.0
        %5294 = vmatpush1.msra.mxu0 0.0
        %5295 = vmatprep.subr.mxu0 0.0
        %5296 = vmatpush1.msra.mxu0 0.0
        %5297 = vmatprep.subr.mxu0 0.0
        %5298 = vmatpush1.msra.mxu0 0.0
        %5299 = vmatprep.subr.mxu0 0.0
        %5300 = vmatpush1.msra.mxu0 0.0
        %5301 = vmatprep.subr.mxu0 0.0
        %5302 = vmatpush1.msra.mxu0 0.0
        %5303 = vmatprep.subr.mxu0 0.0
        %5304 = vmatpush1.msra.mxu0 0.0
        %5305 = vmatprep.subr.mxu0 0.0
        %5306 = vmatpush1.msra.mxu0 0.0
        %5307 = vmatprep.subr.mxu0 0.0
        %5308 = vmatpush1.msra.mxu0 0.0
        %5309 = vmatprep.subr.mxu0 0.0
        %5310 = vmatpush1.msra.mxu0 0.0
        %5311 = vmatprep.subr.mxu0 0.0
        %5312 = vmatpush1.msra.mxu0 0.0
        %5313 = vmatprep.subr.mxu0 0.0
        %5314 = vmatpush1.msra.mxu0 0.0
        %5315 = vmatprep.subr.mxu0 0.0
        %5316 = vmatpush1.msra.mxu0 0.0
        %5317 = vmatprep.subr.mxu0 0.0
        %5318 = vmatpush1.msra.mxu0 0.0
        %5319 = vmatprep.subr.mxu0 0.0
        %5320 = vmatpush1.msra.mxu0 0.0
        %5321 = vmatprep.subr.mxu0 0.0
        %5322 = vmatpush1.msra.mxu0 0.0
        %5323 = vmatprep.mubr.f32.mxu0 0.0
        %5324 = vmatmul.mubr.f32.gmra.mrb[0].mxu0 %v5254
        %v5325 = vpop.f32.mrb[0].mxu0
        %v5326 = vadd.f32 0.0, %v5325
        %v5327 = vpop.f32.mrb[0].mxu0
        %5328 = vmatprep.mubr.f32.mxu0 0.0
        %5329 = vmatmul.mubr.f32.gmra.mrb[0].mxu0 %v5257
        %v5330 = vpop.f32.mrb[0].mxu0
        %v5331 = vadd.f32 0.0, %v5330
        %v5332 = vpop.f32.mrb[0].mxu0
        %5333 = vdwg.mxu0
        %5334 = vrot.lane.b32.xlu0 %v821, 72
        %v5335 = vpop.permute.xlu0 %5334
        %5336 = vrot.lane.b32.xlu0 %v827, 72
        %v5337 = vpop.permute.xlu0 %5336
        %5338 = vrot.lane.b32.xlu0 %v815, 8
        %v5339 = vpop.permute.xlu0 %5338
        %5340 = vrot.lane.b32.xlu0 %v821, 8
        %v5341 = vpop.permute.xlu0 %5340
        %5342 = vrot.lane.b32.xlu0 %v827, 8
        %v5343 = vpop.permute.xlu0 %5342
        %v5344 = vsel %vm834, %v5335, 0
        %v5346 = vsel %vm834, %v5337, 0
        %v5348 = vsel %vm834, %v5339, 0
        %v5350 = vsel %vm834, %v5341, 0
        %v5352 = vsel %vm834, %v5343, 0
        %5354 = vmatprep.subr.mxu0 0.0
        %5355 = vmatpush1.xpose.msra.mxu0 %v5348
        %5356 = vmatprep.subr.mxu0 0.0
        %5357 = vmatpush1.xpose.msra.mxu0 %v5350
        %5358 = vmatprep.subr.mxu0 0.0
        %5359 = vmatpush1.xpose.msra.mxu0 %v5352
        %5360 = vmatprep.subr.mxu0 0.0
        %5361 = vmatpush1.xpose.msra.mxu0 0.0
        %5362 = vmatprep.subr.mxu0 0.0
        %5363 = vmatpush1.xpose.msra.mxu0 0.0
        %5364 = vmatprep.subr.mxu0 0.0
        %5365 = vmatpush1.xpose.msra.mxu0 0.0
        %5366 = vmatprep.subr.mxu0 0.0
        %5367 = vmatpush1.xpose.msra.mxu0 0.0
        %5368 = vmatprep.subr.mxu0 0.0
        %5369 = vmatpush1.xpose.msra.mxu0 0.0
        %5370 = vmatprep.subr.mxu0 0.0
        %5371 = vmatpush1.xpose.msra.mxu0 0.0
        %5372 = vmatprep.subr.mxu0 0.0
        %5373 = vmatpush1.xpose.msra.mxu0 0.0
        %5374 = vmatprep.subr.mxu0 0.0
        %5375 = vmatpush1.xpose.msra.mxu0 0.0
        %5376 = vmatprep.subr.mxu0 0.0
        %5377 = vmatpush1.xpose.msra.mxu0 0.0
        %5378 = vmatprep.subr.mxu0 0.0
        %5379 = vmatpush1.xpose.msra.mxu0 0.0
        %5380 = vmatprep.subr.mxu0 0.0
        %5381 = vmatpush1.xpose.msra.mxu0 0.0
        %5382 = vmatprep.subr.mxu0 0.0
        %5383 = vmatpush1.xpose.msra.mxu0 0.0
        %5384 = vmatprep.subr.mxu0 0.0
        %5385 = vmatpush1.xpose.msra.mxu0 0.0
        %5386 = vmatprep.subr.mxu0 0.0
        %5387 = vmatpush1.xpose.msra.mxu0 0.0
        %5388 = vmatprep.subr.mxu0 0.0
        %5389 = vmatpush1.xpose.msra.mxu0 0.0
        %5390 = vmatprep.subr.mxu0 0.0
        %5391 = vmatpush1.xpose.msra.mxu0 0.0
        %5392 = vmatprep.subr.mxu0 0.0
        %5393 = vmatpush1.xpose.msra.mxu0 0.0
        %5394 = vmatprep.subr.mxu0 0.0
        %5395 = vmatpush1.xpose.msra.mxu0 0.0
        %5396 = vmatprep.subr.mxu0 0.0
        %5397 = vmatpush1.xpose.msra.mxu0 0.0
        %5398 = vmatprep.subr.mxu0 0.0
        %5399 = vmatpush1.xpose.msra.mxu0 0.0
        %5400 = vmatprep.subr.mxu0 0.0
        %5401 = vmatpush1.xpose.msra.mxu0 0.0
        %5402 = vmatprep.subr.mxu0 0.0
        %5403 = vmatpush1.xpose.msra.mxu0 0.0
        %5404 = vmatprep.subr.mxu0 0.0
        %5405 = vmatpush1.xpose.msra.mxu0 0.0
        %5406 = vmatprep.subr.mxu0 0.0
        %5407 = vmatpush1.xpose.msra.mxu0 0.0
        %5408 = vmatprep.subr.mxu0 0.0
        %5409 = vmatpush1.xpose.msra.mxu0 0.0
        %5410 = vmatprep.subr.mxu0 0.0
        %5411 = vmatpush1.xpose.msra.mxu0 0.0
        %5412 = vmatprep.subr.mxu0 0.0
        %5413 = vmatpush1.xpose.msra.mxu0 0.0
        %5414 = vmatprep.subr.mxu0 0.0
        %5415 = vmatpush1.xpose.msra.mxu0 0.0
        %5416 = vmatprep.subr.mxu0 0.0
        %5417 = vmatpush1.xpose.msra.mxu0 0.0
        %5418 = vmatprep.mubr.f32.mxu0 0.0
        %5419 = vmatmul.mubr.f32.gmra.mrb[0].mxu0 %v5344
        %v5420 = vpop.f32.mrb[0].mxu0
        %v5421 = vadd.f32 0.0, %v5420
        %v5422 = vpop.f32.mrb[0].mxu0
        %5423 = vmatprep.mubr.f32.mxu0 0.0
        %5424 = vmatmul.mubr.f32.gmra.mrb[0].mxu0 %v5346
        %v5425 = vpop.f32.mrb[0].mxu0
        %v5426 = vadd.f32 0.0, %v5425
        %v5427 = vpop.f32.mrb[0].mxu0
        %5428 = vdwg.mxu0
        %v5429 = vmul.f32 %v5421, 0.35355338
        %v5430 = vmul.f32 %v5426, 0.35355338
        %v5431 = vsel %vm2188, %v5429, -inf
        %5432 = vmax.xlane.f32.xlu0 %v5431
        %v5433 = vpop.xlane.xlu0 %5432
        %v5434 = vsel %vm2188, %v5430, -inf
        %5435 = vmax.xlane.f32.xlu0 %v5434
        %v5436 = vpop.xlane.xlu0 %5435
        %v5437 = vsub.f32 %v5429, %v5433
        %v5438 = vsub.f32 %v5430, %v5436
        %v5439 = vmul.f32 %v5437, 1.442695
        %v5440 = vpow.pop %v5439
        %v5441 = vmul.f32 %v5438, 1.442695
        %v5442 = vpow.pop %v5441
        %v5443 = vsel %vm2188, %v5440, 0.0
        %5444 = vadd.xlane.f32.xlu0 %v5443
        %v5445 = vpop.xlane.xlu0 %5444
        %v5446 = vsel %vm2188, %v5442, 0.0
        %5447 = vadd.xlane.f32.xlu0 %v5446
        %v5448 = vpop.xlane.xlu0 %5447
        %v5449 = vrcp.pop %v5445
        %v5450 = vmul.f32 %v5440, %v5449
        %v5451 = vrcp.pop %v5448
        %v5452 = vmul.f32 %v5442, %v5451
        %5453 = vrot.lane.b32.xlu0 %v817, 72
        %v5454 = vpop.permute.xlu0 %5453
        %5455 = vrot.lane.b32.xlu0 %v823, 72
        %v5456 = vpop.permute.xlu0 %5455
        %5457 = vrot.lane.b32.xlu0 %v829, 72
        %v5458 = vpop.permute.xlu0 %5457
        %v5463 = vsel %vm2188, %v5450, 0
        %v5466 = vsel %vm2188, %v5452, 0
        %5468 = vmatprep.subr.mxu0 0.0
        %5469 = vmatpush1.msra.mxu0 %v5454
        %5470 = vmatprep.subr.mxu0 0.0
        %5471 = vmatpush1.msra.mxu0 %v5456
        %5472 = vmatprep.subr.mxu0 0.0
        %5473 = vmatpush1.msra.mxu0 %v5458
        %5474 = vmatprep.subr.mxu0 0.0
        %5475 = vmatpush1.msra.mxu0 0.0
        %5476 = vmatprep.subr.mxu0 0.0
        %5477 = vmatpush1.msra.mxu0 0.0
        %5478 = vmatprep.subr.mxu0 0.0
        %5479 = vmatpush1.msra.mxu0 0.0
        %5480 = vmatprep.subr.mxu0 0.0
        %5481 = vmatpush1.msra.mxu0 0.0
        %5482 = vmatprep.subr.mxu0 0.0
        %5483 = vmatpush1.msra.mxu0 0.0
        %5484 = vmatprep.subr.mxu0 0.0
        %5485 = vmatpush1.msra.mxu0 0.0
        %5486 = vmatprep.subr.mxu0 0.0
        %5487 = vmatpush1.msra.mxu0 0.0
        %5488 = vmatprep.subr.mxu0 0.0
        %5489 = vmatpush1.msra.mxu0 0.0
        %5490 = vmatprep.subr.mxu0 0.0
        %5491 = vmatpush1.msra.mxu0 0.0
        %5492 = vmatprep.subr.mxu0 0.0
        %5493 = vmatpush1.msra.mxu0 0.0
        %5494 = vmatprep.subr.mxu0 0.0
        %5495 = vmatpush1.msra.mxu0 0.0
        %5496 = vmatprep.subr.mxu0 0.0
        %5497 = vmatpush1.msra.mxu0 0.0
        %5498 = vmatprep.subr.mxu0 0.0
        %5499 = vmatpush1.msra.mxu0 0.0
        %5500 = vmatprep.subr.mxu0 0.0
        %5501 = vmatpush1.msra.mxu0 0.0
        %5502 = vmatprep.subr.mxu0 0.0
        %5503 = vmatpush1.msra.mxu0 0.0
        %5504 = vmatprep.subr.mxu0 0.0
        %5505 = vmatpush1.msra.mxu0 0.0
        %5506 = vmatprep.subr.mxu0 0.0
        %5507 = vmatpush1.msra.mxu0 0.0
        %5508 = vmatprep.subr.mxu0 0.0
        %5509 = vmatpush1.msra.mxu0 0.0
        %5510 = vmatprep.subr.mxu0 0.0
        %5511 = vmatpush1.msra.mxu0 0.0
        %5512 = vmatprep.subr.mxu0 0.0
        %5513 = vmatpush1.msra.mxu0 0.0
        %5514 = vmatprep.subr.mxu0 0.0
        %5515 = vmatpush1.msra.mxu0 0.0
        %5516 = vmatprep.subr.mxu0 0.0
        %5517 = vmatpush1.msra.mxu0 0.0
        %5518 = vmatprep.subr.mxu0 0.0
        %5519 = vmatpush1.msra.mxu0 0.0
        %5520 = vmatprep.subr.mxu0 0.0
        %5521 = vmatpush1.msra.mxu0 0.0
        %5522 = vmatprep.subr.mxu0 0.0
        %5523 = vmatpush1.msra.mxu0 0.0
        %5524 = vmatprep.subr.mxu0 0.0
        %5525 = vmatpush1.msra.mxu0 0.0
        %5526 = vmatprep.subr.mxu0 0.0
        %5527 = vmatpush1.msra.mxu0 0.0
        %5528 = vmatprep.subr.mxu0 0.0
        %5529 = vmatpush1.msra.mxu0 0.0
        %5530 = vmatprep.subr.mxu0 0.0
        %5531 = vmatpush1.msra.mxu0 0.0
        %5532 = vmatprep.mubr.f32.mxu0 0.0
        %5533 = vmatmul.mubr.f32.gmra.mrb[0].mxu0 %v5463
        %v5534 = vpop.f32.mrb[0].mxu0
        %v5535 = vadd.f32 0.0, %v5534
        %v5536 = vpop.f32.mrb[0].mxu0
        %5537 = vmatprep.mubr.f32.mxu0 0.0
        %5538 = vmatmul.mubr.f32.gmra.mrb[0].mxu0 %v5466
        %v5539 = vpop.f32.mrb[0].mxu0
        %v5540 = vadd.f32 0.0, %v5539
        %v5541 = vpop.f32.mrb[0].mxu0
        %5542 = vdwg.mxu0
        %5545 = vrot.lane.b32.xlu0 %v4281, 8
        %v5546 = vpop.permute.xlu0 %5545
        %5547 = vrot.lane.b32.xlu0 %v4286, 8
        %v5548 = vpop.permute.xlu0 %5547
        %5553 = vrot.lane.b32.xlu0 %v4490, 16
        %v5554 = vpop.permute.xlu0 %5553
        %5555 = vrot.lane.b32.xlu0 %v4495, 16
        %v5556 = vpop.permute.xlu0 %5555
        %5561 = vrot.lane.b32.xlu0 %v4699, 24
        %v5562 = vpop.permute.xlu0 %5561
        %5563 = vrot.lane.b32.xlu0 %v4704, 24
        %v5564 = vpop.permute.xlu0 %5563
        %5569 = vrot.lane.b32.xlu0 %v4908, 32
        %v5570 = vpop.permute.xlu0 %5569
        %5571 = vrot.lane.b32.xlu0 %v4913, 32
        %v5572 = vpop.permute.xlu0 %5571
        %5577 = vrot.lane.b32.xlu0 %v5117, 40
        %v5578 = vpop.permute.xlu0 %5577
        %5579 = vrot.lane.b32.xlu0 %v5122, 40
        %v5580 = vpop.permute.xlu0 %5579
        %5585 = vrot.lane.b32.xlu0 %v5326, 48
        %v5586 = vpop.permute.xlu0 %5585
        %5587 = vrot.lane.b32.xlu0 %v5331, 48
        %v5588 = vpop.permute.xlu0 %5587
        %5593 = vrot.lane.b32.xlu0 %v5535, 56
        %v5594 = vpop.permute.xlu0 %5593
        %5595 = vrot.lane.b32.xlu0 %v5540, 56
        %v5596 = vpop.permute.xlu0 %5595
        %v5599 = vsel %vm834, %v4069, %v5546
        %v5600 = vsel %vm834, %v4074, %v5548
        %v5601 = vsel %vm2186, %v5599, %v5554
        %v5602 = vsel %vm2186, %v5600, %v5556
        %v5603 = vsel %vm2188, %v5601, %v5562
        %v5604 = vsel %vm2188, %v5602, %v5564
        %v5605 = vsel %vm2190, %v5603, %v5570
        %v5606 = vsel %vm2190, %v5604, %v5572
        %v5607 = vsel %vm2192, %v5605, %v5578
        %v5608 = vsel %vm2192, %v5606, %v5580
        %v5609 = vsel %vm2194, %v5607, %v5586
        %v5610 = vsel %vm2194, %v5608, %v5588
        %v5611 = vsel %vm2196, %v5609, %v5594
        %v5612 = vsel %vm2196, %v5610, %v5596
        %v5613 = vld [vmem:[%s5] sm:$0xff]
        %v5614 = vld [vmem:[%s5 + $0x8] sm:$0xff]
        %v5615 = vld [vmem:[%s5 + $0x10] sm:$0xff]
        %v5616 = vld [vmem:[%s5 + $0x18] sm:$0xff]
        %v5617 = vld [vmem:[%s5 + $0x20] sm:$0xff]
        %v5618 = vld [vmem:[%s5 + $0x28] sm:$0xff]
        %v5619 = vld [vmem:[%s5 + $0x30] sm:$0xff]
        %v5620 = vld [vmem:[%s5 + $0x38] sm:$0xff]
        %v5621 = vld [vmem:[%s6] sm:$0x1]
        %v5623 = vsel %vm543, %v2197, 0
        %v5626 = vsel %vm543, %v3876, 0
        %v5629 = vsel %vm543, %v3877, 0
        %5631 = vmatprep.subr.mxu0 0.0
        %5632 = vmatpush1.msra.mxu0 %v5613
        %5633 = vmatprep.subr.mxu0 0.0
        %5634 = vmatpush1.msra.mxu0 %v5614
        %5635 = vmatprep.subr.mxu0 0.0
        %5636 = vmatpush1.msra.mxu0 %v5615
        %5637 = vmatprep.subr.mxu0 0.0
        %5638 = vmatpush1.msra.mxu0 %v5616
        %5639 = vmatprep.subr.mxu0 0.0
        %5640 = vmatpush1.msra.mxu0 %v5617
        %5641 = vmatprep.subr.mxu0 0.0
        %5642 = vmatpush1.msra.mxu0 %v5618
        %5643 = vmatprep.subr.mxu0 0.0
        %5644 = vmatpush1.msra.mxu0 %v5619
        %5645 = vmatprep.subr.mxu0 0.0
        %5646 = vmatpush1.msra.mxu0 %v5620
        %5647 = vmatprep.subr.mxu0 0.0
        %5648 = vmatpush1.msra.mxu0 0.0
        %5649 = vmatprep.subr.mxu0 0.0
        %5650 = vmatpush1.msra.mxu0 0.0
        %5651 = vmatprep.subr.mxu0 0.0
        %5652 = vmatpush1.msra.mxu0 0.0
        %5653 = vmatprep.subr.mxu0 0.0
        %5654 = vmatpush1.msra.mxu0 0.0
        %5655 = vmatprep.subr.mxu0 0.0
        %5656 = vmatpush1.msra.mxu0 0.0
        %5657 = vmatprep.subr.mxu0 0.0
        %5658 = vmatpush1.msra.mxu0 0.0
        %5659 = vmatprep.subr.mxu0 0.0
        %5660 = vmatpush1.msra.mxu0 0.0
        %5661 = vmatprep.subr.mxu0 0.0
        %5662 = vmatpush1.msra.mxu0 0.0
        %5663 = vmatprep.subr.mxu0 0.0
        %5664 = vmatpush1.msra.mxu0 0.0
        %5665 = vmatprep.subr.mxu0 0.0
        %5666 = vmatpush1.msra.mxu0 0.0
        %5667 = vmatprep.subr.mxu0 0.0
        %5668 = vmatpush1.msra.mxu0 0.0
        %5669 = vmatprep.subr.mxu0 0.0
        %5670 = vmatpush1.msra.mxu0 0.0
        %5671 = vmatprep.subr.mxu0 0.0
        %5672 = vmatpush1.msra.mxu0 0.0
        %5673 = vmatprep.subr.mxu0 0.0
        %5674 = vmatpush1.msra.mxu0 0.0
        %5675 = vmatprep.subr.mxu0 0.0
        %5676 = vmatpush1.msra.mxu0 0.0
        %5677 = vmatprep.subr.mxu0 0.0
        %5678 = vmatpush1.msra.mxu0 0.0
        %5679 = vmatprep.subr.mxu0 0.0
        %5680 = vmatpush1.msra.mxu0 0.0
        %5681 = vmatprep.subr.mxu0 0.0
        %5682 = vmatpush1.msra.mxu0 0.0
        %5683 = vmatprep.subr.mxu0 0.0
        %5684 = vmatpush1.msra.mxu0 0.0
        %5685 = vmatprep.subr.mxu0 0.0
        %5686 = vmatpush1.msra.mxu0 0.0
        %5687 = vmatprep.subr.mxu0 0.0
        %5688 = vmatpush1.msra.mxu0 0.0
        %5689 = vmatprep.subr.mxu0 0.0
        %5690 = vmatpush1.msra.mxu0 0.0
        %5691 = vmatprep.subr.mxu0 0.0
        %5692 = vmatpush1.msra.mxu0 0.0
        %5693 = vmatprep.subr.mxu0 0.0
        %5694 = vmatpush1.msra.mxu0 0.0
        %5695 = vmatprep.mubr.f32.mxu0 0.0
        %5696 = vmatmul.mubr.f32.gmra.mrb[0].mxu0 %v5623
        %v5697 = vpop.f32.mrb[0].mxu0
        %v5698 = vadd.f32 0.0, %v5697
        %v5699 = vpop.f32.mrb[0].mxu0
        %5700 = vmatprep.mubr.f32.mxu0 0.0
        %5701 = vmatmul.mubr.f32.gmra.mrb[0].mxu0 %v5626
        %v5702 = vpop.f32.mrb[0].mxu0
        %v5703 = vadd.f32 0.0, %v5702
        %v5704 = vpop.f32.mrb[0].mxu0
        %5705 = vmatprep.mubr.f32.mxu0 0.0
        %5706 = vmatmul.mubr.f32.gmra.mrb[0].mxu0 %v5629
        %v5707 = vpop.f32.mrb[0].mxu0
        %v5708 = vadd.f32 0.0, %v5707
        %v5709 = vpop.f32.mrb[0].mxu0
        %5710 = vdwg.mxu0
        %v5711 = vadd.f32 %v517, %v5698
        %v5712 = vadd.f32 %v518, %v5703
        %v5713 = vadd.f32 %v519, %v5708
        %v5715 = vlaneseq
        %v5716 = vshrl.u32 %v5715, 7
        %v5717 = vsub.s32 0, %v5716
        %v5718 = vrot.slane %v5621, %v5717
        %v5720 = vadd.f32 %v5711, %v5718
        %v5721 = vadd.f32 %v5712, %v5718
        %v5722 = vadd.f32 %v5713, %v5718
        %v5724 = vsel %vm543, %v5611, 0
        %v5727 = vsel %vm543, %v5612, 0
        %5729 = vmatprep.subr.mxu0 0.0
        %5730 = vmatpush1.msra.mxu0 %v5613
        %5731 = vmatprep.subr.mxu0 0.0
        %5732 = vmatpush1.msra.mxu0 %v5614
        %5733 = vmatprep.subr.mxu0 0.0
        %5734 = vmatpush1.msra.mxu0 %v5615
        %5735 = vmatprep.subr.mxu0 0.0
        %5736 = vmatpush1.msra.mxu0 %v5616
        %5737 = vmatprep.subr.mxu0 0.0
        %5738 = vmatpush1.msra.mxu0 %v5617
        %5739 = vmatprep.subr.mxu0 0.0
        %5740 = vmatpush1.msra.mxu0 %v5618
        %5741 = vmatprep.subr.mxu0 0.0
        %5742 = vmatpush1.msra.mxu0 %v5619
        %5743 = vmatprep.subr.mxu0 0.0
        %5744 = vmatpush1.msra.mxu0 %v5620
        %5745 = vmatprep.subr.mxu0 0.0
        %5746 = vmatpush1.msra.mxu0 0.0
        %5747 = vmatprep.subr.mxu0 0.0
        %5748 = vmatpush1.msra.mxu0 0.0
        %5749 = vmatprep.subr.mxu0 0.0
        %5750 = vmatpush1.msra.mxu0 0.0
        %5751 = vmatprep.subr.mxu0 0.0
        %5752 = vmatpush1.msra.mxu0 0.0
        %5753 = vmatprep.subr.mxu0 0.0
        %5754 = vmatpush1.msra.mxu0 0.0
        %5755 = vmatprep.subr.mxu0 0.0
        %5756 = vmatpush1.msra.mxu0 0.0
        %5757 = vmatprep.subr.mxu0 0.0
        %5758 = vmatpush1.msra.mxu0 0.0
        %5759 = vmatprep.subr.mxu0 0.0
        %5760 = vmatpush1.msra.mxu0 0.0
        %5761 = vmatprep.subr.mxu0 0.0
        %5762 = vmatpush1.msra.mxu0 0.0
        %5763 = vmatprep.subr.mxu0 0.0
        %5764 = vmatpush1.msra.mxu0 0.0
        %5765 = vmatprep.subr.mxu0 0.0
        %5766 = vmatpush1.msra.mxu0 0.0
        %5767 = vmatprep.subr.mxu0 0.0
        %5768 = vmatpush1.msra.mxu0 0.0
        %5769 = vmatprep.subr.mxu0 0.0
        %5770 = vmatpush1.msra.mxu0 0.0
        %5771 = vmatprep.subr.mxu0 0.0
        %5772 = vmatpush1.msra.mxu0 0.0
        %5773 = vmatprep.subr.mxu0 0.0
        %5774 = vmatpush1.msra.mxu0 0.0
        %5775 = vmatprep.subr.mxu0 0.0
        %5776 = vmatpush1.msra.mxu0 0.0
        %5777 = vmatprep.subr.mxu0 0.0
        %5778 = vmatpush1.msra.mxu0 0.0
        %5779 = vmatprep.subr.mxu0 0.0
        %5780 = vmatpush1.msra.mxu0 0.0
        %5781 = vmatprep.subr.mxu0 0.0
        %5782 = vmatpush1.msra.mxu0 0.0
        %5783 = vmatprep.subr.mxu0 0.0
        %5784 = vmatpush1.msra.mxu0 0.0
        %5785 = vmatprep.subr.mxu0 0.0
        %5786 = vmatpush1.msra.mxu0 0.0
        %5787 = vmatprep.subr.mxu0 0.0
        %5788 = vmatpush1.msra.mxu0 0.0
        %5789 = vmatprep.subr.mxu0 0.0
        %5790 = vmatpush1.msra.mxu0 0.0
        %5791 = vmatprep.subr.mxu0 0.0
        %5792 = vmatpush1.msra.mxu0 0.0
        %5793 = vmatprep.mubr.f32.mxu0 0.0
        %5794 = vmatmul.mubr.f32.gmra.mrb[0].mxu0 %v5623
        %v5795 = vpop.f32.mrb[0].mxu0
        %v5796 = vadd.f32 0.0, %v5795
        %v5797 = vpop.f32.mrb[0].mxu0
        %5798 = vmatprep.mubr.f32.mxu0 0.0
        %5799 = vmatmul.mubr.f32.gmra.mrb[0].mxu0 %v5724
        %v5800 = vpop.f32.mrb[0].mxu0
        %v5801 = vadd.f32 0.0, %v5800
        %v5802 = vpop.f32.mrb[0].mxu0
        %5803 = vmatprep.mubr.f32.mxu0 0.0
        %5804 = vmatmul.mubr.f32.gmra.mrb[0].mxu0 %v5727
        %v5805 = vpop.f32.mrb[0].mxu0
        %v5806 = vadd.f32 0.0, %v5805
        %v5807 = vpop.f32.mrb[0].mxu0
        %5808 = vdwg.mxu0
        %v5809 = vadd.f32 %v520, %v5796
        %v5810 = vadd.f32 %v521, %v5801
        %v5811 = vadd.f32 %v522, %v5806
        %v5812 = vadd.f32 %v5809, %v5718
        %v5813 = vadd.f32 %v5810, %v5718
        %v5814 = vadd.f32 %v5811, %v5718
        %v5815 = vld [vmem:[%s9] sm:$0xff]
        %v5816 = vld [vmem:[%s9 + $0x8] sm:$0xff]
        %v5817 = vld [vmem:[%s9 + $0x10] sm:$0xff]
        %v5818 = vld [vmem:[%s9 + $0x18] sm:$0xff]
        %v5819 = vld [vmem:[%s9 + $0x20] sm:$0xff]
        %v5820 = vld [vmem:[%s9 + $0x28] sm:$0xff]
        %v5821 = vld [vmem:[%s9 + $0x30] sm:$0xff]
        %v5822 = vld [vmem:[%s9 + $0x38] sm:$0xff]
        %v5823 = vld [vmem:[%s9 + $0x40] sm:$0xff]
        %v5824 = vld [vmem:[%s9 + $0x48] sm:$0xff]
        %v5825 = vld [vmem:[%s9 + $0x50] sm:$0xff]
        %v5826 = vld [vmem:[%s9 + $0x58] sm:$0xff]
        %v5827 = vld [vmem:[%s9 + $0x60] sm:$0xff]
        %v5828 = vld [vmem:[%s9 + $0x68] sm:$0xff]
        %v5829 = vld [vmem:[%s9 + $0x70] sm:$0xff]
        %v5830 = vld [vmem:[%s9 + $0x78] sm:$0xff]
        %v5831 = vld [vmem:[%s10] sm:$0x3]
        %v5832 = vld [vmem:[%s11] sm:$0xff]
        %v5833 = vld [vmem:[%s11 + $0x8] sm:$0xff]
        %v5834 = vld [vmem:[%s11 + $0x10] sm:$0xff]
        %v5835 = vld [vmem:[%s11 + $0x18] sm:$0xff]
        %v5836 = vld [vmem:[%s11 + $0x20] sm:$0xff]
        %v5837 = vld [vmem:[%s11 + $0x28] sm:$0xff]
        %v5838 = vld [vmem:[%s11 + $0x30] sm:$0xff]
        %v5839 = vld [vmem:[%s11 + $0x38] sm:$0xff]
        %v5840 = vld [vmem:[%s11 + $0x40] sm:$0xff]
        %v5841 = vld [vmem:[%s11 + $0x48] sm:$0xff]
        %v5842 = vld [vmem:[%s11 + $0x50] sm:$0xff]
        %v5843 = vld [vmem:[%s11 + $0x58] sm:$0xff]
        %v5844 = vld [vmem:[%s11 + $0x60] sm:$0xff]
        %v5845 = vld [vmem:[%s11 + $0x68] sm:$0xff]
        %v5846 = vld [vmem:[%s11 + $0x70] sm:$0xff]
        %v5847 = vld [vmem:[%s11 + $0x78] sm:$0xff]
        %v5848 = vld [vmem:[%s11 + $0x80] sm:$0xff]
        %v5849 = vld [vmem:[%s11 + $0x88] sm:$0xff]
        %v5850 = vld [vmem:[%s11 + $0x90] sm:$0xff]
        %v5851 = vld [vmem:[%s11 + $0x98] sm:$0xff]
        %v5852 = vld [vmem:[%s11 + $0xa0] sm:$0xff]
        %v5853 = vld [vmem:[%s11 + $0xa8] sm:$0xff]
        %v5854 = vld [vmem:[%s11 + $0xb0] sm:$0xff]
        %v5855 = vld [vmem:[%s11 + $0xb8] sm:$0xff]
        %v5856 = vld [vmem:[%s11 + $0xc0] sm:$0xff]
        %v5857 = vld [vmem:[%s11 + $0xc8] sm:$0xff]
        %v5858 = vld [vmem:[%s11 + $0xd0] sm:$0xff]
        %v5859 = vld [vmem:[%s11 + $0xd8] sm:$0xff]
        %v5860 = vld [vmem:[%s11 + $0xe0] sm:$0xff]
        %v5861 = vld [vmem:[%s11 + $0xe8] sm:$0xff]
        %v5862 = vld [vmem:[%s11 + $0xf0] sm:$0xff]
        %v5863 = vld [vmem:[%s11 + $0xf8] sm:$0xff]
        %v5864 = vld [vmem:[%s12] sm:$0x1]
        %v5865 = vsel %vm543, %v5720, 0.0
        %5866 = vadd.xlane.f32.xlu0 %v5865
        %v5867 = vpop.xlane.xlu0 %5866
        %v5868 = vsel %vm543, %v5721, 0.0
        %5869 = vadd.xlane.f32.xlu0 %v5868
        %v5870 = vpop.xlane.xlu0 %5869
        %v5871 = vsel %vm543, %v5722, 0.0
        %5872 = vadd.xlane.f32.xlu0 %v5871
        %v5873 = vpop.xlane.xlu0 %5872
        %v5874 = vmul.f32 %v5867, %v553
        %v5875 = vmul.f32 %v5870, %v553
        %v5876 = vmul.f32 %v5873, %v553
        %v5877 = vsub.f32 %v5720, %v5874
        %v5878 = vsub.f32 %v5721, %v5875
        %v5879 = vsub.f32 %v5722, %v5876
        %v5880 = vmul.f32 %v5877, %v5877
        %v5881 = vmul.f32 %v5878, %v5878
        %v5882 = vmul.f32 %v5879, %v5879
        %v5883 = vsel %vm543, %v5880, 0.0
        %5884 = vadd.xlane.f32.xlu0 %v5883
        %v5885 = vpop.xlane.xlu0 %5884
        %v5886 = vsel %vm543, %v5881, 0.0
        %5887 = vadd.xlane.f32.xlu0 %v5886
        %v5888 = vpop.xlane.xlu0 %5887
        %v5889 = vsel %vm543, %v5882, 0.0
        %5890 = vadd.xlane.f32.xlu0 %v5889
        %v5891 = vpop.xlane.xlu0 %5890
        %v5892 = vmul.f32 %v5885, %v553
        %v5893 = vmul.f32 %v5888, %v553
        %v5894 = vmul.f32 %v5891, %v553
        %v5895 = vadd.f32 %v5892, 1e-05
        %v5896 = vadd.f32 %v5893, 1e-05
        %v5897 = vadd.f32 %v5894, 1e-05
        %v5898 = vrsqrt.pop %v5895
        %v5899 = vrsqrt.pop %v5896
        %v5900 = vrsqrt.pop %v5897
        %v5901 = vmul.f32 %v5877, %v5898
        %v5902 = vmul.f32 %v5878, %v5899
        %v5903 = vmul.f32 %v5879, %v5900
        %v5905 = vlaneseq
        %v5906 = vshrl.u32 %v5905, 7
        %v5907 = vsub.s32 0, %v5906
        %v5908 = vrot.slane %v525, %v5907
        %v5910 = vmul.f32 %v5901, %v5908
        %v5911 = vmul.f32 %v5902, %v5908
        %v5912 = vmul.f32 %v5903, %v5908
        %v5914 = vlaneseq
        %v5915 = vshrl.u32 %v5914, 7
        %v5916 = vsub.s32 0, %v5915
        %v5917 = vrot.slane %v526, %v5916
        %v5919 = vadd.f32 %v5910, %v5917
        %v5920 = vadd.f32 %v5911, %v5917
        %v5921 = vadd.f32 %v5912, %v5917
        %v5923 = vlaneseq
        %v5924 = vshrl.u32 %v5923, 7
        %v5925 = vsub.s32 0, %v5924
        %v5926 = vrot.slane %v5831, %v5925
        %v5927 = vlaneseq
        %v5928 = vshrl.u32 %v5927, 7
        %v5929 = vsub.s32 1, %v5928
        %v5930 = vrot.slane %v5831, %v5929
        %v5934 = vsel %vm543, %v5919, 0
        %v5937 = vsel %vm543, %v5920, 0
        %v5940 = vsel %vm543, %v5921, 0
        %5942 = vmatprep.subr.mxu0 %v5816
        %5943 = vmatpush1.msra.mxu0 %v5815
        %5944 = vmatprep.subr.mxu0 %v5818
        %5945 = vmatpush1.msra.mxu0 %v5817
        %5946 = vmatprep.subr.mxu0 %v5820
        %5947 = vmatpush1.msra.mxu0 %v5819
        %5948 = vmatprep.subr.mxu0 %v5822
        %5949 = vmatpush1.msra.mxu0 %v5821
        %5950 = vmatprep.subr.mxu0 %v5824
        %5951 = vmatpush1.msra.mxu0 %v5823
        %5952 = vmatprep.subr.mxu0 %v5826
        %5953 = vmatpush1.msra.mxu0 %v5825
        %5954 = vmatprep.subr.mxu0 %v5828
        %5955 = vmatpush1.msra.mxu0 %v5827
        %5956 = vmatprep.subr.mxu0 %v5830
        %5957 = vmatpush1.msra.mxu0 %v5829
        %5958 = vmatprep.subr.mxu0 0.0
        %5959 = vmatpush1.msra.mxu0 0.0
        %5960 = vmatprep.subr.mxu0 0.0
        %5961 = vmatpush1.msra.mxu0 0.0
        %5962 = vmatprep.subr.mxu0 0.0
        %5963 = vmatpush1.msra.mxu0 0.0
        %5964 = vmatprep.subr.mxu0 0.0
        %5965 = vmatpush1.msra.mxu0 0.0
        %5966 = vmatprep.subr.mxu0 0.0
        %5967 = vmatpush1.msra.mxu0 0.0
        %5968 = vmatprep.subr.mxu0 0.0
        %5969 = vmatpush1.msra.mxu0 0.0
        %5970 = vmatprep.subr.mxu0 0.0
        %5971 = vmatpush1.msra.mxu0 0.0
        %5972 = vmatprep.subr.mxu0 0.0
        %5973 = vmatpush1.msra.mxu0 0.0
        %5974 = vmatprep.subr.mxu0 0.0
        %5975 = vmatpush1.msra.mxu0 0.0
        %5976 = vmatprep.subr.mxu0 0.0
        %5977 = vmatpush1.msra.mxu0 0.0
        %5978 = vmatprep.subr.mxu0 0.0
        %5979 = vmatpush1.msra.mxu0 0.0
        %5980 = vmatprep.subr.mxu0 0.0
        %5981 = vmatpush1.msra.mxu0 0.0
        %5982 = vmatprep.subr.mxu0 0.0
        %5983 = vmatpush1.msra.mxu0 0.0
        %5984 = vmatprep.subr.mxu0 0.0
        %5985 = vmatpush1.msra.mxu0 0.0
        %5986 = vmatprep.subr.mxu0 0.0
        %5987 = vmatpush1.msra.mxu0 0.0
        %5988 = vmatprep.subr.mxu0 0.0
        %5989 = vmatpush1.msra.mxu0 0.0
        %5990 = vmatprep.subr.mxu0 0.0
        %5991 = vmatpush1.msra.mxu0 0.0
        %5992 = vmatprep.subr.mxu0 0.0
        %5993 = vmatpush1.msra.mxu0 0.0
        %5994 = vmatprep.subr.mxu0 0.0
        %5995 = vmatpush1.msra.mxu0 0.0
        %5996 = vmatprep.subr.mxu0 0.0
        %5997 = vmatpush1.msra.mxu0 0.0
        %5998 = vmatprep.subr.mxu0 0.0
        %5999 = vmatpush1.msra.mxu0 0.0
        %6000 = vmatprep.subr.mxu0 0.0
        %6001 = vmatpush1.msra.mxu0 0.0
        %6002 = vmatprep.subr.mxu0 0.0
        %6003 = vmatpush1.msra.mxu0 0.0
        %6004 = vmatprep.subr.mxu0 0.0
        %6005 = vmatpush1.msra.mxu0 0.0
        %6006 = vmatprep.mubr.f32.mxu0 0.0
        %6007 = vmatmul.mubr.f32.gmra.mrb[0].mxu0 %v5934
        %v6008 = vpop.f32.mrb[0].mxu0
        %v6009 = vadd.f32 %v5926, %v6008
        %v6010 = vpop.f32.mrb[0].mxu0
        %v6011 = vadd.f32 %v5930, %v6010
        %6012 = vmatprep.mubr.f32.mxu0 0.0
        %6013 = vmatmul.mubr.f32.gmra.mrb[0].mxu0 %v5937
        %v6014 = vpop.f32.mrb[0].mxu0
        %v6015 = vadd.f32 %v5926, %v6014
        %v6016 = vpop.f32.mrb[0].mxu0
        %v6017 = vadd.f32 %v5930, %v6016
        %6018 = vmatprep.mubr.f32.mxu0 0.0
        %6019 = vmatmul.mubr.f32.gmra.mrb[0].mxu0 %v5940
        %v6020 = vpop.f32.mrb[0].mxu0
        %v6021 = vadd.f32 %v5926, %v6020
        %v6022 = vpop.f32.mrb[0].mxu0
        %v6023 = vadd.f32 %v5930, %v6022
        %6024 = vdwg.mxu0
        %v6025 = vmul.f32 %v6009, 0.5
        %v6026 = vmul.f32 %v6011, 0.5
        %v6027 = vmul.f32 %v6015, 0.5
        %v6028 = vmul.f32 %v6017, 0.5
        %v6029 = vmul.f32 %v6021, 0.5
        %v6030 = vmul.f32 %v6023, 0.5
        %v6031 = vmul.f32 %v6009, 0.70710677
        %v6032 = vmul.f32 %v6011, 0.70710677
        %v6033 = vmul.f32 %v6015, 0.70710677
        %v6034 = vmul.f32 %v6017, 0.70710677
        %v6035 = vmul.f32 %v6021, 0.70710677
        %v6036 = vmul.f32 %v6023, 0.70710677
        %v6037 = vand.u32 2147483647, %v6031
        %v6038 = vand.u32 2147483647, %v6032
        %v6039 = vand.u32 2147483647, %v6033
        %v6040 = vand.u32 2147483647, %v6034
        %v6041 = vand.u32 2147483647, %v6035
        %v6042 = vand.u32 2147483647, %v6036
        %v6043 = vmul.f32 %v6037, 0.3275911
        %v6044 = vmul.f32 %v6038, 0.3275911
        %v6045 = vmul.f32 %v6039, 0.3275911
        %v6046 = vmul.f32 %v6040, 0.3275911
        %v6047 = vmul.f32 %v6041, 0.3275911
        %v6048 = vmul.f32 %v6042, 0.3275911
        %v6049 = vadd.f32 %v6043, 1.0
        %v6050 = vadd.f32 %v6044, 1.0
        %v6051 = vadd.f32 %v6045, 1.0
        %v6052 = vadd.f32 %v6046, 1.0
        %v6053 = vadd.f32 %v6047, 1.0
        %v6054 = vadd.f32 %v6048, 1.0
        %v6055 = vrcp.pop %v6049
        %v6056 = vmul.f32 1.0, %v6055
        %v6057 = vrcp.pop %v6050
        %v6058 = vmul.f32 1.0, %v6057
        %v6059 = vrcp.pop %v6051
        %v6060 = vmul.f32 1.0, %v6059
        %v6061 = vrcp.pop %v6052
        %v6062 = vmul.f32 1.0, %v6061
        %v6063 = vrcp.pop %v6053
        %v6064 = vmul.f32 1.0, %v6063
        %v6065 = vrcp.pop %v6054
        %v6066 = vmul.f32 1.0, %v6065
        %v6067 = vmul.f32 %v6056, 1.0614054
        %v6068 = vmul.f32 %v6058, 1.0614054
        %v6069 = vmul.f32 %v6060, 1.0614054
        %v6070 = vmul.f32 %v6062, 1.0614054
        %v6071 = vmul.f32 %v6064, 1.0614054
        %v6072 = vmul.f32 %v6066, 1.0614054
        %v6073 = vadd.f32 %v6067, -1.4531521
        %v6074 = vadd.f32 %v6068, -1.4531521
        %v6075 = vadd.f32 %v6069, -1.4531521
        %v6076 = vadd.f32 %v6070, -1.4531521
        %v6077 = vadd.f32 %v6071, -1.4531521
        %v6078 = vadd.f32 %v6072, -1.4531521
        %v6079 = vmul.f32 %v6073, %v6056
        %v6080 = vmul.f32 %v6074, %v6058
        %v6081 = vmul.f32 %v6075, %v6060
        %v6082 = vmul.f32 %v6076, %v6062
        %v6083 = vmul.f32 %v6077, %v6064
        %v6084 = vmul.f32 %v6078, %v6066
        %v6085 = vadd.f32 %v6079, 1.4214138
        %v6086 = vadd.f32 %v6080, 1.4214138
        %v6087 = vadd.f32 %v6081, 1.4214138
        %v6088 = vadd.f32 %v6082, 1.4214138
        %v6089 = vadd.f32 %v6083, 1.4214138
        %v6090 = vadd.f32 %v6084, 1.4214138
        %v6091 = vmul.f32 %v6085, %v6056
        %v6092 = vmul.f32 %v6086, %v6058
        %v6093 = vmul.f32 %v6087, %v6060
        %v6094 = vmul.f32 %v6088, %v6062
        %v6095 = vmul.f32 %v6089, %v6064
        %v6096 = vmul.f32 %v6090, %v6066
        %v6097 = vadd.f32 %v6091, -0.28449672
        %v6098 = vadd.f32 %v6092, -0.28449672
        %v6099 = vadd.f32 %v6093, -0.28449672
        %v6100 = vadd.f32 %v6094, -0.28449672
        %v6101 = vadd.f32 %v6095, -0.28449672
        %v6102 = vadd.f32 %v6096, -0.28449672
        %v6103 = vmul.f32 %v6097, %v6056
        %v6104 = vmul.f32 %v6098, %v6058
        %v6105 = vmul.f32 %v6099, %v6060
        %v6106 = vmul.f32 %v6100, %v6062
        %v6107 = vmul.f32 %v6101, %v6064
        %v6108 = vmul.f32 %v6102, %v6066
        %v6109 = vadd.f32 %v6103, 0.2548296
        %v6110 = vadd.f32 %v6104, 0.2548296
        %v6111 = vadd.f32 %v6105, 0.2548296
        %v6112 = vadd.f32 %v6106, 0.2548296
        %v6113 = vadd.f32 %v6107, 0.2548296
        %v6114 = vadd.f32 %v6108, 0.2548296
        %v6115 = vmul.f32 %v6109, %v6056
        %v6116 = vmul.f32 %v6110, %v6058
        %v6117 = vmul.f32 %v6111, %v6060
        %v6118 = vmul.f32 %v6112, %v6062
        %v6119 = vmul.f32 %v6113, %v6064
        %v6120 = vmul.f32 %v6114, %v6066
        %v6121 = vmul.f32 %v6037, %v6037
        %v6122 = vmul.f32 %v6038, %v6038
        %v6123 = vmul.f32 %v6039, %v6039
        %v6124 = vmul.f32 %v6040, %v6040
        %v6125 = vmul.f32 %v6041, %v6041
        %v6126 = vmul.f32 %v6042, %v6042
        %v6127 = vsub.f32 0.0, %v6121
        %v6128 = vsub.f32 0.0, %v6122
        %v6129 = vsub.f32 0.0, %v6123
        %v6130 = vsub.f32 0.0, %v6124
        %v6131 = vsub.f32 0.0, %v6125
        %v6132 = vsub.f32 0.0, %v6126
        %v6133 = vmul.f32 %v6127, 1.442695
        %v6134 = vpow.pop %v6133
        %v6135 = vmul.f32 %v6128, 1.442695
        %v6136 = vpow.pop %v6135
        %v6137 = vmul.f32 %v6129, 1.442695
        %v6138 = vpow.pop %v6137
        %v6139 = vmul.f32 %v6130, 1.442695
        %v6140 = vpow.pop %v6139
        %v6141 = vmul.f32 %v6131, 1.442695
        %v6142 = vpow.pop %v6141
        %v6143 = vmul.f32 %v6132, 1.442695
        %v6144 = vpow.pop %v6143
        %v6145 = vmul.f32 %v6115, %v6134
        %v6146 = vmul.f32 %v6116, %v6136
        %v6147 = vmul.f32 %v6117, %v6138
        %v6148 = vmul.f32 %v6118, %v6140
        %v6149 = vmul.f32 %v6119, %v6142
        %v6150 = vmul.f32 %v6120, %v6144
        %v6151 = vsub.f32 1.0, %v6145
        %v6152 = vsub.f32 1.0, %v6146
        %v6153 = vsub.f32 1.0, %v6147
        %v6154 = vsub.f32 1.0, %v6148
        %v6155 = vsub.f32 1.0, %v6149
        %v6156 = vsub.f32 1.0, %v6150
        %vm6157 = vcmp.lt.f32.partialorder %v6031, 0.0
        %vm6158 = vcmp.lt.f32.partialorder %v6032, 0.0
        %vm6159 = vcmp.lt.f32.partialorder %v6033, 0.0
        %vm6160 = vcmp.lt.f32.partialorder %v6034, 0.0
        %vm6161 = vcmp.lt.f32.partialorder %v6035, 0.0
        %vm6162 = vcmp.lt.f32.partialorder %v6036, 0.0
        %v6163 = vsub.f32 0.0, %v6151
        %v6164 = vsub.f32 0.0, %v6152
        %v6165 = vsub.f32 0.0, %v6153
        %v6166 = vsub.f32 0.0, %v6154
        %v6167 = vsub.f32 0.0, %v6155
        %v6168 = vsub.f32 0.0, %v6156
        %v6169 = vsel %vm6157, %v6163, %v6151
        %v6170 = vsel %vm6158, %v6164, %v6152
        %v6171 = vsel %vm6159, %v6165, %v6153
        %v6172 = vsel %vm6160, %v6166, %v6154
        %v6173 = vsel %vm6161, %v6167, %v6155
        %v6174 = vsel %vm6162, %v6168, %v6156
        %v6175 = vadd.f32 %v6169, 1.0
        %v6176 = vadd.f32 %v6170, 1.0
        %v6177 = vadd.f32 %v6171, 1.0
        %v6178 = vadd.f32 %v6172, 1.0
        %v6179 = vadd.f32 %v6173, 1.0
        %v6180 = vadd.f32 %v6174, 1.0
        %v6181 = vmul.f32 %v6025, %v6175
        %v6182 = vmul.f32 %v6026, %v6176
        %v6183 = vmul.f32 %v6027, %v6177
        %v6184 = vmul.f32 %v6028, %v6178
        %v6185 = vmul.f32 %v6029, %v6179
        %v6186 = vmul.f32 %v6030, %v6180
        %v6188 = vlaneseq
        %v6189 = vshrl.u32 %v6188, 7
        %v6190 = vsub.s32 0, %v6189
        %v6191 = vrot.slane %v5864, %v6190
        %6193 = vmatprep.subr.mxu0 0.0
        %6194 = vmatpush1.msra.mxu0 %v5832
        %6195 = vmatprep.subr.mxu0 0.0
        %6196 = vmatpush1.msra.mxu0 %v5833
        %6197 = vmatprep.subr.mxu0 0.0
        %6198 = vmatpush1.msra.mxu0 %v5834
        %6199 = vmatprep.subr.mxu0 0.0
        %6200 = vmatpush1.msra.mxu0 %v5835
        %6201 = vmatprep.subr.mxu0 0.0
        %6202 = vmatpush1.msra.mxu0 %v5836
        %6203 = vmatprep.subr.mxu0 0.0
        %6204 = vmatpush1.msra.mxu0 %v5837
        %6205 = vmatprep.subr.mxu0 0.0
        %6206 = vmatpush1.msra.mxu0 %v5838
        %6207 = vmatprep.subr.mxu0 0.0
        %6208 = vmatpush1.msra.mxu0 %v5839
        %6209 = vmatprep.subr.mxu0 0.0
        %6210 = vmatpush1.msra.mxu0 %v5840
        %6211 = vmatprep.subr.mxu0 0.0
        %6212 = vmatpush1.msra.mxu0 %v5841
        %6213 = vmatprep.subr.mxu0 0.0
        %6214 = vmatpush1.msra.mxu0 %v5842
        %6215 = vmatprep.subr.mxu0 0.0
        %6216 = vmatpush1.msra.mxu0 %v5843
        %6217 = vmatprep.subr.mxu0 0.0
        %6218 = vmatpush1.msra.mxu0 %v5844
        %6219 = vmatprep.subr.mxu0 0.0
        %6220 = vmatpush1.msra.mxu0 %v5845
        %6221 = vmatprep.subr.mxu0 0.0
        %6222 = vmatpush1.msra.mxu0 %v5846
        %6223 = vmatprep.subr.mxu0 0.0
        %6224 = vmatpush1.msra.mxu0 %v5847
        %6225 = vmatprep.subr.mxu0 0.0
        %6226 = vmatpush1.msra.mxu0 %v5848
        %6227 = vmatprep.subr.mxu0 0.0
        %6228 = vmatpush1.msra.mxu0 %v5849
        %6229 = vmatprep.subr.mxu0 0.0
        %6230 = vmatpush1.msra.mxu0 %v5850
        %6231 = vmatprep.subr.mxu0 0.0
        %6232 = vmatpush1.msra.mxu0 %v5851
        %6233 = vmatprep.subr.mxu0 0.0
        %6234 = vmatpush1.msra.mxu0 %v5852
        %6235 = vmatprep.subr.mxu0 0.0
        %6236 = vmatpush1.msra.mxu0 %v5853
        %6237 = vmatprep.subr.mxu0 0.0
        %6238 = vmatpush1.msra.mxu0 %v5854
        %6239 = vmatprep.subr.mxu0 0.0
        %6240 = vmatpush1.msra.mxu0 %v5855
        %6241 = vmatprep.subr.mxu0 0.0
        %6242 = vmatpush1.msra.mxu0 %v5856
        %6243 = vmatprep.subr.mxu0 0.0
        %6244 = vmatpush1.msra.mxu0 %v5857
        %6245 = vmatprep.subr.mxu0 0.0
        %6246 = vmatpush1.msra.mxu0 %v5858
        %6247 = vmatprep.subr.mxu0 0.0
        %6248 = vmatpush1.msra.mxu0 %v5859
        %6249 = vmatprep.subr.mxu0 0.0
        %6250 = vmatpush1.msra.mxu0 %v5860
        %6251 = vmatprep.subr.mxu0 0.0
        %6252 = vmatpush1.msra.mxu0 %v5861
        %6253 = vmatprep.subr.mxu0 0.0
        %6254 = vmatpush1.msra.mxu0 %v5862
        %6255 = vmatprep.subr.mxu0 0.0
        %6256 = vmatpush1.msra.mxu0 %v5863
        %6257 = vmatprep.mubr.f32.mxu0 %v6182
        %6258 = vmatmul.mubr.f32.gmra.mrb[0].mxu0 %v6181
        %v6259 = vpop.f32.mrb[0].mxu0
        %v6260 = vadd.f32 %v6191, %v6259
        %v6261 = vpop.f32.mrb[0].mxu0
        %6262 = vmatprep.mubr.f32.mxu0 %v6184
        %6263 = vmatmul.mubr.f32.gmra.mrb[0].mxu0 %v6183
        %v6264 = vpop.f32.mrb[0].mxu0
        %v6265 = vadd.f32 %v6191, %v6264
        %v6266 = vpop.f32.mrb[0].mxu0
        %6267 = vmatprep.mubr.f32.mxu0 %v6186
        %6268 = vmatmul.mubr.f32.gmra.mrb[0].mxu0 %v6185
        %v6269 = vpop.f32.mrb[0].mxu0
        %v6270 = vadd.f32 %v6191, %v6269
        %v6271 = vpop.f32.mrb[0].mxu0
        %6272 = vdwg.mxu0
        %v6273 = vadd.f32 %v5720, %v6260
        %v6274 = vadd.f32 %v5721, %v6265
        %v6275 = vadd.f32 %v5722, %v6270
        %v6276 = vsel %vm543, %v5812, 0.0
        %6277 = vadd.xlane.f32.xlu0 %v6276
        %v6278 = vpop.xlane.xlu0 %6277
        %v6279 = vsel %vm543, %v5813, 0.0
        %6280 = vadd.xlane.f32.xlu0 %v6279
        %v6281 = vpop.xlane.xlu0 %6280
        %v6282 = vsel %vm543, %v5814, 0.0
        %6283 = vadd.xlane.f32.xlu0 %v6282
        %v6284 = vpop.xlane.xlu0 %6283
        %v6285 = vmul.f32 %v6278, %v553
        %v6286 = vmul.f32 %v6281, %v553
        %v6287 = vmul.f32 %v6284, %v553
        %v6288 = vsub.f32 %v5812, %v6285
        %v6289 = vsub.f32 %v5813, %v6286
        %v6290 = vsub.f32 %v5814, %v6287
        %v6291 = vmul.f32 %v6288, %v6288
        %v6292 = vmul.f32 %v6289, %v6289
        %v6293 = vmul.f32 %v6290, %v6290
        %v6294 = vsel %vm543, %v6291, 0.0
        %6295 = vadd.xlane.f32.xlu0 %v6294
        %v6296 = vpop.xlane.xlu0 %6295
        %v6297 = vsel %vm543, %v6292, 0.0
        %6298 = vadd.xlane.f32.xlu0 %v6297
        %v6299 = vpop.xlane.xlu0 %6298
        %v6300 = vsel %vm543, %v6293, 0.0
        %6301 = vadd.xlane.f32.xlu0 %v6300
        %v6302 = vpop.xlane.xlu0 %6301
        %v6303 = vmul.f32 %v6296, %v553
        %v6304 = vmul.f32 %v6299, %v553
        %v6305 = vmul.f32 %v6302, %v553
        %v6306 = vadd.f32 %v6303, 1e-05
        %v6307 = vadd.f32 %v6304, 1e-05
        %v6308 = vadd.f32 %v6305, 1e-05
        %v6309 = vrsqrt.pop %v6306
        %v6310 = vrsqrt.pop %v6307
        %v6311 = vrsqrt.pop %v6308
        %v6312 = vmul.f32 %v6288, %v6309
        %v6313 = vmul.f32 %v6289, %v6310
        %v6314 = vmul.f32 %v6290, %v6311
        %v6315 = vmul.f32 %v6312, %v5908
        %v6316 = vmul.f32 %v6313, %v5908
        %v6317 = vmul.f32 %v6314, %v5908
        %v6318 = vadd.f32 %v6315, %v5917
        %v6319 = vadd.f32 %v6316, %v5917
        %v6320 = vadd.f32 %v6317, %v5917
        %v6322 = vsel %vm543, %v6318, 0
        %v6325 = vsel %vm543, %v6319, 0
        %v6328 = vsel %vm543, %v6320, 0
        %6330 = vmatprep.subr.mxu0 %v5816
        %6331 = vmatpush1.msra.mxu0 %v5815
        %6332 = vmatprep.subr.mxu0 %v5818
        %6333 = vmatpush1.msra.mxu0 %v5817
        %6334 = vmatprep.subr.mxu0 %v5820
        %6335 = vmatpush1.msra.mxu0 %v5819
        %6336 = vmatprep.subr.mxu0 %v5822
        %6337 = vmatpush1.msra.mxu0 %v5821
        %6338 = vmatprep.subr.mxu0 %v5824
        %6339 = vmatpush1.msra.mxu0 %v5823
        %6340 = vmatprep.subr.mxu0 %v5826
        %6341 = vmatpush1.msra.mxu0 %v5825
        %6342 = vmatprep.subr.mxu0 %v5828
        %6343 = vmatpush1.msra.mxu0 %v5827
        %6344 = vmatprep.subr.mxu0 %v5830
        %6345 = vmatpush1.msra.mxu0 %v5829
        %6346 = vmatprep.subr.mxu0 0.0
        %6347 = vmatpush1.msra.mxu0 0.0
        %6348 = vmatprep.subr.mxu0 0.0
        %6349 = vmatpush1.msra.mxu0 0.0
        %6350 = vmatprep.subr.mxu0 0.0
        %6351 = vmatpush1.msra.mxu0 0.0
        %6352 = vmatprep.subr.mxu0 0.0
        %6353 = vmatpush1.msra.mxu0 0.0
        %6354 = vmatprep.subr.mxu0 0.0
        %6355 = vmatpush1.msra.mxu0 0.0
        %6356 = vmatprep.subr.mxu0 0.0
        %6357 = vmatpush1.msra.mxu0 0.0
        %6358 = vmatprep.subr.mxu0 0.0
        %6359 = vmatpush1.msra.mxu0 0.0
        %6360 = vmatprep.subr.mxu0 0.0
        %6361 = vmatpush1.msra.mxu0 0.0
        %6362 = vmatprep.subr.mxu0 0.0
        %6363 = vmatpush1.msra.mxu0 0.0
        %6364 = vmatprep.subr.mxu0 0.0
        %6365 = vmatpush1.msra.mxu0 0.0
        %6366 = vmatprep.subr.mxu0 0.0
        %6367 = vmatpush1.msra.mxu0 0.0
        %6368 = vmatprep.subr.mxu0 0.0
        %6369 = vmatpush1.msra.mxu0 0.0
        %6370 = vmatprep.subr.mxu0 0.0
        %6371 = vmatpush1.msra.mxu0 0.0
        %6372 = vmatprep.subr.mxu0 0.0
        %6373 = vmatpush1.msra.mxu0 0.0
        %6374 = vmatprep.subr.mxu0 0.0
        %6375 = vmatpush1.msra.mxu0 0.0
        %6376 = vmatprep.subr.mxu0 0.0
        %6377 = vmatpush1.msra.mxu0 0.0
        %6378 = vmatprep.subr.mxu0 0.0
        %6379 = vmatpush1.msra.mxu0 0.0
        %6380 = vmatprep.subr.mxu0 0.0
        %6381 = vmatpush1.msra.mxu0 0.0
        %6382 = vmatprep.subr.mxu0 0.0
        %6383 = vmatpush1.msra.mxu0 0.0
        %6384 = vmatprep.subr.mxu0 0.0
        %6385 = vmatpush1.msra.mxu0 0.0
        %6386 = vmatprep.subr.mxu0 0.0
        %6387 = vmatpush1.msra.mxu0 0.0
        %6388 = vmatprep.subr.mxu0 0.0
        %6389 = vmatpush1.msra.mxu0 0.0
        %6390 = vmatprep.subr.mxu0 0.0
        %6391 = vmatpush1.msra.mxu0 0.0
        %6392 = vmatprep.subr.mxu0 0.0
        %6393 = vmatpush1.msra.mxu0 0.0
        %6394 = vmatprep.mubr.f32.mxu0 0.0
        %6395 = vmatmul.mubr.f32.gmra.mrb[0].mxu0 %v6322
        %v6396 = vpop.f32.mrb[0].mxu0
        %v6397 = vadd.f32 %v5926, %v6396
        %v6398 = vpop.f32.mrb[0].mxu0
        %v6399 = vadd.f32 %v5930, %v6398
        %6400 = vmatprep.mubr.f32.mxu0 0.0
        %6401 = vmatmul.mubr.f32.gmra.mrb[0].mxu0 %v6325
        %v6402 = vpop.f32.mrb[0].mxu0
        %v6403 = vadd.f32 %v5926, %v6402
        %v6404 = vpop.f32.mrb[0].mxu0
        %v6405 = vadd.f32 %v5930, %v6404
        %6406 = vmatprep.mubr.f32.mxu0 0.0
        %6407 = vmatmul.mubr.f32.gmra.mrb[0].mxu0 %v6328
        %v6408 = vpop.f32.mrb[0].mxu0
        %v6409 = vadd.f32 %v5926, %v6408
        %v6410 = vpop.f32.mrb[0].mxu0
        %v6411 = vadd.f32 %v5930, %v6410
        %6412 = vdwg.mxu0
        %v6413 = vmul.f32 %v6397, 0.5
        %v6414 = vmul.f32 %v6399, 0.5
        %v6415 = vmul.f32 %v6403, 0.5
        %v6416 = vmul.f32 %v6405, 0.5
        %v6417 = vmul.f32 %v6409, 0.5
        %v6418 = vmul.f32 %v6411, 0.5
        %v6419 = vmul.f32 %v6397, 0.70710677
        %v6420 = vmul.f32 %v6399, 0.70710677
        %v6421 = vmul.f32 %v6403, 0.70710677
        %v6422 = vmul.f32 %v6405, 0.70710677
        %v6423 = vmul.f32 %v6409, 0.70710677
        %v6424 = vmul.f32 %v6411, 0.70710677
        %v6425 = vand.u32 2147483647, %v6419
        %v6426 = vand.u32 2147483647, %v6420
        %v6427 = vand.u32 2147483647, %v6421
        %v6428 = vand.u32 2147483647, %v6422
        %v6429 = vand.u32 2147483647, %v6423
        %v6430 = vand.u32 2147483647, %v6424
        %v6431 = vmul.f32 %v6425, 0.3275911
        %v6432 = vmul.f32 %v6426, 0.3275911
        %v6433 = vmul.f32 %v6427, 0.3275911
        %v6434 = vmul.f32 %v6428, 0.3275911
        %v6435 = vmul.f32 %v6429, 0.3275911
        %v6436 = vmul.f32 %v6430, 0.3275911
        %v6437 = vadd.f32 %v6431, 1.0
        %v6438 = vadd.f32 %v6432, 1.0
        %v6439 = vadd.f32 %v6433, 1.0
        %v6440 = vadd.f32 %v6434, 1.0
        %v6441 = vadd.f32 %v6435, 1.0
        %v6442 = vadd.f32 %v6436, 1.0
        %v6443 = vrcp.pop %v6437
        %v6444 = vmul.f32 1.0, %v6443
        %v6445 = vrcp.pop %v6438
        %v6446 = vmul.f32 1.0, %v6445
        %v6447 = vrcp.pop %v6439
        %v6448 = vmul.f32 1.0, %v6447
        %v6449 = vrcp.pop %v6440
        %v6450 = vmul.f32 1.0, %v6449
        %v6451 = vrcp.pop %v6441
        %v6452 = vmul.f32 1.0, %v6451
        %v6453 = vrcp.pop %v6442
        %v6454 = vmul.f32 1.0, %v6453
        %v6455 = vmul.f32 %v6444, 1.0614054
        %v6456 = vmul.f32 %v6446, 1.0614054
        %v6457 = vmul.f32 %v6448, 1.0614054
        %v6458 = vmul.f32 %v6450, 1.0614054
        %v6459 = vmul.f32 %v6452, 1.0614054
        %v6460 = vmul.f32 %v6454, 1.0614054
        %v6461 = vadd.f32 %v6455, -1.4531521
        %v6462 = vadd.f32 %v6456, -1.4531521
        %v6463 = vadd.f32 %v6457, -1.4531521
        %v6464 = vadd.f32 %v6458, -1.4531521
        %v6465 = vadd.f32 %v6459, -1.4531521
        %v6466 = vadd.f32 %v6460, -1.4531521
        %v6467 = vmul.f32 %v6461, %v6444
        %v6468 = vmul.f32 %v6462, %v6446
        %v6469 = vmul.f32 %v6463, %v6448
        %v6470 = vmul.f32 %v6464, %v6450
        %v6471 = vmul.f32 %v6465, %v6452
        %v6472 = vmul.f32 %v6466, %v6454
        %v6473 = vadd.f32 %v6467, 1.4214138
        %v6474 = vadd.f32 %v6468, 1.4214138
        %v6475 = vadd.f32 %v6469, 1.4214138
        %v6476 = vadd.f32 %v6470, 1.4214138
        %v6477 = vadd.f32 %v6471, 1.4214138
        %v6478 = vadd.f32 %v6472, 1.4214138
        %v6479 = vmul.f32 %v6473, %v6444
        %v6480 = vmul.f32 %v6474, %v6446
        %v6481 = vmul.f32 %v6475, %v6448
        %v6482 = vmul.f32 %v6476, %v6450
        %v6483 = vmul.f32 %v6477, %v6452
        %v6484 = vmul.f32 %v6478, %v6454
        %v6485 = vadd.f32 %v6479, -0.28449672
        %v6486 = vadd.f32 %v6480, -0.28449672
        %v6487 = vadd.f32 %v6481, -0.28449672
        %v6488 = vadd.f32 %v6482, -0.28449672
        %v6489 = vadd.f32 %v6483, -0.28449672
        %v6490 = vadd.f32 %v6484, -0.28449672
        %v6491 = vmul.f32 %v6485, %v6444
        %v6492 = vmul.f32 %v6486, %v6446
        %v6493 = vmul.f32 %v6487, %v6448
        %v6494 = vmul.f32 %v6488, %v6450
        %v6495 = vmul.f32 %v6489, %v6452
        %v6496 = vmul.f32 %v6490, %v6454
        %v6497 = vadd.f32 %v6491, 0.2548296
        %v6498 = vadd.f32 %v6492, 0.2548296
        %v6499 = vadd.f32 %v6493, 0.2548296
        %v6500 = vadd.f32 %v6494, 0.2548296
        %v6501 = vadd.f32 %v6495, 0.2548296
        %v6502 = vadd.f32 %v6496, 0.2548296
        %v6503 = vmul.f32 %v6497, %v6444
        %v6504 = vmul.f32 %v6498, %v6446
        %v6505 = vmul.f32 %v6499, %v6448
        %v6506 = vmul.f32 %v6500, %v6450
        %v6507 = vmul.f32 %v6501, %v6452
        %v6508 = vmul.f32 %v6502, %v6454
        %v6509 = vmul.f32 %v6425, %v6425
        %v6510 = vmul.f32 %v6426, %v6426
        %v6511 = vmul.f32 %v6427, %v6427
        %v6512 = vmul.f32 %v6428, %v6428
        %v6513 = vmul.f32 %v6429, %v6429
        %v6514 = vmul.f32 %v6430, %v6430
        %v6515 = vsub.f32 0.0, %v6509
        %v6516 = vsub.f32 0.0, %v6510
        %v6517 = vsub.f32 0.0, %v6511
        %v6518 = vsub.f32 0.0, %v6512
        %v6519 = vsub.f32 0.0, %v6513
        %v6520 = vsub.f32 0.0, %v6514
        %v6521 = vmul.f32 %v6515, 1.442695
        %v6522 = vpow.pop %v6521
        %v6523 = vmul.f32 %v6516, 1.442695
        %v6524 = vpow.pop %v6523
        %v6525 = vmul.f32 %v6517, 1.442695
        %v6526 = vpow.pop %v6525
        %v6527 = vmul.f32 %v6518, 1.442695
        %v6528 = vpow.pop %v6527
        %v6529 = vmul.f32 %v6519, 1.442695
        %v6530 = vpow.pop %v6529
        %v6531 = vmul.f32 %v6520, 1.442695
        %v6532 = vpow.pop %v6531
        %v6533 = vmul.f32 %v6503, %v6522
        %v6534 = vmul.f32 %v6504, %v6524
        %v6535 = vmul.f32 %v6505, %v6526
        %v6536 = vmul.f32 %v6506, %v6528
        %v6537 = vmul.f32 %v6507, %v6530
        %v6538 = vmul.f32 %v6508, %v6532
        %v6539 = vsub.f32 1.0, %v6533
        %v6540 = vsub.f32 1.0, %v6534
        %v6541 = vsub.f32 1.0, %v6535
        %v6542 = vsub.f32 1.0, %v6536
        %v6543 = vsub.f32 1.0, %v6537
        %v6544 = vsub.f32 1.0, %v6538
        %vm6545 = vcmp.lt.f32.partialorder %v6419, 0.0
        %vm6546 = vcmp.lt.f32.partialorder %v6420, 0.0
        %vm6547 = vcmp.lt.f32.partialorder %v6421, 0.0
        %vm6548 = vcmp.lt.f32.partialorder %v6422, 0.0
        %vm6549 = vcmp.lt.f32.partialorder %v6423, 0.0
        %vm6550 = vcmp.lt.f32.partialorder %v6424, 0.0
        %v6551 = vsub.f32 0.0, %v6539
        %v6552 = vsub.f32 0.0, %v6540
        %v6553 = vsub.f32 0.0, %v6541
        %v6554 = vsub.f32 0.0, %v6542
        %v6555 = vsub.f32 0.0, %v6543
        %v6556 = vsub.f32 0.0, %v6544
        %v6557 = vsel %vm6545, %v6551, %v6539
        %v6558 = vsel %vm6546, %v6552, %v6540
        %v6559 = vsel %vm6547, %v6553, %v6541
        %v6560 = vsel %vm6548, %v6554, %v6542
        %v6561 = vsel %vm6549, %v6555, %v6543
        %v6562 = vsel %vm6550, %v6556, %v6544
        %v6563 = vadd.f32 %v6557, 1.0
        %v6564 = vadd.f32 %v6558, 1.0
        %v6565 = vadd.f32 %v6559, 1.0
        %v6566 = vadd.f32 %v6560, 1.0
        %v6567 = vadd.f32 %v6561, 1.0
        %v6568 = vadd.f32 %v6562, 1.0
        %v6569 = vmul.f32 %v6413, %v6563
        %v6570 = vmul.f32 %v6414, %v6564
        %v6571 = vmul.f32 %v6415, %v6565
        %v6572 = vmul.f32 %v6416, %v6566
        %v6573 = vmul.f32 %v6417, %v6567
        %v6574 = vmul.f32 %v6418, %v6568
        %6575 = vmatprep.subr.mxu0 0.0
        %6576 = vmatpush1.msra.mxu0 %v5832
        %6577 = vmatprep.subr.mxu0 0.0
        %6578 = vmatpush1.msra.mxu0 %v5833
        %6579 = vmatprep.subr.mxu0 0.0
        %6580 = vmatpush1.msra.mxu0 %v5834
        %6581 = vmatprep.subr.mxu0 0.0
        %6582 = vmatpush1.msra.mxu0 %v5835
        %6583 = vmatprep.subr.mxu0 0.0
        %6584 = vmatpush1.msra.mxu0 %v5836
        %6585 = vmatprep.subr.mxu0 0.0
        %6586 = vmatpush1.msra.mxu0 %v5837
        %6587 = vmatprep.subr.mxu0 0.0
        %6588 = vmatpush1.msra.mxu0 %v5838
        %6589 = vmatprep.subr.mxu0 0.0
        %6590 = vmatpush1.msra.mxu0 %v5839
        %6591 = vmatprep.subr.mxu0 0.0
        %6592 = vmatpush1.msra.mxu0 %v5840
        %6593 = vmatprep.subr.mxu0 0.0
        %6594 = vmatpush1.msra.mxu0 %v5841
        %6595 = vmatprep.subr.mxu0 0.0
        %6596 = vmatpush1.msra.mxu0 %v5842
        %6597 = vmatprep.subr.mxu0 0.0
        %6598 = vmatpush1.msra.mxu0 %v5843
        %6599 = vmatprep.subr.mxu0 0.0
        %6600 = vmatpush1.msra.mxu0 %v5844
        %6601 = vmatprep.subr.mxu0 0.0
        %6602 = vmatpush1.msra.mxu0 %v5845
        %6603 = vmatprep.subr.mxu0 0.0
        %6604 = vmatpush1.msra.mxu0 %v5846
        %6605 = vmatprep.subr.mxu0 0.0
        %6606 = vmatpush1.msra.mxu0 %v5847
        %6607 = vmatprep.subr.mxu0 0.0
        %6608 = vmatpush1.msra.mxu0 %v5848
        %6609 = vmatprep.subr.mxu0 0.0
        %6610 = vmatpush1.msra.mxu0 %v5849
        %6611 = vmatprep.subr.mxu0 0.0
        %6612 = vmatpush1.msra.mxu0 %v5850
        %6613 = vmatprep.subr.mxu0 0.0
        %6614 = vmatpush1.msra.mxu0 %v5851
        %6615 = vmatprep.subr.mxu0 0.0
        %6616 = vmatpush1.msra.mxu0 %v5852
        %6617 = vmatprep.subr.mxu0 0.0
        %6618 = vmatpush1.msra.mxu0 %v5853
        %6619 = vmatprep.subr.mxu0 0.0
        %6620 = vmatpush1.msra.mxu0 %v5854
        %6621 = vmatprep.subr.mxu0 0.0
        %6622 = vmatpush1.msra.mxu0 %v5855
        %6623 = vmatprep.subr.mxu0 0.0
        %6624 = vmatpush1.msra.mxu0 %v5856
        %6625 = vmatprep.subr.mxu0 0.0
        %6626 = vmatpush1.msra.mxu0 %v5857
        %6627 = vmatprep.subr.mxu0 0.0
        %6628 = vmatpush1.msra.mxu0 %v5858
        %6629 = vmatprep.subr.mxu0 0.0
        %6630 = vmatpush1.msra.mxu0 %v5859
        %6631 = vmatprep.subr.mxu0 0.0
        %6632 = vmatpush1.msra.mxu0 %v5860
        %6633 = vmatprep.subr.mxu0 0.0
        %6634 = vmatpush1.msra.mxu0 %v5861
        %6635 = vmatprep.subr.mxu0 0.0
        %6636 = vmatpush1.msra.mxu0 %v5862
        %6637 = vmatprep.subr.mxu0 0.0
        %6638 = vmatpush1.msra.mxu0 %v5863
        %6639 = vmatprep.mubr.f32.mxu0 %v6570
        %6640 = vmatmul.mubr.f32.gmra.mrb[0].mxu0 %v6569
        %v6641 = vpop.f32.mrb[0].mxu0
        %v6642 = vadd.f32 %v6191, %v6641
        %v6643 = vpop.f32.mrb[0].mxu0
        %6644 = vmatprep.mubr.f32.mxu0 %v6572
        %6645 = vmatmul.mubr.f32.gmra.mrb[0].mxu0 %v6571
        %v6646 = vpop.f32.mrb[0].mxu0
        %v6647 = vadd.f32 %v6191, %v6646
        %v6648 = vpop.f32.mrb[0].mxu0
        %6649 = vmatprep.mubr.f32.mxu0 %v6574
        %6650 = vmatmul.mubr.f32.gmra.mrb[0].mxu0 %v6573
        %v6651 = vpop.f32.mrb[0].mxu0
        %v6652 = vadd.f32 %v6191, %v6651
        %v6653 = vpop.f32.mrb[0].mxu0
        %6654 = vdwg.mxu0
        %v6655 = vadd.f32 %v5812, %v6642
        %v6656 = vadd.f32 %v5813, %v6647
        %v6657 = vadd.f32 %v5814, %v6652
        %6658 = vst.msk [vmem:[%s504] sm:$0xff] %vm543, %v6273
        %6659 = vst.msk [vmem:[%s504 + $0x8] sm:$0xff] %vm543, %v6274
        %6660 = vst.msk [vmem:[%s504 + $0x10] sm:$0xff] %vm543, %v6275
        %6661 = vst.msk [vmem:[%s511] sm:$0xff] %vm543, %v6655
        %6662 = vst.msk [vmem:[%s511 + $0x8] sm:$0xff] %vm543, %v6656
        %6663 = vst.msk [vmem:[%s511 + $0x10] sm:$0xff] %vm543, %v6657
        %s6664 = sand.u32 %s326, 1
        %s6665 = scalar_lea.sflag [#allocation4], %s6664
        %s6666 = sand.u32 %s326, 1
        %s6667 = smul.addr %s6666, 24
        %s6668 = scalar_lea.vmem [#allocation5], %s6667
        %s6669 = sand.u32 %s352, 1
        %s6670 = scalar_lea.sflag [#allocation7], %s6669
        %s6671 = sand.u32 %s352, 1
        %s6672 = smul.addr %s6671, 24
        %s6673 = scalar_lea.vmem [#allocation6], %s6672
        // Predicated region
        $region77: #{block_forward.1} parent=71 // pred_check
          %p6674 = pneg %p336
        $region78: #{block_forward.1} parent=71 // pred_check_branch
          %6676 = sbr.rel (%p6674) target = $region80
        $region79: #{block_forward.1} parent=71 // pred_region
          %s6678 = ssub.s32 384, 384
          %6679 = vsyncadd %s6665, %s6678
          %s6680 = smul.addr %s35, 3
          %s6681 = smul.addr %s6680, 128
          %s6682 = scalar_lea.hbm %s13, %s6681
          %s6683 = sshll.u32 %s6668, 4
          %s6684 = int_to_ptr.vmem [resolvable:$true] %s6683
          %6689 = dma.vmem_to_hbm [thread:$0]  %s6684, 384, %s6682, %s6665, 128, 128, 8
        $region80: #{block_forward.1} parent=71 // pred_fallthru
          _
        // Predicated region
        $region81: #{block_forward.1} parent=71 // pred_check
          %p6690 = pneg %p362
        $region82: #{block_forward.1} parent=71 // pred_check_branch
          %6692 = sbr.rel (%p6690) target = $region84
        $region83: #{block_forward.1} parent=71 // pred_region
          %s6694 = ssub.s32 384, 384
          %6695 = vsyncadd %s6670, %s6694
          %s6696 = smul.addr %s35, 3
          %s6697 = smul.addr %s6696, 128
          %s6698 = scalar_lea.hbm %s14, %s6697
          %s6699 = sshll.u32 %s6673, 4
          %s6700 = int_to_ptr.vmem [resolvable:$true] %s6699
          %6705 = dma.vmem_to_hbm [thread:$0]  %s6700, 384, %s6698, %s6670, 128, 128, 8
        $region84: #{block_forward.1} parent=71 // pred_fallthru
          _
      $region72: #{block_forward.1} parent=5 // pred_fallthru
        _
      %p6706 = scmp.le.s32.totalorder 2, %s30
      // Predicated region
      $region85: #{block_forward.1} parent=5 // pred_check
        %p6707 = pneg %p6706
      $region86: #{block_forward.1} parent=5 // pred_check_branch
        %6709 = sbr.rel (%p6707) target = $region88
      $region87: #{block_forward.1} parent=5 // pred_region
        %s6710 = ssub.s32 %s30, 2
        // Predicated region
        $region89: #{block_forward.1} parent=87 // pred_check
          %p6711 = pneg %p342
        $region90: #{block_forward.1} parent=87 // pred_check_branch
          %6713 = sbr.rel (%p6711) target = $region92
        $region91: #{block_forward.1} parent=87 // pred_region
          %s6714 = sand.u32 %s327, 1
          %s6715 = scalar_lea.sflag [#allocation4], %s6714
          %s6716 = sand.u32 %s327, 1
          %s6717 = smul.addr %s6716, 24
          %s6718 = scalar_lea.vmem [#allocation5], %s6717
          %6719 = dma.done %s6715, 384
        $region92: #{block_forward.1} parent=87 // pred_fallthru
          _
        // Predicated region
        $region93: #{block_forward.1} parent=87 // pred_check
          %p6720 = pneg %p368
        $region94: #{block_forward.1} parent=87 // pred_check_branch
          %6722 = sbr.rel (%p6720) target = $region96
        $region95: #{block_forward.1} parent=87 // pred_region
          %s6723 = sand.u32 %s353, 1
          %s6724 = scalar_lea.sflag [#allocation7], %s6723
          %s6725 = sand.u32 %s353, 1
          %s6726 = smul.addr %s6725, 24
          %s6727 = scalar_lea.vmem [#allocation6], %s6726
          %6728 = dma.done %s6724, 384
        $region96: #{block_forward.1} parent=87 // pred_fallthru
          _
      $region88: #{block_forward.1} parent=5 // pred_fallthru
        _
    $region6: #{block_forward.1} parent=1 // loop_footer
      %s34 = sadd.s32 1, %s30
    $region7: #{block_forward.1} parent=1 // loop_footer_branch
      %29 = sbr.rel target = $region3
    $region8: #{block_forward.1} parent=1 // loop_exit
      _
    %6729 = vsyncpa [#allocation3], 1
    %s6730 = scalar_lea.sflag [#allocation3], 1
    %6731 = vsyncpa %s6730, 1
    %6732 = vsyncpa [#allocation4], 1
    %s6733 = scalar_lea.sflag [#allocation4], 1
    %6734 = vsyncpa %s6733, 1
    %6735 = vsyncpa [#allocation7], 1
    %s6736 = scalar_lea.sflag [#allocation7], 1
    %6737 = vsyncpa %s6736, 1

</llo_original>
